<compile_context>
chip_gen: v6e
topology: v6e:2x2x1
jax: 0.10.0
libtpu: 0.0.40
codegen_flags: <defaults>
</compile_context>

<pallas_src>
import math

import jax
import jax.numpy as jnp
from jax.experimental import pallas as pl
from jax.experimental.pallas import tpu as pltpu

_LANE = 128            # all channel dims zero-padded to one multiple-of-128 width CP
_BN_EPS = 1e-5
_KERNEL_SIZES = (8, 5, 3)
_PAD_OFF = 16          # row offset of the activation inside each padded buffer (halo)
_L_CHUNK = 256         # output rows per in-kernel matmul chunk (bounds the f32 accumulator)
_TAP_GROUP = 2         # taps per accumulated matmul: 2 -> 256-deep contraction (v6e/v7x);
                       # use 1 on v5e (128-deep MXU)
_MAX_UNROLL_CHUNKS = 4 # static Python unroll up to this many chunks, else lax.fori_loop


def _round_up(x, m):
    return ((x + m - 1) // m) * m


def _const_spec(shape):
    zeros = (0,) * len(shape)
    return pl.BlockSpec(tuple(shape), lambda i: zeros)


_COMPILER_PARAMS = pltpu.CompilerParams(
    dimension_semantics=("parallel",),       # grid=(B,): megacore shards over batch
    vmem_limit_bytes=48 * 1024 * 1024,       # explicit budget; fits v7x's 64 MiB VMEM
)


# ----------------------------------------------------------------------------
# Fused whole-network kernel builder
# ----------------------------------------------------------------------------
def _make_fused_kernel(*, L, LT, CP, matches):
    """Fused 3x ResNetBlock + mean-pool + Linear kernel for one batch element."""
    K1, K2, K3 = _KERNEL_SIZES
    P = _PAD_OFF
    n_wrefs = sum(8 if m else 6 for m in matches) + 2   # conv/bias (+res) refs + fc_w/fc_b

    def conv_chunk(src, w, K, l0, lc):
        """SAME-padded conv1d over output rows [l0, l0+lc): tap-grouped accumulated matmuls.

        src holds the activation at rows [P, P+L) of a zero-haloed buffer, so tap k of
        output row l reads row P + l + k - (K-1)//2 (zero halo == SAME padding).
        """
        s0 = P - (K - 1) // 2 + l0
        acc = None
        k = 0
        while k < K:
            t = min(_TAP_GROUP, K - k)
            if t == 1:
                cols = src[pl.ds(s0 + k, lc), :]
            else:
                cols = jnp.concatenate(
                    [src[pl.ds(s0 + k + j, lc), :] for j in range(t)], axis=-1)
            part = jnp.dot(cols, w[k * CP:(k + t) * CP, :],
                           preferred_element_type=jnp.float32)
            acc = part if acc is None else acc + part
            k += t
        return acc

    def for_each_chunk(fn):
        """Apply fn(l0, lc) over [0, L) in LT-row chunks; dynamic loop for long L."""
        n_full, rem = divmod(L, LT)
        if n_full <= _MAX_UNROLL_CHUNKS:
            for c in range(n_full):
                fn(c * LT, LT)
        else:
            def body(c, carry):
                fn(pl.multiple_of(c * LT, LT), LT)
                return carry
            jax.lax.fori_loop(0, n_full, body, 0)
        if rem:
            fn(n_full * LT, rem)          # statically peeled tail chunk

    def kernel(*refs):
        assert len(refs) == 1 + n_wrefs + 1 + 4
        x_ref = refs[0]
        w = refs[1:1 + n_wrefs]
        o_ref = refs[1 + n_wrefs]
        buf_a, buf_b, buf_c, pool = refs[2 + n_wrefs:]
        bufs = (buf_a, buf_b, buf_c)

        # Zero ONLY the halo rows. Interiors are fully overwritten before every read.
        # Done every grid step: with a "parallel" grid each core owns its scratch, so a
        # program_id==0 guard would skip the second core's buffers.
        for buf in bufs:
            buf[0:P, :] = jnp.zeros((P, CP), buf.dtype)
            buf[P + L:P + 2 * P, :] = jnp.zeros((P, CP), buf.dtype)

        # Stage this batch element's input into buffer A's interior.
        buf_a[P:P + L, :] = x_ref[0]

        def conv_relu(src, dst, wm, bv, K):
            bias = bv[...]
            def fn(l0, lc):
                a = conv_chunk(src, wm, K, l0, lc) + bias
                dst[pl.ds(P + l0, lc), :] = jnp.maximum(a, 0.0).astype(dst.dtype)
            for_each_chunk(fn)

        def conv_relu_res(src, res_src, dst, wm, bv, wrm, brv, K):
            bias = bv[...]
            rbias = brv[...]
            def fn(l0, lc):
                a = jnp.maximum(conv_chunk(src, wm, K, l0, lc) + bias, 0.0)
                r = jnp.dot(res_src[pl.ds(P + l0, lc), :], wrm[...],
                            preferred_element_type=jnp.float32) + rbias
                dst[pl.ds(P + l0, lc), :] = (a + r).astype(dst.dtype)
            for_each_chunk(fn)

        def conv_relu_pool(src, wm, bv, K, res=None):
            bias = bv[...]
            if res is not None:
                res_src, wrm, brv = res
                rbias = brv[...]
            pool[...] = jnp.zeros_like(pool)
            def fn(l0, lc):
                a = jnp.maximum(conv_chunk(src, wm, K, l0, lc) + bias, 0.0)
                if res is not None:
                    a = a + jnp.dot(res_src[pl.ds(P + l0, lc), :], wrm[...],
                                    preferred_element_type=jnp.float32) + rbias
                pool[...] = pool[...] + jnp.sum(a, axis=0, keepdims=True)
            for_each_chunk(fn)

        # Buffer ping-pong schedule: (input, h1, h2, block-output) indices into bufs.
        # Block outputs land where they are next read; block-3's conv3 feeds the pool.
        sched = ((0, 1, 2, 1), (1, 2, 0, 2), (2, 0, 1, None))
        wi = 0
        for blk in range(3):
            si, h1i, h2i, oi = sched[blk]
            src, h1, h2 = bufs[si], bufs[h1i], bufs[h2i]
            w1, b1, w2, b2, w3, b3 = w[wi:wi + 6]
            wi += 6
            res = None
            if matches[blk]:
                wr, br = w[wi:wi + 2]
                wi += 2
                res = (src, wr, br)

            conv_relu(src, h1, w1, b1, K1)
            conv_relu(h1, h2, w2, b2, K2)
            if blk < 2:
                dst = bufs[oi]
                if res is not None:
                    conv_relu_res(h2, src, dst, w3, b3, wr, br, K3)
                else:
                    conv_relu(h2, dst, w3, b3, K3)
            else:
                conv_relu_pool(h2, w3, b3, K3, res=res)

        fcw, fcb = w[wi], w[wi + 1]
        pooled = pool[...] * (1.0 / L)                     # mean over sequence dim
        logits = jnp.dot(pooled, fcw[...],
                         preferred_element_type=jnp.float32) + fcb[...]
        o_ref[0] = logits.astype(o_ref.dtype)

    return kernel


# ----------------------------------------------------------------------------
# Parameter construction (deterministic; BN folded in eval mode; lane-padded to CP)
# ----------------------------------------------------------------------------
def _init_conv_bn(key, c_in, c_out, k, cp):
    """Conv1d + BatchNorm1d (eval mode, default running stats) folded, padded to cp x cp.

    Returns (w_mat, b_row): w_mat (k*cp, cp) bf16 with row index = tap*cp + in_channel,
    column = out_channel; b_row (1, cp) f32. Padded rows/columns are zero, so padded
    channel lanes carry exact zeros through the whole network.
    """
    kw, kb, kg, kbe = jax.random.split(key, 4)
    bound = 1.0 / math.sqrt(c_in * k)
    wgt = jax.random.uniform(kw, (c_out, c_in, k), jnp.float32, -bound, bound)
    bias = jax.random.uniform(kb, (c_out,), jnp.float32, -bound, bound)
    gamma = jax.random.uniform(kg, (c_out,), jnp.float32, 0.5, 1.5)
    beta = jax.random.uniform(kbe, (c_out,), jnp.float32, -0.5, 0.5)

    scale = gamma / jnp.sqrt(1.0 + _BN_EPS)      # running_mean=0, running_var=1
    w_eff = wgt * scale[:, None, None]           # (c_out, c_in, k)
    b_eff = bias * scale + beta

    w_kio = jnp.transpose(w_eff, (2, 1, 0))      # (k, c_in, c_out)
    w_pad = jnp.zeros((k, cp, cp), jnp.float32).at[:, :c_in, :c_out].set(w_kio)
    w_mat = w_pad.reshape(k * cp, cp).astype(jnp.bfloat16)
    b_row = jnp.zeros((1, cp), jnp.float32).at[0, :c_out].set(b_eff)
    return w_mat, b_row


def init_resnet_baseline(key, in_channels, mid_channels, num_pred_classes):
    chan = (in_channels, mid_channels, mid_channels * 2, mid_channels * 2)
    cp = _round_up(max(chan), _LANE)
    params = {"blocks": [], "cp": cp, "n_classes": num_pred_classes}

    for b in range(3):
        c_in, c_out = chan[b], chan[b + 1]
        key, *ks = jax.random.split(key, 5)
        lay_c = (c_in, c_out, c_out, c_out)
        blk = {"match": c_in != c_out, "convs": []}
        for i, ksz in enumerate(_KERNEL_SIZES):
            blk["convs"].append(_init_conv_bn(ks[i], lay_c[i], lay_c[i + 1], ksz, cp))
        if blk["match"]:
            blk["res"] = _init_conv_bn(ks[3], c_in, c_out, 1, cp)
        params["blocks"].append(blk)

    key, kw, kb = jax.random.split(key, 3)
    c_fin = chan[3]
    n_pad = _round_up(num_pred_classes, _LANE)
    bound = 1.0 / math.sqrt(c_fin)
    fw = jax.random.uniform(kw, (num_pred_classes, c_fin), jnp.float32, -bound, bound)
    fb = jax.random.uniform(kb, (num_pred_classes,), jnp.float32, -bound, bound)
    params["fc_w"] = (jnp.zeros((cp, n_pad), jnp.float32)
                      .at[:c_fin, :num_pred_classes].set(fw.T))
    params["fc_b"] = (jnp.zeros((1, n_pad), jnp.float32)
                      .at[0, :num_pred_classes].set(fb))
    return params


# ----------------------------------------------------------------------------
# Forward pass: one fused pallas_call over the whole network, grid over batch
# ----------------------------------------------------------------------------
def resnet_baseline_forward(x_ncl, params):
    """x_ncl: (B, C_in, L) float32, PyTorch layout. Returns (B, num_pred_classes) f32."""
    x = jnp.transpose(x_ncl, (0, 2, 1))                          # NCL -> NLC
    B, L, c_in = x.shape
    cp = params["cp"]
    x = jnp.pad(x, ((0, 0), (0, 0), (0, cp - c_in))).astype(jnp.bfloat16)

    matches = tuple(blk["match"] for blk in params["blocks"])
    args = [x]
    in_specs = [pl.BlockSpec((1, L, cp), lambda i: (i, 0, 0))]
    for blk in params["blocks"]:
        for (wm, bv) in blk["convs"]:
            args += [wm, bv]
            in_specs += [_const_spec(wm.shape), _const_spec(bv.shape)]
        if blk["match"]:
            wr, br = blk["res"]
            args += [wr, br]
            in_specs += [_const_spec(wr.shape), _const_spec(br.shape)]
    fc_w, fc_b = params["fc_w"], params["fc_b"]
    args += [fc_w, fc_b]
    in_specs += [_const_spec(fc_w.shape), _const_spec(fc_b.shape)]
    n_pad = fc_w.shape[1]

    lt = min(_L_CHUNK, L)
    kernel = _make_fused_kernel(L=L, LT=lt, CP=cp, matches=matches)
    out = pl.pallas_call(
        kernel,
        out_shape=jax.ShapeDtypeStruct((B, 1, n_pad), jnp.float32),
        grid=(B,),
        in_specs=in_specs,
        out_specs=pl.BlockSpec((1, 1, n_pad), lambda i: (i, 0, 0)),
        scratch_shapes=[
            pltpu.VMEM((L + 2 * _PAD_OFF, cp), jnp.bfloat16),    # padded buffer A
            pltpu.VMEM((L + 2 * _PAD_OFF, cp), jnp.bfloat16),    # padded buffer B
            pltpu.VMEM((L + 2 * _PAD_OFF, cp), jnp.bfloat16),    # padded buffer C
            pltpu.VMEM((1, cp), jnp.float32),                    # mean-pool accumulator
        ],
        compiler_params=_COMPILER_PARAMS,
    )(*args)
    return out[:, 0, :params["n_classes"]]


# ----------------------------------------------------------------------------
if __name__ == "__main__":
    key = jax.random.PRNGKey(0)
    k_x, k_p = jax.random.split(key)

    B, C_IN, L = 2, 4, 16
    MID, N_CLS = 8, 3

    x = jax.random.normal(k_x, (B, C_IN, L), dtype=jnp.float32)
    params = init_resnet_baseline(k_p, C_IN, MID, N_CLS)

    fwd = jax.jit(lambda xx: resnet_baseline_forward(xx, params))
    out = jax.block_until_ready(fwd(x))

    assert out.shape == (B, N_CLS), out.shape
    assert bool(jnp.all(jnp.isfinite(out)))
    print("KERNEL_OK")
</pallas_src>

<mosaic_0001>
module attributes {stable_mosaic.version = 11 : i64} {
  func.func @kernel(%arg0: i32, %arg1: memref<1x16x128xbf16, #tpu.memory_space<vmem>>, %arg2: memref<1024x128xbf16, #tpu.memory_space<vmem>>, %arg3: memref<1x128xf32, #tpu.memory_space<vmem>>, %arg4: memref<640x128xbf16, #tpu.memory_space<vmem>>, %arg5: memref<1x128xf32, #tpu.memory_space<vmem>>, %arg6: memref<384x128xbf16, #tpu.memory_space<vmem>>, %arg7: memref<1x128xf32, #tpu.memory_space<vmem>>, %arg8: memref<128x128xbf16, #tpu.memory_space<vmem>>, %arg9: memref<1x128xf32, #tpu.memory_space<vmem>>, %arg10: memref<1024x128xbf16, #tpu.memory_space<vmem>>, %arg11: memref<1x128xf32, #tpu.memory_space<vmem>>, %arg12: memref<640x128xbf16, #tpu.memory_space<vmem>>, %arg13: memref<1x128xf32, #tpu.memory_space<vmem>>, %arg14: memref<384x128xbf16, #tpu.memory_space<vmem>>, %arg15: memref<1x128xf32, #tpu.memory_space<vmem>>, %arg16: memref<128x128xbf16, #tpu.memory_space<vmem>>, %arg17: memref<1x128xf32, #tpu.memory_space<vmem>>, %arg18: memref<1024x128xbf16, #tpu.memory_space<vmem>>, %arg19: memref<1x128xf32, #tpu.memory_space<vmem>>, %arg20: memref<640x128xbf16, #tpu.memory_space<vmem>>, %arg21: memref<1x128xf32, #tpu.memory_space<vmem>>, %arg22: memref<384x128xbf16, #tpu.memory_space<vmem>>, %arg23: memref<1x128xf32, #tpu.memory_space<vmem>>, %arg24: memref<128x128xf32, #tpu.memory_space<vmem>>, %arg25: memref<1x128xf32, #tpu.memory_space<vmem>>, %arg26: memref<1x1x128xf32, #tpu.memory_space<vmem>>, %arg27: memref<48x128xbf16, #tpu.memory_space<vmem>>, %arg28: memref<48x128xbf16, #tpu.memory_space<vmem>>, %arg29: memref<48x128xbf16, #tpu.memory_space<vmem>>, %arg30: memref<1x128xf32, #tpu.memory_space<vmem>>) attributes {dimension_semantics = [#tpu.dimension_semantics<parallel>], iteration_bounds = array<i64: 2>, scalar_prefetch = 0 : i64, scratch_operands = 4 : i64, tpu.core_type = #tpu.core_type<tc>, window_params = [{transform_indices = @transform_0, window_bounds = array<i64: 1, 16, 128>}, {pipeline_mode = #tpu.pipeline_mode<synchronous>, transform_indices = @transform_1, window_bounds = array<i64: 1024, 128>}, {pipeline_mode = #tpu.pipeline_mode<synchronous>, transform_indices = @transform_2, window_bounds = array<i64: 1, 128>}, {pipeline_mode = #tpu.pipeline_mode<synchronous>, transform_indices = @transform_3, window_bounds = array<i64: 640, 128>}, {pipeline_mode = #tpu.pipeline_mode<synchronous>, transform_indices = @transform_4, window_bounds = array<i64: 1, 128>}, {pipeline_mode = #tpu.pipeline_mode<synchronous>, transform_indices = @transform_5, window_bounds = array<i64: 384, 128>}, {pipeline_mode = #tpu.pipeline_mode<synchronous>, transform_indices = @transform_6, window_bounds = array<i64: 1, 128>}, {pipeline_mode = #tpu.pipeline_mode<synchronous>, transform_indices = @transform_7, window_bounds = array<i64: 128, 128>}, {pipeline_mode = #tpu.pipeline_mode<synchronous>, transform_indices = @transform_8, window_bounds = array<i64: 1, 128>}, {pipeline_mode = #tpu.pipeline_mode<synchronous>, transform_indices = @transform_9, window_bounds = array<i64: 1024, 128>}, {pipeline_mode = #tpu.pipeline_mode<synchronous>, transform_indices = @transform_10, window_bounds = array<i64: 1, 128>}, {pipeline_mode = #tpu.pipeline_mode<synchronous>, transform_indices = @transform_11, window_bounds = array<i64: 640, 128>}, {pipeline_mode = #tpu.pipeline_mode<synchronous>, transform_indices = @transform_12, window_bounds = array<i64: 1, 128>}, {pipeline_mode = #tpu.pipeline_mode<synchronous>, transform_indices = @transform_13, window_bounds = array<i64: 384, 128>}, {pipeline_mode = #tpu.pipeline_mode<synchronous>, transform_indices = @transform_14, window_bounds = array<i64: 1, 128>}, {pipeline_mode = #tpu.pipeline_mode<synchronous>, transform_indices = @transform_15, window_bounds = array<i64: 128, 128>}, {pipeline_mode = #tpu.pipeline_mode<synchronous>, transform_indices = @transform_16, window_bounds = array<i64: 1, 128>}, {pipeline_mode = #tpu.pipeline_mode<synchronous>, transform_indices = @transform_17, window_bounds = array<i64: 1024, 128>}, {pipeline_mode = #tpu.pipeline_mode<synchronous>, transform_indices = @transform_18, window_bounds = array<i64: 1, 128>}, {pipeline_mode = #tpu.pipeline_mode<synchronous>, transform_indices = @transform_19, window_bounds = array<i64: 640, 128>}, {pipeline_mode = #tpu.pipeline_mode<synchronous>, transform_indices = @transform_20, window_bounds = array<i64: 1, 128>}, {pipeline_mode = #tpu.pipeline_mode<synchronous>, transform_indices = @transform_21, window_bounds = array<i64: 384, 128>}, {pipeline_mode = #tpu.pipeline_mode<synchronous>, transform_indices = @transform_22, window_bounds = array<i64: 1, 128>}, {pipeline_mode = #tpu.pipeline_mode<synchronous>, transform_indices = @transform_23, window_bounds = array<i64: 128, 128>}, {pipeline_mode = #tpu.pipeline_mode<synchronous>, transform_indices = @transform_24, window_bounds = array<i64: 1, 128>}, {transform_indices = @transform_25, window_bounds = array<i64: 1, 1, 128>}]} {
    %cst = arith.constant 0.000000e+00 : bf16
    %0 = vector.broadcast %cst : bf16 to vector<16x128xbf16>
    %c0 = arith.constant 0 : index
    %c0_0 = arith.constant 0 : index
    %1 = vector.load %arg27[%c0, %c0_0] : memref<48x128xbf16, #tpu.memory_space<vmem>>, vector<16x128xbf16>
    tpu.vector_store %arg27[%c0, %c0_0], %0 {strides = array<i32>} : memref<48x128xbf16, #tpu.memory_space<vmem>>, vector<16x128xbf16>,
    %cst_1 = arith.constant 0.000000e+00 : bf16
    %2 = vector.broadcast %cst_1 : bf16 to vector<16x128xbf16>
    %c32 = arith.constant 32 : index
    %c0_2 = arith.constant 0 : index
    %3 = vector.load %arg27[%c32, %c0_2] : memref<48x128xbf16, #tpu.memory_space<vmem>>, vector<16x128xbf16>
    tpu.vector_store %arg27[%c32, %c0_2], %2 {strides = array<i32>} : memref<48x128xbf16, #tpu.memory_space<vmem>>, vector<16x128xbf16>,
    %cst_3 = arith.constant 0.000000e+00 : bf16
    %4 = vector.broadcast %cst_3 : bf16 to vector<16x128xbf16>
    %c0_4 = arith.constant 0 : index
    %c0_5 = arith.constant 0 : index
    %5 = vector.load %arg28[%c0_4, %c0_5] : memref<48x128xbf16, #tpu.memory_space<vmem>>, vector<16x128xbf16>
    tpu.vector_store %arg28[%c0_4, %c0_5], %4 {strides = array<i32>} : memref<48x128xbf16, #tpu.memory_space<vmem>>, vector<16x128xbf16>,
    %cst_6 = arith.constant 0.000000e+00 : bf16
    %6 = vector.broadcast %cst_6 : bf16 to vector<16x128xbf16>
    %c32_7 = arith.constant 32 : index
    %c0_8 = arith.constant 0 : index
    %7 = vector.load %arg28[%c32_7, %c0_8] : memref<48x128xbf16, #tpu.memory_space<vmem>>, vector<16x128xbf16>
    tpu.vector_store %arg28[%c32_7, %c0_8], %6 {strides = array<i32>} : memref<48x128xbf16, #tpu.memory_space<vmem>>, vector<16x128xbf16>,
    %cst_9 = arith.constant 0.000000e+00 : bf16
    %8 = vector.broadcast %cst_9 : bf16 to vector<16x128xbf16>
    %c0_10 = arith.constant 0 : index
    %c0_11 = arith.constant 0 : index
    %9 = vector.load %arg29[%c0_10, %c0_11] : memref<48x128xbf16, #tpu.memory_space<vmem>>, vector<16x128xbf16>
    tpu.vector_store %arg29[%c0_10, %c0_11], %8 {strides = array<i32>} : memref<48x128xbf16, #tpu.memory_space<vmem>>, vector<16x128xbf16>,
    %cst_12 = arith.constant 0.000000e+00 : bf16
    %10 = vector.broadcast %cst_12 : bf16 to vector<16x128xbf16>
    %c32_13 = arith.constant 32 : index
    %c0_14 = arith.constant 0 : index
    %11 = vector.load %arg29[%c32_13, %c0_14] : memref<48x128xbf16, #tpu.memory_space<vmem>>, vector<16x128xbf16>
    tpu.vector_store %arg29[%c32_13, %c0_14], %10 {strides = array<i32>} : memref<48x128xbf16, #tpu.memory_space<vmem>>, vector<16x128xbf16>,
    %c0_15 = arith.constant 0 : index
    %c0_16 = arith.constant 0 : index
    %c0_17 = arith.constant 0 : index
    %12 = vector.load %arg1[%c0_15, %c0_16, %c0_17] : memref<1x16x128xbf16, #tpu.memory_space<vmem>>, vector<1x16x128xbf16>
    %13 = vector.shape_cast %12 : vector<1x16x128xbf16> to vector<16x128xbf16>
    %c16 = arith.constant 16 : index
    %c0_18 = arith.constant 0 : index
    %14 = vector.load %arg27[%c16, %c0_18] : memref<48x128xbf16, #tpu.memory_space<vmem>>, vector<16x128xbf16>
    tpu.vector_store %arg27[%c16, %c0_18], %13 {strides = array<i32>} : memref<48x128xbf16, #tpu.memory_space<vmem>>, vector<16x128xbf16>,
    %c0_19 = arith.constant 0 : index
    %c0_20 = arith.constant 0 : index
    %15 = vector.load %arg3[%c0_19, %c0_20] : memref<1x128xf32, #tpu.memory_space<vmem>>, vector<1x128xf32>
    %c13 = arith.constant 13 : index
    %c0_21 = arith.constant 0 : index
    %16 = vector.load %arg27[%c13, %c0_21] : memref<48x128xbf16, #tpu.memory_space<vmem>>, vector<16x128xbf16>
    %c14 = arith.constant 14 : index
    %c0_22 = arith.constant 0 : index
    %17 = vector.load %arg27[%c14, %c0_22] : memref<48x128xbf16, #tpu.memory_space<vmem>>, vector<16x128xbf16>
    %18 = tpu.concatenate %16, %17 in 1 : vector<16x128xbf16>, vector<16x128xbf16> -> vector<16x256xbf16>
    %c0_23 = arith.constant 0 : index
    %c0_24 = arith.constant 0 : index
    %19 = vector.load %arg2[%c0_23, %c0_24] : memref<1024x128xbf16, #tpu.memory_space<vmem>>, vector<256x128xbf16>
    %cst_25 = arith.constant dense<0.000000e+00> : vector<16x128xf32>
    %20 = tpu.matmul %18, %19, %cst_25 {dimension_numbers = #tpu.dot_dimension_numbers<[1], [0], [0], [1], [0, 0, 1, 1], [], []>} : vector<16x256xbf16>, vector<256x128xbf16>, vector<16x128xf32> -> vector<16x128xf32>
    %c15 = arith.constant 15 : index
    %c0_26 = arith.constant 0 : index
    %21 = vector.load %arg27[%c15, %c0_26] : memref<48x128xbf16, #tpu.memory_space<vmem>>, vector<16x128xbf16>
    %c16_27 = arith.constant 16 : index
    %c0_28 = arith.constant 0 : index
    %22 = vector.load %arg27[%c16_27, %c0_28] : memref<48x128xbf16, #tpu.memory_space<vmem>>, vector<16x128xbf16>
    %23 = tpu.concatenate %21, %22 in 1 : vector<16x128xbf16>, vector<16x128xbf16> -> vector<16x256xbf16>
    %c256 = arith.constant 256 : index
    %c0_29 = arith.constant 0 : index
    %24 = vector.load %arg2[%c256, %c0_29] : memref<1024x128xbf16, #tpu.memory_space<vmem>>, vector<256x128xbf16>
    %cst_30 = arith.constant dense<0.000000e+00> : vector<16x128xf32>
    %25 = tpu.matmul %23, %24, %cst_30 {dimension_numbers = #tpu.dot_dimension_numbers<[1], [0], [0], [1], [0, 0, 1, 1], [], []>} : vector<16x256xbf16>, vector<256x128xbf16>, vector<16x128xf32> -> vector<16x128xf32>
    %26 = arith.addf %20, %25 : vector<16x128xf32>
    %c17 = arith.constant 17 : index
    %c0_31 = arith.constant 0 : index
    %27 = vector.load %arg27[%c17, %c0_31] : memref<48x128xbf16, #tpu.memory_space<vmem>>, vector<16x128xbf16>
    %c18 = arith.constant 18 : index
    %c0_32 = arith.constant 0 : index
    %28 = vector.load %arg27[%c18, %c0_32] : memref<48x128xbf16, #tpu.memory_space<vmem>>, vector<16x128xbf16>
    %29 = tpu.concatenate %27, %28 in 1 : vector<16x128xbf16>, vector<16x128xbf16> -> vector<16x256xbf16>
    %c512 = arith.constant 512 : index
    %c0_33 = arith.constant 0 : index
    %30 = vector.load %arg2[%c512, %c0_33] : memref<1024x128xbf16, #tpu.memory_space<vmem>>, vector<256x128xbf16>
    %cst_34 = arith.constant dense<0.000000e+00> : vector<16x128xf32>
    %31 = tpu.matmul %29, %30, %cst_34 {dimension_numbers = #tpu.dot_dimension_numbers<[1], [0], [0], [1], [0, 0, 1, 1], [], []>} : vector<16x256xbf16>, vector<256x128xbf16>, vector<16x128xf32> -> vector<16x128xf32>
    %32 = arith.addf %26, %31 : vector<16x128xf32>
    %c19 = arith.constant 19 : index
    %c0_35 = arith.constant 0 : index
    %33 = vector.load %arg27[%c19, %c0_35] : memref<48x128xbf16, #tpu.memory_space<vmem>>, vector<16x128xbf16>
    %c20 = arith.constant 20 : index
    %c0_36 = arith.constant 0 : index
    %34 = vector.load %arg27[%c20, %c0_36] : memref<48x128xbf16, #tpu.memory_space<vmem>>, vector<16x128xbf16>
    %35 = tpu.concatenate %33, %34 in 1 : vector<16x128xbf16>, vector<16x128xbf16> -> vector<16x256xbf16>
    %c768 = arith.constant 768 : index
    %c0_37 = arith.constant 0 : index
    %36 = vector.load %arg2[%c768, %c0_37] : memref<1024x128xbf16, #tpu.memory_space<vmem>>, vector<256x128xbf16>
    %cst_38 = arith.constant dense<0.000000e+00> : vector<16x128xf32>
    %37 = tpu.matmul %35, %36, %cst_38 {dimension_numbers = #tpu.dot_dimension_numbers<[1], [0], [0], [1], [0, 0, 1, 1], [], []>} : vector<16x256xbf16>, vector<256x128xbf16>, vector<16x128xf32> -> vector<16x128xf32>
    %38 = arith.addf %32, %37 : vector<16x128xf32>
    %39 = vector.broadcast %15 : vector<1x128xf32> to vector<16x128xf32>
    %40 = arith.addf %38, %39 : vector<16x128xf32>
    %cst_39 = arith.constant 0.000000e+00 : f32
    %41 = vector.broadcast %cst_39 : f32 to vector<16x128xf32>
    %42 = arith.maximumf %40, %41 : vector<16x128xf32>
    %43 = arith.truncf %42 : vector<16x128xf32> to vector<16x128xbf16>
    %c16_40 = arith.constant 16 : index
    %c0_41 = arith.constant 0 : index
    %44 = vector.load %arg28[%c16_40, %c0_41] : memref<48x128xbf16, #tpu.memory_space<vmem>>, vector<16x128xbf16>
    tpu.vector_store %arg28[%c16_40, %c0_41], %43 {strides = array<i32>} : memref<48x128xbf16, #tpu.memory_space<vmem>>, vector<16x128xbf16>,
    %c0_42 = arith.constant 0 : index
    %c0_43 = arith.constant 0 : index
    %45 = vector.load %arg5[%c0_42, %c0_43] : memref<1x128xf32, #tpu.memory_space<vmem>>, vector<1x128xf32>
    %c14_44 = arith.constant 14 : index
    %c0_45 = arith.constant 0 : index
    %46 = vector.load %arg28[%c14_44, %c0_45] : memref<48x128xbf16, #tpu.memory_space<vmem>>, vector<16x128xbf16>
    %c15_46 = arith.constant 15 : index
    %c0_47 = arith.constant 0 : index
    %47 = vector.load %arg28[%c15_46, %c0_47] : memref<48x128xbf16, #tpu.memory_space<vmem>>, vector<16x128xbf16>
    %48 = tpu.concatenate %46, %47 in 1 : vector<16x128xbf16>, vector<16x128xbf16> -> vector<16x256xbf16>
    %c0_48 = arith.constant 0 : index
    %c0_49 = arith.constant 0 : index
    %49 = vector.load %arg4[%c0_48, %c0_49] : memref<640x128xbf16, #tpu.memory_space<vmem>>, vector<256x128xbf16>
    %cst_50 = arith.constant dense<0.000000e+00> : vector<16x128xf32>
    %50 = tpu.matmul %48, %49, %cst_50 {dimension_numbers = #tpu.dot_dimension_numbers<[1], [0], [0], [1], [0, 0, 1, 1], [], []>} : vector<16x256xbf16>, vector<256x128xbf16>, vector<16x128xf32> -> vector<16x128xf32>
    %c16_51 = arith.constant 16 : index
    %c0_52 = arith.constant 0 : index
    %51 = vector.load %arg28[%c16_51, %c0_52] : memref<48x128xbf16, #tpu.memory_space<vmem>>, vector<16x128xbf16>
    %c17_53 = arith.constant 17 : index
    %c0_54 = arith.constant 0 : index
    %52 = vector.load %arg28[%c17_53, %c0_54] : memref<48x128xbf16, #tpu.memory_space<vmem>>, vector<16x128xbf16>
    %53 = tpu.concatenate %51, %52 in 1 : vector<16x128xbf16>, vector<16x128xbf16> -> vector<16x256xbf16>
    %c256_55 = arith.constant 256 : index
    %c0_56 = arith.constant 0 : index
    %54 = vector.load %arg4[%c256_55, %c0_56] : memref<640x128xbf16, #tpu.memory_space<vmem>>, vector<256x128xbf16>
    %cst_57 = arith.constant dense<0.000000e+00> : vector<16x128xf32>
    %55 = tpu.matmul %53, %54, %cst_57 {dimension_numbers = #tpu.dot_dimension_numbers<[1], [0], [0], [1], [0, 0, 1, 1], [], []>} : vector<16x256xbf16>, vector<256x128xbf16>, vector<16x128xf32> -> vector<16x128xf32>
    %56 = arith.addf %50, %55 : vector<16x128xf32>
    %c18_58 = arith.constant 18 : index
    %c0_59 = arith.constant 0 : index
    %57 = vector.load %arg28[%c18_58, %c0_59] : memref<48x128xbf16, #tpu.memory_space<vmem>>, vector<16x128xbf16>
    %c512_60 = arith.constant 512 : index
    %c0_61 = arith.constant 0 : index
    %58 = vector.load %arg4[%c512_60, %c0_61] : memref<640x128xbf16, #tpu.memory_space<vmem>>, vector<128x128xbf16>
    %cst_62 = arith.constant dense<0.000000e+00> : vector<16x128xf32>
    %59 = tpu.matmul %57, %58, %cst_62 {dimension_numbers = #tpu.dot_dimension_numbers<[1], [0], [0], [1], [0, 0, 1, 1], [], []>} : vector<16x128xbf16>, vector<128x128xbf16>, vector<16x128xf32> -> vector<16x128xf32>
    %60 = arith.addf %56, %59 : vector<16x128xf32>
    %61 = vector.broadcast %45 : vector<1x128xf32> to vector<16x128xf32>
    %62 = arith.addf %60, %61 : vector<16x128xf32>
    %cst_63 = arith.constant 0.000000e+00 : f32
    %63 = vector.broadcast %cst_63 : f32 to vector<16x128xf32>
    %64 = arith.maximumf %62, %63 : vector<16x128xf32>
    %65 = arith.truncf %64 : vector<16x128xf32> to vector<16x128xbf16>
    %c16_64 = arith.constant 16 : index
    %c0_65 = arith.constant 0 : index
    %66 = vector.load %arg29[%c16_64, %c0_65] : memref<48x128xbf16, #tpu.memory_space<vmem>>, vector<16x128xbf16>
    tpu.vector_store %arg29[%c16_64, %c0_65], %65 {strides = array<i32>} : memref<48x128xbf16, #tpu.memory_space<vmem>>, vector<16x128xbf16>,
    %c0_66 = arith.constant 0 : index
    %c0_67 = arith.constant 0 : index
    %67 = vector.load %arg7[%c0_66, %c0_67] : memref<1x128xf32, #tpu.memory_space<vmem>>, vector<1x128xf32>
    %c0_68 = arith.constant 0 : index
    %c0_69 = arith.constant 0 : index
    %68 = vector.load %arg9[%c0_68, %c0_69] : memref<1x128xf32, #tpu.memory_space<vmem>>, vector<1x128xf32>
    %c15_70 = arith.constant 15 : index
    %c0_71 = arith.constant 0 : index
    %69 = vector.load %arg29[%c15_70, %c0_71] : memref<48x128xbf16, #tpu.memory_space<vmem>>, vector<16x128xbf16>
    %c16_72 = arith.constant 16 : index
    %c0_73 = arith.constant 0 : index
    %70 = vector.load %arg29[%c16_72, %c0_73] : memref<48x128xbf16, #tpu.memory_space<vmem>>, vector<16x128xbf16>
    %71 = tpu.concatenate %69, %70 in 1 : vector<16x128xbf16>, vector<16x128xbf16> -> vector<16x256xbf16>
    %c0_74 = arith.constant 0 : index
    %c0_75 = arith.constant 0 : index
    %72 = vector.load %arg6[%c0_74, %c0_75] : memref<384x128xbf16, #tpu.memory_space<vmem>>, vector<256x128xbf16>
    %cst_76 = arith.constant dense<0.000000e+00> : vector<16x128xf32>
    %73 = tpu.matmul %71, %72, %cst_76 {dimension_numbers = #tpu.dot_dimension_numbers<[1], [0], [0], [1], [0, 0, 1, 1], [], []>} : vector<16x256xbf16>, vector<256x128xbf16>, vector<16x128xf32> -> vector<16x128xf32>
    %c17_77 = arith.constant 17 : index
    %c0_78 = arith.constant 0 : index
    %74 = vector.load %arg29[%c17_77, %c0_78] : memref<48x128xbf16, #tpu.memory_space<vmem>>, vector<16x128xbf16>
    %c256_79 = arith.constant 256 : index
    %c0_80 = arith.constant 0 : index
    %75 = vector.load %arg6[%c256_79, %c0_80] : memref<384x128xbf16, #tpu.memory_space<vmem>>, vector<128x128xbf16>
    %cst_81 = arith.constant dense<0.000000e+00> : vector<16x128xf32>
    %76 = tpu.matmul %74, %75, %cst_81 {dimension_numbers = #tpu.dot_dimension_numbers<[1], [0], [0], [1], [0, 0, 1, 1], [], []>} : vector<16x128xbf16>, vector<128x128xbf16>, vector<16x128xf32> -> vector<16x128xf32>
    %77 = arith.addf %73, %76 : vector<16x128xf32>
    %78 = vector.broadcast %67 : vector<1x128xf32> to vector<16x128xf32>
    %79 = arith.addf %77, %78 : vector<16x128xf32>
    %cst_82 = arith.constant 0.000000e+00 : f32
    %80 = vector.broadcast %cst_82 : f32 to vector<16x128xf32>
    %81 = arith.maximumf %79, %80 : vector<16x128xf32>
    %c16_83 = arith.constant 16 : index
    %c0_84 = arith.constant 0 : index
    %82 = vector.load %arg27[%c16_83, %c0_84] : memref<48x128xbf16, #tpu.memory_space<vmem>>, vector<16x128xbf16>
    %c0_85 = arith.constant 0 : index
    %c0_86 = arith.constant 0 : index
    %83 = vector.load %arg8[%c0_85, %c0_86] : memref<128x128xbf16, #tpu.memory_space<vmem>>, vector<128x128xbf16>
    %cst_87 = arith.constant dense<0.000000e+00> : vector<16x128xf32>
    %84 = tpu.matmul %82, %83, %cst_87 {dimension_numbers = #tpu.dot_dimension_numbers<[1], [0], [0], [1], [0, 0, 1, 1], [], []>} : vector<16x128xbf16>, vector<128x128xbf16>, vector<16x128xf32> -> vector<16x128xf32>
    %85 = vector.broadcast %68 : vector<1x128xf32> to vector<16x128xf32>
    %86 = arith.addf %84, %85 : vector<16x128xf32>
    %87 = arith.addf %81, %86 : vector<16x128xf32>
    %88 = arith.truncf %87 : vector<16x128xf32> to vector<16x128xbf16>
    %c16_88 = arith.constant 16 : index
    %c0_89 = arith.constant 0 : index
    %89 = vector.load %arg28[%c16_88, %c0_89] : memref<48x128xbf16, #tpu.memory_space<vmem>>, vector<16x128xbf16>
    tpu.vector_store %arg28[%c16_88, %c0_89], %88 {strides = array<i32>} : memref<48x128xbf16, #tpu.memory_space<vmem>>, vector<16x128xbf16>,
    %c0_90 = arith.constant 0 : index
    %c0_91 = arith.constant 0 : index
    %90 = vector.load %arg11[%c0_90, %c0_91] : memref<1x128xf32, #tpu.memory_space<vmem>>, vector<1x128xf32>
    %c13_92 = arith.constant 13 : index
    %c0_93 = arith.constant 0 : index
    %91 = vector.load %arg28[%c13_92, %c0_93] : memref<48x128xbf16, #tpu.memory_space<vmem>>, vector<16x128xbf16>
    %c14_94 = arith.constant 14 : index
    %c0_95 = arith.constant 0 : index
    %92 = vector.load %arg28[%c14_94, %c0_95] : memref<48x128xbf16, #tpu.memory_space<vmem>>, vector<16x128xbf16>
    %93 = tpu.concatenate %91, %92 in 1 : vector<16x128xbf16>, vector<16x128xbf16> -> vector<16x256xbf16>
    %c0_96 = arith.constant 0 : index
    %c0_97 = arith.constant 0 : index
    %94 = vector.load %arg10[%c0_96, %c0_97] : memref<1024x128xbf16, #tpu.memory_space<vmem>>, vector<256x128xbf16>
    %cst_98 = arith.constant dense<0.000000e+00> : vector<16x128xf32>
    %95 = tpu.matmul %93, %94, %cst_98 {dimension_numbers = #tpu.dot_dimension_numbers<[1], [0], [0], [1], [0, 0, 1, 1], [], []>} : vector<16x256xbf16>, vector<256x128xbf16>, vector<16x128xf32> -> vector<16x128xf32>
    %c15_99 = arith.constant 15 : index
    %c0_100 = arith.constant 0 : index
    %96 = vector.load %arg28[%c15_99, %c0_100] : memref<48x128xbf16, #tpu.memory_space<vmem>>, vector<16x128xbf16>
    %c16_101 = arith.constant 16 : index
    %c0_102 = arith.constant 0 : index
    %97 = vector.load %arg28[%c16_101, %c0_102] : memref<48x128xbf16, #tpu.memory_space<vmem>>, vector<16x128xbf16>
    %98 = tpu.concatenate %96, %97 in 1 : vector<16x128xbf16>, vector<16x128xbf16> -> vector<16x256xbf16>
    %c256_103 = arith.constant 256 : index
    %c0_104 = arith.constant 0 : index
    %99 = vector.load %arg10[%c256_103, %c0_104] : memref<1024x128xbf16, #tpu.memory_space<vmem>>, vector<256x128xbf16>
    %cst_105 = arith.constant dense<0.000000e+00> : vector<16x128xf32>
    %100 = tpu.matmul %98, %99, %cst_105 {dimension_numbers = #tpu.dot_dimension_numbers<[1], [0], [0], [1], [0, 0, 1, 1], [], []>} : vector<16x256xbf16>, vector<256x128xbf16>, vector<16x128xf32> -> vector<16x128xf32>
    %101 = arith.addf %95, %100 : vector<16x128xf32>
    %c17_106 = arith.constant 17 : index
    %c0_107 = arith.constant 0 : index
    %102 = vector.load %arg28[%c17_106, %c0_107] : memref<48x128xbf16, #tpu.memory_space<vmem>>, vector<16x128xbf16>
    %c18_108 = arith.constant 18 : index
    %c0_109 = arith.constant 0 : index
    %103 = vector.load %arg28[%c18_108, %c0_109] : memref<48x128xbf16, #tpu.memory_space<vmem>>, vector<16x128xbf16>
    %104 = tpu.concatenate %102, %103 in 1 : vector<16x128xbf16>, vector<16x128xbf16> -> vector<16x256xbf16>
    %c512_110 = arith.constant 512 : index
    %c0_111 = arith.constant 0 : index
    %105 = vector.load %arg10[%c512_110, %c0_111] : memref<1024x128xbf16, #tpu.memory_space<vmem>>, vector<256x128xbf16>
    %cst_112 = arith.constant dense<0.000000e+00> : vector<16x128xf32>
    %106 = tpu.matmul %104, %105, %cst_112 {dimension_numbers = #tpu.dot_dimension_numbers<[1], [0], [0], [1], [0, 0, 1, 1], [], []>} : vector<16x256xbf16>, vector<256x128xbf16>, vector<16x128xf32> -> vector<16x128xf32>
    %107 = arith.addf %101, %106 : vector<16x128xf32>
    %c19_113 = arith.constant 19 : index
    %c0_114 = arith.constant 0 : index
    %108 = vector.load %arg28[%c19_113, %c0_114] : memref<48x128xbf16, #tpu.memory_space<vmem>>, vector<16x128xbf16>
    %c20_115 = arith.constant 20 : index
    %c0_116 = arith.constant 0 : index
    %109 = vector.load %arg28[%c20_115, %c0_116] : memref<48x128xbf16, #tpu.memory_space<vmem>>, vector<16x128xbf16>
    %110 = tpu.concatenate %108, %109 in 1 : vector<16x128xbf16>, vector<16x128xbf16> -> vector<16x256xbf16>
    %c768_117 = arith.constant 768 : index
    %c0_118 = arith.constant 0 : index
    %111 = vector.load %arg10[%c768_117, %c0_118] : memref<1024x128xbf16, #tpu.memory_space<vmem>>, vector<256x128xbf16>
    %cst_119 = arith.constant dense<0.000000e+00> : vector<16x128xf32>
    %112 = tpu.matmul %110, %111, %cst_119 {dimension_numbers = #tpu.dot_dimension_numbers<[1], [0], [0], [1], [0, 0, 1, 1], [], []>} : vector<16x256xbf16>, vector<256x128xbf16>, vector<16x128xf32> -> vector<16x128xf32>
    %113 = arith.addf %107, %112 : vector<16x128xf32>
    %114 = vector.broadcast %90 : vector<1x128xf32> to vector<16x128xf32>
    %115 = arith.addf %113, %114 : vector<16x128xf32>
    %cst_120 = arith.constant 0.000000e+00 : f32
    %116 = vector.broadcast %cst_120 : f32 to vector<16x128xf32>
    %117 = arith.maximumf %115, %116 : vector<16x128xf32>
    %118 = arith.truncf %117 : vector<16x128xf32> to vector<16x128xbf16>
    %c16_121 = arith.constant 16 : index
    %c0_122 = arith.constant 0 : index
    %119 = vector.load %arg29[%c16_121, %c0_122] : memref<48x128xbf16, #tpu.memory_space<vmem>>, vector<16x128xbf16>
    tpu.vector_store %arg29[%c16_121, %c0_122], %118 {strides = array<i32>} : memref<48x128xbf16, #tpu.memory_space<vmem>>, vector<16x128xbf16>,
    %c0_123 = arith.constant 0 : index
    %c0_124 = arith.constant 0 : index
    %120 = vector.load %arg13[%c0_123, %c0_124] : memref<1x128xf32, #tpu.memory_space<vmem>>, vector<1x128xf32>
    %c14_125 = arith.constant 14 : index
    %c0_126 = arith.constant 0 : index
    %121 = vector.load %arg29[%c14_125, %c0_126] : memref<48x128xbf16, #tpu.memory_space<vmem>>, vector<16x128xbf16>
    %c15_127 = arith.constant 15 : index
    %c0_128 = arith.constant 0 : index
    %122 = vector.load %arg29[%c15_127, %c0_128] : memref<48x128xbf16, #tpu.memory_space<vmem>>, vector<16x128xbf16>
    %123 = tpu.concatenate %121, %122 in 1 : vector<16x128xbf16>, vector<16x128xbf16> -> vector<16x256xbf16>
    %c0_129 = arith.constant 0 : index
    %c0_130 = arith.constant 0 : index
    %124 = vector.load %arg12[%c0_129, %c0_130] : memref<640x128xbf16, #tpu.memory_space<vmem>>, vector<256x128xbf16>
    %cst_131 = arith.constant dense<0.000000e+00> : vector<16x128xf32>
    %125 = tpu.matmul %123, %124, %cst_131 {dimension_numbers = #tpu.dot_dimension_numbers<[1], [0], [0], [1], [0, 0, 1, 1], [], []>} : vector<16x256xbf16>, vector<256x128xbf16>, vector<16x128xf32> -> vector<16x128xf32>
    %c16_132 = arith.constant 16 : index
    %c0_133 = arith.constant 0 : index
    %126 = vector.load %arg29[%c16_132, %c0_133] : memref<48x128xbf16, #tpu.memory_space<vmem>>, vector<16x128xbf16>
    %c17_134 = arith.constant 17 : index
    %c0_135 = arith.constant 0 : index
    %127 = vector.load %arg29[%c17_134, %c0_135] : memref<48x128xbf16, #tpu.memory_space<vmem>>, vector<16x128xbf16>
    %128 = tpu.concatenate %126, %127 in 1 : vector<16x128xbf16>, vector<16x128xbf16> -> vector<16x256xbf16>
    %c256_136 = arith.constant 256 : index
    %c0_137 = arith.constant 0 : index
    %129 = vector.load %arg12[%c256_136, %c0_137] : memref<640x128xbf16, #tpu.memory_space<vmem>>, vector<256x128xbf16>
    %cst_138 = arith.constant dense<0.000000e+00> : vector<16x128xf32>
    %130 = tpu.matmul %128, %129, %cst_138 {dimension_numbers = #tpu.dot_dimension_numbers<[1], [0], [0], [1], [0, 0, 1, 1], [], []>} : vector<16x256xbf16>, vector<256x128xbf16>, vector<16x128xf32> -> vector<16x128xf32>
    %131 = arith.addf %125, %130 : vector<16x128xf32>
    %c18_139 = arith.constant 18 : index
    %c0_140 = arith.constant 0 : index
    %132 = vector.load %arg29[%c18_139, %c0_140] : memref<48x128xbf16, #tpu.memory_space<vmem>>, vector<16x128xbf16>
    %c512_141 = arith.constant 512 : index
    %c0_142 = arith.constant 0 : index
    %133 = vector.load %arg12[%c512_141, %c0_142] : memref<640x128xbf16, #tpu.memory_space<vmem>>, vector<128x128xbf16>
    %cst_143 = arith.constant dense<0.000000e+00> : vector<16x128xf32>
    %134 = tpu.matmul %132, %133, %cst_143 {dimension_numbers = #tpu.dot_dimension_numbers<[1], [0], [0], [1], [0, 0, 1, 1], [], []>} : vector<16x128xbf16>, vector<128x128xbf16>, vector<16x128xf32> -> vector<16x128xf32>
    %135 = arith.addf %131, %134 : vector<16x128xf32>
    %136 = vector.broadcast %120 : vector<1x128xf32> to vector<16x128xf32>
    %137 = arith.addf %135, %136 : vector<16x128xf32>
    %cst_144 = arith.constant 0.000000e+00 : f32
    %138 = vector.broadcast %cst_144 : f32 to vector<16x128xf32>
    %139 = arith.maximumf %137, %138 : vector<16x128xf32>
    %140 = arith.truncf %139 : vector<16x128xf32> to vector<16x128xbf16>
    %c16_145 = arith.constant 16 : index
    %c0_146 = arith.constant 0 : index
    %141 = vector.load %arg27[%c16_145, %c0_146] : memref<48x128xbf16, #tpu.memory_space<vmem>>, vector<16x128xbf16>
    tpu.vector_store %arg27[%c16_145, %c0_146], %140 {strides = array<i32>} : memref<48x128xbf16, #tpu.memory_space<vmem>>, vector<16x128xbf16>,
    %c0_147 = arith.constant 0 : index
    %c0_148 = arith.constant 0 : index
    %142 = vector.load %arg15[%c0_147, %c0_148] : memref<1x128xf32, #tpu.memory_space<vmem>>, vector<1x128xf32>
    %c0_149 = arith.constant 0 : index
    %c0_150 = arith.constant 0 : index
    %143 = vector.load %arg17[%c0_149, %c0_150] : memref<1x128xf32, #tpu.memory_space<vmem>>, vector<1x128xf32>
    %c15_151 = arith.constant 15 : index
    %c0_152 = arith.constant 0 : index
    %144 = vector.load %arg27[%c15_151, %c0_152] : memref<48x128xbf16, #tpu.memory_space<vmem>>, vector<16x128xbf16>
    %c16_153 = arith.constant 16 : index
    %c0_154 = arith.constant 0 : index
    %145 = vector.load %arg27[%c16_153, %c0_154] : memref<48x128xbf16, #tpu.memory_space<vmem>>, vector<16x128xbf16>
    %146 = tpu.concatenate %144, %145 in 1 : vector<16x128xbf16>, vector<16x128xbf16> -> vector<16x256xbf16>
    %c0_155 = arith.constant 0 : index
    %c0_156 = arith.constant 0 : index
    %147 = vector.load %arg14[%c0_155, %c0_156] : memref<384x128xbf16, #tpu.memory_space<vmem>>, vector<256x128xbf16>
    %cst_157 = arith.constant dense<0.000000e+00> : vector<16x128xf32>
    %148 = tpu.matmul %146, %147, %cst_157 {dimension_numbers = #tpu.dot_dimension_numbers<[1], [0], [0], [1], [0, 0, 1, 1], [], []>} : vector<16x256xbf16>, vector<256x128xbf16>, vector<16x128xf32> -> vector<16x128xf32>
    %c17_158 = arith.constant 17 : index
    %c0_159 = arith.constant 0 : index
    %149 = vector.load %arg27[%c17_158, %c0_159] : memref<48x128xbf16, #tpu.memory_space<vmem>>, vector<16x128xbf16>
    %c256_160 = arith.constant 256 : index
    %c0_161 = arith.constant 0 : index
    %150 = vector.load %arg14[%c256_160, %c0_161] : memref<384x128xbf16, #tpu.memory_space<vmem>>, vector<128x128xbf16>
    %cst_162 = arith.constant dense<0.000000e+00> : vector<16x128xf32>
    %151 = tpu.matmul %149, %150, %cst_162 {dimension_numbers = #tpu.dot_dimension_numbers<[1], [0], [0], [1], [0, 0, 1, 1], [], []>} : vector<16x128xbf16>, vector<128x128xbf16>, vector<16x128xf32> -> vector<16x128xf32>
    %152 = arith.addf %148, %151 : vector<16x128xf32>
    %153 = vector.broadcast %142 : vector<1x128xf32> to vector<16x128xf32>
    %154 = arith.addf %152, %153 : vector<16x128xf32>
    %cst_163 = arith.constant 0.000000e+00 : f32
    %155 = vector.broadcast %cst_163 : f32 to vector<16x128xf32>
    %156 = arith.maximumf %154, %155 : vector<16x128xf32>
    %c16_164 = arith.constant 16 : index
    %c0_165 = arith.constant 0 : index
    %157 = vector.load %arg28[%c16_164, %c0_165] : memref<48x128xbf16, #tpu.memory_space<vmem>>, vector<16x128xbf16>
    %c0_166 = arith.constant 0 : index
    %c0_167 = arith.constant 0 : index
    %158 = vector.load %arg16[%c0_166, %c0_167] : memref<128x128xbf16, #tpu.memory_space<vmem>>, vector<128x128xbf16>
    %cst_168 = arith.constant dense<0.000000e+00> : vector<16x128xf32>
    %159 = tpu.matmul %157, %158, %cst_168 {dimension_numbers = #tpu.dot_dimension_numbers<[1], [0], [0], [1], [0, 0, 1, 1], [], []>} : vector<16x128xbf16>, vector<128x128xbf16>, vector<16x128xf32> -> vector<16x128xf32>
    %160 = vector.broadcast %143 : vector<1x128xf32> to vector<16x128xf32>
    %161 = arith.addf %159, %160 : vector<16x128xf32>
    %162 = arith.addf %156, %161 : vector<16x128xf32>
    %163 = arith.truncf %162 : vector<16x128xf32> to vector<16x128xbf16>
    %c16_169 = arith.constant 16 : index
    %c0_170 = arith.constant 0 : index
    %164 = vector.load %arg29[%c16_169, %c0_170] : memref<48x128xbf16, #tpu.memory_space<vmem>>, vector<16x128xbf16>
    tpu.vector_store %arg29[%c16_169, %c0_170], %163 {strides = array<i32>} : memref<48x128xbf16, #tpu.memory_space<vmem>>, vector<16x128xbf16>,
    %c0_171 = arith.constant 0 : index
    %c0_172 = arith.constant 0 : index
    %165 = vector.load %arg19[%c0_171, %c0_172] : memref<1x128xf32, #tpu.memory_space<vmem>>, vector<1x128xf32>
    %c13_173 = arith.constant 13 : index
    %c0_174 = arith.constant 0 : index
    %166 = vector.load %arg29[%c13_173, %c0_174] : memref<48x128xbf16, #tpu.memory_space<vmem>>, vector<16x128xbf16>
    %c14_175 = arith.constant 14 : index
    %c0_176 = arith.constant 0 : index
    %167 = vector.load %arg29[%c14_175, %c0_176] : memref<48x128xbf16, #tpu.memory_space<vmem>>, vector<16x128xbf16>
    %168 = tpu.concatenate %166, %167 in 1 : vector<16x128xbf16>, vector<16x128xbf16> -> vector<16x256xbf16>
    %c0_177 = arith.constant 0 : index
    %c0_178 = arith.constant 0 : index
    %169 = vector.load %arg18[%c0_177, %c0_178] : memref<1024x128xbf16, #tpu.memory_space<vmem>>, vector<256x128xbf16>
    %cst_179 = arith.constant dense<0.000000e+00> : vector<16x128xf32>
    %170 = tpu.matmul %168, %169, %cst_179 {dimension_numbers = #tpu.dot_dimension_numbers<[1], [0], [0], [1], [0, 0, 1, 1], [], []>} : vector<16x256xbf16>, vector<256x128xbf16>, vector<16x128xf32> -> vector<16x128xf32>
    %c15_180 = arith.constant 15 : index
    %c0_181 = arith.constant 0 : index
    %171 = vector.load %arg29[%c15_180, %c0_181] : memref<48x128xbf16, #tpu.memory_space<vmem>>, vector<16x128xbf16>
    %c16_182 = arith.constant 16 : index
    %c0_183 = arith.constant 0 : index
    %172 = vector.load %arg29[%c16_182, %c0_183] : memref<48x128xbf16, #tpu.memory_space<vmem>>, vector<16x128xbf16>
    %173 = tpu.concatenate %171, %172 in 1 : vector<16x128xbf16>, vector<16x128xbf16> -> vector<16x256xbf16>
    %c256_184 = arith.constant 256 : index
    %c0_185 = arith.constant 0 : index
    %174 = vector.load %arg18[%c256_184, %c0_185] : memref<1024x128xbf16, #tpu.memory_space<vmem>>, vector<256x128xbf16>
    %cst_186 = arith.constant dense<0.000000e+00> : vector<16x128xf32>
    %175 = tpu.matmul %173, %174, %cst_186 {dimension_numbers = #tpu.dot_dimension_numbers<[1], [0], [0], [1], [0, 0, 1, 1], [], []>} : vector<16x256xbf16>, vector<256x128xbf16>, vector<16x128xf32> -> vector<16x128xf32>
    %176 = arith.addf %170, %175 : vector<16x128xf32>
    %c17_187 = arith.constant 17 : index
    %c0_188 = arith.constant 0 : index
    %177 = vector.load %arg29[%c17_187, %c0_188] : memref<48x128xbf16, #tpu.memory_space<vmem>>, vector<16x128xbf16>
    %c18_189 = arith.constant 18 : index
    %c0_190 = arith.constant 0 : index
    %178 = vector.load %arg29[%c18_189, %c0_190] : memref<48x128xbf16, #tpu.memory_space<vmem>>, vector<16x128xbf16>
    %179 = tpu.concatenate %177, %178 in 1 : vector<16x128xbf16>, vector<16x128xbf16> -> vector<16x256xbf16>
    %c512_191 = arith.constant 512 : index
    %c0_192 = arith.constant 0 : index
    %180 = vector.load %arg18[%c512_191, %c0_192] : memref<1024x128xbf16, #tpu.memory_space<vmem>>, vector<256x128xbf16>
    %cst_193 = arith.constant dense<0.000000e+00> : vector<16x128xf32>
    %181 = tpu.matmul %179, %180, %cst_193 {dimension_numbers = #tpu.dot_dimension_numbers<[1], [0], [0], [1], [0, 0, 1, 1], [], []>} : vector<16x256xbf16>, vector<256x128xbf16>, vector<16x128xf32> -> vector<16x128xf32>
    %182 = arith.addf %176, %181 : vector<16x128xf32>
    %c19_194 = arith.constant 19 : index
    %c0_195 = arith.constant 0 : index
    %183 = vector.load %arg29[%c19_194, %c0_195] : memref<48x128xbf16, #tpu.memory_space<vmem>>, vector<16x128xbf16>
    %c20_196 = arith.constant 20 : index
    %c0_197 = arith.constant 0 : index
    %184 = vector.load %arg29[%c20_196, %c0_197] : memref<48x128xbf16, #tpu.memory_space<vmem>>, vector<16x128xbf16>
    %185 = tpu.concatenate %183, %184 in 1 : vector<16x128xbf16>, vector<16x128xbf16> -> vector<16x256xbf16>
    %c768_198 = arith.constant 768 : index
    %c0_199 = arith.constant 0 : index
    %186 = vector.load %arg18[%c768_198, %c0_199] : memref<1024x128xbf16, #tpu.memory_space<vmem>>, vector<256x128xbf16>
    %cst_200 = arith.constant dense<0.000000e+00> : vector<16x128xf32>
    %187 = tpu.matmul %185, %186, %cst_200 {dimension_numbers = #tpu.dot_dimension_numbers<[1], [0], [0], [1], [0, 0, 1, 1], [], []>} : vector<16x256xbf16>, vector<256x128xbf16>, vector<16x128xf32> -> vector<16x128xf32>
    %188 = arith.addf %182, %187 : vector<16x128xf32>
    %189 = vector.broadcast %165 : vector<1x128xf32> to vector<16x128xf32>
    %190 = arith.addf %188, %189 : vector<16x128xf32>
    %cst_201 = arith.constant 0.000000e+00 : f32
    %191 = vector.broadcast %cst_201 : f32 to vector<16x128xf32>
    %192 = arith.maximumf %190, %191 : vector<16x128xf32>
    %193 = arith.truncf %192 : vector<16x128xf32> to vector<16x128xbf16>
    %c16_202 = arith.constant 16 : index
    %c0_203 = arith.constant 0 : index
    %194 = vector.load %arg27[%c16_202, %c0_203] : memref<48x128xbf16, #tpu.memory_space<vmem>>, vector<16x128xbf16>
    tpu.vector_store %arg27[%c16_202, %c0_203], %193 {strides = array<i32>} : memref<48x128xbf16, #tpu.memory_space<vmem>>, vector<16x128xbf16>,
    %c0_204 = arith.constant 0 : index
    %c0_205 = arith.constant 0 : index
    %195 = vector.load %arg21[%c0_204, %c0_205] : memref<1x128xf32, #tpu.memory_space<vmem>>, vector<1x128xf32>
    %c14_206 = arith.constant 14 : index
    %c0_207 = arith.constant 0 : index
    %196 = vector.load %arg27[%c14_206, %c0_207] : memref<48x128xbf16, #tpu.memory_space<vmem>>, vector<16x128xbf16>
    %c15_208 = arith.constant 15 : index
    %c0_209 = arith.constant 0 : index
    %197 = vector.load %arg27[%c15_208, %c0_209] : memref<48x128xbf16, #tpu.memory_space<vmem>>, vector<16x128xbf16>
    %198 = tpu.concatenate %196, %197 in 1 : vector<16x128xbf16>, vector<16x128xbf16> -> vector<16x256xbf16>
    %c0_210 = arith.constant 0 : index
    %c0_211 = arith.constant 0 : index
    %199 = vector.load %arg20[%c0_210, %c0_211] : memref<640x128xbf16, #tpu.memory_space<vmem>>, vector<256x128xbf16>
    %cst_212 = arith.constant dense<0.000000e+00> : vector<16x128xf32>
    %200 = tpu.matmul %198, %199, %cst_212 {dimension_numbers = #tpu.dot_dimension_numbers<[1], [0], [0], [1], [0, 0, 1, 1], [], []>} : vector<16x256xbf16>, vector<256x128xbf16>, vector<16x128xf32> -> vector<16x128xf32>
    %c16_213 = arith.constant 16 : index
    %c0_214 = arith.constant 0 : index
    %201 = vector.load %arg27[%c16_213, %c0_214] : memref<48x128xbf16, #tpu.memory_space<vmem>>, vector<16x128xbf16>
    %c17_215 = arith.constant 17 : index
    %c0_216 = arith.constant 0 : index
    %202 = vector.load %arg27[%c17_215, %c0_216] : memref<48x128xbf16, #tpu.memory_space<vmem>>, vector<16x128xbf16>
    %203 = tpu.concatenate %201, %202 in 1 : vector<16x128xbf16>, vector<16x128xbf16> -> vector<16x256xbf16>
    %c256_217 = arith.constant 256 : index
    %c0_218 = arith.constant 0 : index
    %204 = vector.load %arg20[%c256_217, %c0_218] : memref<640x128xbf16, #tpu.memory_space<vmem>>, vector<256x128xbf16>
    %cst_219 = arith.constant dense<0.000000e+00> : vector<16x128xf32>
    %205 = tpu.matmul %203, %204, %cst_219 {dimension_numbers = #tpu.dot_dimension_numbers<[1], [0], [0], [1], [0, 0, 1, 1], [], []>} : vector<16x256xbf16>, vector<256x128xbf16>, vector<16x128xf32> -> vector<16x128xf32>
    %206 = arith.addf %200, %205 : vector<16x128xf32>
    %c18_220 = arith.constant 18 : index
    %c0_221 = arith.constant 0 : index
    %207 = vector.load %arg27[%c18_220, %c0_221] : memref<48x128xbf16, #tpu.memory_space<vmem>>, vector<16x128xbf16>
    %c512_222 = arith.constant 512 : index
    %c0_223 = arith.constant 0 : index
    %208 = vector.load %arg20[%c512_222, %c0_223] : memref<640x128xbf16, #tpu.memory_space<vmem>>, vector<128x128xbf16>
    %cst_224 = arith.constant dense<0.000000e+00> : vector<16x128xf32>
    %209 = tpu.matmul %207, %208, %cst_224 {dimension_numbers = #tpu.dot_dimension_numbers<[1], [0], [0], [1], [0, 0, 1, 1], [], []>} : vector<16x128xbf16>, vector<128x128xbf16>, vector<16x128xf32> -> vector<16x128xf32>
    %210 = arith.addf %206, %209 : vector<16x128xf32>
    %211 = vector.broadcast %195 : vector<1x128xf32> to vector<16x128xf32>
    %212 = arith.addf %210, %211 : vector<16x128xf32>
    %cst_225 = arith.constant 0.000000e+00 : f32
    %213 = vector.broadcast %cst_225 : f32 to vector<16x128xf32>
    %214 = arith.maximumf %212, %213 : vector<16x128xf32>
    %215 = arith.truncf %214 : vector<16x128xf32> to vector<16x128xbf16>
    %c16_226 = arith.constant 16 : index
    %c0_227 = arith.constant 0 : index
    %216 = vector.load %arg28[%c16_226, %c0_227] : memref<48x128xbf16, #tpu.memory_space<vmem>>, vector<16x128xbf16>
    tpu.vector_store %arg28[%c16_226, %c0_227], %215 {strides = array<i32>} : memref<48x128xbf16, #tpu.memory_space<vmem>>, vector<16x128xbf16>,
    %c0_228 = arith.constant 0 : index
    %c0_229 = arith.constant 0 : index
    %217 = vector.load %arg23[%c0_228, %c0_229] : memref<1x128xf32, #tpu.memory_space<vmem>>, vector<1x128xf32>
    %cst_230 = arith.constant 0.000000e+00 : f32
    %218 = vector.broadcast %cst_230 : f32 to vector<1x128xf32>
    %c0_231 = arith.constant 0 : index
    %c0_232 = arith.constant 0 : index
    %219 = vector.load %arg30[%c0_231, %c0_232] : memref<1x128xf32, #tpu.memory_space<vmem>>, vector<1x128xf32>
    tpu.vector_store %arg30[%c0_231, %c0_232], %218 {strides = array<i32>} : memref<1x128xf32, #tpu.memory_space<vmem>>, vector<1x128xf32>,
    %c15_233 = arith.constant 15 : index
    %c0_234 = arith.constant 0 : index
    %220 = vector.load %arg28[%c15_233, %c0_234] : memref<48x128xbf16, #tpu.memory_space<vmem>>, vector<16x128xbf16>
    %c16_235 = arith.constant 16 : index
    %c0_236 = arith.constant 0 : index
    %221 = vector.load %arg28[%c16_235, %c0_236] : memref<48x128xbf16, #tpu.memory_space<vmem>>, vector<16x128xbf16>
    %222 = tpu.concatenate %220, %221 in 1 : vector<16x128xbf16>, vector<16x128xbf16> -> vector<16x256xbf16>
    %c0_237 = arith.constant 0 : index
    %c0_238 = arith.constant 0 : index
    %223 = vector.load %arg22[%c0_237, %c0_238] : memref<384x128xbf16, #tpu.memory_space<vmem>>, vector<256x128xbf16>
    %cst_239 = arith.constant dense<0.000000e+00> : vector<16x128xf32>
    %224 = tpu.matmul %222, %223, %cst_239 {dimension_numbers = #tpu.dot_dimension_numbers<[1], [0], [0], [1], [0, 0, 1, 1], [], []>} : vector<16x256xbf16>, vector<256x128xbf16>, vector<16x128xf32> -> vector<16x128xf32>
    %c17_240 = arith.constant 17 : index
    %c0_241 = arith.constant 0 : index
    %225 = vector.load %arg28[%c17_240, %c0_241] : memref<48x128xbf16, #tpu.memory_space<vmem>>, vector<16x128xbf16>
    %c256_242 = arith.constant 256 : index
    %c0_243 = arith.constant 0 : index
    %226 = vector.load %arg22[%c256_242, %c0_243] : memref<384x128xbf16, #tpu.memory_space<vmem>>, vector<128x128xbf16>
    %cst_244 = arith.constant dense<0.000000e+00> : vector<16x128xf32>
    %227 = tpu.matmul %225, %226, %cst_244 {dimension_numbers = #tpu.dot_dimension_numbers<[1], [0], [0], [1], [0, 0, 1, 1], [], []>} : vector<16x128xbf16>, vector<128x128xbf16>, vector<16x128xf32> -> vector<16x128xf32>
    %228 = arith.addf %224, %227 : vector<16x128xf32>
    %229 = vector.broadcast %217 : vector<1x128xf32> to vector<16x128xf32>
    %230 = arith.addf %228, %229 : vector<16x128xf32>
    %cst_245 = arith.constant 0.000000e+00 : f32
    %231 = vector.broadcast %cst_245 : f32 to vector<16x128xf32>
    %232 = arith.maximumf %230, %231 : vector<16x128xf32>
    %c0_246 = arith.constant 0 : index
    %c0_247 = arith.constant 0 : index
    %233 = vector.load %arg30[%c0_246, %c0_247] : memref<1x128xf32, #tpu.memory_space<vmem>>, vector<1x128xf32>
    %cst_248 = arith.constant dense<0.000000e+00> : vector<128xf32>
    %234 = vector.multi_reduction <add>, %232, %cst_248 [0] : vector<16x128xf32> to vector<128xf32>
    %235 = vector.shape_cast %234 : vector<128xf32> to vector<1x128xf32>
    %236 = arith.addf %233, %235 : vector<1x128xf32>
    %c0_249 = arith.constant 0 : index
    %c0_250 = arith.constant 0 : index
    %237 = vector.load %arg30[%c0_249, %c0_250] : memref<1x128xf32, #tpu.memory_space<vmem>>, vector<1x128xf32>
    tpu.vector_store %arg30[%c0_249, %c0_250], %236 {strides = array<i32>} : memref<1x128xf32, #tpu.memory_space<vmem>>, vector<1x128xf32>,
    %c0_251 = arith.constant 0 : index
    %c0_252 = arith.constant 0 : index
    %238 = vector.load %arg30[%c0_251, %c0_252] : memref<1x128xf32, #tpu.memory_space<vmem>>, vector<1x128xf32>
    %cst_253 = arith.constant 6.250000e-02 : f32
    %239 = vector.broadcast %cst_253 : f32 to vector<1x128xf32>
    %240 = arith.mulf %238, %239 : vector<1x128xf32>
    %c0_254 = arith.constant 0 : index
    %c0_255 = arith.constant 0 : index
    %241 = vector.load %arg24[%c0_254, %c0_255] : memref<128x128xf32, #tpu.memory_space<vmem>>, vector<128x128xf32>
    %cst_256 = arith.constant dense<0.000000e+00> : vector<1x128xf32>
    %242 = tpu.matmul %240, %241, %cst_256 {dimension_numbers = #tpu.dot_dimension_numbers<[1], [0], [0], [1], [0, 0, 1, 1], [], []>} : vector<1x128xf32>, vector<128x128xf32>, vector<1x128xf32> -> vector<1x128xf32>
    %c0_257 = arith.constant 0 : index
    %c0_258 = arith.constant 0 : index
    %243 = vector.load %arg25[%c0_257, %c0_258] : memref<1x128xf32, #tpu.memory_space<vmem>>, vector<1x128xf32>
    %244 = arith.addf %242, %243 : vector<1x128xf32>
    %c0_259 = arith.constant 0 : index
    %c0_260 = arith.constant 0 : index
    %c0_261 = arith.constant 0 : index
    %245 = vector.load %arg26[%c0_259, %c0_260, %c0_261] : memref<1x1x128xf32, #tpu.memory_space<vmem>>, vector<1x1x128xf32>
    %246 = vector.shape_cast %245 : vector<1x1x128xf32> to vector<1x128xf32>
    %247 = vector.shape_cast %244 : vector<1x128xf32> to vector<1x1x128xf32>
    tpu.vector_store %arg26[%c0_259, %c0_260, %c0_261], %247 {strides = array<i32>} : memref<1x1x128xf32, #tpu.memory_space<vmem>>, vector<1x1x128xf32>,
    return
  }
  func.func @transform_0(%arg0: i32) -> (i32, i32, i32) {
    %c0_i32 = arith.constant 0 : i32
    %c0_i32_0 = arith.constant 0 : i32
    %c0_i32_1 = arith.constant 0 : i32
    return %arg0, %c0_i32, %c0_i32_0 : i32, i32, i32
  }
  func.func @transform_1(%arg0: i32) -> (i32, i32) {
    %c0_i32 = arith.constant 0 : i32
    %c0_i32_0 = arith.constant 0 : i32
    %c0_i32_1 = arith.constant 0 : i32
    return %c0_i32, %c0_i32_0 : i32, i32
  }
  func.func @transform_2(%arg0: i32) -> (i32, i32) {
    %c0_i32 = arith.constant 0 : i32
    %c0_i32_0 = arith.constant 0 : i32
    %c0_i32_1 = arith.constant 0 : i32
    return %c0_i32, %c0_i32_0 : i32, i32
  }
  func.func @transform_3(%arg0: i32) -> (i32, i32) {
    %c0_i32 = arith.constant 0 : i32
    %c0_i32_0 = arith.constant 0 : i32
    %c0_i32_1 = arith.constant 0 : i32
    return %c0_i32, %c0_i32_0 : i32, i32
  }
  func.func @transform_4(%arg0: i32) -> (i32, i32) {
    %c0_i32 = arith.constant 0 : i32
    %c0_i32_0 = arith.constant 0 : i32
    %c0_i32_1 = arith.constant 0 : i32
    return %c0_i32, %c0_i32_0 : i32, i32
  }
  func.func @transform_5(%arg0: i32) -> (i32, i32) {
    %c0_i32 = arith.constant 0 : i32
    %c0_i32_0 = arith.constant 0 : i32
    %c0_i32_1 = arith.constant 0 : i32
    return %c0_i32, %c0_i32_0 : i32, i32
  }
  func.func @transform_6(%arg0: i32) -> (i32, i32) {
    %c0_i32 = arith.constant 0 : i32
    %c0_i32_0 = arith.constant 0 : i32
    %c0_i32_1 = arith.constant 0 : i32
    return %c0_i32, %c0_i32_0 : i32, i32
  }
  func.func @transform_7(%arg0: i32) -> (i32, i32) {
    %c0_i32 = arith.constant 0 : i32
    %c0_i32_0 = arith.constant 0 : i32
    %c0_i32_1 = arith.constant 0 : i32
    return %c0_i32, %c0_i32_0 : i32, i32
  }
  func.func @transform_8(%arg0: i32) -> (i32, i32) {
    %c0_i32 = arith.constant 0 : i32
    %c0_i32_0 = arith.constant 0 : i32
    %c0_i32_1 = arith.constant 0 : i32
    return %c0_i32, %c0_i32_0 : i32, i32
  }
  func.func @transform_9(%arg0: i32) -> (i32, i32) {
    %c0_i32 = arith.constant 0 : i32
    %c0_i32_0 = arith.constant 0 : i32
    %c0_i32_1 = arith.constant 0 : i32
    return %c0_i32, %c0_i32_0 : i32, i32
  }
  func.func @transform_10(%arg0: i32) -> (i32, i32) {
    %c0_i32 = arith.constant 0 : i32
    %c0_i32_0 = arith.constant 0 : i32
    %c0_i32_1 = arith.constant 0 : i32
    return %c0_i32, %c0_i32_0 : i32, i32
  }
  func.func @transform_11(%arg0: i32) -> (i32, i32) {
    %c0_i32 = arith.constant 0 : i32
    %c0_i32_0 = arith.constant 0 : i32
    %c0_i32_1 = arith.constant 0 : i32
    return %c0_i32, %c0_i32_0 : i32, i32
  }
  func.func @transform_12(%arg0: i32) -> (i32, i32) {
    %c0_i32 = arith.constant 0 : i32
    %c0_i32_0 = arith.constant 0 : i32
    %c0_i32_1 = arith.constant 0 : i32
    return %c0_i32, %c0_i32_0 : i32, i32
  }
  func.func @transform_13(%arg0: i32) -> (i32, i32) {
    %c0_i32 = arith.constant 0 : i32
    %c0_i32_0 = arith.constant 0 : i32
    %c0_i32_1 = arith.constant 0 : i32
    return %c0_i32, %c0_i32_0 : i32, i32
  }
  func.func @transform_14(%arg0: i32) -> (i32, i32) {
    %c0_i32 = arith.constant 0 : i32
    %c0_i32_0 = arith.constant 0 : i32
    %c0_i32_1 = arith.constant 0 : i32
    return %c0_i32, %c0_i32_0 : i32, i32
  }
  func.func @transform_15(%arg0: i32) -> (i32, i32) {
    %c0_i32 = arith.constant 0 : i32
    %c0_i32_0 = arith.constant 0 : i32
    %c0_i32_1 = arith.constant 0 : i32
    return %c0_i32, %c0_i32_0 : i32, i32
  }
  func.func @transform_16(%arg0: i32) -> (i32, i32) {
    %c0_i32 = arith.constant 0 : i32
    %c0_i32_0 = arith.constant 0 : i32
    %c0_i32_1 = arith.constant 0 : i32
    return %c0_i32, %c0_i32_0 : i32, i32
  }
  func.func @transform_17(%arg0: i32) -> (i32, i32) {
    %c0_i32 = arith.constant 0 : i32
    %c0_i32_0 = arith.constant 0 : i32
    %c0_i32_1 = arith.constant 0 : i32
    return %c0_i32, %c0_i32_0 : i32, i32
  }
  func.func @transform_18(%arg0: i32) -> (i32, i32) {
    %c0_i32 = arith.constant 0 : i32
    %c0_i32_0 = arith.constant 0 : i32
    %c0_i32_1 = arith.constant 0 : i32
    return %c0_i32, %c0_i32_0 : i32, i32
  }
  func.func @transform_19(%arg0: i32) -> (i32, i32) {
    %c0_i32 = arith.constant 0 : i32
    %c0_i32_0 = arith.constant 0 : i32
    %c0_i32_1 = arith.constant 0 : i32
    return %c0_i32, %c0_i32_0 : i32, i32
  }
  func.func @transform_20(%arg0: i32) -> (i32, i32) {
    %c0_i32 = arith.constant 0 : i32
    %c0_i32_0 = arith.constant 0 : i32
    %c0_i32_1 = arith.constant 0 : i32
    return %c0_i32, %c0_i32_0 : i32, i32
  }
  func.func @transform_21(%arg0: i32) -> (i32, i32) {
    %c0_i32 = arith.constant 0 : i32
    %c0_i32_0 = arith.constant 0 : i32
    %c0_i32_1 = arith.constant 0 : i32
    return %c0_i32, %c0_i32_0 : i32, i32
  }
  func.func @transform_22(%arg0: i32) -> (i32, i32) {
    %c0_i32 = arith.constant 0 : i32
    %c0_i32_0 = arith.constant 0 : i32
    %c0_i32_1 = arith.constant 0 : i32
    return %c0_i32, %c0_i32_0 : i32, i32
  }
  func.func @transform_23(%arg0: i32) -> (i32, i32) {
    %c0_i32 = arith.constant 0 : i32
    %c0_i32_0 = arith.constant 0 : i32
    %c0_i32_1 = arith.constant 0 : i32
    return %c0_i32, %c0_i32_0 : i32, i32
  }
  func.func @transform_24(%arg0: i32) -> (i32, i32) {
    %c0_i32 = arith.constant 0 : i32
    %c0_i32_0 = arith.constant 0 : i32
    %c0_i32_1 = arith.constant 0 : i32
    return %c0_i32, %c0_i32_0 : i32, i32
  }
  func.func @transform_25(%arg0: i32) -> (i32, i32, i32) {
    %c0_i32 = arith.constant 0 : i32
    %c0_i32_0 = arith.constant 0 : i32
    %c0_i32_1 = arith.constant 0 : i32
    return %arg0, %c0_i32, %c0_i32_0 : i32, i32, i32
  }
}

</mosaic_0001>

<llo_original>
// kernel: _lambda_.1
$region0: #{_lambda_.1}
  #allocation0 [shape = 'u32[]', space=smem, size = 0x4, offset = 0x4, fixed_abs, tag = 'smem constant byte address 0x4 - core index']
  #allocation1 [shape = 'u32[144,128]{1,0:T(1,128)}', space=vmem, size = 0x12000, scoped, tag = 'internal scratch']
  #allocation2 [shape = 'bf16[48,128]{1,0:T(8,128)(2,1)}', space=vmem, size = 0x3000, scoped, tag = 'scratch operand']
  #allocation3 [shape = 'bf16[48,128]{1,0:T(8,128)(2,1)}', space=vmem, size = 0x3000, scoped, tag = 'scratch operand']
  #allocation4 [shape = 'bf16[48,128]{1,0:T(8,128)(2,1)}', space=vmem, size = 0x3000, scoped, tag = 'scratch operand']
  #allocation5 [shape = 'f32[1,128]{1,0:T(1,128)}', space=vmem, size = 0x200, scoped, tag = 'scratch operand']
  %s0 = inlined_call_operand.vmem [shape: bf16[2,16,128], index: 0, kind: input, shape index: {}]
  %s1 = inlined_call_operand.hbm [shape: bf16[1024,128], index: 1, kind: input, shape index: {}]
  %s2 = inlined_call_operand.vmem [shape: f32[1,128], index: 2, kind: input, shape index: {}]
  %s3 = inlined_call_operand.hbm [shape: bf16[640,128], index: 3, kind: input, shape index: {}]
  %s4 = inlined_call_operand.vmem [shape: f32[1,128], index: 4, kind: input, shape index: {}]
  %s5 = inlined_call_operand.hbm [shape: bf16[384,128], index: 5, kind: input, shape index: {}]
  %s6 = inlined_call_operand.vmem [shape: f32[1,128], index: 6, kind: input, shape index: {}]
  %s7 = inlined_call_operand.hbm [shape: bf16[128,128], index: 7, kind: input, shape index: {}]
  %s8 = inlined_call_operand.vmem [shape: f32[1,128], index: 8, kind: input, shape index: {}]
  %s9 = inlined_call_operand.hbm [shape: bf16[1024,128], index: 9, kind: input, shape index: {}]
  %s10 = inlined_call_operand.vmem [shape: f32[1,128], index: 10, kind: input, shape index: {}]
  %s11 = inlined_call_operand.hbm [shape: bf16[640,128], index: 11, kind: input, shape index: {}]
  %s12 = inlined_call_operand.vmem [shape: f32[1,128], index: 12, kind: input, shape index: {}]
  %s13 = inlined_call_operand.hbm [shape: bf16[384,128], index: 13, kind: input, shape index: {}]
  %s14 = inlined_call_operand.vmem [shape: f32[1,128], index: 14, kind: input, shape index: {}]
  %s15 = inlined_call_operand.vmem [shape: bf16[128,128], index: 15, kind: input, shape index: {}]
  %s16 = inlined_call_operand.vmem [shape: f32[1,128], index: 16, kind: input, shape index: {}]
  %s17 = inlined_call_operand.hbm [shape: bf16[1024,128], index: 17, kind: input, shape index: {}]
  %s18 = inlined_call_operand.vmem [shape: f32[1,128], index: 18, kind: input, shape index: {}]
  %s19 = inlined_call_operand.hbm [shape: bf16[640,128], index: 19, kind: input, shape index: {}]
  %s20 = inlined_call_operand.vmem [shape: f32[1,128], index: 20, kind: input, shape index: {}]
  %s21 = inlined_call_operand.hbm [shape: bf16[384,128], index: 21, kind: input, shape index: {}]
  %s22 = inlined_call_operand.vmem [shape: f32[1,128], index: 22, kind: input, shape index: {}]
  %s23 = inlined_call_operand.hbm [shape: f32[128,128], index: 23, kind: input, shape index: {}]
  %s24 = inlined_call_operand.vmem [shape: f32[1,128], index: 24, kind: input, shape index: {}]
  %s25 = inlined_call_operand.hbm [shape: f32[2,1,128], index: 25, kind: output, shape index: {}]
  %s26 = sld [smem:[#allocation0]]
  $region177: #{_lambda_.1} parent=0
    _
  %s28 = ssub.s32 1, %s26
  %s29 = scalar_select 0, %s28, %s26
  $region1: #{_lambda_.1} parent=0
    #allocation6 [shape = 'u8[262144]{0}', space=vmem, size = 0x40000, scoped, tag = 'input window, operand 1, single buffered']
    #allocation7 [shape = 's32[2]{0}', space=sflag, size = 0x8, scoped, tag = 'scoped memory for _lambda_.1']
    #allocation8 [shape = 's32[2]{0}', space=sflag, size = 0x8, scoped, tag = 'scoped memory for _lambda_.1']
    #allocation9 [shape = 'u8[163840]{0}', space=vmem, size = 0x28000, scoped, tag = 'input window, operand 3, single buffered']
    #allocation10 [shape = 's32[1]{0}', space=sflag, size = 0x4, scoped, tag = 'scoped memory for _lambda_.1']
    #allocation11 [shape = 'u8[98304]{0}', space=vmem, size = 0x18000, scoped, tag = 'input window, operand 5, single buffered']
    #allocation12 [shape = 'u8[32768]{0}', space=vmem, size = 0x8000, scoped, tag = 'input window, operand 7, single buffered']
    #allocation13 [shape = 's32[1]{0}', space=sflag, size = 0x4, scoped, tag = 'scoped memory for _lambda_.1']
    #allocation14 [shape = 'u8[262144]{0}', space=vmem, size = 0x40000, scoped, tag = 'input window, operand 9, single buffered']
    #allocation15 [shape = 'u8[163840]{0}', space=vmem, size = 0x28000, scoped, tag = 'input window, operand 11, single buffered']
    #allocation16 [shape = 's32[1]{0}', space=sflag, size = 0x4, scoped, tag = 'scoped memory for _lambda_.1']
    #allocation17 [shape = 'u8[98304]{0}', space=vmem, size = 0x18000, scoped, tag = 'input window, operand 13, single buffered']
    #allocation18 [shape = 'u8[262144]{0}', space=vmem, size = 0x40000, scoped, tag = 'input window, operand 17, single buffered']
    #allocation19 [shape = 's32[1]{0}', space=sflag, size = 0x4, scoped, tag = 'scoped memory for _lambda_.1']
    #allocation20 [shape = 'u8[163840]{0}', space=vmem, size = 0x28000, scoped, tag = 'input window, operand 19, single buffered']
    #allocation21 [shape = 'u8[98304]{0}', space=vmem, size = 0x18000, scoped, tag = 'input window, operand 21, single buffered']
    #allocation22 [shape = 's32[1]{0}', space=sflag, size = 0x4, scoped, tag = 'scoped memory for _lambda_.1']
    #allocation23 [shape = 'u8[65536]{0}', space=vmem, size = 0x10000, scoped, tag = 'input window, operand 23, single buffered']
    #allocation24 [shape = 'u8[1024]{0}', space=vmem, size = 0x400, scoped, tag = 'output window, operand 0']
    %30 = vsyncpa [#allocation7], 0
    %31 = vsyncpa [#allocation10], 0
    %32 = vsyncpa [#allocation13], 0
    %33 = vsyncpa [#allocation16], 0
    %34 = vsyncpa [#allocation19], 0
    %35 = vsyncpa [#allocation22], 0
    %36 = vsyncpa [#allocation8], 0
    %s37 = scalar_lea.sflag [#allocation8], 1
    %38 = vsyncpa %s37, 0
    loop: start=0, step=1, limit=4
    $region2: #{_lambda_.1} parent=1 // loop_pre_header
      _
    $region3: #{_lambda_.1} parent=1 // loop_header
      %s40 = sphi 0, %s44
      %p41 = scmp.ge.s32.totalorder %s40, 4
      %s50 = sphi 0, %s52
      %s53 = sphi 0, %s50
      %s54 = sphi 0, %s53
      %s70 = sphi 0, %s54
      %s74 = sphi 0, %s74
      %s76 = sphi 0, %s74
      %s77 = sphi 0, %s76
      %s91 = sphi 0, %s77
      %s95 = sphi 0, %s95
      %s97 = sphi 0, %s95
      %s98 = sphi 0, %s97
      %s112 = sphi 0, %s98
      %s116 = sphi 0, %s116
      %s118 = sphi 0, %s116
      %s119 = sphi 0, %s118
      %s133 = sphi 0, %s119
      %s137 = sphi 0, %s137
      %s139 = sphi 0, %s137
      %s140 = sphi 0, %s139
      %s154 = sphi 0, %s140
      %s158 = sphi 0, %s158
      %s160 = sphi 0, %s158
      %s161 = sphi 0, %s160
      %s175 = sphi 0, %s161
      %s179 = sphi 0, %s179
      %s181 = sphi 0, %s179
      %s182 = sphi 0, %s181
      %s196 = sphi 0, %s182
      %s200 = sphi 0, %s200
      %s202 = sphi 0, %s200
      %s203 = sphi 0, %s202
      %s217 = sphi 0, %s203
      %s221 = sphi 0, %s221
      %s223 = sphi 0, %s221
      %s224 = sphi 0, %s223
      %s238 = sphi 0, %s224
      %s242 = sphi 0, %s242
      %s244 = sphi 0, %s242
      %s245 = sphi 0, %s244
      %s259 = sphi 0, %s245
      %s263 = sphi 0, %s263
      %s265 = sphi 0, %s263
      %s266 = sphi 0, %s265
      %s280 = sphi 0, %s266
      %s284 = sphi 0, %s284
      %s286 = sphi 0, %s284
      %s287 = sphi 0, %s286
      %s301 = sphi 0, %s287
      %s305 = sphi 0, %s305
      %s307 = sphi 0, %s305
      %s308 = sphi 0, %s307
      %s322 = sphi 0, %s308
      %s326 = sphi 0, %s326
      %s328 = sphi 0, %s326
      %s329 = sphi 0, %s328
      %s343 = sphi 0, %s329
      %s347 = sphi 0, %s347
      %s349 = sphi 0, %s347
      %s350 = sphi 0, %s349
      %s364 = sphi 0, %s350
      %s368 = sphi 0, %s368
      %s370 = sphi 0, %s368
      %s371 = sphi 0, %s370
      %s385 = sphi 0, %s371
      %s389 = sphi 0, %s389
      %s391 = sphi 0, %s389
      %s392 = sphi 0, %s391
      %s406 = sphi 0, %s392
      %s410 = sphi 0, %s410
      %s412 = sphi 0, %s410
      %s413 = sphi 0, %s412
      %s427 = sphi 0, %s413
      %s431 = sphi 0, %s431
      %s433 = sphi 0, %s431
      %s434 = sphi 0, %s433
      %s448 = sphi 0, %s434
      %s452 = sphi 0, %s452
      %s454 = sphi 0, %s452
      %s455 = sphi 0, %s454
      %s469 = sphi 0, %s455
      %s473 = sphi 0, %s473
      %s475 = sphi 0, %s473
      %s476 = sphi 0, %s475
      %s490 = sphi 0, %s476
      %s494 = sphi 0, %s494
      %s496 = sphi 0, %s494
      %s497 = sphi 0, %s496
      %s511 = sphi 0, %s497
      %s515 = sphi 0, %s515
      %s517 = sphi 0, %s515
      %s518 = sphi 0, %s517
      %s532 = sphi 0, %s518
      %s536 = sphi 0, %s536
      %s538 = sphi 0, %s536
      %s539 = sphi 0, %s538
      %s553 = sphi 0, %s539
      %s557 = sphi 0, %s557
      %s559 = sphi 0, %s557
      %s560 = sphi 0, %s559
      %s574 = sphi 0, %s560
      %s580 = sphi 0, %s582
      %s583 = sphi 0, %s580
      %s584 = sphi 0, %s583
      %s600 = sphi 0, %s584
    $region4: #{_lambda_.1} parent=1 // loop_header_branch
      %43 = sbr.rel (%p41) target = $region8
    $region5: #{_lambda_.1} parent=1 // loop_body
      %s45 = ssub.s32 %s40, 1
      %s46 = ssub.s32 %s40, 2
      %s47 = sadd.s32 %s40, 1
      %s48 = ssub.s32 %s40, %s47
      %p49 = scmp.eq.s32.totalorder %s48, 0
      %s51 = sadd.s32 %s50, 1
      %s52 = scalar_select %p49, %s50, %s51
      %p55 = pneg %p49
      %p56 = scmp.eq.s32.totalorder %s40, 1
      %p57 = por %p55, %p56
      %p58 = scmp.ne.s32.totalorder %s50, %s53
      %p59 = scmp.eq.s32.totalorder %s40, 0
      %p60 = por %p58, %p59
      %p61 = scmp.ne.s32.totalorder %s50, %s53
      %p62 = scmp.eq.s32.totalorder %s45, 1
      %p63 = por %p61, %p62
      %p64 = scmp.ne.s32.totalorder %s53, %s54
      %p65 = scmp.eq.s32.totalorder %s45, 0
      %p66 = por %p64, %p65
      %p67 = scmp.ne.s32.totalorder %s53, %s54
      %p68 = scmp.eq.s32.totalorder %s46, 1
      %p69 = por %p67, %p68
      %p71 = scmp.ne.s32.totalorder %s54, %s70
      %p72 = scmp.eq.s32.totalorder %s46, 0
      %p73 = por %p71, %p72
      %s75 = sadd.s32 %s74, 1
      %p78 = scmp.eq.s32.totalorder %s40, 1
      %p79 = scmp.ne.s32.totalorder %s74, %s76
      %p80 = scmp.eq.s32.totalorder %s40, 0
      %p81 = por %p79, %p80
      %p82 = scmp.ne.s32.totalorder %s74, %s76
      %p83 = scmp.eq.s32.totalorder %s45, 1
      %p84 = por %p82, %p83
      %p85 = scmp.ne.s32.totalorder %s76, %s77
      %p86 = scmp.eq.s32.totalorder %s45, 0
      %p87 = por %p85, %p86
      %p88 = scmp.ne.s32.totalorder %s76, %s77
      %p89 = scmp.eq.s32.totalorder %s46, 1
      %p90 = por %p88, %p89
      %p92 = scmp.ne.s32.totalorder %s77, %s91
      %p93 = scmp.eq.s32.totalorder %s46, 0
      %p94 = por %p92, %p93
      %s96 = sadd.s32 %s95, 1
      %p99 = scmp.eq.s32.totalorder %s40, 1
      %p100 = scmp.ne.s32.totalorder %s95, %s97
      %p101 = scmp.eq.s32.totalorder %s40, 0
      %p102 = por %p100, %p101
      %p103 = scmp.ne.s32.totalorder %s95, %s97
      %p104 = scmp.eq.s32.totalorder %s45, 1
      %p105 = por %p103, %p104
      %p106 = scmp.ne.s32.totalorder %s97, %s98
      %p107 = scmp.eq.s32.totalorder %s45, 0
      %p108 = por %p106, %p107
      %p109 = scmp.ne.s32.totalorder %s97, %s98
      %p110 = scmp.eq.s32.totalorder %s46, 1
      %p111 = por %p109, %p110
      %p113 = scmp.ne.s32.totalorder %s98, %s112
      %p114 = scmp.eq.s32.totalorder %s46, 0
      %p115 = por %p113, %p114
      %s117 = sadd.s32 %s116, 1
      %p120 = scmp.eq.s32.totalorder %s40, 1
      %p121 = scmp.ne.s32.totalorder %s116, %s118
      %p122 = scmp.eq.s32.totalorder %s40, 0
      %p123 = por %p121, %p122
      %p124 = scmp.ne.s32.totalorder %s116, %s118
      %p125 = scmp.eq.s32.totalorder %s45, 1
      %p126 = por %p124, %p125
      %p127 = scmp.ne.s32.totalorder %s118, %s119
      %p128 = scmp.eq.s32.totalorder %s45, 0
      %p129 = por %p127, %p128
      %p130 = scmp.ne.s32.totalorder %s118, %s119
      %p131 = scmp.eq.s32.totalorder %s46, 1
      %p132 = por %p130, %p131
      %p134 = scmp.ne.s32.totalorder %s119, %s133
      %p135 = scmp.eq.s32.totalorder %s46, 0
      %p136 = por %p134, %p135
      %s138 = sadd.s32 %s137, 1
      %p141 = scmp.eq.s32.totalorder %s40, 1
      %p142 = scmp.ne.s32.totalorder %s137, %s139
      %p143 = scmp.eq.s32.totalorder %s40, 0
      %p144 = por %p142, %p143
      %p145 = scmp.ne.s32.totalorder %s137, %s139
      %p146 = scmp.eq.s32.totalorder %s45, 1
      %p147 = por %p145, %p146
      %p148 = scmp.ne.s32.totalorder %s139, %s140
      %p149 = scmp.eq.s32.totalorder %s45, 0
      %p150 = por %p148, %p149
      %p151 = scmp.ne.s32.totalorder %s139, %s140
      %p152 = scmp.eq.s32.totalorder %s46, 1
      %p153 = por %p151, %p152
      %p155 = scmp.ne.s32.totalorder %s140, %s154
      %p156 = scmp.eq.s32.totalorder %s46, 0
      %p157 = por %p155, %p156
      %s159 = sadd.s32 %s158, 1
      %p162 = scmp.eq.s32.totalorder %s40, 1
      %p163 = scmp.ne.s32.totalorder %s158, %s160
      %p164 = scmp.eq.s32.totalorder %s40, 0
      %p165 = por %p163, %p164
      %p166 = scmp.ne.s32.totalorder %s158, %s160
      %p167 = scmp.eq.s32.totalorder %s45, 1
      %p168 = por %p166, %p167
      %p169 = scmp.ne.s32.totalorder %s160, %s161
      %p170 = scmp.eq.s32.totalorder %s45, 0
      %p171 = por %p169, %p170
      %p172 = scmp.ne.s32.totalorder %s160, %s161
      %p173 = scmp.eq.s32.totalorder %s46, 1
      %p174 = por %p172, %p173
      %p176 = scmp.ne.s32.totalorder %s161, %s175
      %p177 = scmp.eq.s32.totalorder %s46, 0
      %p178 = por %p176, %p177
      %s180 = sadd.s32 %s179, 1
      %p183 = scmp.eq.s32.totalorder %s40, 1
      %p184 = scmp.ne.s32.totalorder %s179, %s181
      %p185 = scmp.eq.s32.totalorder %s40, 0
      %p186 = por %p184, %p185
      %p187 = scmp.ne.s32.totalorder %s179, %s181
      %p188 = scmp.eq.s32.totalorder %s45, 1
      %p189 = por %p187, %p188
      %p190 = scmp.ne.s32.totalorder %s181, %s182
      %p191 = scmp.eq.s32.totalorder %s45, 0
      %p192 = por %p190, %p191
      %p193 = scmp.ne.s32.totalorder %s181, %s182
      %p194 = scmp.eq.s32.totalorder %s46, 1
      %p195 = por %p193, %p194
      %p197 = scmp.ne.s32.totalorder %s182, %s196
      %p198 = scmp.eq.s32.totalorder %s46, 0
      %p199 = por %p197, %p198
      %s201 = sadd.s32 %s200, 1
      %p204 = scmp.eq.s32.totalorder %s40, 1
      %p205 = scmp.ne.s32.totalorder %s200, %s202
      %p206 = scmp.eq.s32.totalorder %s40, 0
      %p207 = por %p205, %p206
      %p208 = scmp.ne.s32.totalorder %s200, %s202
      %p209 = scmp.eq.s32.totalorder %s45, 1
      %p210 = por %p208, %p209
      %p211 = scmp.ne.s32.totalorder %s202, %s203
      %p212 = scmp.eq.s32.totalorder %s45, 0
      %p213 = por %p211, %p212
      %p214 = scmp.ne.s32.totalorder %s202, %s203
      %p215 = scmp.eq.s32.totalorder %s46, 1
      %p216 = por %p214, %p215
      %p218 = scmp.ne.s32.totalorder %s203, %s217
      %p219 = scmp.eq.s32.totalorder %s46, 0
      %p220 = por %p218, %p219
      %s222 = sadd.s32 %s221, 1
      %p225 = scmp.eq.s32.totalorder %s40, 1
      %p226 = scmp.ne.s32.totalorder %s221, %s223
      %p227 = scmp.eq.s32.totalorder %s40, 0
      %p228 = por %p226, %p227
      %p229 = scmp.ne.s32.totalorder %s221, %s223
      %p230 = scmp.eq.s32.totalorder %s45, 1
      %p231 = por %p229, %p230
      %p232 = scmp.ne.s32.totalorder %s223, %s224
      %p233 = scmp.eq.s32.totalorder %s45, 0
      %p234 = por %p232, %p233
      %p235 = scmp.ne.s32.totalorder %s223, %s224
      %p236 = scmp.eq.s32.totalorder %s46, 1
      %p237 = por %p235, %p236
      %p239 = scmp.ne.s32.totalorder %s224, %s238
      %p240 = scmp.eq.s32.totalorder %s46, 0
      %p241 = por %p239, %p240
      %s243 = sadd.s32 %s242, 1
      %p246 = scmp.eq.s32.totalorder %s40, 1
      %p247 = scmp.ne.s32.totalorder %s242, %s244
      %p248 = scmp.eq.s32.totalorder %s40, 0
      %p249 = por %p247, %p248
      %p250 = scmp.ne.s32.totalorder %s242, %s244
      %p251 = scmp.eq.s32.totalorder %s45, 1
      %p252 = por %p250, %p251
      %p253 = scmp.ne.s32.totalorder %s244, %s245
      %p254 = scmp.eq.s32.totalorder %s45, 0
      %p255 = por %p253, %p254
      %p256 = scmp.ne.s32.totalorder %s244, %s245
      %p257 = scmp.eq.s32.totalorder %s46, 1
      %p258 = por %p256, %p257
      %p260 = scmp.ne.s32.totalorder %s245, %s259
      %p261 = scmp.eq.s32.totalorder %s46, 0
      %p262 = por %p260, %p261
      %s264 = sadd.s32 %s263, 1
      %p267 = scmp.eq.s32.totalorder %s40, 1
      %p268 = scmp.ne.s32.totalorder %s263, %s265
      %p269 = scmp.eq.s32.totalorder %s40, 0
      %p270 = por %p268, %p269
      %p271 = scmp.ne.s32.totalorder %s263, %s265
      %p272 = scmp.eq.s32.totalorder %s45, 1
      %p273 = por %p271, %p272
      %p274 = scmp.ne.s32.totalorder %s265, %s266
      %p275 = scmp.eq.s32.totalorder %s45, 0
      %p276 = por %p274, %p275
      %p277 = scmp.ne.s32.totalorder %s265, %s266
      %p278 = scmp.eq.s32.totalorder %s46, 1
      %p279 = por %p277, %p278
      %p281 = scmp.ne.s32.totalorder %s266, %s280
      %p282 = scmp.eq.s32.totalorder %s46, 0
      %p283 = por %p281, %p282
      %s285 = sadd.s32 %s284, 1
      %p288 = scmp.eq.s32.totalorder %s40, 1
      %p289 = scmp.ne.s32.totalorder %s284, %s286
      %p290 = scmp.eq.s32.totalorder %s40, 0
      %p291 = por %p289, %p290
      %p292 = scmp.ne.s32.totalorder %s284, %s286
      %p293 = scmp.eq.s32.totalorder %s45, 1
      %p294 = por %p292, %p293
      %p295 = scmp.ne.s32.totalorder %s286, %s287
      %p296 = scmp.eq.s32.totalorder %s45, 0
      %p297 = por %p295, %p296
      %p298 = scmp.ne.s32.totalorder %s286, %s287
      %p299 = scmp.eq.s32.totalorder %s46, 1
      %p300 = por %p298, %p299
      %p302 = scmp.ne.s32.totalorder %s287, %s301
      %p303 = scmp.eq.s32.totalorder %s46, 0
      %p304 = por %p302, %p303
      %s306 = sadd.s32 %s305, 1
      %p309 = scmp.eq.s32.totalorder %s40, 1
      %p310 = scmp.ne.s32.totalorder %s305, %s307
      %p311 = scmp.eq.s32.totalorder %s40, 0
      %p312 = por %p310, %p311
      %p313 = scmp.ne.s32.totalorder %s305, %s307
      %p314 = scmp.eq.s32.totalorder %s45, 1
      %p315 = por %p313, %p314
      %p316 = scmp.ne.s32.totalorder %s307, %s308
      %p317 = scmp.eq.s32.totalorder %s45, 0
      %p318 = por %p316, %p317
      %p319 = scmp.ne.s32.totalorder %s307, %s308
      %p320 = scmp.eq.s32.totalorder %s46, 1
      %p321 = por %p319, %p320
      %p323 = scmp.ne.s32.totalorder %s308, %s322
      %p324 = scmp.eq.s32.totalorder %s46, 0
      %p325 = por %p323, %p324
      %s327 = sadd.s32 %s326, 1
      %p330 = scmp.eq.s32.totalorder %s40, 1
      %p331 = scmp.ne.s32.totalorder %s326, %s328
      %p332 = scmp.eq.s32.totalorder %s40, 0
      %p333 = por %p331, %p332
      %p334 = scmp.ne.s32.totalorder %s326, %s328
      %p335 = scmp.eq.s32.totalorder %s45, 1
      %p336 = por %p334, %p335
      %p337 = scmp.ne.s32.totalorder %s328, %s329
      %p338 = scmp.eq.s32.totalorder %s45, 0
      %p339 = por %p337, %p338
      %p340 = scmp.ne.s32.totalorder %s328, %s329
      %p341 = scmp.eq.s32.totalorder %s46, 1
      %p342 = por %p340, %p341
      %p344 = scmp.ne.s32.totalorder %s329, %s343
      %p345 = scmp.eq.s32.totalorder %s46, 0
      %p346 = por %p344, %p345
      %s348 = sadd.s32 %s347, 1
      %p351 = scmp.eq.s32.totalorder %s40, 1
      %p352 = scmp.ne.s32.totalorder %s347, %s349
      %p353 = scmp.eq.s32.totalorder %s40, 0
      %p354 = por %p352, %p353
      %p355 = scmp.ne.s32.totalorder %s347, %s349
      %p356 = scmp.eq.s32.totalorder %s45, 1
      %p357 = por %p355, %p356
      %p358 = scmp.ne.s32.totalorder %s349, %s350
      %p359 = scmp.eq.s32.totalorder %s45, 0
      %p360 = por %p358, %p359
      %p361 = scmp.ne.s32.totalorder %s349, %s350
      %p362 = scmp.eq.s32.totalorder %s46, 1
      %p363 = por %p361, %p362
      %p365 = scmp.ne.s32.totalorder %s350, %s364
      %p366 = scmp.eq.s32.totalorder %s46, 0
      %p367 = por %p365, %p366
      %s369 = sadd.s32 %s368, 1
      %p372 = scmp.eq.s32.totalorder %s40, 1
      %p373 = scmp.ne.s32.totalorder %s368, %s370
      %p374 = scmp.eq.s32.totalorder %s40, 0
      %p375 = por %p373, %p374
      %p376 = scmp.ne.s32.totalorder %s368, %s370
      %p377 = scmp.eq.s32.totalorder %s45, 1
      %p378 = por %p376, %p377
      %p379 = scmp.ne.s32.totalorder %s370, %s371
      %p380 = scmp.eq.s32.totalorder %s45, 0
      %p381 = por %p379, %p380
      %p382 = scmp.ne.s32.totalorder %s370, %s371
      %p383 = scmp.eq.s32.totalorder %s46, 1
      %p384 = por %p382, %p383
      %p386 = scmp.ne.s32.totalorder %s371, %s385
      %p387 = scmp.eq.s32.totalorder %s46, 0
      %p388 = por %p386, %p387
      %s390 = sadd.s32 %s389, 1
      %p393 = scmp.eq.s32.totalorder %s40, 1
      %p394 = scmp.ne.s32.totalorder %s389, %s391
      %p395 = scmp.eq.s32.totalorder %s40, 0
      %p396 = por %p394, %p395
      %p397 = scmp.ne.s32.totalorder %s389, %s391
      %p398 = scmp.eq.s32.totalorder %s45, 1
      %p399 = por %p397, %p398
      %p400 = scmp.ne.s32.totalorder %s391, %s392
      %p401 = scmp.eq.s32.totalorder %s45, 0
      %p402 = por %p400, %p401
      %p403 = scmp.ne.s32.totalorder %s391, %s392
      %p404 = scmp.eq.s32.totalorder %s46, 1
      %p405 = por %p403, %p404
      %p407 = scmp.ne.s32.totalorder %s392, %s406
      %p408 = scmp.eq.s32.totalorder %s46, 0
      %p409 = por %p407, %p408
      %s411 = sadd.s32 %s410, 1
      %p414 = scmp.eq.s32.totalorder %s40, 1
      %p415 = scmp.ne.s32.totalorder %s410, %s412
      %p416 = scmp.eq.s32.totalorder %s40, 0
      %p417 = por %p415, %p416
      %p418 = scmp.ne.s32.totalorder %s410, %s412
      %p419 = scmp.eq.s32.totalorder %s45, 1
      %p420 = por %p418, %p419
      %p421 = scmp.ne.s32.totalorder %s412, %s413
      %p422 = scmp.eq.s32.totalorder %s45, 0
      %p423 = por %p421, %p422
      %p424 = scmp.ne.s32.totalorder %s412, %s413
      %p425 = scmp.eq.s32.totalorder %s46, 1
      %p426 = por %p424, %p425
      %p428 = scmp.ne.s32.totalorder %s413, %s427
      %p429 = scmp.eq.s32.totalorder %s46, 0
      %p430 = por %p428, %p429
      %s432 = sadd.s32 %s431, 1
      %p435 = scmp.eq.s32.totalorder %s40, 1
      %p436 = scmp.ne.s32.totalorder %s431, %s433
      %p437 = scmp.eq.s32.totalorder %s40, 0
      %p438 = por %p436, %p437
      %p439 = scmp.ne.s32.totalorder %s431, %s433
      %p440 = scmp.eq.s32.totalorder %s45, 1
      %p441 = por %p439, %p440
      %p442 = scmp.ne.s32.totalorder %s433, %s434
      %p443 = scmp.eq.s32.totalorder %s45, 0
      %p444 = por %p442, %p443
      %p445 = scmp.ne.s32.totalorder %s433, %s434
      %p446 = scmp.eq.s32.totalorder %s46, 1
      %p447 = por %p445, %p446
      %p449 = scmp.ne.s32.totalorder %s434, %s448
      %p450 = scmp.eq.s32.totalorder %s46, 0
      %p451 = por %p449, %p450
      %s453 = sadd.s32 %s452, 1
      %p456 = scmp.eq.s32.totalorder %s40, 1
      %p457 = scmp.ne.s32.totalorder %s452, %s454
      %p458 = scmp.eq.s32.totalorder %s40, 0
      %p459 = por %p457, %p458
      %p460 = scmp.ne.s32.totalorder %s452, %s454
      %p461 = scmp.eq.s32.totalorder %s45, 1
      %p462 = por %p460, %p461
      %p463 = scmp.ne.s32.totalorder %s454, %s455
      %p464 = scmp.eq.s32.totalorder %s45, 0
      %p465 = por %p463, %p464
      %p466 = scmp.ne.s32.totalorder %s454, %s455
      %p467 = scmp.eq.s32.totalorder %s46, 1
      %p468 = por %p466, %p467
      %p470 = scmp.ne.s32.totalorder %s455, %s469
      %p471 = scmp.eq.s32.totalorder %s46, 0
      %p472 = por %p470, %p471
      %s474 = sadd.s32 %s473, 1
      %p477 = scmp.eq.s32.totalorder %s40, 1
      %p478 = scmp.ne.s32.totalorder %s473, %s475
      %p479 = scmp.eq.s32.totalorder %s40, 0
      %p480 = por %p478, %p479
      %p481 = scmp.ne.s32.totalorder %s473, %s475
      %p482 = scmp.eq.s32.totalorder %s45, 1
      %p483 = por %p481, %p482
      %p484 = scmp.ne.s32.totalorder %s475, %s476
      %p485 = scmp.eq.s32.totalorder %s45, 0
      %p486 = por %p484, %p485
      %p487 = scmp.ne.s32.totalorder %s475, %s476
      %p488 = scmp.eq.s32.totalorder %s46, 1
      %p489 = por %p487, %p488
      %p491 = scmp.ne.s32.totalorder %s476, %s490
      %p492 = scmp.eq.s32.totalorder %s46, 0
      %p493 = por %p491, %p492
      %s495 = sadd.s32 %s494, 1
      %p498 = scmp.eq.s32.totalorder %s40, 1
      %p499 = scmp.ne.s32.totalorder %s494, %s496
      %p500 = scmp.eq.s32.totalorder %s40, 0
      %p501 = por %p499, %p500
      %p502 = scmp.ne.s32.totalorder %s494, %s496
      %p503 = scmp.eq.s32.totalorder %s45, 1
      %p504 = por %p502, %p503
      %p505 = scmp.ne.s32.totalorder %s496, %s497
      %p506 = scmp.eq.s32.totalorder %s45, 0
      %p507 = por %p505, %p506
      %p508 = scmp.ne.s32.totalorder %s496, %s497
      %p509 = scmp.eq.s32.totalorder %s46, 1
      %p510 = por %p508, %p509
      %p512 = scmp.ne.s32.totalorder %s497, %s511
      %p513 = scmp.eq.s32.totalorder %s46, 0
      %p514 = por %p512, %p513
      %s516 = sadd.s32 %s515, 1
      %p519 = scmp.eq.s32.totalorder %s40, 1
      %p520 = scmp.ne.s32.totalorder %s515, %s517
      %p521 = scmp.eq.s32.totalorder %s40, 0
      %p522 = por %p520, %p521
      %p523 = scmp.ne.s32.totalorder %s515, %s517
      %p524 = scmp.eq.s32.totalorder %s45, 1
      %p525 = por %p523, %p524
      %p526 = scmp.ne.s32.totalorder %s517, %s518
      %p527 = scmp.eq.s32.totalorder %s45, 0
      %p528 = por %p526, %p527
      %p529 = scmp.ne.s32.totalorder %s517, %s518
      %p530 = scmp.eq.s32.totalorder %s46, 1
      %p531 = por %p529, %p530
      %p533 = scmp.ne.s32.totalorder %s518, %s532
      %p534 = scmp.eq.s32.totalorder %s46, 0
      %p535 = por %p533, %p534
      %s537 = sadd.s32 %s536, 1
      %p540 = scmp.eq.s32.totalorder %s40, 1
      %p541 = scmp.ne.s32.totalorder %s536, %s538
      %p542 = scmp.eq.s32.totalorder %s40, 0
      %p543 = por %p541, %p542
      %p544 = scmp.ne.s32.totalorder %s536, %s538
      %p545 = scmp.eq.s32.totalorder %s45, 1
      %p546 = por %p544, %p545
      %p547 = scmp.ne.s32.totalorder %s538, %s539
      %p548 = scmp.eq.s32.totalorder %s45, 0
      %p549 = por %p547, %p548
      %p550 = scmp.ne.s32.totalorder %s538, %s539
      %p551 = scmp.eq.s32.totalorder %s46, 1
      %p552 = por %p550, %p551
      %p554 = scmp.ne.s32.totalorder %s539, %s553
      %p555 = scmp.eq.s32.totalorder %s46, 0
      %p556 = por %p554, %p555
      %s558 = sadd.s32 %s557, 1
      %p561 = scmp.eq.s32.totalorder %s40, 1
      %p562 = scmp.ne.s32.totalorder %s557, %s559
      %p563 = scmp.eq.s32.totalorder %s40, 0
      %p564 = por %p562, %p563
      %p565 = scmp.ne.s32.totalorder %s557, %s559
      %p566 = scmp.eq.s32.totalorder %s45, 1
      %p567 = por %p565, %p566
      %p568 = scmp.ne.s32.totalorder %s559, %s560
      %p569 = scmp.eq.s32.totalorder %s45, 0
      %p570 = por %p568, %p569
      %p571 = scmp.ne.s32.totalorder %s559, %s560
      %p572 = scmp.eq.s32.totalorder %s46, 1
      %p573 = por %p571, %p572
      %p575 = scmp.ne.s32.totalorder %s560, %s574
      %p576 = scmp.eq.s32.totalorder %s46, 0
      %p577 = por %p575, %p576
      %s578 = ssub.s32 %s40, %s47
      %p579 = scmp.eq.s32.totalorder %s578, 0
      %s581 = sadd.s32 %s580, 1
      %s582 = scalar_select %p579, %s580, %s581
      %p585 = pneg %p579
      %p586 = scmp.eq.s32.totalorder %s40, 1
      %p587 = por %p585, %p586
      %p588 = scmp.ne.s32.totalorder %s580, %s583
      %p589 = scmp.eq.s32.totalorder %s40, 0
      %p590 = por %p588, %p589
      %p591 = scmp.ne.s32.totalorder %s580, %s583
      %p592 = scmp.eq.s32.totalorder %s45, 1
      %p593 = por %p591, %p592
      %p594 = scmp.ne.s32.totalorder %s583, %s584
      %p595 = scmp.eq.s32.totalorder %s45, 0
      %p596 = por %p594, %p595
      %p597 = scmp.ne.s32.totalorder %s583, %s584
      %p598 = scmp.eq.s32.totalorder %s46, 1
      %p599 = por %p597, %p598
      %p601 = scmp.ne.s32.totalorder %s584, %s600
      %p602 = scmp.eq.s32.totalorder %s46, 0
      %p603 = por %p601, %p602
      %p604 = scmp.le.s32.totalorder 1, %s40
      %p605 = scmp.lt.s32.totalorder %s40, 3
      %p606 = pnand %p604, %p605
      %p607 = pneg %p606
      // Predicated region
      $region9: #{_lambda_.1} parent=5 // pred_check
        _
      $region10: #{_lambda_.1} parent=5 // pred_check_branch
        %609 = sbr.rel (%p606) target = $region12
      $region11: #{_lambda_.1} parent=5 // pred_region
        %s610 = ssub.s32 %s40, 1
        // Predicated region
        $region13: #{_lambda_.1} parent=11 // pred_check
          %p611 = pneg %p87
        $region14: #{_lambda_.1} parent=11 // pred_check_branch
          %613 = sbr.rel (%p611) target = $region16
        $region15: #{_lambda_.1} parent=11 // pred_region
          %s615 = ssub.s32 8192, 8192
          %616 = vsyncadd [#allocation7], %s615
          %s617 = sshll.u32 [#allocation6], 4
          %s618 = int_to_ptr.vmem [resolvable:$true] %s617
          %623 = dma.hbm_to_vmem [thread:$0]  %s1, 8192, %s618, [#allocation7], 64, 64, 4
        $region16: #{_lambda_.1} parent=11 // pred_fallthru
          _
        // Predicated region
        $region17: #{_lambda_.1} parent=11 // pred_check
          %p624 = pneg %p108
        $region18: #{_lambda_.1} parent=11 // pred_check_branch
          %626 = sbr.rel (%p624) target = $region20
        $region19: #{_lambda_.1} parent=11 // pred_region
          _
        $region20: #{_lambda_.1} parent=11 // pred_fallthru
          _
        // Predicated region
        $region21: #{_lambda_.1} parent=11 // pred_check
          %p627 = pneg %p129
        $region22: #{_lambda_.1} parent=11 // pred_check_branch
          %629 = sbr.rel (%p627) target = $region24
        $region23: #{_lambda_.1} parent=11 // pred_region
          %s631 = ssub.s32 5120, 5120
          %632 = vsyncadd [#allocation10], %s631
          %s633 = sshll.u32 [#allocation9], 4
          %s634 = int_to_ptr.vmem [resolvable:$true] %s633
          %639 = dma.hbm_to_vmem [thread:$0]  %s3, 5120, %s634, [#allocation10], 64, 64, 4
        $region24: #{_lambda_.1} parent=11 // pred_fallthru
          _
        // Predicated region
        $region25: #{_lambda_.1} parent=11 // pred_check
          %p640 = pneg %p150
        $region26: #{_lambda_.1} parent=11 // pred_check_branch
          %642 = sbr.rel (%p640) target = $region28
        $region27: #{_lambda_.1} parent=11 // pred_region
          _
        $region28: #{_lambda_.1} parent=11 // pred_fallthru
          _
        // Predicated region
        $region29: #{_lambda_.1} parent=11 // pred_check
          %p643 = pneg %p171
        $region30: #{_lambda_.1} parent=11 // pred_check_branch
          %645 = sbr.rel (%p643) target = $region32
        $region31: #{_lambda_.1} parent=11 // pred_region
          %s647 = ssub.s32 3072, 3072
          %648 = vsyncadd [#allocation10], %s647
          %s649 = sshll.u32 [#allocation11], 4
          %s650 = int_to_ptr.vmem [resolvable:$true] %s649
          %655 = dma.hbm_to_vmem [thread:$0]  %s5, 3072, %s650, [#allocation10], 64, 64, 4
        $region32: #{_lambda_.1} parent=11 // pred_fallthru
          _
        // Predicated region
        $region33: #{_lambda_.1} parent=11 // pred_check
          %p656 = pneg %p192
        $region34: #{_lambda_.1} parent=11 // pred_check_branch
          %658 = sbr.rel (%p656) target = $region36
        $region35: #{_lambda_.1} parent=11 // pred_region
          _
        $region36: #{_lambda_.1} parent=11 // pred_fallthru
          _
        // Predicated region
        $region37: #{_lambda_.1} parent=11 // pred_check
          %p659 = pneg %p213
        $region38: #{_lambda_.1} parent=11 // pred_check_branch
          %661 = sbr.rel (%p659) target = $region40
        $region39: #{_lambda_.1} parent=11 // pred_region
          %s663 = ssub.s32 1024, 1024
          %664 = vsyncadd [#allocation13], %s663
          %s665 = sshll.u32 [#allocation12], 4
          %s666 = int_to_ptr.vmem [resolvable:$true] %s665
          %671 = dma.hbm_to_vmem [thread:$0]  %s7, 1024, %s666, [#allocation13], 64, 64, 4
        $region40: #{_lambda_.1} parent=11 // pred_fallthru
          _
        // Predicated region
        $region41: #{_lambda_.1} parent=11 // pred_check
          %p672 = pneg %p234
        $region42: #{_lambda_.1} parent=11 // pred_check_branch
          %674 = sbr.rel (%p672) target = $region44
        $region43: #{_lambda_.1} parent=11 // pred_region
          _
        $region44: #{_lambda_.1} parent=11 // pred_fallthru
          _
        // Predicated region
        $region45: #{_lambda_.1} parent=11 // pred_check
          %p675 = pneg %p255
        $region46: #{_lambda_.1} parent=11 // pred_check_branch
          %677 = sbr.rel (%p675) target = $region48
        $region47: #{_lambda_.1} parent=11 // pred_region
          %s679 = ssub.s32 8192, 8192
          %680 = vsyncadd [#allocation13], %s679
          %s681 = sshll.u32 [#allocation14], 4
          %s682 = int_to_ptr.vmem [resolvable:$true] %s681
          %687 = dma.hbm_to_vmem [thread:$0]  %s9, 8192, %s682, [#allocation13], 64, 64, 4
        $region48: #{_lambda_.1} parent=11 // pred_fallthru
          _
        // Predicated region
        $region49: #{_lambda_.1} parent=11 // pred_check
          %p688 = pneg %p276
        $region50: #{_lambda_.1} parent=11 // pred_check_branch
          %690 = sbr.rel (%p688) target = $region52
        $region51: #{_lambda_.1} parent=11 // pred_region
          _
        $region52: #{_lambda_.1} parent=11 // pred_fallthru
          _
        // Predicated region
        $region53: #{_lambda_.1} parent=11 // pred_check
          %p691 = pneg %p297
        $region54: #{_lambda_.1} parent=11 // pred_check_branch
          %693 = sbr.rel (%p691) target = $region56
        $region55: #{_lambda_.1} parent=11 // pred_region
          %s695 = ssub.s32 5120, 5120
          %696 = vsyncadd [#allocation16], %s695
          %s697 = sshll.u32 [#allocation15], 4
          %s698 = int_to_ptr.vmem [resolvable:$true] %s697
          %703 = dma.hbm_to_vmem [thread:$0]  %s11, 5120, %s698, [#allocation16], 64, 64, 4
        $region56: #{_lambda_.1} parent=11 // pred_fallthru
          _
        // Predicated region
        $region57: #{_lambda_.1} parent=11 // pred_check
          %p704 = pneg %p318
        $region58: #{_lambda_.1} parent=11 // pred_check_branch
          %706 = sbr.rel (%p704) target = $region60
        $region59: #{_lambda_.1} parent=11 // pred_region
          _
        $region60: #{_lambda_.1} parent=11 // pred_fallthru
          _
        // Predicated region
        $region61: #{_lambda_.1} parent=11 // pred_check
          %p707 = pneg %p339
        $region62: #{_lambda_.1} parent=11 // pred_check_branch
          %709 = sbr.rel (%p707) target = $region64
        $region63: #{_lambda_.1} parent=11 // pred_region
          %s711 = ssub.s32 3072, 3072
          %712 = vsyncadd [#allocation16], %s711
          %s713 = sshll.u32 [#allocation17], 4
          %s714 = int_to_ptr.vmem [resolvable:$true] %s713
          %719 = dma.hbm_to_vmem [thread:$0]  %s13, 3072, %s714, [#allocation16], 64, 64, 4
        $region64: #{_lambda_.1} parent=11 // pred_fallthru
          _
        // Predicated region
        $region65: #{_lambda_.1} parent=11 // pred_check
          %p720 = pneg %p360
        $region66: #{_lambda_.1} parent=11 // pred_check_branch
          %722 = sbr.rel (%p720) target = $region68
        $region67: #{_lambda_.1} parent=11 // pred_region
          _
        $region68: #{_lambda_.1} parent=11 // pred_fallthru
          _
        // Predicated region
        $region69: #{_lambda_.1} parent=11 // pred_check
          %p723 = pneg %p381
        $region70: #{_lambda_.1} parent=11 // pred_check_branch
          %725 = sbr.rel (%p723) target = $region72
        $region71: #{_lambda_.1} parent=11 // pred_region
          _
        $region72: #{_lambda_.1} parent=11 // pred_fallthru
          _
        // Predicated region
        $region73: #{_lambda_.1} parent=11 // pred_check
          %p726 = pneg %p402
        $region74: #{_lambda_.1} parent=11 // pred_check_branch
          %728 = sbr.rel (%p726) target = $region76
        $region75: #{_lambda_.1} parent=11 // pred_region
          _
        $region76: #{_lambda_.1} parent=11 // pred_fallthru
          _
        // Predicated region
        $region77: #{_lambda_.1} parent=11 // pred_check
          %p729 = pneg %p423
        $region78: #{_lambda_.1} parent=11 // pred_check_branch
          %731 = sbr.rel (%p729) target = $region80
        $region79: #{_lambda_.1} parent=11 // pred_region
          %s733 = ssub.s32 8192, 8192
          %734 = vsyncadd [#allocation19], %s733
          %s735 = sshll.u32 [#allocation18], 4
          %s736 = int_to_ptr.vmem [resolvable:$true] %s735
          %741 = dma.hbm_to_vmem [thread:$0]  %s17, 8192, %s736, [#allocation19], 64, 64, 4
        $region80: #{_lambda_.1} parent=11 // pred_fallthru
          _
        // Predicated region
        $region81: #{_lambda_.1} parent=11 // pred_check
          %p742 = pneg %p444
        $region82: #{_lambda_.1} parent=11 // pred_check_branch
          %744 = sbr.rel (%p742) target = $region84
        $region83: #{_lambda_.1} parent=11 // pred_region
          _
        $region84: #{_lambda_.1} parent=11 // pred_fallthru
          _
        // Predicated region
        $region85: #{_lambda_.1} parent=11 // pred_check
          %p745 = pneg %p465
        $region86: #{_lambda_.1} parent=11 // pred_check_branch
          %747 = sbr.rel (%p745) target = $region88
        $region87: #{_lambda_.1} parent=11 // pred_region
          %s749 = ssub.s32 5120, 5120
          %750 = vsyncadd [#allocation19], %s749
          %s751 = sshll.u32 [#allocation20], 4
          %s752 = int_to_ptr.vmem [resolvable:$true] %s751
          %757 = dma.hbm_to_vmem [thread:$0]  %s19, 5120, %s752, [#allocation19], 64, 64, 4
        $region88: #{_lambda_.1} parent=11 // pred_fallthru
          _
        // Predicated region
        $region89: #{_lambda_.1} parent=11 // pred_check
          %p758 = pneg %p486
        $region90: #{_lambda_.1} parent=11 // pred_check_branch
          %760 = sbr.rel (%p758) target = $region92
        $region91: #{_lambda_.1} parent=11 // pred_region
          _
        $region92: #{_lambda_.1} parent=11 // pred_fallthru
          _
        // Predicated region
        $region93: #{_lambda_.1} parent=11 // pred_check
          %p761 = pneg %p507
        $region94: #{_lambda_.1} parent=11 // pred_check_branch
          %763 = sbr.rel (%p761) target = $region96
        $region95: #{_lambda_.1} parent=11 // pred_region
          %s765 = ssub.s32 3072, 3072
          %766 = vsyncadd [#allocation22], %s765
          %s767 = sshll.u32 [#allocation21], 4
          %s768 = int_to_ptr.vmem [resolvable:$true] %s767
          %773 = dma.hbm_to_vmem [thread:$0]  %s21, 3072, %s768, [#allocation22], 64, 64, 4
        $region96: #{_lambda_.1} parent=11 // pred_fallthru
          _
        // Predicated region
        $region97: #{_lambda_.1} parent=11 // pred_check
          %p774 = pneg %p528
        $region98: #{_lambda_.1} parent=11 // pred_check_branch
          %776 = sbr.rel (%p774) target = $region100
        $region99: #{_lambda_.1} parent=11 // pred_region
          _
        $region100: #{_lambda_.1} parent=11 // pred_fallthru
          _
        // Predicated region
        $region101: #{_lambda_.1} parent=11 // pred_check
          %p777 = pneg %p549
        $region102: #{_lambda_.1} parent=11 // pred_check_branch
          %779 = sbr.rel (%p777) target = $region104
        $region103: #{_lambda_.1} parent=11 // pred_region
          %s781 = ssub.s32 2048, 2048
          %782 = vsyncadd [#allocation22], %s781
          %s783 = sshll.u32 [#allocation23], 4
          %s784 = int_to_ptr.vmem [resolvable:$true] %s783
          %789 = dma.hbm_to_vmem [thread:$0]  %s23, 2048, %s784, [#allocation22], 128, 128, 8
        $region104: #{_lambda_.1} parent=11 // pred_fallthru
          _
        // Predicated region
        $region105: #{_lambda_.1} parent=11 // pred_check
          %p790 = pneg %p570
        $region106: #{_lambda_.1} parent=11 // pred_check_branch
          %792 = sbr.rel (%p790) target = $region108
        $region107: #{_lambda_.1} parent=11 // pred_region
          _
        $region108: #{_lambda_.1} parent=11 // pred_fallthru
          _
      $region12: #{_lambda_.1} parent=5 // pred_fallthru
        _
      %p793 = scmp.lt.s32.totalorder %s40, 2
      // Predicated region
      $region109: #{_lambda_.1} parent=5 // pred_check
        %p794 = pneg %p793
      $region110: #{_lambda_.1} parent=5 // pred_check_branch
        %796 = sbr.rel (%p794) target = $region112
      $region111: #{_lambda_.1} parent=5 // pred_region
        // Predicated region
        $region113: #{_lambda_.1} parent=111 // pred_check
          %p797 = pneg %p60
        $region114: #{_lambda_.1} parent=111 // pred_check_branch
          %799 = sbr.rel (%p797) target = $region116
        $region115: #{_lambda_.1} parent=111 // pred_region
          %p800 = scmp.lt.s32.totalorder %s40, 1
          %s801 = scalar_select %p800, %s40, 1
          %s802 = smul.addr %s801, 2
          %s803 = smul.addr %s802, 4
          %s804 = scalar_lea.vmem %s0, %s803
        $region116: #{_lambda_.1} parent=111 // pred_fallthru
          _
      $region112: #{_lambda_.1} parent=5 // pred_fallthru
        _
      %p805 = scmp.le.s32.totalorder 1, %s40
      %p806 = scmp.lt.s32.totalorder %s40, 3
      %p807 = pnand %p805, %p806
      %p808 = pneg %p807
      // Predicated region
      $region117: #{_lambda_.1} parent=5 // pred_check
        _
      $region118: #{_lambda_.1} parent=5 // pred_check_branch
        %810 = sbr.rel (%p807) target = $region120
      $region119: #{_lambda_.1} parent=5 // pred_region
        %s811 = ssub.s32 %s40, 1
        // Predicated region
        $region121: #{_lambda_.1} parent=119 // pred_check
          %p812 = pneg %p87
        $region122: #{_lambda_.1} parent=119 // pred_check_branch
          %814 = sbr.rel (%p812) target = $region124
        $region123: #{_lambda_.1} parent=119 // pred_region
          %815 = dma.done [#allocation7], 8192
        $region124: #{_lambda_.1} parent=119 // pred_fallthru
          _
        // Predicated region
        $region125: #{_lambda_.1} parent=119 // pred_check
          %p816 = pneg %p129
        $region126: #{_lambda_.1} parent=119 // pred_check_branch
          %818 = sbr.rel (%p816) target = $region128
        $region127: #{_lambda_.1} parent=119 // pred_region
          %819 = dma.done [#allocation10], 5120
        $region128: #{_lambda_.1} parent=119 // pred_fallthru
          _
        // Predicated region
        $region129: #{_lambda_.1} parent=119 // pred_check
          %p820 = pneg %p171
        $region130: #{_lambda_.1} parent=119 // pred_check_branch
          %822 = sbr.rel (%p820) target = $region132
        $region131: #{_lambda_.1} parent=119 // pred_region
          %823 = dma.done [#allocation10], 3072
        $region132: #{_lambda_.1} parent=119 // pred_fallthru
          _
        // Predicated region
        $region133: #{_lambda_.1} parent=119 // pred_check
          %p824 = pneg %p213
        $region134: #{_lambda_.1} parent=119 // pred_check_branch
          %826 = sbr.rel (%p824) target = $region136
        $region135: #{_lambda_.1} parent=119 // pred_region
          %827 = dma.done [#allocation13], 1024
        $region136: #{_lambda_.1} parent=119 // pred_fallthru
          _
        // Predicated region
        $region137: #{_lambda_.1} parent=119 // pred_check
          %p828 = pneg %p255
        $region138: #{_lambda_.1} parent=119 // pred_check_branch
          %830 = sbr.rel (%p828) target = $region140
        $region139: #{_lambda_.1} parent=119 // pred_region
          %831 = dma.done [#allocation13], 8192
        $region140: #{_lambda_.1} parent=119 // pred_fallthru
          _
        // Predicated region
        $region141: #{_lambda_.1} parent=119 // pred_check
          %p832 = pneg %p297
        $region142: #{_lambda_.1} parent=119 // pred_check_branch
          %834 = sbr.rel (%p832) target = $region144
        $region143: #{_lambda_.1} parent=119 // pred_region
          %835 = dma.done [#allocation16], 5120
        $region144: #{_lambda_.1} parent=119 // pred_fallthru
          _
        // Predicated region
        $region145: #{_lambda_.1} parent=119 // pred_check
          %p836 = pneg %p339
        $region146: #{_lambda_.1} parent=119 // pred_check_branch
          %838 = sbr.rel (%p836) target = $region148
        $region147: #{_lambda_.1} parent=119 // pred_region
          %839 = dma.done [#allocation16], 3072
        $region148: #{_lambda_.1} parent=119 // pred_fallthru
          _
        // Predicated region
        $region149: #{_lambda_.1} parent=119 // pred_check
          %p840 = pneg %p423
        $region150: #{_lambda_.1} parent=119 // pred_check_branch
          %842 = sbr.rel (%p840) target = $region152
        $region151: #{_lambda_.1} parent=119 // pred_region
          %843 = dma.done [#allocation19], 8192
        $region152: #{_lambda_.1} parent=119 // pred_fallthru
          _
        // Predicated region
        $region153: #{_lambda_.1} parent=119 // pred_check
          %p844 = pneg %p465
        $region154: #{_lambda_.1} parent=119 // pred_check_branch
          %846 = sbr.rel (%p844) target = $region156
        $region155: #{_lambda_.1} parent=119 // pred_region
          %847 = dma.done [#allocation19], 5120
        $region156: #{_lambda_.1} parent=119 // pred_fallthru
          _
        // Predicated region
        $region157: #{_lambda_.1} parent=119 // pred_check
          %p848 = pneg %p507
        $region158: #{_lambda_.1} parent=119 // pred_check_branch
          %850 = sbr.rel (%p848) target = $region160
        $region159: #{_lambda_.1} parent=119 // pred_region
          %851 = dma.done [#allocation22], 3072
        $region160: #{_lambda_.1} parent=119 // pred_fallthru
          _
        // Predicated region
        $region161: #{_lambda_.1} parent=119 // pred_check
          %p852 = pneg %p549
        $region162: #{_lambda_.1} parent=119 // pred_check_branch
          %854 = sbr.rel (%p852) target = $region164
        $region163: #{_lambda_.1} parent=119 // pred_region
          %855 = dma.done [#allocation22], 2048
        $region164: #{_lambda_.1} parent=119 // pred_fallthru
          _
        %p856 = scmp.lt.s32.totalorder %s45, 1
        %s857 = scalar_select %p856, %s45, 1
        %s858 = smul.addr %s857, 2
        %s859 = smul.addr %s858, 4
        %s860 = scalar_lea.vmem %s0, %s859
        %p861 = pneg %p66
        %p862 = pneg %p63
        %p863 = pneg %p87
        %p864 = pneg %p84
        %p865 = pneg %p108
        %p866 = pneg %p105
        %p867 = pneg %p129
        %p868 = pneg %p126
        %p869 = pneg %p150
        %p870 = pneg %p147
        %p871 = pneg %p171
        %p872 = pneg %p168
        %p873 = pneg %p192
        %p874 = pneg %p189
        %p875 = pneg %p213
        %p876 = pneg %p210
        %p877 = pneg %p234
        %p878 = pneg %p231
        %p879 = pneg %p255
        %p880 = pneg %p252
        %p881 = pneg %p276
        %p882 = pneg %p273
        %p883 = pneg %p297
        %p884 = pneg %p294
        %p885 = pneg %p318
        %p886 = pneg %p315
        %p887 = pneg %p339
        %p888 = pneg %p336
        %p889 = pneg %p360
        %p890 = pneg %p357
        %p891 = pneg %p381
        %p892 = pneg %p378
        %p893 = pneg %p402
        %p894 = pneg %p399
        %p895 = pneg %p423
        %p896 = pneg %p420
        %p897 = pneg %p444
        %p898 = pneg %p441
        %p899 = pneg %p465
        %p900 = pneg %p462
        %p901 = pneg %p486
        %p902 = pneg %p483
        %p903 = pneg %p507
        %p904 = pneg %p504
        %p905 = pneg %p528
        %p906 = pneg %p525
        %p907 = pneg %p549
        %p908 = pneg %p546
        %p909 = pneg %p570
        %p910 = pneg %p567
        %p911 = pneg %p596
        %p912 = pneg %p593
        %s913 = sand.u32 %s583, 1
        %s914 = scalar_lea.sflag [#allocation8], %s913
        %s915 = sand.u32 %s583, 1
        %s916 = scalar_lea.vmem [#allocation24], %s915
        %p917 = scmp.lt.s32.totalorder %s45, 1
        %s918 = scalar_select %p917, %s45, 1
        %s919 = smul.addr %s918, 2
        %s920 = smul.addr %s919, 4
        %s921 = scalar_lea.vmem %s0, %s920
        %923 = vst [vmem:[#allocation2] sm:$0xf] 0
        %924 = vst [vmem:[#allocation2 + $0x4] sm:$0xf] 0
        %925 = vst [vmem:[#allocation2 + $0x10] sm:$0xf] 0
        %926 = vst [vmem:[#allocation2 + $0x14] sm:$0xf] 0
        %927 = vst [vmem:[#allocation3] sm:$0xf] 0
        %928 = vst [vmem:[#allocation3 + $0x4] sm:$0xf] 0
        %929 = vst [vmem:[#allocation3 + $0x10] sm:$0xf] 0
        %930 = vst [vmem:[#allocation3 + $0x14] sm:$0xf] 0
        %931 = vst [vmem:[#allocation4] sm:$0xf] 0
        %932 = vst [vmem:[#allocation4 + $0x4] sm:$0xf] 0
        %933 = vst [vmem:[#allocation4 + $0x10] sm:$0xf] 0
        %934 = vst [vmem:[#allocation4 + $0x14] sm:$0xf] 0
        %v935 = vld [vmem:[%s921] sm:$0xf]
        %v936 = vld [vmem:[%s921 + $0x4] sm:$0xf]
        %937 = vst [vmem:[#allocation2 + $0x8] sm:$0xf] %v935
        %938 = vst [vmem:[#allocation2 + $0xc] sm:$0xf] %v936
        %v939 = vld [vmem:[%s2] sm:$0x1]
        %v940 = vld [vmem:[#allocation2 + $0x4] sm:$0xc]
        %v941 = vld [vmem:[#allocation2 + $0x8] sm:$0xf]
        %v942 = vld [vmem:[#allocation2 + $0xc] sm:$0x7]
        %v943 = vld [vmem:[#allocation2 + $0x4] sm:$0x8]
        %v947 = vunpack.c.l.b16 %v940
        %v948 = vunpack.c.l.b16 %v941
        %v949 = vunpack.c.l.b16 %v942
        %v950 = vpack.c.b16 %v948, %v947
        %v951 = vpack.c.b16 %v949, %v949
        %v953 = vunpack.c.l.b16 %v943
        %v954 = vpack.c.b16 %v948, %v953
        %vm955 = vsmask.f32 7424
        %v957 = vshrl.u32 %v954, 16
        %v959 = vshll.u32 %v954, 16
        %v961 = vrot.slane %v959, 1
        %v962 = vor.u32 %v957, %v961
        %v964 = vshll.u32 %v951, 16
        %v966 = vrot.slane %v964, 1
        %v967 = vsel %vm955, %v962, %v966
        %v968 = vshrl.u32 %v951, 16
        %v970 = vor.u32 %v968, %v966
        %v971 = vld [vmem:[#allocation6] sm:$0xf]
        %v972 = vld [vmem:[#allocation6 + $0x4] sm:$0xf]
        %v973 = vld [vmem:[#allocation6 + $0x8] sm:$0xf]
        %v974 = vld [vmem:[#allocation6 + $0xc] sm:$0xf]
        %v975 = vld [vmem:[#allocation6 + $0x10] sm:$0xf]
        %v976 = vld [vmem:[#allocation6 + $0x14] sm:$0xf]
        %v977 = vld [vmem:[#allocation6 + $0x18] sm:$0xf]
        %v978 = vld [vmem:[#allocation6 + $0x1c] sm:$0xf]
        %v979 = vld [vmem:[#allocation6 + $0x20] sm:$0xf]
        %v980 = vld [vmem:[#allocation6 + $0x24] sm:$0xf]
        %v981 = vld [vmem:[#allocation6 + $0x28] sm:$0xf]
        %v982 = vld [vmem:[#allocation6 + $0x2c] sm:$0xf]
        %v983 = vld [vmem:[#allocation6 + $0x30] sm:$0xf]
        %v984 = vld [vmem:[#allocation6 + $0x34] sm:$0xf]
        %v985 = vld [vmem:[#allocation6 + $0x38] sm:$0xf]
        %v986 = vld [vmem:[#allocation6 + $0x3c] sm:$0xf]
        %v987 = vld [vmem:[#allocation6 + $0x40] sm:$0xf]
        %v988 = vld [vmem:[#allocation6 + $0x44] sm:$0xf]
        %v989 = vld [vmem:[#allocation6 + $0x48] sm:$0xf]
        %v990 = vld [vmem:[#allocation6 + $0x4c] sm:$0xf]
        %v991 = vld [vmem:[#allocation6 + $0x50] sm:$0xf]
        %v992 = vld [vmem:[#allocation6 + $0x54] sm:$0xf]
        %v993 = vld [vmem:[#allocation6 + $0x58] sm:$0xf]
        %v994 = vld [vmem:[#allocation6 + $0x5c] sm:$0xf]
        %v995 = vld [vmem:[#allocation6 + $0x60] sm:$0xf]
        %v996 = vld [vmem:[#allocation6 + $0x64] sm:$0xf]
        %v997 = vld [vmem:[#allocation6 + $0x68] sm:$0xf]
        %v998 = vld [vmem:[#allocation6 + $0x6c] sm:$0xf]
        %v999 = vld [vmem:[#allocation6 + $0x70] sm:$0xf]
        %v1000 = vld [vmem:[#allocation6 + $0x74] sm:$0xf]
        %v1001 = vld [vmem:[#allocation6 + $0x78] sm:$0xf]
        %v1002 = vld [vmem:[#allocation6 + $0x7c] sm:$0xf]
        %v1003 = vld [vmem:[#allocation2 + $0xc] sm:$0xf]
        %v1005 = vunpack.c.l.b16 %v1003
        %v1006 = vpack.c.b16 %v1005, %v1005
        %v1007 = vpack.c.b16 %v1005, %v948
        %v1009 = vshrl.u32 %v1007, 16
        %v1011 = vrot.slane %v1009, 4
        %v1012 = vshll.u32 %v1007, 16
        %v1014 = vrot.slane %v1012, 5
        %v1015 = vor.u32 %v1011, %v1014
        %v1016 = vld [vmem:[#allocation6 + $0x80] sm:$0xf]
        %v1017 = vld [vmem:[#allocation6 + $0x84] sm:$0xf]
        %v1018 = vld [vmem:[#allocation6 + $0x88] sm:$0xf]
        %v1019 = vld [vmem:[#allocation6 + $0x8c] sm:$0xf]
        %v1020 = vld [vmem:[#allocation6 + $0x90] sm:$0xf]
        %v1021 = vld [vmem:[#allocation6 + $0x94] sm:$0xf]
        %v1022 = vld [vmem:[#allocation6 + $0x98] sm:$0xf]
        %v1023 = vld [vmem:[#allocation6 + $0x9c] sm:$0xf]
        %v1024 = vld [vmem:[#allocation6 + $0xa0] sm:$0xf]
        %v1025 = vld [vmem:[#allocation6 + $0xa4] sm:$0xf]
        %v1026 = vld [vmem:[#allocation6 + $0xa8] sm:$0xf]
        %v1027 = vld [vmem:[#allocation6 + $0xac] sm:$0xf]
        %v1028 = vld [vmem:[#allocation6 + $0xb0] sm:$0xf]
        %v1029 = vld [vmem:[#allocation6 + $0xb4] sm:$0xf]
        %v1030 = vld [vmem:[#allocation6 + $0xb8] sm:$0xf]
        %v1031 = vld [vmem:[#allocation6 + $0xbc] sm:$0xf]
        %v1032 = vld [vmem:[#allocation6 + $0xc0] sm:$0xf]
        %v1033 = vld [vmem:[#allocation6 + $0xc4] sm:$0xf]
        %v1034 = vld [vmem:[#allocation6 + $0xc8] sm:$0xf]
        %v1035 = vld [vmem:[#allocation6 + $0xcc] sm:$0xf]
        %v1036 = vld [vmem:[#allocation6 + $0xd0] sm:$0xf]
        %v1037 = vld [vmem:[#allocation6 + $0xd4] sm:$0xf]
        %v1038 = vld [vmem:[#allocation6 + $0xd8] sm:$0xf]
        %v1039 = vld [vmem:[#allocation6 + $0xdc] sm:$0xf]
        %v1040 = vld [vmem:[#allocation6 + $0xe0] sm:$0xf]
        %v1041 = vld [vmem:[#allocation6 + $0xe4] sm:$0xf]
        %v1042 = vld [vmem:[#allocation6 + $0xe8] sm:$0xf]
        %v1043 = vld [vmem:[#allocation6 + $0xec] sm:$0xf]
        %v1044 = vld [vmem:[#allocation6 + $0xf0] sm:$0xf]
        %v1045 = vld [vmem:[#allocation6 + $0xf4] sm:$0xf]
        %v1046 = vld [vmem:[#allocation6 + $0xf8] sm:$0xf]
        %v1047 = vld [vmem:[#allocation6 + $0xfc] sm:$0xf]
        %vm1048 = vsmask.f32 4352
        %v1049 = vrot.slane %v957, 3
        %v1050 = vrot.slane %v959, 4
        %v1051 = vor.u32 %v1049, %v1050
        %v1053 = vshrl.u32 %v1006, 16
        %v1055 = vrot.slane %v1053, 3
        %v1056 = vshll.u32 %v1006, 16
        %v1058 = vrot.slane %v1056, 4
        %v1059 = vor.u32 %v1055, %v1058
        %v1060 = vsel %vm1048, %v1051, %v1059
        %v1062 = vshrl.u32 %v1015, 16
        %v1064 = vrot.slane %v1062, 3
        %v1065 = vshll.u32 %v1015, 16
        %v1067 = vrot.slane %v1065, 4
        %v1068 = vor.u32 %v1064, %v1067
        %v1069 = vsel %vm1048, %v1068, %v1068
        %v1104 = vunpack.c.l.b16 %v1016
        %v1105 = vunpack.c.l.b16 %v1017
        %v1106 = vunpack.c.l.b16 %v1018
        %v1107 = vunpack.c.l.b16 %v1019
        %v1108 = vunpack.c.l.b16 %v1020
        %v1109 = vunpack.c.l.b16 %v1021
        %v1110 = vunpack.c.l.b16 %v1022
        %v1111 = vunpack.c.l.b16 %v1023
        %v1112 = vunpack.c.l.b16 %v1024
        %v1113 = vunpack.c.l.b16 %v1025
        %v1114 = vunpack.c.l.b16 %v1026
        %v1115 = vunpack.c.l.b16 %v1027
        %v1116 = vunpack.c.l.b16 %v1028
        %v1117 = vunpack.c.l.b16 %v1029
        %v1118 = vunpack.c.l.b16 %v1030
        %v1119 = vunpack.c.l.b16 %v1031
        %v1120 = vunpack.c.l.b16 %v1032
        %v1121 = vunpack.c.l.b16 %v1033
        %v1122 = vunpack.c.l.b16 %v1034
        %v1123 = vunpack.c.l.b16 %v1035
        %v1124 = vunpack.c.l.b16 %v1036
        %v1125 = vunpack.c.l.b16 %v1037
        %v1126 = vunpack.c.l.b16 %v1038
        %v1127 = vunpack.c.l.b16 %v1039
        %v1128 = vunpack.c.l.b16 %v1040
        %v1129 = vunpack.c.l.b16 %v1041
        %v1130 = vunpack.c.l.b16 %v1042
        %v1131 = vunpack.c.l.b16 %v1043
        %v1132 = vunpack.c.l.b16 %v1044
        %v1133 = vunpack.c.l.b16 %v1045
        %v1134 = vunpack.c.l.b16 %v1046
        %v1135 = vunpack.c.l.b16 %v1047
        %v1136 = vpack.c.b16 %v1105, %v1104
        %v1137 = vpack.c.b16 %v1107, %v1106
        %v1138 = vpack.c.b16 %v1109, %v1108
        %v1139 = vpack.c.b16 %v1111, %v1110
        %v1140 = vpack.c.b16 %v1113, %v1112
        %v1141 = vpack.c.b16 %v1115, %v1114
        %v1142 = vpack.c.b16 %v1117, %v1116
        %v1143 = vpack.c.b16 %v1119, %v1118
        %v1144 = vpack.c.b16 %v1121, %v1120
        %v1145 = vpack.c.b16 %v1123, %v1122
        %v1146 = vpack.c.b16 %v1125, %v1124
        %v1147 = vpack.c.b16 %v1127, %v1126
        %v1148 = vpack.c.b16 %v1129, %v1128
        %v1149 = vpack.c.b16 %v1131, %v1130
        %v1150 = vpack.c.b16 %v1133, %v1132
        %v1151 = vpack.c.b16 %v1135, %v1134
        %1168 = vmatprep.subr.bf16.mxu0 0
        %1169 = vmatpush1.bf16.msra.mxu0 %v1143
        %1170 = vmatprep.subr.bf16.mxu0 0
        %1171 = vmatpush1.bf16.msra.mxu0 %v1142
        %1172 = vmatprep.subr.bf16.mxu0 0
        %1173 = vmatpush1.bf16.msra.mxu0 %v1141
        %1174 = vmatprep.subr.bf16.mxu0 0
        %1175 = vmatpush1.bf16.msra.mxu0 %v1140
        %1176 = vmatprep.subr.bf16.mxu0 0
        %1177 = vmatpush1.bf16.msra.mxu0 %v1139
        %1178 = vmatprep.subr.bf16.mxu0 0
        %1179 = vmatpush1.bf16.msra.mxu0 %v1138
        %1180 = vmatprep.subr.bf16.mxu0 0
        %1181 = vmatpush1.bf16.msra.mxu0 %v1137
        %1182 = vmatprep.subr.bf16.mxu0 0
        %1183 = vmatpush1.bf16.msra.mxu0 %v1136
        %1184 = vmatprep.subr.bf16.mxu0 0
        %1185 = vmatpush2.bf16.msra.mxu0 %v1151
        %1186 = vmatprep.subr.bf16.mxu0 0
        %1187 = vmatpush2.bf16.msra.mxu0 %v1150
        %1188 = vmatprep.subr.bf16.mxu0 0
        %1189 = vmatpush2.bf16.msra.mxu0 %v1149
        %1190 = vmatprep.subr.bf16.mxu0 0
        %1191 = vmatpush2.bf16.msra.mxu0 %v1148
        %1192 = vmatprep.subr.bf16.mxu0 0
        %1193 = vmatpush2.bf16.msra.mxu0 %v1147
        %1194 = vmatprep.subr.bf16.mxu0 0
        %1195 = vmatpush2.bf16.msra.mxu0 %v1146
        %1196 = vmatprep.subr.bf16.mxu0 0
        %1197 = vmatpush2.bf16.msra.mxu0 %v1145
        %1198 = vmatprep.subr.bf16.mxu0 0
        %1199 = vmatpush2.bf16.msra.mxu0 %v1144
        %1200 = vmatprep.mubr.bf16.mxu0 %v1069
        %1201 = vmatmul.mubr.bf16.gmra.mxu0 %v1060
        %v1202 = vpop.f32.mrf.mxu0
        %v1203 = vadd.f32 0.0, %v1202
        %v1204 = vpop.f32.mrf.mxu0
        %v1205 = vpop.f32.mrf.mxu0
        %v1206 = vadd.f32 0.0, %v1205
        %v1207 = vpop.f32.mrf.mxu0
        %1208 = vdwg.mxu0
        %vm1209 = vsmask.f32 5376
        %v1211 = vshrl.u32 %v950, 16
        %v1213 = vrot.slane %v1211, 2
        %v1214 = vshll.u32 %v950, 16
        %v1216 = vrot.slane %v1214, 3
        %v1217 = vor.u32 %v1213, %v1216
        %v1218 = vrot.slane %v968, 2
        %v1219 = vrot.slane %v964, 3
        %v1220 = vor.u32 %v1218, %v1219
        %v1221 = vsel %vm1209, %v1217, %v1220
        %v1223 = vshrl.u32 %v967, 16
        %v1225 = vrot.slane %v1223, 2
        %v1226 = vshll.u32 %v967, 16
        %v1228 = vrot.slane %v1226, 3
        %v1229 = vor.u32 %v1225, %v1228
        %v1231 = vshrl.u32 %v970, 16
        %v1233 = vrot.slane %v1231, 2
        %v1234 = vshll.u32 %v970, 16
        %v1236 = vrot.slane %v1234, 3
        %v1237 = vor.u32 %v1233, %v1236
        %v1238 = vsel %vm1209, %v1229, %v1237
        %v1273 = vunpack.c.l.b16 %v971
        %v1274 = vunpack.c.l.b16 %v972
        %v1275 = vunpack.c.l.b16 %v973
        %v1276 = vunpack.c.l.b16 %v974
        %v1277 = vunpack.c.l.b16 %v975
        %v1278 = vunpack.c.l.b16 %v976
        %v1279 = vunpack.c.l.b16 %v977
        %v1280 = vunpack.c.l.b16 %v978
        %v1281 = vunpack.c.l.b16 %v979
        %v1282 = vunpack.c.l.b16 %v980
        %v1283 = vunpack.c.l.b16 %v981
        %v1284 = vunpack.c.l.b16 %v982
        %v1285 = vunpack.c.l.b16 %v983
        %v1286 = vunpack.c.l.b16 %v984
        %v1287 = vunpack.c.l.b16 %v985
        %v1288 = vunpack.c.l.b16 %v986
        %v1289 = vunpack.c.l.b16 %v987
        %v1290 = vunpack.c.l.b16 %v988
        %v1291 = vunpack.c.l.b16 %v989
        %v1292 = vunpack.c.l.b16 %v990
        %v1293 = vunpack.c.l.b16 %v991
        %v1294 = vunpack.c.l.b16 %v992
        %v1295 = vunpack.c.l.b16 %v993
        %v1296 = vunpack.c.l.b16 %v994
        %v1297 = vunpack.c.l.b16 %v995
        %v1298 = vunpack.c.l.b16 %v996
        %v1299 = vunpack.c.l.b16 %v997
        %v1300 = vunpack.c.l.b16 %v998
        %v1301 = vunpack.c.l.b16 %v999
        %v1302 = vunpack.c.l.b16 %v1000
        %v1303 = vunpack.c.l.b16 %v1001
        %v1304 = vunpack.c.l.b16 %v1002
        %v1305 = vpack.c.b16 %v1274, %v1273
        %v1306 = vpack.c.b16 %v1276, %v1275
        %v1307 = vpack.c.b16 %v1278, %v1277
        %v1308 = vpack.c.b16 %v1280, %v1279
        %v1309 = vpack.c.b16 %v1282, %v1281
        %v1310 = vpack.c.b16 %v1284, %v1283
        %v1311 = vpack.c.b16 %v1286, %v1285
        %v1312 = vpack.c.b16 %v1288, %v1287
        %v1313 = vpack.c.b16 %v1290, %v1289
        %v1314 = vpack.c.b16 %v1292, %v1291
        %v1315 = vpack.c.b16 %v1294, %v1293
        %v1316 = vpack.c.b16 %v1296, %v1295
        %v1317 = vpack.c.b16 %v1298, %v1297
        %v1318 = vpack.c.b16 %v1300, %v1299
        %v1319 = vpack.c.b16 %v1302, %v1301
        %v1320 = vpack.c.b16 %v1304, %v1303
        %1337 = vmatprep.subr.bf16.mxu0 0
        %1338 = vmatpush1.bf16.msra.mxu0 %v1312
        %1339 = vmatprep.subr.bf16.mxu0 0
        %1340 = vmatpush1.bf16.msra.mxu0 %v1311
        %1341 = vmatprep.subr.bf16.mxu0 0
        %1342 = vmatpush1.bf16.msra.mxu0 %v1310
        %1343 = vmatprep.subr.bf16.mxu0 0
        %1344 = vmatpush1.bf16.msra.mxu0 %v1309
        %1345 = vmatprep.subr.bf16.mxu0 0
        %1346 = vmatpush1.bf16.msra.mxu0 %v1308
        %1347 = vmatprep.subr.bf16.mxu0 0
        %1348 = vmatpush1.bf16.msra.mxu0 %v1307
        %1349 = vmatprep.subr.bf16.mxu0 0
        %1350 = vmatpush1.bf16.msra.mxu0 %v1306
        %1351 = vmatprep.subr.bf16.mxu0 0
        %1352 = vmatpush1.bf16.msra.mxu0 %v1305
        %1353 = vmatprep.subr.bf16.mxu0 0
        %1354 = vmatpush2.bf16.msra.mxu0 %v1320
        %1355 = vmatprep.subr.bf16.mxu0 0
        %1356 = vmatpush2.bf16.msra.mxu0 %v1319
        %1357 = vmatprep.subr.bf16.mxu0 0
        %1358 = vmatpush2.bf16.msra.mxu0 %v1318
        %1359 = vmatprep.subr.bf16.mxu0 0
        %1360 = vmatpush2.bf16.msra.mxu0 %v1317
        %1361 = vmatprep.subr.bf16.mxu0 0
        %1362 = vmatpush2.bf16.msra.mxu0 %v1316
        %1363 = vmatprep.subr.bf16.mxu0 0
        %1364 = vmatpush2.bf16.msra.mxu0 %v1315
        %1365 = vmatprep.subr.bf16.mxu0 0
        %1366 = vmatpush2.bf16.msra.mxu0 %v1314
        %1367 = vmatprep.subr.bf16.mxu0 0
        %1368 = vmatpush2.bf16.msra.mxu0 %v1313
        %1369 = vmatprep.mubr.bf16.mxu0 %v1238
        %1370 = vmatmul.mubr.bf16.gmra.mxu0 %v1221
        %v1371 = vpop.f32.mrf.mxu0
        %v1372 = vadd.f32 %v1203, %v1371
        %v1373 = vpop.f32.mrf.mxu0
        %v1374 = vpop.f32.mrf.mxu0
        %v1375 = vadd.f32 %v1206, %v1374
        %v1376 = vpop.f32.mrf.mxu0
        %1377 = vdwg.mxu0
        %v1378 = vld [vmem:[#allocation2 + $0x8] sm:$0xf]
        %v1379 = vld [vmem:[#allocation2 + $0xc] sm:$0xf]
        %v1380 = vld [vmem:[#allocation2 + $0x10] sm:$0x1]
        %v1381 = vld [vmem:[#allocation2 + $0x8] sm:$0xe]
        %v1385 = vunpack.c.l.b16 %v1378
        %v1386 = vunpack.c.l.b16 %v1379
        %v1387 = vunpack.c.l.b16 %v1380
        %v1388 = vpack.c.b16 %v1386, %v1385
        %v1389 = vpack.c.b16 %v1387, %v1387
        %v1391 = vunpack.c.l.b16 %v1381
        %v1392 = vpack.c.b16 %v1386, %v1391
        %v1394 = vshrl.u32 %v1392, 16
        %v1396 = vshll.u32 %v1392, 16
        %v1398 = vrot.slane %v1396, 1
        %v1399 = vor.u32 %v1394, %v1398
        %v1401 = vshll.u32 %v1389, 16
        %v1403 = vrot.slane %v1401, 1
        %v1404 = vsel %vm955, %v1399, %v1403
        %v1405 = vshrl.u32 %v1389, 16
        %v1407 = vld [vmem:[#allocation6 + $0x100] sm:$0xf]
        %v1408 = vld [vmem:[#allocation6 + $0x104] sm:$0xf]
        %v1409 = vld [vmem:[#allocation6 + $0x108] sm:$0xf]
        %v1410 = vld [vmem:[#allocation6 + $0x10c] sm:$0xf]
        %v1411 = vld [vmem:[#allocation6 + $0x110] sm:$0xf]
        %v1412 = vld [vmem:[#allocation6 + $0x114] sm:$0xf]
        %v1413 = vld [vmem:[#allocation6 + $0x118] sm:$0xf]
        %v1414 = vld [vmem:[#allocation6 + $0x11c] sm:$0xf]
        %v1415 = vld [vmem:[#allocation6 + $0x120] sm:$0xf]
        %v1416 = vld [vmem:[#allocation6 + $0x124] sm:$0xf]
        %v1417 = vld [vmem:[#allocation6 + $0x128] sm:$0xf]
        %v1418 = vld [vmem:[#allocation6 + $0x12c] sm:$0xf]
        %v1419 = vld [vmem:[#allocation6 + $0x130] sm:$0xf]
        %v1420 = vld [vmem:[#allocation6 + $0x134] sm:$0xf]
        %v1421 = vld [vmem:[#allocation6 + $0x138] sm:$0xf]
        %v1422 = vld [vmem:[#allocation6 + $0x13c] sm:$0xf]
        %v1423 = vld [vmem:[#allocation6 + $0x140] sm:$0xf]
        %v1424 = vld [vmem:[#allocation6 + $0x144] sm:$0xf]
        %v1425 = vld [vmem:[#allocation6 + $0x148] sm:$0xf]
        %v1426 = vld [vmem:[#allocation6 + $0x14c] sm:$0xf]
        %v1427 = vld [vmem:[#allocation6 + $0x150] sm:$0xf]
        %v1428 = vld [vmem:[#allocation6 + $0x154] sm:$0xf]
        %v1429 = vld [vmem:[#allocation6 + $0x158] sm:$0xf]
        %v1430 = vld [vmem:[#allocation6 + $0x15c] sm:$0xf]
        %v1431 = vld [vmem:[#allocation6 + $0x160] sm:$0xf]
        %v1432 = vld [vmem:[#allocation6 + $0x164] sm:$0xf]
        %v1433 = vld [vmem:[#allocation6 + $0x168] sm:$0xf]
        %v1434 = vld [vmem:[#allocation6 + $0x16c] sm:$0xf]
        %v1435 = vld [vmem:[#allocation6 + $0x170] sm:$0xf]
        %v1436 = vld [vmem:[#allocation6 + $0x174] sm:$0xf]
        %v1437 = vld [vmem:[#allocation6 + $0x178] sm:$0xf]
        %v1438 = vld [vmem:[#allocation6 + $0x17c] sm:$0xf]
        %v1440 = vshrl.u32 %v1388, 16
        %v1442 = vshll.u32 %v1388, 16
        %v1444 = vrot.slane %v1442, 1
        %v1445 = vor.u32 %v1440, %v1444
        %v1446 = vsel %vm955, %v1445, %v1403
        %v1448 = vshrl.u32 %v1404, 16
        %v1450 = vshll.u32 %v1404, 16
        %v1452 = vrot.slane %v1450, 1
        %v1453 = vor.u32 %v1448, %v1452
        %v1455 = vshll.u32 %v1405, 16
        %v1457 = vrot.slane %v1455, 1
        %v1458 = vsel %vm955, %v1453, %v1457
        %v1493 = vunpack.c.l.b16 %v1407
        %v1494 = vunpack.c.l.b16 %v1408
        %v1495 = vunpack.c.l.b16 %v1409
        %v1496 = vunpack.c.l.b16 %v1410
        %v1497 = vunpack.c.l.b16 %v1411
        %v1498 = vunpack.c.l.b16 %v1412
        %v1499 = vunpack.c.l.b16 %v1413
        %v1500 = vunpack.c.l.b16 %v1414
        %v1501 = vunpack.c.l.b16 %v1415
        %v1502 = vunpack.c.l.b16 %v1416
        %v1503 = vunpack.c.l.b16 %v1417
        %v1504 = vunpack.c.l.b16 %v1418
        %v1505 = vunpack.c.l.b16 %v1419
        %v1506 = vunpack.c.l.b16 %v1420
        %v1507 = vunpack.c.l.b16 %v1421
        %v1508 = vunpack.c.l.b16 %v1422
        %v1509 = vunpack.c.l.b16 %v1423
        %v1510 = vunpack.c.l.b16 %v1424
        %v1511 = vunpack.c.l.b16 %v1425
        %v1512 = vunpack.c.l.b16 %v1426
        %v1513 = vunpack.c.l.b16 %v1427
        %v1514 = vunpack.c.l.b16 %v1428
        %v1515 = vunpack.c.l.b16 %v1429
        %v1516 = vunpack.c.l.b16 %v1430
        %v1517 = vunpack.c.l.b16 %v1431
        %v1518 = vunpack.c.l.b16 %v1432
        %v1519 = vunpack.c.l.b16 %v1433
        %v1520 = vunpack.c.l.b16 %v1434
        %v1521 = vunpack.c.l.b16 %v1435
        %v1522 = vunpack.c.l.b16 %v1436
        %v1523 = vunpack.c.l.b16 %v1437
        %v1524 = vunpack.c.l.b16 %v1438
        %v1525 = vpack.c.b16 %v1494, %v1493
        %v1526 = vpack.c.b16 %v1496, %v1495
        %v1527 = vpack.c.b16 %v1498, %v1497
        %v1528 = vpack.c.b16 %v1500, %v1499
        %v1529 = vpack.c.b16 %v1502, %v1501
        %v1530 = vpack.c.b16 %v1504, %v1503
        %v1531 = vpack.c.b16 %v1506, %v1505
        %v1532 = vpack.c.b16 %v1508, %v1507
        %v1533 = vpack.c.b16 %v1510, %v1509
        %v1534 = vpack.c.b16 %v1512, %v1511
        %v1535 = vpack.c.b16 %v1514, %v1513
        %v1536 = vpack.c.b16 %v1516, %v1515
        %v1537 = vpack.c.b16 %v1518, %v1517
        %v1538 = vpack.c.b16 %v1520, %v1519
        %v1539 = vpack.c.b16 %v1522, %v1521
        %v1540 = vpack.c.b16 %v1524, %v1523
        %1557 = vmatprep.subr.bf16.mxu0 0
        %1558 = vmatpush1.bf16.msra.mxu0 %v1532
        %1559 = vmatprep.subr.bf16.mxu0 0
        %1560 = vmatpush1.bf16.msra.mxu0 %v1531
        %1561 = vmatprep.subr.bf16.mxu0 0
        %1562 = vmatpush1.bf16.msra.mxu0 %v1530
        %1563 = vmatprep.subr.bf16.mxu0 0
        %1564 = vmatpush1.bf16.msra.mxu0 %v1529
        %1565 = vmatprep.subr.bf16.mxu0 0
        %1566 = vmatpush1.bf16.msra.mxu0 %v1528
        %1567 = vmatprep.subr.bf16.mxu0 0
        %1568 = vmatpush1.bf16.msra.mxu0 %v1527
        %1569 = vmatprep.subr.bf16.mxu0 0
        %1570 = vmatpush1.bf16.msra.mxu0 %v1526
        %1571 = vmatprep.subr.bf16.mxu0 0
        %1572 = vmatpush1.bf16.msra.mxu0 %v1525
        %1573 = vmatprep.subr.bf16.mxu0 0
        %1574 = vmatpush2.bf16.msra.mxu0 %v1540
        %1575 = vmatprep.subr.bf16.mxu0 0
        %1576 = vmatpush2.bf16.msra.mxu0 %v1539
        %1577 = vmatprep.subr.bf16.mxu0 0
        %1578 = vmatpush2.bf16.msra.mxu0 %v1538
        %1579 = vmatprep.subr.bf16.mxu0 0
        %1580 = vmatpush2.bf16.msra.mxu0 %v1537
        %1581 = vmatprep.subr.bf16.mxu0 0
        %1582 = vmatpush2.bf16.msra.mxu0 %v1536
        %1583 = vmatprep.subr.bf16.mxu0 0
        %1584 = vmatpush2.bf16.msra.mxu0 %v1535
        %1585 = vmatprep.subr.bf16.mxu0 0
        %1586 = vmatpush2.bf16.msra.mxu0 %v1534
        %1587 = vmatprep.subr.bf16.mxu0 0
        %1588 = vmatpush2.bf16.msra.mxu0 %v1533
        %1589 = vmatprep.mubr.bf16.mxu0 %v1458
        %1590 = vmatmul.mubr.bf16.gmra.mxu0 %v1446
        %v1591 = vpop.f32.mrf.mxu0
        %v1592 = vadd.f32 0.0, %v1591
        %v1593 = vpop.f32.mrf.mxu0
        %v1594 = vpop.f32.mrf.mxu0
        %v1595 = vadd.f32 0.0, %v1594
        %v1596 = vpop.f32.mrf.mxu0
        %1597 = vdwg.mxu0
        %v1598 = vadd.f32 %v1372, %v1592
        %v1599 = vadd.f32 %v1375, %v1595
        %v1600 = vld [vmem:[#allocation2 + $0x10] sm:$0x3]
        %v1601 = vld [vmem:[#allocation2 + $0x8] sm:$0xc]
        %v1603 = vunpack.c.l.b16 %v1600
        %v1604 = vpack.c.b16 %v1603, %v1603
        %v1606 = vunpack.c.l.b16 %v1601
        %v1607 = vpack.c.b16 %v1386, %v1606
        %v1609 = vshrl.u32 %v1607, 16
        %v1611 = vshll.u32 %v1607, 16
        %v1613 = vrot.slane %v1611, 1
        %v1614 = vor.u32 %v1609, %v1613
        %v1616 = vshll.u32 %v1604, 16
        %v1618 = vrot.slane %v1616, 1
        %v1619 = vsel %vm955, %v1614, %v1618
        %v1620 = vshrl.u32 %v1604, 16
        %v1622 = vor.u32 %v1620, %v1618
        %v1623 = vld [vmem:[#allocation6 + $0x180] sm:$0xf]
        %v1624 = vld [vmem:[#allocation6 + $0x184] sm:$0xf]
        %v1625 = vld [vmem:[#allocation6 + $0x188] sm:$0xf]
        %v1626 = vld [vmem:[#allocation6 + $0x18c] sm:$0xf]
        %v1627 = vld [vmem:[#allocation6 + $0x190] sm:$0xf]
        %v1628 = vld [vmem:[#allocation6 + $0x194] sm:$0xf]
        %v1629 = vld [vmem:[#allocation6 + $0x198] sm:$0xf]
        %v1630 = vld [vmem:[#allocation6 + $0x19c] sm:$0xf]
        %v1631 = vld [vmem:[#allocation6 + $0x1a0] sm:$0xf]
        %v1632 = vld [vmem:[#allocation6 + $0x1a4] sm:$0xf]
        %v1633 = vld [vmem:[#allocation6 + $0x1a8] sm:$0xf]
        %v1634 = vld [vmem:[#allocation6 + $0x1ac] sm:$0xf]
        %v1635 = vld [vmem:[#allocation6 + $0x1b0] sm:$0xf]
        %v1636 = vld [vmem:[#allocation6 + $0x1b4] sm:$0xf]
        %v1637 = vld [vmem:[#allocation6 + $0x1b8] sm:$0xf]
        %v1638 = vld [vmem:[#allocation6 + $0x1bc] sm:$0xf]
        %v1639 = vld [vmem:[#allocation6 + $0x1c0] sm:$0xf]
        %v1640 = vld [vmem:[#allocation6 + $0x1c4] sm:$0xf]
        %v1641 = vld [vmem:[#allocation6 + $0x1c8] sm:$0xf]
        %v1642 = vld [vmem:[#allocation6 + $0x1cc] sm:$0xf]
        %v1643 = vld [vmem:[#allocation6 + $0x1d0] sm:$0xf]
        %v1644 = vld [vmem:[#allocation6 + $0x1d4] sm:$0xf]
        %v1645 = vld [vmem:[#allocation6 + $0x1d8] sm:$0xf]
        %v1646 = vld [vmem:[#allocation6 + $0x1dc] sm:$0xf]
        %v1647 = vld [vmem:[#allocation6 + $0x1e0] sm:$0xf]
        %v1648 = vld [vmem:[#allocation6 + $0x1e4] sm:$0xf]
        %v1649 = vld [vmem:[#allocation6 + $0x1e8] sm:$0xf]
        %v1650 = vld [vmem:[#allocation6 + $0x1ec] sm:$0xf]
        %v1651 = vld [vmem:[#allocation6 + $0x1f0] sm:$0xf]
        %v1652 = vld [vmem:[#allocation6 + $0x1f4] sm:$0xf]
        %v1653 = vld [vmem:[#allocation6 + $0x1f8] sm:$0xf]
        %v1654 = vld [vmem:[#allocation6 + $0x1fc] sm:$0xf]
        %vm1655 = vsmask.f32 6400
        %v1656 = vrot.slane %v1394, 1
        %v1657 = vrot.slane %v1396, 2
        %v1658 = vor.u32 %v1656, %v1657
        %v1659 = vrot.slane %v1620, 1
        %v1660 = vrot.slane %v1616, 2
        %v1661 = vor.u32 %v1659, %v1660
        %v1662 = vsel %vm1655, %v1658, %v1661
        %v1664 = vshrl.u32 %v1619, 16
        %v1666 = vrot.slane %v1664, 1
        %v1667 = vshll.u32 %v1619, 16
        %v1669 = vrot.slane %v1667, 2
        %v1670 = vor.u32 %v1666, %v1669
        %v1672 = vshrl.u32 %v1622, 16
        %v1674 = vrot.slane %v1672, 1
        %v1675 = vshll.u32 %v1622, 16
        %v1677 = vrot.slane %v1675, 2
        %v1678 = vor.u32 %v1674, %v1677
        %v1679 = vsel %vm1655, %v1670, %v1678
        %v1714 = vunpack.c.l.b16 %v1623
        %v1715 = vunpack.c.l.b16 %v1624
        %v1716 = vunpack.c.l.b16 %v1625
        %v1717 = vunpack.c.l.b16 %v1626
        %v1718 = vunpack.c.l.b16 %v1627
        %v1719 = vunpack.c.l.b16 %v1628
        %v1720 = vunpack.c.l.b16 %v1629
        %v1721 = vunpack.c.l.b16 %v1630
        %v1722 = vunpack.c.l.b16 %v1631
        %v1723 = vunpack.c.l.b16 %v1632
        %v1724 = vunpack.c.l.b16 %v1633
        %v1725 = vunpack.c.l.b16 %v1634
        %v1726 = vunpack.c.l.b16 %v1635
        %v1727 = vunpack.c.l.b16 %v1636
        %v1728 = vunpack.c.l.b16 %v1637
        %v1729 = vunpack.c.l.b16 %v1638
        %v1730 = vunpack.c.l.b16 %v1639
        %v1731 = vunpack.c.l.b16 %v1640
        %v1732 = vunpack.c.l.b16 %v1641
        %v1733 = vunpack.c.l.b16 %v1642
        %v1734 = vunpack.c.l.b16 %v1643
        %v1735 = vunpack.c.l.b16 %v1644
        %v1736 = vunpack.c.l.b16 %v1645
        %v1737 = vunpack.c.l.b16 %v1646
        %v1738 = vunpack.c.l.b16 %v1647
        %v1739 = vunpack.c.l.b16 %v1648
        %v1740 = vunpack.c.l.b16 %v1649
        %v1741 = vunpack.c.l.b16 %v1650
        %v1742 = vunpack.c.l.b16 %v1651
        %v1743 = vunpack.c.l.b16 %v1652
        %v1744 = vunpack.c.l.b16 %v1653
        %v1745 = vunpack.c.l.b16 %v1654
        %v1746 = vpack.c.b16 %v1715, %v1714
        %v1747 = vpack.c.b16 %v1717, %v1716
        %v1748 = vpack.c.b16 %v1719, %v1718
        %v1749 = vpack.c.b16 %v1721, %v1720
        %v1750 = vpack.c.b16 %v1723, %v1722
        %v1751 = vpack.c.b16 %v1725, %v1724
        %v1752 = vpack.c.b16 %v1727, %v1726
        %v1753 = vpack.c.b16 %v1729, %v1728
        %v1754 = vpack.c.b16 %v1731, %v1730
        %v1755 = vpack.c.b16 %v1733, %v1732
        %v1756 = vpack.c.b16 %v1735, %v1734
        %v1757 = vpack.c.b16 %v1737, %v1736
        %v1758 = vpack.c.b16 %v1739, %v1738
        %v1759 = vpack.c.b16 %v1741, %v1740
        %v1760 = vpack.c.b16 %v1743, %v1742
        %v1761 = vpack.c.b16 %v1745, %v1744
        %1778 = vmatprep.subr.bf16.mxu0 0
        %1779 = vmatpush1.bf16.msra.mxu0 %v1753
        %1780 = vmatprep.subr.bf16.mxu0 0
        %1781 = vmatpush1.bf16.msra.mxu0 %v1752
        %1782 = vmatprep.subr.bf16.mxu0 0
        %1783 = vmatpush1.bf16.msra.mxu0 %v1751
        %1784 = vmatprep.subr.bf16.mxu0 0
        %1785 = vmatpush1.bf16.msra.mxu0 %v1750
        %1786 = vmatprep.subr.bf16.mxu0 0
        %1787 = vmatpush1.bf16.msra.mxu0 %v1749
        %1788 = vmatprep.subr.bf16.mxu0 0
        %1789 = vmatpush1.bf16.msra.mxu0 %v1748
        %1790 = vmatprep.subr.bf16.mxu0 0
        %1791 = vmatpush1.bf16.msra.mxu0 %v1747
        %1792 = vmatprep.subr.bf16.mxu0 0
        %1793 = vmatpush1.bf16.msra.mxu0 %v1746
        %1794 = vmatprep.subr.bf16.mxu0 0
        %1795 = vmatpush2.bf16.msra.mxu0 %v1761
        %1796 = vmatprep.subr.bf16.mxu0 0
        %1797 = vmatpush2.bf16.msra.mxu0 %v1760
        %1798 = vmatprep.subr.bf16.mxu0 0
        %1799 = vmatpush2.bf16.msra.mxu0 %v1759
        %1800 = vmatprep.subr.bf16.mxu0 0
        %1801 = vmatpush2.bf16.msra.mxu0 %v1758
        %1802 = vmatprep.subr.bf16.mxu0 0
        %1803 = vmatpush2.bf16.msra.mxu0 %v1757
        %1804 = vmatprep.subr.bf16.mxu0 0
        %1805 = vmatpush2.bf16.msra.mxu0 %v1756
        %1806 = vmatprep.subr.bf16.mxu0 0
        %1807 = vmatpush2.bf16.msra.mxu0 %v1755
        %1808 = vmatprep.subr.bf16.mxu0 0
        %1809 = vmatpush2.bf16.msra.mxu0 %v1754
        %1810 = vmatprep.mubr.bf16.mxu0 %v1679
        %1811 = vmatmul.mubr.bf16.gmra.mxu0 %v1662
        %v1812 = vpop.f32.mrf.mxu0
        %v1813 = vadd.f32 0.0, %v1812
        %v1814 = vpop.f32.mrf.mxu0
        %v1815 = vpop.f32.mrf.mxu0
        %v1816 = vadd.f32 0.0, %v1815
        %v1817 = vpop.f32.mrf.mxu0
        %1818 = vdwg.mxu0
        %v1819 = vadd.f32 %v1598, %v1813
        %v1820 = vadd.f32 %v1599, %v1816
        %v1822 = vlaneseq
        %v1823 = vshrl.u32 %v1822, 7
        %v1824 = vsub.s32 0, %v1823
        %v1825 = vrot.slane %v939, %v1824
        %v1827 = vadd.f32 %v1819, %v1825
        %v1828 = vadd.f32 %v1820, %v1825
        %v1829 = vmax.f32 %v1827, 0.0
        %v1830 = vmax.f32 %v1828, 0.0
        %v1831 = vpack.c.bf16 %v1830, %v1829
        %v1833 = vunpack.c.l.b16 %v1831
        %v1834 = vunpack.c.h.b16 %v1831
        %v1835 = vpack.c.b16 %v1833, %v1833
        %v1836 = vpack.c.b16 %v1834, %v1834
        %1839 = vst [vmem:[#allocation3 + $0x8] sm:$0xf] %v1835
        %1840 = vst [vmem:[#allocation3 + $0xc] sm:$0xf] %v1836
        %v1841 = vld [vmem:[%s4] sm:$0x1]
        %v1842 = vld [vmem:[#allocation3 + $0x4] sm:$0x8]
        %v1843 = vld [vmem:[#allocation3 + $0x8] sm:$0xf]
        %v1844 = vld [vmem:[#allocation3 + $0xc] sm:$0x7]
        %v1845 = vld [vmem:[#allocation3 + $0xc] sm:$0xf]
        %v1849 = vunpack.c.l.b16 %v1842
        %v1850 = vunpack.c.l.b16 %v1843
        %v1851 = vunpack.c.l.b16 %v1844
        %v1852 = vpack.c.b16 %v1850, %v1849
        %v1853 = vpack.c.b16 %v1851, %v1851
        %v1855 = vunpack.c.l.b16 %v1845
        %v1856 = vpack.c.b16 %v1855, %v1855
        %v1858 = vshrl.u32 %v1852, 16
        %v1860 = vshll.u32 %v1852, 16
        %v1862 = vrot.slane %v1860, 1
        %v1863 = vor.u32 %v1858, %v1862
        %v1865 = vshll.u32 %v1856, 16
        %v1867 = vrot.slane %v1865, 1
        %v1868 = vsel %vm955, %v1863, %v1867
        %v1869 = vshrl.u32 %v1856, 16
        %v1871 = vor.u32 %v1869, %v1867
        %v1872 = vld [vmem:[#allocation9] sm:$0xf]
        %v1873 = vld [vmem:[#allocation9 + $0x4] sm:$0xf]
        %v1874 = vld [vmem:[#allocation9 + $0x8] sm:$0xf]
        %v1875 = vld [vmem:[#allocation9 + $0xc] sm:$0xf]
        %v1876 = vld [vmem:[#allocation9 + $0x10] sm:$0xf]
        %v1877 = vld [vmem:[#allocation9 + $0x14] sm:$0xf]
        %v1878 = vld [vmem:[#allocation9 + $0x18] sm:$0xf]
        %v1879 = vld [vmem:[#allocation9 + $0x1c] sm:$0xf]
        %v1880 = vld [vmem:[#allocation9 + $0x20] sm:$0xf]
        %v1881 = vld [vmem:[#allocation9 + $0x24] sm:$0xf]
        %v1882 = vld [vmem:[#allocation9 + $0x28] sm:$0xf]
        %v1883 = vld [vmem:[#allocation9 + $0x2c] sm:$0xf]
        %v1884 = vld [vmem:[#allocation9 + $0x30] sm:$0xf]
        %v1885 = vld [vmem:[#allocation9 + $0x34] sm:$0xf]
        %v1886 = vld [vmem:[#allocation9 + $0x38] sm:$0xf]
        %v1887 = vld [vmem:[#allocation9 + $0x3c] sm:$0xf]
        %v1888 = vld [vmem:[#allocation9 + $0x40] sm:$0xf]
        %v1889 = vld [vmem:[#allocation9 + $0x44] sm:$0xf]
        %v1890 = vld [vmem:[#allocation9 + $0x48] sm:$0xf]
        %v1891 = vld [vmem:[#allocation9 + $0x4c] sm:$0xf]
        %v1892 = vld [vmem:[#allocation9 + $0x50] sm:$0xf]
        %v1893 = vld [vmem:[#allocation9 + $0x54] sm:$0xf]
        %v1894 = vld [vmem:[#allocation9 + $0x58] sm:$0xf]
        %v1895 = vld [vmem:[#allocation9 + $0x5c] sm:$0xf]
        %v1896 = vld [vmem:[#allocation9 + $0x60] sm:$0xf]
        %v1897 = vld [vmem:[#allocation9 + $0x64] sm:$0xf]
        %v1898 = vld [vmem:[#allocation9 + $0x68] sm:$0xf]
        %v1899 = vld [vmem:[#allocation9 + $0x6c] sm:$0xf]
        %v1900 = vld [vmem:[#allocation9 + $0x70] sm:$0xf]
        %v1901 = vld [vmem:[#allocation9 + $0x74] sm:$0xf]
        %v1902 = vld [vmem:[#allocation9 + $0x78] sm:$0xf]
        %v1903 = vld [vmem:[#allocation9 + $0x7c] sm:$0xf]
        %v1904 = vld [vmem:[#allocation3 + $0x10] sm:$0x1]
        %v1905 = vpack.c.b16 %v1855, %v1850
        %v1908 = vunpack.c.l.b16 %v1904
        %v1909 = vpack.c.b16 %v1908, %v1908
        %v1911 = vshrl.u32 %v1905, 16
        %v1913 = vshll.u32 %v1905, 16
        %v1915 = vrot.slane %v1913, 1
        %v1916 = vor.u32 %v1911, %v1915
        %v1918 = vshll.u32 %v1909, 16
        %v1920 = vrot.slane %v1918, 1
        %v1921 = vsel %vm955, %v1916, %v1920
        %v1923 = vld [vmem:[#allocation9 + $0x80] sm:$0xf]
        %v1924 = vld [vmem:[#allocation9 + $0x84] sm:$0xf]
        %v1925 = vld [vmem:[#allocation9 + $0x88] sm:$0xf]
        %v1926 = vld [vmem:[#allocation9 + $0x8c] sm:$0xf]
        %v1927 = vld [vmem:[#allocation9 + $0x90] sm:$0xf]
        %v1928 = vld [vmem:[#allocation9 + $0x94] sm:$0xf]
        %v1929 = vld [vmem:[#allocation9 + $0x98] sm:$0xf]
        %v1930 = vld [vmem:[#allocation9 + $0x9c] sm:$0xf]
        %v1931 = vld [vmem:[#allocation9 + $0xa0] sm:$0xf]
        %v1932 = vld [vmem:[#allocation9 + $0xa4] sm:$0xf]
        %v1933 = vld [vmem:[#allocation9 + $0xa8] sm:$0xf]
        %v1934 = vld [vmem:[#allocation9 + $0xac] sm:$0xf]
        %v1935 = vld [vmem:[#allocation9 + $0xb0] sm:$0xf]
        %v1936 = vld [vmem:[#allocation9 + $0xb4] sm:$0xf]
        %v1937 = vld [vmem:[#allocation9 + $0xb8] sm:$0xf]
        %v1938 = vld [vmem:[#allocation9 + $0xbc] sm:$0xf]
        %v1939 = vld [vmem:[#allocation9 + $0xc0] sm:$0xf]
        %v1940 = vld [vmem:[#allocation9 + $0xc4] sm:$0xf]
        %v1941 = vld [vmem:[#allocation9 + $0xc8] sm:$0xf]
        %v1942 = vld [vmem:[#allocation9 + $0xcc] sm:$0xf]
        %v1943 = vld [vmem:[#allocation9 + $0xd0] sm:$0xf]
        %v1944 = vld [vmem:[#allocation9 + $0xd4] sm:$0xf]
        %v1945 = vld [vmem:[#allocation9 + $0xd8] sm:$0xf]
        %v1946 = vld [vmem:[#allocation9 + $0xdc] sm:$0xf]
        %v1947 = vld [vmem:[#allocation9 + $0xe0] sm:$0xf]
        %v1948 = vld [vmem:[#allocation9 + $0xe4] sm:$0xf]
        %v1949 = vld [vmem:[#allocation9 + $0xe8] sm:$0xf]
        %v1950 = vld [vmem:[#allocation9 + $0xec] sm:$0xf]
        %v1951 = vld [vmem:[#allocation9 + $0xf0] sm:$0xf]
        %v1952 = vld [vmem:[#allocation9 + $0xf4] sm:$0xf]
        %v1953 = vld [vmem:[#allocation9 + $0xf8] sm:$0xf]
        %v1954 = vld [vmem:[#allocation9 + $0xfc] sm:$0xf]
        %v1987 = vunpack.c.l.b16 %v1923
        %v1988 = vunpack.c.l.b16 %v1924
        %v1989 = vunpack.c.l.b16 %v1925
        %v1990 = vunpack.c.l.b16 %v1926
        %v1991 = vunpack.c.l.b16 %v1927
        %v1992 = vunpack.c.l.b16 %v1928
        %v1993 = vunpack.c.l.b16 %v1929
        %v1994 = vunpack.c.l.b16 %v1930
        %v1995 = vunpack.c.l.b16 %v1931
        %v1996 = vunpack.c.l.b16 %v1932
        %v1997 = vunpack.c.l.b16 %v1933
        %v1998 = vunpack.c.l.b16 %v1934
        %v1999 = vunpack.c.l.b16 %v1935
        %v2000 = vunpack.c.l.b16 %v1936
        %v2001 = vunpack.c.l.b16 %v1937
        %v2002 = vunpack.c.l.b16 %v1938
        %v2003 = vunpack.c.l.b16 %v1939
        %v2004 = vunpack.c.l.b16 %v1940
        %v2005 = vunpack.c.l.b16 %v1941
        %v2006 = vunpack.c.l.b16 %v1942
        %v2007 = vunpack.c.l.b16 %v1943
        %v2008 = vunpack.c.l.b16 %v1944
        %v2009 = vunpack.c.l.b16 %v1945
        %v2010 = vunpack.c.l.b16 %v1946
        %v2011 = vunpack.c.l.b16 %v1947
        %v2012 = vunpack.c.l.b16 %v1948
        %v2013 = vunpack.c.l.b16 %v1949
        %v2014 = vunpack.c.l.b16 %v1950
        %v2015 = vunpack.c.l.b16 %v1951
        %v2016 = vunpack.c.l.b16 %v1952
        %v2017 = vunpack.c.l.b16 %v1953
        %v2018 = vunpack.c.l.b16 %v1954
        %v2019 = vpack.c.b16 %v1988, %v1987
        %v2020 = vpack.c.b16 %v1990, %v1989
        %v2021 = vpack.c.b16 %v1992, %v1991
        %v2022 = vpack.c.b16 %v1994, %v1993
        %v2023 = vpack.c.b16 %v1996, %v1995
        %v2024 = vpack.c.b16 %v1998, %v1997
        %v2025 = vpack.c.b16 %v2000, %v1999
        %v2026 = vpack.c.b16 %v2002, %v2001
        %v2027 = vpack.c.b16 %v2004, %v2003
        %v2028 = vpack.c.b16 %v2006, %v2005
        %v2029 = vpack.c.b16 %v2008, %v2007
        %v2030 = vpack.c.b16 %v2010, %v2009
        %v2031 = vpack.c.b16 %v2012, %v2011
        %v2032 = vpack.c.b16 %v2014, %v2013
        %v2033 = vpack.c.b16 %v2016, %v2015
        %v2034 = vpack.c.b16 %v2018, %v2017
        %2051 = vmatprep.subr.bf16.mxu0 0
        %2052 = vmatpush1.bf16.msra.mxu0 %v2026
        %2053 = vmatprep.subr.bf16.mxu0 0
        %2054 = vmatpush1.bf16.msra.mxu0 %v2025
        %2055 = vmatprep.subr.bf16.mxu0 0
        %2056 = vmatpush1.bf16.msra.mxu0 %v2024
        %2057 = vmatprep.subr.bf16.mxu0 0
        %2058 = vmatpush1.bf16.msra.mxu0 %v2023
        %2059 = vmatprep.subr.bf16.mxu0 0
        %2060 = vmatpush1.bf16.msra.mxu0 %v2022
        %2061 = vmatprep.subr.bf16.mxu0 0
        %2062 = vmatpush1.bf16.msra.mxu0 %v2021
        %2063 = vmatprep.subr.bf16.mxu0 0
        %2064 = vmatpush1.bf16.msra.mxu0 %v2020
        %2065 = vmatprep.subr.bf16.mxu0 0
        %2066 = vmatpush1.bf16.msra.mxu0 %v2019
        %2067 = vmatprep.subr.bf16.mxu0 0
        %2068 = vmatpush2.bf16.msra.mxu0 %v2034
        %2069 = vmatprep.subr.bf16.mxu0 0
        %2070 = vmatpush2.bf16.msra.mxu0 %v2033
        %2071 = vmatprep.subr.bf16.mxu0 0
        %2072 = vmatpush2.bf16.msra.mxu0 %v2032
        %2073 = vmatprep.subr.bf16.mxu0 0
        %2074 = vmatpush2.bf16.msra.mxu0 %v2031
        %2075 = vmatprep.subr.bf16.mxu0 0
        %2076 = vmatpush2.bf16.msra.mxu0 %v2030
        %2077 = vmatprep.subr.bf16.mxu0 0
        %2078 = vmatpush2.bf16.msra.mxu0 %v2029
        %2079 = vmatprep.subr.bf16.mxu0 0
        %2080 = vmatpush2.bf16.msra.mxu0 %v2028
        %2081 = vmatprep.subr.bf16.mxu0 0
        %2082 = vmatpush2.bf16.msra.mxu0 %v2027
        %2083 = vmatprep.mubr.bf16.mxu0 %v1921
        %2084 = vmatmul.mubr.bf16.gmra.mxu0 %v1905
        %v2085 = vpop.f32.mrf.mxu0
        %v2086 = vadd.f32 0.0, %v2085
        %v2087 = vpop.f32.mrf.mxu0
        %v2088 = vpop.f32.mrf.mxu0
        %v2089 = vadd.f32 0.0, %v2088
        %v2090 = vpop.f32.mrf.mxu0
        %2091 = vdwg.mxu0
        %vm2092 = vcmask 1044480
        %v2093 = vrot.slane %v1852, 3
        %v2094 = vrot.slane %v1853, 3
        %v2095 = vsel %vm2092, %v2093, %v2094
        %v2096 = vrot.slane %v1868, 3
        %v2097 = vrot.slane %v1871, 3
        %v2098 = vsel %vm2092, %v2096, %v2097
        %v2133 = vunpack.c.l.b16 %v1872
        %v2134 = vunpack.c.l.b16 %v1873
        %v2135 = vunpack.c.l.b16 %v1874
        %v2136 = vunpack.c.l.b16 %v1875
        %v2137 = vunpack.c.l.b16 %v1876
        %v2138 = vunpack.c.l.b16 %v1877
        %v2139 = vunpack.c.l.b16 %v1878
        %v2140 = vunpack.c.l.b16 %v1879
        %v2141 = vunpack.c.l.b16 %v1880
        %v2142 = vunpack.c.l.b16 %v1881
        %v2143 = vunpack.c.l.b16 %v1882
        %v2144 = vunpack.c.l.b16 %v1883
        %v2145 = vunpack.c.l.b16 %v1884
        %v2146 = vunpack.c.l.b16 %v1885
        %v2147 = vunpack.c.l.b16 %v1886
        %v2148 = vunpack.c.l.b16 %v1887
        %v2149 = vunpack.c.l.b16 %v1888
        %v2150 = vunpack.c.l.b16 %v1889
        %v2151 = vunpack.c.l.b16 %v1890
        %v2152 = vunpack.c.l.b16 %v1891
        %v2153 = vunpack.c.l.b16 %v1892
        %v2154 = vunpack.c.l.b16 %v1893
        %v2155 = vunpack.c.l.b16 %v1894
        %v2156 = vunpack.c.l.b16 %v1895
        %v2157 = vunpack.c.l.b16 %v1896
        %v2158 = vunpack.c.l.b16 %v1897
        %v2159 = vunpack.c.l.b16 %v1898
        %v2160 = vunpack.c.l.b16 %v1899
        %v2161 = vunpack.c.l.b16 %v1900
        %v2162 = vunpack.c.l.b16 %v1901
        %v2163 = vunpack.c.l.b16 %v1902
        %v2164 = vunpack.c.l.b16 %v1903
        %v2165 = vpack.c.b16 %v2134, %v2133
        %v2166 = vpack.c.b16 %v2136, %v2135
        %v2167 = vpack.c.b16 %v2138, %v2137
        %v2168 = vpack.c.b16 %v2140, %v2139
        %v2169 = vpack.c.b16 %v2142, %v2141
        %v2170 = vpack.c.b16 %v2144, %v2143
        %v2171 = vpack.c.b16 %v2146, %v2145
        %v2172 = vpack.c.b16 %v2148, %v2147
        %v2173 = vpack.c.b16 %v2150, %v2149
        %v2174 = vpack.c.b16 %v2152, %v2151
        %v2175 = vpack.c.b16 %v2154, %v2153
        %v2176 = vpack.c.b16 %v2156, %v2155
        %v2177 = vpack.c.b16 %v2158, %v2157
        %v2178 = vpack.c.b16 %v2160, %v2159
        %v2179 = vpack.c.b16 %v2162, %v2161
        %v2180 = vpack.c.b16 %v2164, %v2163
        %2197 = vmatprep.subr.bf16.mxu0 0
        %2198 = vmatpush1.bf16.msra.mxu0 %v2172
        %2199 = vmatprep.subr.bf16.mxu0 0
        %2200 = vmatpush1.bf16.msra.mxu0 %v2171
        %2201 = vmatprep.subr.bf16.mxu0 0
        %2202 = vmatpush1.bf16.msra.mxu0 %v2170
        %2203 = vmatprep.subr.bf16.mxu0 0
        %2204 = vmatpush1.bf16.msra.mxu0 %v2169
        %2205 = vmatprep.subr.bf16.mxu0 0
        %2206 = vmatpush1.bf16.msra.mxu0 %v2168
        %2207 = vmatprep.subr.bf16.mxu0 0
        %2208 = vmatpush1.bf16.msra.mxu0 %v2167
        %2209 = vmatprep.subr.bf16.mxu0 0
        %2210 = vmatpush1.bf16.msra.mxu0 %v2166
        %2211 = vmatprep.subr.bf16.mxu0 0
        %2212 = vmatpush1.bf16.msra.mxu0 %v2165
        %2213 = vmatprep.subr.bf16.mxu0 0
        %2214 = vmatpush2.bf16.msra.mxu0 %v2180
        %2215 = vmatprep.subr.bf16.mxu0 0
        %2216 = vmatpush2.bf16.msra.mxu0 %v2179
        %2217 = vmatprep.subr.bf16.mxu0 0
        %2218 = vmatpush2.bf16.msra.mxu0 %v2178
        %2219 = vmatprep.subr.bf16.mxu0 0
        %2220 = vmatpush2.bf16.msra.mxu0 %v2177
        %2221 = vmatprep.subr.bf16.mxu0 0
        %2222 = vmatpush2.bf16.msra.mxu0 %v2176
        %2223 = vmatprep.subr.bf16.mxu0 0
        %2224 = vmatpush2.bf16.msra.mxu0 %v2175
        %2225 = vmatprep.subr.bf16.mxu0 0
        %2226 = vmatpush2.bf16.msra.mxu0 %v2174
        %2227 = vmatprep.subr.bf16.mxu0 0
        %2228 = vmatpush2.bf16.msra.mxu0 %v2173
        %2229 = vmatprep.mubr.bf16.mxu0 %v2098
        %2230 = vmatmul.mubr.bf16.gmra.mxu0 %v2095
        %v2231 = vpop.f32.mrf.mxu0
        %v2232 = vadd.f32 %v2086, %v2231
        %v2233 = vpop.f32.mrf.mxu0
        %v2234 = vpop.f32.mrf.mxu0
        %v2235 = vadd.f32 %v2089, %v2234
        %v2236 = vpop.f32.mrf.mxu0
        %2237 = vdwg.mxu0
        %v2238 = vld [vmem:[#allocation3 + $0x8] sm:$0xe]
        %v2239 = vld [vmem:[#allocation9 + $0x100] sm:$0xf]
        %v2240 = vld [vmem:[#allocation9 + $0x104] sm:$0xf]
        %v2241 = vld [vmem:[#allocation9 + $0x108] sm:$0xf]
        %v2242 = vld [vmem:[#allocation9 + $0x10c] sm:$0xf]
        %v2243 = vld [vmem:[#allocation9 + $0x110] sm:$0xf]
        %v2244 = vld [vmem:[#allocation9 + $0x114] sm:$0xf]
        %v2245 = vld [vmem:[#allocation9 + $0x118] sm:$0xf]
        %v2246 = vld [vmem:[#allocation9 + $0x11c] sm:$0xf]
        %v2247 = vld [vmem:[#allocation9 + $0x120] sm:$0xf]
        %v2248 = vld [vmem:[#allocation9 + $0x124] sm:$0xf]
        %v2249 = vld [vmem:[#allocation9 + $0x128] sm:$0xf]
        %v2250 = vld [vmem:[#allocation9 + $0x12c] sm:$0xf]
        %v2251 = vld [vmem:[#allocation9 + $0x130] sm:$0xf]
        %v2252 = vld [vmem:[#allocation9 + $0x134] sm:$0xf]
        %v2253 = vld [vmem:[#allocation9 + $0x138] sm:$0xf]
        %v2254 = vld [vmem:[#allocation9 + $0x13c] sm:$0xf]
        %v2256 = vunpack.c.l.b16 %v2238
        %v2257 = vpack.c.b16 %v1855, %v2256
        %vm2258 = vcmask 1046528
        %v2259 = vrot.slane %v2257, 1
        %v2260 = vrot.slane %v1909, 1
        %v2261 = vsel %vm2258, %v2259, %v2260
        %v2279 = vunpack.c.l.b16 %v2239
        %v2280 = vunpack.c.l.b16 %v2240
        %v2281 = vunpack.c.l.b16 %v2241
        %v2282 = vunpack.c.l.b16 %v2242
        %v2283 = vunpack.c.l.b16 %v2243
        %v2284 = vunpack.c.l.b16 %v2244
        %v2285 = vunpack.c.l.b16 %v2245
        %v2286 = vunpack.c.l.b16 %v2246
        %v2287 = vunpack.c.l.b16 %v2247
        %v2288 = vunpack.c.l.b16 %v2248
        %v2289 = vunpack.c.l.b16 %v2249
        %v2290 = vunpack.c.l.b16 %v2250
        %v2291 = vunpack.c.l.b16 %v2251
        %v2292 = vunpack.c.l.b16 %v2252
        %v2293 = vunpack.c.l.b16 %v2253
        %v2294 = vunpack.c.l.b16 %v2254
        %v2295 = vpack.c.b16 %v2280, %v2279
        %v2296 = vpack.c.b16 %v2282, %v2281
        %v2297 = vpack.c.b16 %v2284, %v2283
        %v2298 = vpack.c.b16 %v2286, %v2285
        %v2299 = vpack.c.b16 %v2288, %v2287
        %v2300 = vpack.c.b16 %v2290, %v2289
        %v2301 = vpack.c.b16 %v2292, %v2291
        %v2302 = vpack.c.b16 %v2294, %v2293
        %2311 = vmatprep.subr.bf16.mxu0 0
        %2312 = vmatpush1.bf16.msra.mxu0 %v2302
        %2313 = vmatprep.subr.bf16.mxu0 0
        %2314 = vmatpush1.bf16.msra.mxu0 %v2301
        %2315 = vmatprep.subr.bf16.mxu0 0
        %2316 = vmatpush1.bf16.msra.mxu0 %v2300
        %2317 = vmatprep.subr.bf16.mxu0 0
        %2318 = vmatpush1.bf16.msra.mxu0 %v2299
        %2319 = vmatprep.subr.bf16.mxu0 0
        %2320 = vmatpush1.bf16.msra.mxu0 %v2298
        %2321 = vmatprep.subr.bf16.mxu0 0
        %2322 = vmatpush1.bf16.msra.mxu0 %v2297
        %2323 = vmatprep.subr.bf16.mxu0 0
        %2324 = vmatpush1.bf16.msra.mxu0 %v2296
        %2325 = vmatprep.subr.bf16.mxu0 0
        %2326 = vmatpush1.bf16.msra.mxu0 %v2295
        %2327 = vmatprep.subr.bf16.mxu0 0
        %2328 = vmatpush2.bf16.msra.mxu0 0
        %2329 = vmatprep.subr.bf16.mxu0 0
        %2330 = vmatpush2.bf16.msra.mxu0 0
        %2331 = vmatprep.subr.bf16.mxu0 0
        %2332 = vmatpush2.bf16.msra.mxu0 0
        %2333 = vmatprep.subr.bf16.mxu0 0
        %2334 = vmatpush2.bf16.msra.mxu0 0
        %2335 = vmatprep.subr.bf16.mxu0 0
        %2336 = vmatpush2.bf16.msra.mxu0 0
        %2337 = vmatprep.subr.bf16.mxu0 0
        %2338 = vmatpush2.bf16.msra.mxu0 0
        %2339 = vmatprep.subr.bf16.mxu0 0
        %2340 = vmatpush2.bf16.msra.mxu0 0
        %2341 = vmatprep.subr.bf16.mxu0 0
        %2342 = vmatpush2.bf16.msra.mxu0 0
        %2343 = vmatprep.mubr.bf16.mxu0 0
        %2344 = vmatmul.mubr.bf16.gmra.mxu0 %v2261
        %v2345 = vpop.f32.mrf.mxu0
        %v2346 = vadd.f32 0.0, %v2345
        %v2347 = vpop.f32.mrf.mxu0
        %v2348 = vpop.f32.mrf.mxu0
        %v2349 = vadd.f32 0.0, %v2348
        %v2350 = vpop.f32.mrf.mxu0
        %2351 = vdwg.mxu0
        %v2352 = vadd.f32 %v2232, %v2346
        %v2353 = vadd.f32 %v2235, %v2349
        %v2355 = vlaneseq
        %v2356 = vshrl.u32 %v2355, 7
        %v2357 = vsub.s32 0, %v2356
        %v2358 = vrot.slane %v1841, %v2357
        %v2360 = vadd.f32 %v2352, %v2358
        %v2361 = vadd.f32 %v2353, %v2358
        %v2362 = vmax.f32 %v2360, 0.0
        %v2363 = vmax.f32 %v2361, 0.0
        %v2364 = vpack.c.bf16 %v2363, %v2362
        %v2366 = vunpack.c.l.b16 %v2364
        %v2367 = vunpack.c.h.b16 %v2364
        %v2368 = vpack.c.b16 %v2366, %v2366
        %v2369 = vpack.c.b16 %v2367, %v2367
        %2372 = vst [vmem:[#allocation4 + $0x8] sm:$0xf] %v2368
        %2373 = vst [vmem:[#allocation4 + $0xc] sm:$0xf] %v2369
        %v2374 = vld [vmem:[%s6] sm:$0x1]
        %v2375 = vld [vmem:[%s8] sm:$0x1]
        %v2376 = vld [vmem:[#allocation4 + $0x4] sm:$0x8]
        %v2377 = vld [vmem:[#allocation4 + $0x8] sm:$0xf]
        %v2378 = vld [vmem:[#allocation4 + $0xc] sm:$0xf]
        %v2382 = vunpack.c.l.b16 %v2376
        %v2383 = vunpack.c.l.b16 %v2377
        %v2384 = vunpack.c.l.b16 %v2378
        %v2385 = vpack.c.b16 %v2383, %v2382
        %v2386 = vpack.c.b16 %v2384, %v2384
        %v2387 = vpack.c.b16 %v2384, %v2383
        %v2389 = vshrl.u32 %v2387, 16
        %v2391 = vrot.slane %v2389, 4
        %v2392 = vshll.u32 %v2387, 16
        %v2394 = vrot.slane %v2392, 5
        %v2395 = vor.u32 %v2391, %v2394
        %v2396 = vld [vmem:[#allocation11] sm:$0xf]
        %v2397 = vld [vmem:[#allocation11 + $0x4] sm:$0xf]
        %v2398 = vld [vmem:[#allocation11 + $0x8] sm:$0xf]
        %v2399 = vld [vmem:[#allocation11 + $0xc] sm:$0xf]
        %v2400 = vld [vmem:[#allocation11 + $0x10] sm:$0xf]
        %v2401 = vld [vmem:[#allocation11 + $0x14] sm:$0xf]
        %v2402 = vld [vmem:[#allocation11 + $0x18] sm:$0xf]
        %v2403 = vld [vmem:[#allocation11 + $0x1c] sm:$0xf]
        %v2404 = vld [vmem:[#allocation11 + $0x20] sm:$0xf]
        %v2405 = vld [vmem:[#allocation11 + $0x24] sm:$0xf]
        %v2406 = vld [vmem:[#allocation11 + $0x28] sm:$0xf]
        %v2407 = vld [vmem:[#allocation11 + $0x2c] sm:$0xf]
        %v2408 = vld [vmem:[#allocation11 + $0x30] sm:$0xf]
        %v2409 = vld [vmem:[#allocation11 + $0x34] sm:$0xf]
        %v2410 = vld [vmem:[#allocation11 + $0x38] sm:$0xf]
        %v2411 = vld [vmem:[#allocation11 + $0x3c] sm:$0xf]
        %v2412 = vld [vmem:[#allocation11 + $0x40] sm:$0xf]
        %v2413 = vld [vmem:[#allocation11 + $0x44] sm:$0xf]
        %v2414 = vld [vmem:[#allocation11 + $0x48] sm:$0xf]
        %v2415 = vld [vmem:[#allocation11 + $0x4c] sm:$0xf]
        %v2416 = vld [vmem:[#allocation11 + $0x50] sm:$0xf]
        %v2417 = vld [vmem:[#allocation11 + $0x54] sm:$0xf]
        %v2418 = vld [vmem:[#allocation11 + $0x58] sm:$0xf]
        %v2419 = vld [vmem:[#allocation11 + $0x5c] sm:$0xf]
        %v2420 = vld [vmem:[#allocation11 + $0x60] sm:$0xf]
        %v2421 = vld [vmem:[#allocation11 + $0x64] sm:$0xf]
        %v2422 = vld [vmem:[#allocation11 + $0x68] sm:$0xf]
        %v2423 = vld [vmem:[#allocation11 + $0x6c] sm:$0xf]
        %v2424 = vld [vmem:[#allocation11 + $0x70] sm:$0xf]
        %v2425 = vld [vmem:[#allocation11 + $0x74] sm:$0xf]
        %v2426 = vld [vmem:[#allocation11 + $0x78] sm:$0xf]
        %v2427 = vld [vmem:[#allocation11 + $0x7c] sm:$0xf]
        %v2428 = vld [vmem:[#allocation4 + $0x10] sm:$0x1]
        %v2429 = vld [vmem:[#allocation11 + $0x80] sm:$0xf]
        %v2430 = vld [vmem:[#allocation11 + $0x84] sm:$0xf]
        %v2431 = vld [vmem:[#allocation11 + $0x88] sm:$0xf]
        %v2432 = vld [vmem:[#allocation11 + $0x8c] sm:$0xf]
        %v2433 = vld [vmem:[#allocation11 + $0x90] sm:$0xf]
        %v2434 = vld [vmem:[#allocation11 + $0x94] sm:$0xf]
        %v2435 = vld [vmem:[#allocation11 + $0x98] sm:$0xf]
        %v2436 = vld [vmem:[#allocation11 + $0x9c] sm:$0xf]
        %v2437 = vld [vmem:[#allocation11 + $0xa0] sm:$0xf]
        %v2438 = vld [vmem:[#allocation11 + $0xa4] sm:$0xf]
        %v2439 = vld [vmem:[#allocation11 + $0xa8] sm:$0xf]
        %v2440 = vld [vmem:[#allocation11 + $0xac] sm:$0xf]
        %v2441 = vld [vmem:[#allocation11 + $0xb0] sm:$0xf]
        %v2442 = vld [vmem:[#allocation11 + $0xb4] sm:$0xf]
        %v2443 = vld [vmem:[#allocation11 + $0xb8] sm:$0xf]
        %v2444 = vld [vmem:[#allocation11 + $0xbc] sm:$0xf]
        %v2446 = vunpack.c.l.b16 %v2428
        %v2447 = vpack.c.b16 %v2446, %v2446
        %v2448 = vrot.slane %v2392, 1
        %v2449 = vor.u32 %v2389, %v2448
        %v2451 = vshll.u32 %v2447, 16
        %v2453 = vrot.slane %v2451, 1
        %v2454 = vsel %vm955, %v2449, %v2453
        %v2472 = vunpack.c.l.b16 %v2429
        %v2473 = vunpack.c.l.b16 %v2430
        %v2474 = vunpack.c.l.b16 %v2431
        %v2475 = vunpack.c.l.b16 %v2432
        %v2476 = vunpack.c.l.b16 %v2433
        %v2477 = vunpack.c.l.b16 %v2434
        %v2478 = vunpack.c.l.b16 %v2435
        %v2479 = vunpack.c.l.b16 %v2436
        %v2480 = vunpack.c.l.b16 %v2437
        %v2481 = vunpack.c.l.b16 %v2438
        %v2482 = vunpack.c.l.b16 %v2439
        %v2483 = vunpack.c.l.b16 %v2440
        %v2484 = vunpack.c.l.b16 %v2441
        %v2485 = vunpack.c.l.b16 %v2442
        %v2486 = vunpack.c.l.b16 %v2443
        %v2487 = vunpack.c.l.b16 %v2444
        %v2488 = vpack.c.b16 %v2473, %v2472
        %v2489 = vpack.c.b16 %v2475, %v2474
        %v2490 = vpack.c.b16 %v2477, %v2476
        %v2491 = vpack.c.b16 %v2479, %v2478
        %v2492 = vpack.c.b16 %v2481, %v2480
        %v2493 = vpack.c.b16 %v2483, %v2482
        %v2494 = vpack.c.b16 %v2485, %v2484
        %v2495 = vpack.c.b16 %v2487, %v2486
        %2504 = vmatprep.subr.bf16.mxu0 0
        %2505 = vmatpush1.bf16.msra.mxu0 %v2495
        %2506 = vmatprep.subr.bf16.mxu0 0
        %2507 = vmatpush1.bf16.msra.mxu0 %v2494
        %2508 = vmatprep.subr.bf16.mxu0 0
        %2509 = vmatpush1.bf16.msra.mxu0 %v2493
        %2510 = vmatprep.subr.bf16.mxu0 0
        %2511 = vmatpush1.bf16.msra.mxu0 %v2492
        %2512 = vmatprep.subr.bf16.mxu0 0
        %2513 = vmatpush1.bf16.msra.mxu0 %v2491
        %2514 = vmatprep.subr.bf16.mxu0 0
        %2515 = vmatpush1.bf16.msra.mxu0 %v2490
        %2516 = vmatprep.subr.bf16.mxu0 0
        %2517 = vmatpush1.bf16.msra.mxu0 %v2489
        %2518 = vmatprep.subr.bf16.mxu0 0
        %2519 = vmatpush1.bf16.msra.mxu0 %v2488
        %2520 = vmatprep.subr.bf16.mxu0 0
        %2521 = vmatpush2.bf16.msra.mxu0 0
        %2522 = vmatprep.subr.bf16.mxu0 0
        %2523 = vmatpush2.bf16.msra.mxu0 0
        %2524 = vmatprep.subr.bf16.mxu0 0
        %2525 = vmatpush2.bf16.msra.mxu0 0
        %2526 = vmatprep.subr.bf16.mxu0 0
        %2527 = vmatpush2.bf16.msra.mxu0 0
        %2528 = vmatprep.subr.bf16.mxu0 0
        %2529 = vmatpush2.bf16.msra.mxu0 0
        %2530 = vmatprep.subr.bf16.mxu0 0
        %2531 = vmatpush2.bf16.msra.mxu0 0
        %2532 = vmatprep.subr.bf16.mxu0 0
        %2533 = vmatpush2.bf16.msra.mxu0 0
        %2534 = vmatprep.subr.bf16.mxu0 0
        %2535 = vmatpush2.bf16.msra.mxu0 0
        %2536 = vmatprep.mubr.bf16.mxu0 0
        %2537 = vmatmul.mubr.bf16.gmra.mxu0 %v2454
        %v2538 = vpop.f32.mrf.mxu0
        %v2539 = vadd.f32 0.0, %v2538
        %v2540 = vpop.f32.mrf.mxu0
        %v2541 = vpop.f32.mrf.mxu0
        %v2542 = vadd.f32 0.0, %v2541
        %v2543 = vpop.f32.mrf.mxu0
        %2544 = vdwg.mxu0
        %v2546 = vshrl.u32 %v2385, 16
        %v2548 = vrot.slane %v2546, 3
        %v2549 = vshll.u32 %v2385, 16
        %v2551 = vrot.slane %v2549, 4
        %v2552 = vor.u32 %v2548, %v2551
        %v2554 = vshrl.u32 %v2386, 16
        %v2556 = vrot.slane %v2554, 3
        %v2557 = vshll.u32 %v2386, 16
        %v2559 = vrot.slane %v2557, 4
        %v2560 = vor.u32 %v2556, %v2559
        %v2561 = vsel %vm1048, %v2552, %v2560
        %v2563 = vshrl.u32 %v2395, 16
        %v2565 = vrot.slane %v2563, 3
        %v2566 = vshll.u32 %v2395, 16
        %v2568 = vrot.slane %v2566, 4
        %v2569 = vor.u32 %v2565, %v2568
        %v2570 = vsel %vm1048, %v2569, %v2569
        %v2605 = vunpack.c.l.b16 %v2396
        %v2606 = vunpack.c.l.b16 %v2397
        %v2607 = vunpack.c.l.b16 %v2398
        %v2608 = vunpack.c.l.b16 %v2399
        %v2609 = vunpack.c.l.b16 %v2400
        %v2610 = vunpack.c.l.b16 %v2401
        %v2611 = vunpack.c.l.b16 %v2402
        %v2612 = vunpack.c.l.b16 %v2403
        %v2613 = vunpack.c.l.b16 %v2404
        %v2614 = vunpack.c.l.b16 %v2405
        %v2615 = vunpack.c.l.b16 %v2406
        %v2616 = vunpack.c.l.b16 %v2407
        %v2617 = vunpack.c.l.b16 %v2408
        %v2618 = vunpack.c.l.b16 %v2409
        %v2619 = vunpack.c.l.b16 %v2410
        %v2620 = vunpack.c.l.b16 %v2411
        %v2621 = vunpack.c.l.b16 %v2412
        %v2622 = vunpack.c.l.b16 %v2413
        %v2623 = vunpack.c.l.b16 %v2414
        %v2624 = vunpack.c.l.b16 %v2415
        %v2625 = vunpack.c.l.b16 %v2416
        %v2626 = vunpack.c.l.b16 %v2417
        %v2627 = vunpack.c.l.b16 %v2418
        %v2628 = vunpack.c.l.b16 %v2419
        %v2629 = vunpack.c.l.b16 %v2420
        %v2630 = vunpack.c.l.b16 %v2421
        %v2631 = vunpack.c.l.b16 %v2422
        %v2632 = vunpack.c.l.b16 %v2423
        %v2633 = vunpack.c.l.b16 %v2424
        %v2634 = vunpack.c.l.b16 %v2425
        %v2635 = vunpack.c.l.b16 %v2426
        %v2636 = vunpack.c.l.b16 %v2427
        %v2637 = vpack.c.b16 %v2606, %v2605
        %v2638 = vpack.c.b16 %v2608, %v2607
        %v2639 = vpack.c.b16 %v2610, %v2609
        %v2640 = vpack.c.b16 %v2612, %v2611
        %v2641 = vpack.c.b16 %v2614, %v2613
        %v2642 = vpack.c.b16 %v2616, %v2615
        %v2643 = vpack.c.b16 %v2618, %v2617
        %v2644 = vpack.c.b16 %v2620, %v2619
        %v2645 = vpack.c.b16 %v2622, %v2621
        %v2646 = vpack.c.b16 %v2624, %v2623
        %v2647 = vpack.c.b16 %v2626, %v2625
        %v2648 = vpack.c.b16 %v2628, %v2627
        %v2649 = vpack.c.b16 %v2630, %v2629
        %v2650 = vpack.c.b16 %v2632, %v2631
        %v2651 = vpack.c.b16 %v2634, %v2633
        %v2652 = vpack.c.b16 %v2636, %v2635
        %2669 = vmatprep.subr.bf16.mxu0 0
        %2670 = vmatpush1.bf16.msra.mxu0 %v2644
        %2671 = vmatprep.subr.bf16.mxu0 0
        %2672 = vmatpush1.bf16.msra.mxu0 %v2643
        %2673 = vmatprep.subr.bf16.mxu0 0
        %2674 = vmatpush1.bf16.msra.mxu0 %v2642
        %2675 = vmatprep.subr.bf16.mxu0 0
        %2676 = vmatpush1.bf16.msra.mxu0 %v2641
        %2677 = vmatprep.subr.bf16.mxu0 0
        %2678 = vmatpush1.bf16.msra.mxu0 %v2640
        %2679 = vmatprep.subr.bf16.mxu0 0
        %2680 = vmatpush1.bf16.msra.mxu0 %v2639
        %2681 = vmatprep.subr.bf16.mxu0 0
        %2682 = vmatpush1.bf16.msra.mxu0 %v2638
        %2683 = vmatprep.subr.bf16.mxu0 0
        %2684 = vmatpush1.bf16.msra.mxu0 %v2637
        %2685 = vmatprep.subr.bf16.mxu0 0
        %2686 = vmatpush2.bf16.msra.mxu0 %v2652
        %2687 = vmatprep.subr.bf16.mxu0 0
        %2688 = vmatpush2.bf16.msra.mxu0 %v2651
        %2689 = vmatprep.subr.bf16.mxu0 0
        %2690 = vmatpush2.bf16.msra.mxu0 %v2650
        %2691 = vmatprep.subr.bf16.mxu0 0
        %2692 = vmatpush2.bf16.msra.mxu0 %v2649
        %2693 = vmatprep.subr.bf16.mxu0 0
        %2694 = vmatpush2.bf16.msra.mxu0 %v2648
        %2695 = vmatprep.subr.bf16.mxu0 0
        %2696 = vmatpush2.bf16.msra.mxu0 %v2647
        %2697 = vmatprep.subr.bf16.mxu0 0
        %2698 = vmatpush2.bf16.msra.mxu0 %v2646
        %2699 = vmatprep.subr.bf16.mxu0 0
        %2700 = vmatpush2.bf16.msra.mxu0 %v2645
        %2701 = vmatprep.mubr.bf16.mxu0 %v2570
        %2702 = vmatmul.mubr.bf16.gmra.mxu0 %v2561
        %v2703 = vpop.f32.mrf.mxu0
        %v2704 = vadd.f32 %v2539, %v2703
        %v2705 = vpop.f32.mrf.mxu0
        %v2706 = vpop.f32.mrf.mxu0
        %v2707 = vadd.f32 %v2542, %v2706
        %v2708 = vpop.f32.mrf.mxu0
        %2709 = vdwg.mxu0
        %v2711 = vlaneseq
        %v2712 = vshrl.u32 %v2711, 7
        %v2713 = vsub.s32 0, %v2712
        %v2714 = vrot.slane %v2374, %v2713
        %v2716 = vadd.f32 %v2704, %v2714
        %v2717 = vadd.f32 %v2707, %v2714
        %v2718 = vmax.f32 %v2716, 0.0
        %v2719 = vmax.f32 %v2717, 0.0
        %v2720 = vld [vmem:[#allocation2 + $0x8] sm:$0xf]
        %v2721 = vld [vmem:[#allocation2 + $0xc] sm:$0xf]
        %v2722 = vld [vmem:[#allocation12] sm:$0xf]
        %v2723 = vld [vmem:[#allocation12 + $0x4] sm:$0xf]
        %v2724 = vld [vmem:[#allocation12 + $0x8] sm:$0xf]
        %v2725 = vld [vmem:[#allocation12 + $0xc] sm:$0xf]
        %v2726 = vld [vmem:[#allocation12 + $0x10] sm:$0xf]
        %v2727 = vld [vmem:[#allocation12 + $0x14] sm:$0xf]
        %v2728 = vld [vmem:[#allocation12 + $0x18] sm:$0xf]
        %v2729 = vld [vmem:[#allocation12 + $0x1c] sm:$0xf]
        %v2730 = vld [vmem:[#allocation12 + $0x20] sm:$0xf]
        %v2731 = vld [vmem:[#allocation12 + $0x24] sm:$0xf]
        %v2732 = vld [vmem:[#allocation12 + $0x28] sm:$0xf]
        %v2733 = vld [vmem:[#allocation12 + $0x2c] sm:$0xf]
        %v2734 = vld [vmem:[#allocation12 + $0x30] sm:$0xf]
        %v2735 = vld [vmem:[#allocation12 + $0x34] sm:$0xf]
        %v2736 = vld [vmem:[#allocation12 + $0x38] sm:$0xf]
        %v2737 = vld [vmem:[#allocation12 + $0x3c] sm:$0xf]
        %v2739 = vlaneseq
        %v2740 = vshrl.u32 %v2739, 7
        %v2741 = vsub.s32 0, %v2740
        %v2742 = vrot.slane %v2375, %v2741
        %v2746 = vunpack.c.l.b16 %v2720
        %v2747 = vunpack.c.l.b16 %v2721
        %v2748 = vpack.c.b16 %v2747, %v2746
        %v2766 = vunpack.c.l.b16 %v2722
        %v2767 = vunpack.c.l.b16 %v2723
        %v2768 = vunpack.c.l.b16 %v2724
        %v2769 = vunpack.c.l.b16 %v2725
        %v2770 = vunpack.c.l.b16 %v2726
        %v2771 = vunpack.c.l.b16 %v2727
        %v2772 = vunpack.c.l.b16 %v2728
        %v2773 = vunpack.c.l.b16 %v2729
        %v2774 = vunpack.c.l.b16 %v2730
        %v2775 = vunpack.c.l.b16 %v2731
        %v2776 = vunpack.c.l.b16 %v2732
        %v2777 = vunpack.c.l.b16 %v2733
        %v2778 = vunpack.c.l.b16 %v2734
        %v2779 = vunpack.c.l.b16 %v2735
        %v2780 = vunpack.c.l.b16 %v2736
        %v2781 = vunpack.c.l.b16 %v2737
        %v2782 = vpack.c.b16 %v2767, %v2766
        %v2783 = vpack.c.b16 %v2769, %v2768
        %v2784 = vpack.c.b16 %v2771, %v2770
        %v2785 = vpack.c.b16 %v2773, %v2772
        %v2786 = vpack.c.b16 %v2775, %v2774
        %v2787 = vpack.c.b16 %v2777, %v2776
        %v2788 = vpack.c.b16 %v2779, %v2778
        %v2789 = vpack.c.b16 %v2781, %v2780
        %2798 = vmatprep.subr.bf16.mxu0 0
        %2799 = vmatpush1.bf16.msra.mxu0 %v2789
        %2800 = vmatprep.subr.bf16.mxu0 0
        %2801 = vmatpush1.bf16.msra.mxu0 %v2788
        %2802 = vmatprep.subr.bf16.mxu0 0
        %2803 = vmatpush1.bf16.msra.mxu0 %v2787
        %2804 = vmatprep.subr.bf16.mxu0 0
        %2805 = vmatpush1.bf16.msra.mxu0 %v2786
        %2806 = vmatprep.subr.bf16.mxu0 0
        %2807 = vmatpush1.bf16.msra.mxu0 %v2785
        %2808 = vmatprep.subr.bf16.mxu0 0
        %2809 = vmatpush1.bf16.msra.mxu0 %v2784
        %2810 = vmatprep.subr.bf16.mxu0 0
        %2811 = vmatpush1.bf16.msra.mxu0 %v2783
        %2812 = vmatprep.subr.bf16.mxu0 0
        %2813 = vmatpush1.bf16.msra.mxu0 %v2782
        %2814 = vmatprep.subr.bf16.mxu0 0
        %2815 = vmatpush2.bf16.msra.mxu0 0
        %2816 = vmatprep.subr.bf16.mxu0 0
        %2817 = vmatpush2.bf16.msra.mxu0 0
        %2818 = vmatprep.subr.bf16.mxu0 0
        %2819 = vmatpush2.bf16.msra.mxu0 0
        %2820 = vmatprep.subr.bf16.mxu0 0
        %2821 = vmatpush2.bf16.msra.mxu0 0
        %2822 = vmatprep.subr.bf16.mxu0 0
        %2823 = vmatpush2.bf16.msra.mxu0 0
        %2824 = vmatprep.subr.bf16.mxu0 0
        %2825 = vmatpush2.bf16.msra.mxu0 0
        %2826 = vmatprep.subr.bf16.mxu0 0
        %2827 = vmatpush2.bf16.msra.mxu0 0
        %2828 = vmatprep.subr.bf16.mxu0 0
        %2829 = vmatpush2.bf16.msra.mxu0 0
        %2830 = vmatprep.mubr.bf16.mxu0 0
        %2831 = vmatmul.mubr.bf16.gmra.mxu0 %v2748
        %v2832 = vpop.f32.mrf.mxu0
        %v2833 = vadd.f32 %v2742, %v2832
        %v2834 = vpop.f32.mrf.mxu0
        %v2835 = vpop.f32.mrf.mxu0
        %v2836 = vadd.f32 %v2742, %v2835
        %v2837 = vpop.f32.mrf.mxu0
        %2838 = vdwg.mxu0
        %v2839 = vadd.f32 %v2718, %v2833
        %v2840 = vadd.f32 %v2719, %v2836
        %v2841 = vpack.c.bf16 %v2840, %v2839
        %v2843 = vunpack.c.l.b16 %v2841
        %v2844 = vunpack.c.h.b16 %v2841
        %v2845 = vpack.c.b16 %v2843, %v2843
        %v2846 = vpack.c.b16 %v2844, %v2844
        %2849 = vst [vmem:[#allocation3 + $0x8] sm:$0xf] %v2845
        %2850 = vst [vmem:[#allocation3 + $0xc] sm:$0xf] %v2846
        %v2851 = vld [vmem:[%s10] sm:$0x1]
        %v2852 = vld [vmem:[#allocation3 + $0x4] sm:$0xc]
        %v2853 = vld [vmem:[#allocation3 + $0x8] sm:$0xf]
        %v2854 = vld [vmem:[#allocation3 + $0xc] sm:$0x7]
        %v2855 = vld [vmem:[#allocation3 + $0x4] sm:$0x8]
        %v2859 = vunpack.c.l.b16 %v2852
        %v2860 = vunpack.c.l.b16 %v2853
        %v2861 = vunpack.c.l.b16 %v2854
        %v2862 = vpack.c.b16 %v2860, %v2859
        %v2863 = vpack.c.b16 %v2861, %v2861
        %v2865 = vunpack.c.l.b16 %v2855
        %v2866 = vpack.c.b16 %v2860, %v2865
        %v2868 = vshrl.u32 %v2866, 16
        %v2870 = vshll.u32 %v2866, 16
        %v2872 = vrot.slane %v2870, 1
        %v2873 = vor.u32 %v2868, %v2872
        %v2875 = vshll.u32 %v2863, 16
        %v2877 = vrot.slane %v2875, 1
        %v2878 = vsel %vm955, %v2873, %v2877
        %v2879 = vshrl.u32 %v2863, 16
        %v2881 = vor.u32 %v2879, %v2877
        %v2882 = vld [vmem:[#allocation14] sm:$0xf]
        %v2883 = vld [vmem:[#allocation14 + $0x4] sm:$0xf]
        %v2884 = vld [vmem:[#allocation14 + $0x8] sm:$0xf]
        %v2885 = vld [vmem:[#allocation14 + $0xc] sm:$0xf]
        %v2886 = vld [vmem:[#allocation14 + $0x10] sm:$0xf]
        %v2887 = vld [vmem:[#allocation14 + $0x14] sm:$0xf]
        %v2888 = vld [vmem:[#allocation14 + $0x18] sm:$0xf]
        %v2889 = vld [vmem:[#allocation14 + $0x1c] sm:$0xf]
        %v2890 = vld [vmem:[#allocation14 + $0x20] sm:$0xf]
        %v2891 = vld [vmem:[#allocation14 + $0x24] sm:$0xf]
        %v2892 = vld [vmem:[#allocation14 + $0x28] sm:$0xf]
        %v2893 = vld [vmem:[#allocation14 + $0x2c] sm:$0xf]
        %v2894 = vld [vmem:[#allocation14 + $0x30] sm:$0xf]
        %v2895 = vld [vmem:[#allocation14 + $0x34] sm:$0xf]
        %v2896 = vld [vmem:[#allocation14 + $0x38] sm:$0xf]
        %v2897 = vld [vmem:[#allocation14 + $0x3c] sm:$0xf]
        %v2898 = vld [vmem:[#allocation14 + $0x40] sm:$0xf]
        %v2899 = vld [vmem:[#allocation14 + $0x44] sm:$0xf]
        %v2900 = vld [vmem:[#allocation14 + $0x48] sm:$0xf]
        %v2901 = vld [vmem:[#allocation14 + $0x4c] sm:$0xf]
        %v2902 = vld [vmem:[#allocation14 + $0x50] sm:$0xf]
        %v2903 = vld [vmem:[#allocation14 + $0x54] sm:$0xf]
        %v2904 = vld [vmem:[#allocation14 + $0x58] sm:$0xf]
        %v2905 = vld [vmem:[#allocation14 + $0x5c] sm:$0xf]
        %v2906 = vld [vmem:[#allocation14 + $0x60] sm:$0xf]
        %v2907 = vld [vmem:[#allocation14 + $0x64] sm:$0xf]
        %v2908 = vld [vmem:[#allocation14 + $0x68] sm:$0xf]
        %v2909 = vld [vmem:[#allocation14 + $0x6c] sm:$0xf]
        %v2910 = vld [vmem:[#allocation14 + $0x70] sm:$0xf]
        %v2911 = vld [vmem:[#allocation14 + $0x74] sm:$0xf]
        %v2912 = vld [vmem:[#allocation14 + $0x78] sm:$0xf]
        %v2913 = vld [vmem:[#allocation14 + $0x7c] sm:$0xf]
        %v2914 = vld [vmem:[#allocation3 + $0xc] sm:$0xf]
        %v2916 = vunpack.c.l.b16 %v2914
        %v2917 = vpack.c.b16 %v2916, %v2916
        %v2918 = vpack.c.b16 %v2916, %v2860
        %v2920 = vshrl.u32 %v2918, 16
        %v2922 = vrot.slane %v2920, 4
        %v2923 = vshll.u32 %v2918, 16
        %v2925 = vrot.slane %v2923, 5
        %v2926 = vor.u32 %v2922, %v2925
        %v2927 = vld [vmem:[#allocation14 + $0x80] sm:$0xf]
        %v2928 = vld [vmem:[#allocation14 + $0x84] sm:$0xf]
        %v2929 = vld [vmem:[#allocation14 + $0x88] sm:$0xf]
        %v2930 = vld [vmem:[#allocation14 + $0x8c] sm:$0xf]
        %v2931 = vld [vmem:[#allocation14 + $0x90] sm:$0xf]
        %v2932 = vld [vmem:[#allocation14 + $0x94] sm:$0xf]
        %v2933 = vld [vmem:[#allocation14 + $0x98] sm:$0xf]
        %v2934 = vld [vmem:[#allocation14 + $0x9c] sm:$0xf]
        %v2935 = vld [vmem:[#allocation14 + $0xa0] sm:$0xf]
        %v2936 = vld [vmem:[#allocation14 + $0xa4] sm:$0xf]
        %v2937 = vld [vmem:[#allocation14 + $0xa8] sm:$0xf]
        %v2938 = vld [vmem:[#allocation14 + $0xac] sm:$0xf]
        %v2939 = vld [vmem:[#allocation14 + $0xb0] sm:$0xf]
        %v2940 = vld [vmem:[#allocation14 + $0xb4] sm:$0xf]
        %v2941 = vld [vmem:[#allocation14 + $0xb8] sm:$0xf]
        %v2942 = vld [vmem:[#allocation14 + $0xbc] sm:$0xf]
        %v2943 = vld [vmem:[#allocation14 + $0xc0] sm:$0xf]
        %v2944 = vld [vmem:[#allocation14 + $0xc4] sm:$0xf]
        %v2945 = vld [vmem:[#allocation14 + $0xc8] sm:$0xf]
        %v2946 = vld [vmem:[#allocation14 + $0xcc] sm:$0xf]
        %v2947 = vld [vmem:[#allocation14 + $0xd0] sm:$0xf]
        %v2948 = vld [vmem:[#allocation14 + $0xd4] sm:$0xf]
        %v2949 = vld [vmem:[#allocation14 + $0xd8] sm:$0xf]
        %v2950 = vld [vmem:[#allocation14 + $0xdc] sm:$0xf]
        %v2951 = vld [vmem:[#allocation14 + $0xe0] sm:$0xf]
        %v2952 = vld [vmem:[#allocation14 + $0xe4] sm:$0xf]
        %v2953 = vld [vmem:[#allocation14 + $0xe8] sm:$0xf]
        %v2954 = vld [vmem:[#allocation14 + $0xec] sm:$0xf]
        %v2955 = vld [vmem:[#allocation14 + $0xf0] sm:$0xf]
        %v2956 = vld [vmem:[#allocation14 + $0xf4] sm:$0xf]
        %v2957 = vld [vmem:[#allocation14 + $0xf8] sm:$0xf]
        %v2958 = vld [vmem:[#allocation14 + $0xfc] sm:$0xf]
        %v2959 = vrot.slane %v2868, 3
        %v2960 = vrot.slane %v2870, 4
        %v2961 = vor.u32 %v2959, %v2960
        %v2963 = vshrl.u32 %v2917, 16
        %v2965 = vrot.slane %v2963, 3
        %v2966 = vshll.u32 %v2917, 16
        %v2968 = vrot.slane %v2966, 4
        %v2969 = vor.u32 %v2965, %v2968
        %v2970 = vsel %vm1048, %v2961, %v2969
        %v2972 = vshrl.u32 %v2926, 16
        %v2974 = vrot.slane %v2972, 3
        %v2975 = vshll.u32 %v2926, 16
        %v2977 = vrot.slane %v2975, 4
        %v2978 = vor.u32 %v2974, %v2977
        %v2979 = vsel %vm1048, %v2978, %v2978
        %v3014 = vunpack.c.l.b16 %v2927
        %v3015 = vunpack.c.l.b16 %v2928
        %v3016 = vunpack.c.l.b16 %v2929
        %v3017 = vunpack.c.l.b16 %v2930
        %v3018 = vunpack.c.l.b16 %v2931
        %v3019 = vunpack.c.l.b16 %v2932
        %v3020 = vunpack.c.l.b16 %v2933
        %v3021 = vunpack.c.l.b16 %v2934
        %v3022 = vunpack.c.l.b16 %v2935
        %v3023 = vunpack.c.l.b16 %v2936
        %v3024 = vunpack.c.l.b16 %v2937
        %v3025 = vunpack.c.l.b16 %v2938
        %v3026 = vunpack.c.l.b16 %v2939
        %v3027 = vunpack.c.l.b16 %v2940
        %v3028 = vunpack.c.l.b16 %v2941
        %v3029 = vunpack.c.l.b16 %v2942
        %v3030 = vunpack.c.l.b16 %v2943
        %v3031 = vunpack.c.l.b16 %v2944
        %v3032 = vunpack.c.l.b16 %v2945
        %v3033 = vunpack.c.l.b16 %v2946
        %v3034 = vunpack.c.l.b16 %v2947
        %v3035 = vunpack.c.l.b16 %v2948
        %v3036 = vunpack.c.l.b16 %v2949
        %v3037 = vunpack.c.l.b16 %v2950
        %v3038 = vunpack.c.l.b16 %v2951
        %v3039 = vunpack.c.l.b16 %v2952
        %v3040 = vunpack.c.l.b16 %v2953
        %v3041 = vunpack.c.l.b16 %v2954
        %v3042 = vunpack.c.l.b16 %v2955
        %v3043 = vunpack.c.l.b16 %v2956
        %v3044 = vunpack.c.l.b16 %v2957
        %v3045 = vunpack.c.l.b16 %v2958
        %v3046 = vpack.c.b16 %v3015, %v3014
        %v3047 = vpack.c.b16 %v3017, %v3016
        %v3048 = vpack.c.b16 %v3019, %v3018
        %v3049 = vpack.c.b16 %v3021, %v3020
        %v3050 = vpack.c.b16 %v3023, %v3022
        %v3051 = vpack.c.b16 %v3025, %v3024
        %v3052 = vpack.c.b16 %v3027, %v3026
        %v3053 = vpack.c.b16 %v3029, %v3028
        %v3054 = vpack.c.b16 %v3031, %v3030
        %v3055 = vpack.c.b16 %v3033, %v3032
        %v3056 = vpack.c.b16 %v3035, %v3034
        %v3057 = vpack.c.b16 %v3037, %v3036
        %v3058 = vpack.c.b16 %v3039, %v3038
        %v3059 = vpack.c.b16 %v3041, %v3040
        %v3060 = vpack.c.b16 %v3043, %v3042
        %v3061 = vpack.c.b16 %v3045, %v3044
        %3078 = vmatprep.subr.bf16.mxu0 0
        %3079 = vmatpush1.bf16.msra.mxu0 %v3053
        %3080 = vmatprep.subr.bf16.mxu0 0
        %3081 = vmatpush1.bf16.msra.mxu0 %v3052
        %3082 = vmatprep.subr.bf16.mxu0 0
        %3083 = vmatpush1.bf16.msra.mxu0 %v3051
        %3084 = vmatprep.subr.bf16.mxu0 0
        %3085 = vmatpush1.bf16.msra.mxu0 %v3050
        %3086 = vmatprep.subr.bf16.mxu0 0
        %3087 = vmatpush1.bf16.msra.mxu0 %v3049
        %3088 = vmatprep.subr.bf16.mxu0 0
        %3089 = vmatpush1.bf16.msra.mxu0 %v3048
        %3090 = vmatprep.subr.bf16.mxu0 0
        %3091 = vmatpush1.bf16.msra.mxu0 %v3047
        %3092 = vmatprep.subr.bf16.mxu0 0
        %3093 = vmatpush1.bf16.msra.mxu0 %v3046
        %3094 = vmatprep.subr.bf16.mxu0 0
        %3095 = vmatpush2.bf16.msra.mxu0 %v3061
        %3096 = vmatprep.subr.bf16.mxu0 0
        %3097 = vmatpush2.bf16.msra.mxu0 %v3060
        %3098 = vmatprep.subr.bf16.mxu0 0
        %3099 = vmatpush2.bf16.msra.mxu0 %v3059
        %3100 = vmatprep.subr.bf16.mxu0 0
        %3101 = vmatpush2.bf16.msra.mxu0 %v3058
        %3102 = vmatprep.subr.bf16.mxu0 0
        %3103 = vmatpush2.bf16.msra.mxu0 %v3057
        %3104 = vmatprep.subr.bf16.mxu0 0
        %3105 = vmatpush2.bf16.msra.mxu0 %v3056
        %3106 = vmatprep.subr.bf16.mxu0 0
        %3107 = vmatpush2.bf16.msra.mxu0 %v3055
        %3108 = vmatprep.subr.bf16.mxu0 0
        %3109 = vmatpush2.bf16.msra.mxu0 %v3054
        %3110 = vmatprep.mubr.bf16.mxu0 %v2979
        %3111 = vmatmul.mubr.bf16.gmra.mxu0 %v2970
        %v3112 = vpop.f32.mrf.mxu0
        %v3113 = vadd.f32 0.0, %v3112
        %v3114 = vpop.f32.mrf.mxu0
        %v3115 = vpop.f32.mrf.mxu0
        %v3116 = vadd.f32 0.0, %v3115
        %v3117 = vpop.f32.mrf.mxu0
        %3118 = vdwg.mxu0
        %v3120 = vshrl.u32 %v2862, 16
        %v3122 = vrot.slane %v3120, 2
        %v3123 = vshll.u32 %v2862, 16
        %v3125 = vrot.slane %v3123, 3
        %v3126 = vor.u32 %v3122, %v3125
        %v3127 = vrot.slane %v2879, 2
        %v3128 = vrot.slane %v2875, 3
        %v3129 = vor.u32 %v3127, %v3128
        %v3130 = vsel %vm1209, %v3126, %v3129
        %v3132 = vshrl.u32 %v2878, 16
        %v3134 = vrot.slane %v3132, 2
        %v3135 = vshll.u32 %v2878, 16
        %v3137 = vrot.slane %v3135, 3
        %v3138 = vor.u32 %v3134, %v3137
        %v3140 = vshrl.u32 %v2881, 16
        %v3142 = vrot.slane %v3140, 2
        %v3143 = vshll.u32 %v2881, 16
        %v3145 = vrot.slane %v3143, 3
        %v3146 = vor.u32 %v3142, %v3145
        %v3147 = vsel %vm1209, %v3138, %v3146
        %v3182 = vunpack.c.l.b16 %v2882
        %v3183 = vunpack.c.l.b16 %v2883
        %v3184 = vunpack.c.l.b16 %v2884
        %v3185 = vunpack.c.l.b16 %v2885
        %v3186 = vunpack.c.l.b16 %v2886
        %v3187 = vunpack.c.l.b16 %v2887
        %v3188 = vunpack.c.l.b16 %v2888
        %v3189 = vunpack.c.l.b16 %v2889
        %v3190 = vunpack.c.l.b16 %v2890
        %v3191 = vunpack.c.l.b16 %v2891
        %v3192 = vunpack.c.l.b16 %v2892
        %v3193 = vunpack.c.l.b16 %v2893
        %v3194 = vunpack.c.l.b16 %v2894
        %v3195 = vunpack.c.l.b16 %v2895
        %v3196 = vunpack.c.l.b16 %v2896
        %v3197 = vunpack.c.l.b16 %v2897
        %v3198 = vunpack.c.l.b16 %v2898
        %v3199 = vunpack.c.l.b16 %v2899
        %v3200 = vunpack.c.l.b16 %v2900
        %v3201 = vunpack.c.l.b16 %v2901
        %v3202 = vunpack.c.l.b16 %v2902
        %v3203 = vunpack.c.l.b16 %v2903
        %v3204 = vunpack.c.l.b16 %v2904
        %v3205 = vunpack.c.l.b16 %v2905
        %v3206 = vunpack.c.l.b16 %v2906
        %v3207 = vunpack.c.l.b16 %v2907
        %v3208 = vunpack.c.l.b16 %v2908
        %v3209 = vunpack.c.l.b16 %v2909
        %v3210 = vunpack.c.l.b16 %v2910
        %v3211 = vunpack.c.l.b16 %v2911
        %v3212 = vunpack.c.l.b16 %v2912
        %v3213 = vunpack.c.l.b16 %v2913
        %v3214 = vpack.c.b16 %v3183, %v3182
        %v3215 = vpack.c.b16 %v3185, %v3184
        %v3216 = vpack.c.b16 %v3187, %v3186
        %v3217 = vpack.c.b16 %v3189, %v3188
        %v3218 = vpack.c.b16 %v3191, %v3190
        %v3219 = vpack.c.b16 %v3193, %v3192
        %v3220 = vpack.c.b16 %v3195, %v3194
        %v3221 = vpack.c.b16 %v3197, %v3196
        %v3222 = vpack.c.b16 %v3199, %v3198
        %v3223 = vpack.c.b16 %v3201, %v3200
        %v3224 = vpack.c.b16 %v3203, %v3202
        %v3225 = vpack.c.b16 %v3205, %v3204
        %v3226 = vpack.c.b16 %v3207, %v3206
        %v3227 = vpack.c.b16 %v3209, %v3208
        %v3228 = vpack.c.b16 %v3211, %v3210
        %v3229 = vpack.c.b16 %v3213, %v3212
        %3246 = vmatprep.subr.bf16.mxu0 0
        %3247 = vmatpush1.bf16.msra.mxu0 %v3221
        %3248 = vmatprep.subr.bf16.mxu0 0
        %3249 = vmatpush1.bf16.msra.mxu0 %v3220
        %3250 = vmatprep.subr.bf16.mxu0 0
        %3251 = vmatpush1.bf16.msra.mxu0 %v3219
        %3252 = vmatprep.subr.bf16.mxu0 0
        %3253 = vmatpush1.bf16.msra.mxu0 %v3218
        %3254 = vmatprep.subr.bf16.mxu0 0
        %3255 = vmatpush1.bf16.msra.mxu0 %v3217
        %3256 = vmatprep.subr.bf16.mxu0 0
        %3257 = vmatpush1.bf16.msra.mxu0 %v3216
        %3258 = vmatprep.subr.bf16.mxu0 0
        %3259 = vmatpush1.bf16.msra.mxu0 %v3215
        %3260 = vmatprep.subr.bf16.mxu0 0
        %3261 = vmatpush1.bf16.msra.mxu0 %v3214
        %3262 = vmatprep.subr.bf16.mxu0 0
        %3263 = vmatpush2.bf16.msra.mxu0 %v3229
        %3264 = vmatprep.subr.bf16.mxu0 0
        %3265 = vmatpush2.bf16.msra.mxu0 %v3228
        %3266 = vmatprep.subr.bf16.mxu0 0
        %3267 = vmatpush2.bf16.msra.mxu0 %v3227
        %3268 = vmatprep.subr.bf16.mxu0 0
        %3269 = vmatpush2.bf16.msra.mxu0 %v3226
        %3270 = vmatprep.subr.bf16.mxu0 0
        %3271 = vmatpush2.bf16.msra.mxu0 %v3225
        %3272 = vmatprep.subr.bf16.mxu0 0
        %3273 = vmatpush2.bf16.msra.mxu0 %v3224
        %3274 = vmatprep.subr.bf16.mxu0 0
        %3275 = vmatpush2.bf16.msra.mxu0 %v3223
        %3276 = vmatprep.subr.bf16.mxu0 0
        %3277 = vmatpush2.bf16.msra.mxu0 %v3222
        %3278 = vmatprep.mubr.bf16.mxu0 %v3147
        %3279 = vmatmul.mubr.bf16.gmra.mxu0 %v3130
        %v3280 = vpop.f32.mrf.mxu0
        %v3281 = vadd.f32 %v3113, %v3280
        %v3282 = vpop.f32.mrf.mxu0
        %v3283 = vpop.f32.mrf.mxu0
        %v3284 = vadd.f32 %v3116, %v3283
        %v3285 = vpop.f32.mrf.mxu0
        %3286 = vdwg.mxu0
        %v3287 = vld [vmem:[#allocation3 + $0x8] sm:$0xf]
        %v3288 = vld [vmem:[#allocation3 + $0xc] sm:$0xf]
        %v3289 = vld [vmem:[#allocation3 + $0x10] sm:$0x1]
        %v3290 = vld [vmem:[#allocation3 + $0x8] sm:$0xe]
        %v3294 = vunpack.c.l.b16 %v3287
        %v3295 = vunpack.c.l.b16 %v3288
        %v3296 = vunpack.c.l.b16 %v3289
        %v3297 = vpack.c.b16 %v3295, %v3294
        %v3298 = vpack.c.b16 %v3296, %v3296
        %v3300 = vunpack.c.l.b16 %v3290
        %v3301 = vpack.c.b16 %v3295, %v3300
        %v3303 = vshrl.u32 %v3301, 16
        %v3305 = vshll.u32 %v3301, 16
        %v3307 = vrot.slane %v3305, 1
        %v3308 = vor.u32 %v3303, %v3307
        %v3310 = vshll.u32 %v3298, 16
        %v3312 = vrot.slane %v3310, 1
        %v3313 = vsel %vm955, %v3308, %v3312
        %v3314 = vshrl.u32 %v3298, 16
        %v3316 = vld [vmem:[#allocation14 + $0x100] sm:$0xf]
        %v3317 = vld [vmem:[#allocation14 + $0x104] sm:$0xf]
        %v3318 = vld [vmem:[#allocation14 + $0x108] sm:$0xf]
        %v3319 = vld [vmem:[#allocation14 + $0x10c] sm:$0xf]
        %v3320 = vld [vmem:[#allocation14 + $0x110] sm:$0xf]
        %v3321 = vld [vmem:[#allocation14 + $0x114] sm:$0xf]
        %v3322 = vld [vmem:[#allocation14 + $0x118] sm:$0xf]
        %v3323 = vld [vmem:[#allocation14 + $0x11c] sm:$0xf]
        %v3324 = vld [vmem:[#allocation14 + $0x120] sm:$0xf]
        %v3325 = vld [vmem:[#allocation14 + $0x124] sm:$0xf]
        %v3326 = vld [vmem:[#allocation14 + $0x128] sm:$0xf]
        %v3327 = vld [vmem:[#allocation14 + $0x12c] sm:$0xf]
        %v3328 = vld [vmem:[#allocation14 + $0x130] sm:$0xf]
        %v3329 = vld [vmem:[#allocation14 + $0x134] sm:$0xf]
        %v3330 = vld [vmem:[#allocation14 + $0x138] sm:$0xf]
        %v3331 = vld [vmem:[#allocation14 + $0x13c] sm:$0xf]
        %v3332 = vld [vmem:[#allocation14 + $0x140] sm:$0xf]
        %v3333 = vld [vmem:[#allocation14 + $0x144] sm:$0xf]
        %v3334 = vld [vmem:[#allocation14 + $0x148] sm:$0xf]
        %v3335 = vld [vmem:[#allocation14 + $0x14c] sm:$0xf]
        %v3336 = vld [vmem:[#allocation14 + $0x150] sm:$0xf]
        %v3337 = vld [vmem:[#allocation14 + $0x154] sm:$0xf]
        %v3338 = vld [vmem:[#allocation14 + $0x158] sm:$0xf]
        %v3339 = vld [vmem:[#allocation14 + $0x15c] sm:$0xf]
        %v3340 = vld [vmem:[#allocation14 + $0x160] sm:$0xf]
        %v3341 = vld [vmem:[#allocation14 + $0x164] sm:$0xf]
        %v3342 = vld [vmem:[#allocation14 + $0x168] sm:$0xf]
        %v3343 = vld [vmem:[#allocation14 + $0x16c] sm:$0xf]
        %v3344 = vld [vmem:[#allocation14 + $0x170] sm:$0xf]
        %v3345 = vld [vmem:[#allocation14 + $0x174] sm:$0xf]
        %v3346 = vld [vmem:[#allocation14 + $0x178] sm:$0xf]
        %v3347 = vld [vmem:[#allocation14 + $0x17c] sm:$0xf]
        %v3349 = vshrl.u32 %v3297, 16
        %v3351 = vshll.u32 %v3297, 16
        %v3353 = vrot.slane %v3351, 1
        %v3354 = vor.u32 %v3349, %v3353
        %v3355 = vsel %vm955, %v3354, %v3312
        %v3357 = vshrl.u32 %v3313, 16
        %v3359 = vshll.u32 %v3313, 16
        %v3361 = vrot.slane %v3359, 1
        %v3362 = vor.u32 %v3357, %v3361
        %v3364 = vshll.u32 %v3314, 16
        %v3366 = vrot.slane %v3364, 1
        %v3367 = vsel %vm955, %v3362, %v3366
        %v3402 = vunpack.c.l.b16 %v3316
        %v3403 = vunpack.c.l.b16 %v3317
        %v3404 = vunpack.c.l.b16 %v3318
        %v3405 = vunpack.c.l.b16 %v3319
        %v3406 = vunpack.c.l.b16 %v3320
        %v3407 = vunpack.c.l.b16 %v3321
        %v3408 = vunpack.c.l.b16 %v3322
        %v3409 = vunpack.c.l.b16 %v3323
        %v3410 = vunpack.c.l.b16 %v3324
        %v3411 = vunpack.c.l.b16 %v3325
        %v3412 = vunpack.c.l.b16 %v3326
        %v3413 = vunpack.c.l.b16 %v3327
        %v3414 = vunpack.c.l.b16 %v3328
        %v3415 = vunpack.c.l.b16 %v3329
        %v3416 = vunpack.c.l.b16 %v3330
        %v3417 = vunpack.c.l.b16 %v3331
        %v3418 = vunpack.c.l.b16 %v3332
        %v3419 = vunpack.c.l.b16 %v3333
        %v3420 = vunpack.c.l.b16 %v3334
        %v3421 = vunpack.c.l.b16 %v3335
        %v3422 = vunpack.c.l.b16 %v3336
        %v3423 = vunpack.c.l.b16 %v3337
        %v3424 = vunpack.c.l.b16 %v3338
        %v3425 = vunpack.c.l.b16 %v3339
        %v3426 = vunpack.c.l.b16 %v3340
        %v3427 = vunpack.c.l.b16 %v3341
        %v3428 = vunpack.c.l.b16 %v3342
        %v3429 = vunpack.c.l.b16 %v3343
        %v3430 = vunpack.c.l.b16 %v3344
        %v3431 = vunpack.c.l.b16 %v3345
        %v3432 = vunpack.c.l.b16 %v3346
        %v3433 = vunpack.c.l.b16 %v3347
        %v3434 = vpack.c.b16 %v3403, %v3402
        %v3435 = vpack.c.b16 %v3405, %v3404
        %v3436 = vpack.c.b16 %v3407, %v3406
        %v3437 = vpack.c.b16 %v3409, %v3408
        %v3438 = vpack.c.b16 %v3411, %v3410
        %v3439 = vpack.c.b16 %v3413, %v3412
        %v3440 = vpack.c.b16 %v3415, %v3414
        %v3441 = vpack.c.b16 %v3417, %v3416
        %v3442 = vpack.c.b16 %v3419, %v3418
        %v3443 = vpack.c.b16 %v3421, %v3420
        %v3444 = vpack.c.b16 %v3423, %v3422
        %v3445 = vpack.c.b16 %v3425, %v3424
        %v3446 = vpack.c.b16 %v3427, %v3426
        %v3447 = vpack.c.b16 %v3429, %v3428
        %v3448 = vpack.c.b16 %v3431, %v3430
        %v3449 = vpack.c.b16 %v3433, %v3432
        %3466 = vmatprep.subr.bf16.mxu0 0
        %3467 = vmatpush1.bf16.msra.mxu0 %v3441
        %3468 = vmatprep.subr.bf16.mxu0 0
        %3469 = vmatpush1.bf16.msra.mxu0 %v3440
        %3470 = vmatprep.subr.bf16.mxu0 0
        %3471 = vmatpush1.bf16.msra.mxu0 %v3439
        %3472 = vmatprep.subr.bf16.mxu0 0
        %3473 = vmatpush1.bf16.msra.mxu0 %v3438
        %3474 = vmatprep.subr.bf16.mxu0 0
        %3475 = vmatpush1.bf16.msra.mxu0 %v3437
        %3476 = vmatprep.subr.bf16.mxu0 0
        %3477 = vmatpush1.bf16.msra.mxu0 %v3436
        %3478 = vmatprep.subr.bf16.mxu0 0
        %3479 = vmatpush1.bf16.msra.mxu0 %v3435
        %3480 = vmatprep.subr.bf16.mxu0 0
        %3481 = vmatpush1.bf16.msra.mxu0 %v3434
        %3482 = vmatprep.subr.bf16.mxu0 0
        %3483 = vmatpush2.bf16.msra.mxu0 %v3449
        %3484 = vmatprep.subr.bf16.mxu0 0
        %3485 = vmatpush2.bf16.msra.mxu0 %v3448
        %3486 = vmatprep.subr.bf16.mxu0 0
        %3487 = vmatpush2.bf16.msra.mxu0 %v3447
        %3488 = vmatprep.subr.bf16.mxu0 0
        %3489 = vmatpush2.bf16.msra.mxu0 %v3446
        %3490 = vmatprep.subr.bf16.mxu0 0
        %3491 = vmatpush2.bf16.msra.mxu0 %v3445
        %3492 = vmatprep.subr.bf16.mxu0 0
        %3493 = vmatpush2.bf16.msra.mxu0 %v3444
        %3494 = vmatprep.subr.bf16.mxu0 0
        %3495 = vmatpush2.bf16.msra.mxu0 %v3443
        %3496 = vmatprep.subr.bf16.mxu0 0
        %3497 = vmatpush2.bf16.msra.mxu0 %v3442
        %3498 = vmatprep.mubr.bf16.mxu0 %v3367
        %3499 = vmatmul.mubr.bf16.gmra.mxu0 %v3355
        %v3500 = vpop.f32.mrf.mxu0
        %v3501 = vadd.f32 0.0, %v3500
        %v3502 = vpop.f32.mrf.mxu0
        %v3503 = vpop.f32.mrf.mxu0
        %v3504 = vadd.f32 0.0, %v3503
        %v3505 = vpop.f32.mrf.mxu0
        %3506 = vdwg.mxu0
        %v3507 = vadd.f32 %v3281, %v3501
        %v3508 = vadd.f32 %v3284, %v3504
        %v3509 = vld [vmem:[#allocation3 + $0x10] sm:$0x3]
        %v3510 = vld [vmem:[#allocation3 + $0x8] sm:$0xc]
        %v3512 = vunpack.c.l.b16 %v3509
        %v3513 = vpack.c.b16 %v3512, %v3512
        %v3515 = vunpack.c.l.b16 %v3510
        %v3516 = vpack.c.b16 %v3295, %v3515
        %v3518 = vshrl.u32 %v3516, 16
        %v3520 = vshll.u32 %v3516, 16
        %v3522 = vrot.slane %v3520, 1
        %v3523 = vor.u32 %v3518, %v3522
        %v3525 = vshll.u32 %v3513, 16
        %v3527 = vrot.slane %v3525, 1
        %v3528 = vsel %vm955, %v3523, %v3527
        %v3529 = vshrl.u32 %v3513, 16
        %v3531 = vor.u32 %v3529, %v3527
        %v3532 = vld [vmem:[#allocation14 + $0x180] sm:$0xf]
        %v3533 = vld [vmem:[#allocation14 + $0x184] sm:$0xf]
        %v3534 = vld [vmem:[#allocation14 + $0x188] sm:$0xf]
        %v3535 = vld [vmem:[#allocation14 + $0x18c] sm:$0xf]
        %v3536 = vld [vmem:[#allocation14 + $0x190] sm:$0xf]
        %v3537 = vld [vmem:[#allocation14 + $0x194] sm:$0xf]
        %v3538 = vld [vmem:[#allocation14 + $0x198] sm:$0xf]
        %v3539 = vld [vmem:[#allocation14 + $0x19c] sm:$0xf]
        %v3540 = vld [vmem:[#allocation14 + $0x1a0] sm:$0xf]
        %v3541 = vld [vmem:[#allocation14 + $0x1a4] sm:$0xf]
        %v3542 = vld [vmem:[#allocation14 + $0x1a8] sm:$0xf]
        %v3543 = vld [vmem:[#allocation14 + $0x1ac] sm:$0xf]
        %v3544 = vld [vmem:[#allocation14 + $0x1b0] sm:$0xf]
        %v3545 = vld [vmem:[#allocation14 + $0x1b4] sm:$0xf]
        %v3546 = vld [vmem:[#allocation14 + $0x1b8] sm:$0xf]
        %v3547 = vld [vmem:[#allocation14 + $0x1bc] sm:$0xf]
        %v3548 = vld [vmem:[#allocation14 + $0x1c0] sm:$0xf]
        %v3549 = vld [vmem:[#allocation14 + $0x1c4] sm:$0xf]
        %v3550 = vld [vmem:[#allocation14 + $0x1c8] sm:$0xf]
        %v3551 = vld [vmem:[#allocation14 + $0x1cc] sm:$0xf]
        %v3552 = vld [vmem:[#allocation14 + $0x1d0] sm:$0xf]
        %v3553 = vld [vmem:[#allocation14 + $0x1d4] sm:$0xf]
        %v3554 = vld [vmem:[#allocation14 + $0x1d8] sm:$0xf]
        %v3555 = vld [vmem:[#allocation14 + $0x1dc] sm:$0xf]
        %v3556 = vld [vmem:[#allocation14 + $0x1e0] sm:$0xf]
        %v3557 = vld [vmem:[#allocation14 + $0x1e4] sm:$0xf]
        %v3558 = vld [vmem:[#allocation14 + $0x1e8] sm:$0xf]
        %v3559 = vld [vmem:[#allocation14 + $0x1ec] sm:$0xf]
        %v3560 = vld [vmem:[#allocation14 + $0x1f0] sm:$0xf]
        %v3561 = vld [vmem:[#allocation14 + $0x1f4] sm:$0xf]
        %v3562 = vld [vmem:[#allocation14 + $0x1f8] sm:$0xf]
        %v3563 = vld [vmem:[#allocation14 + $0x1fc] sm:$0xf]
        %v3564 = vrot.slane %v3303, 1
        %v3565 = vrot.slane %v3305, 2
        %v3566 = vor.u32 %v3564, %v3565
        %v3567 = vrot.slane %v3529, 1
        %v3568 = vrot.slane %v3525, 2
        %v3569 = vor.u32 %v3567, %v3568
        %v3570 = vsel %vm1655, %v3566, %v3569
        %v3572 = vshrl.u32 %v3528, 16
        %v3574 = vrot.slane %v3572, 1
        %v3575 = vshll.u32 %v3528, 16
        %v3577 = vrot.slane %v3575, 2
        %v3578 = vor.u32 %v3574, %v3577
        %v3580 = vshrl.u32 %v3531, 16
        %v3582 = vrot.slane %v3580, 1
        %v3583 = vshll.u32 %v3531, 16
        %v3585 = vrot.slane %v3583, 2
        %v3586 = vor.u32 %v3582, %v3585
        %v3587 = vsel %vm1655, %v3578, %v3586
        %v3622 = vunpack.c.l.b16 %v3532
        %v3623 = vunpack.c.l.b16 %v3533
        %v3624 = vunpack.c.l.b16 %v3534
        %v3625 = vunpack.c.l.b16 %v3535
        %v3626 = vunpack.c.l.b16 %v3536
        %v3627 = vunpack.c.l.b16 %v3537
        %v3628 = vunpack.c.l.b16 %v3538
        %v3629 = vunpack.c.l.b16 %v3539
        %v3630 = vunpack.c.l.b16 %v3540
        %v3631 = vunpack.c.l.b16 %v3541
        %v3632 = vunpack.c.l.b16 %v3542
        %v3633 = vunpack.c.l.b16 %v3543
        %v3634 = vunpack.c.l.b16 %v3544
        %v3635 = vunpack.c.l.b16 %v3545
        %v3636 = vunpack.c.l.b16 %v3546
        %v3637 = vunpack.c.l.b16 %v3547
        %v3638 = vunpack.c.l.b16 %v3548
        %v3639 = vunpack.c.l.b16 %v3549
        %v3640 = vunpack.c.l.b16 %v3550
        %v3641 = vunpack.c.l.b16 %v3551
        %v3642 = vunpack.c.l.b16 %v3552
        %v3643 = vunpack.c.l.b16 %v3553
        %v3644 = vunpack.c.l.b16 %v3554
        %v3645 = vunpack.c.l.b16 %v3555
        %v3646 = vunpack.c.l.b16 %v3556
        %v3647 = vunpack.c.l.b16 %v3557
        %v3648 = vunpack.c.l.b16 %v3558
        %v3649 = vunpack.c.l.b16 %v3559
        %v3650 = vunpack.c.l.b16 %v3560
        %v3651 = vunpack.c.l.b16 %v3561
        %v3652 = vunpack.c.l.b16 %v3562
        %v3653 = vunpack.c.l.b16 %v3563
        %v3654 = vpack.c.b16 %v3623, %v3622
        %v3655 = vpack.c.b16 %v3625, %v3624
        %v3656 = vpack.c.b16 %v3627, %v3626
        %v3657 = vpack.c.b16 %v3629, %v3628
        %v3658 = vpack.c.b16 %v3631, %v3630
        %v3659 = vpack.c.b16 %v3633, %v3632
        %v3660 = vpack.c.b16 %v3635, %v3634
        %v3661 = vpack.c.b16 %v3637, %v3636
        %v3662 = vpack.c.b16 %v3639, %v3638
        %v3663 = vpack.c.b16 %v3641, %v3640
        %v3664 = vpack.c.b16 %v3643, %v3642
        %v3665 = vpack.c.b16 %v3645, %v3644
        %v3666 = vpack.c.b16 %v3647, %v3646
        %v3667 = vpack.c.b16 %v3649, %v3648
        %v3668 = vpack.c.b16 %v3651, %v3650
        %v3669 = vpack.c.b16 %v3653, %v3652
        %3686 = vmatprep.subr.bf16.mxu0 0
        %3687 = vmatpush1.bf16.msra.mxu0 %v3661
        %3688 = vmatprep.subr.bf16.mxu0 0
        %3689 = vmatpush1.bf16.msra.mxu0 %v3660
        %3690 = vmatprep.subr.bf16.mxu0 0
        %3691 = vmatpush1.bf16.msra.mxu0 %v3659
        %3692 = vmatprep.subr.bf16.mxu0 0
        %3693 = vmatpush1.bf16.msra.mxu0 %v3658
        %3694 = vmatprep.subr.bf16.mxu0 0
        %3695 = vmatpush1.bf16.msra.mxu0 %v3657
        %3696 = vmatprep.subr.bf16.mxu0 0
        %3697 = vmatpush1.bf16.msra.mxu0 %v3656
        %3698 = vmatprep.subr.bf16.mxu0 0
        %3699 = vmatpush1.bf16.msra.mxu0 %v3655
        %3700 = vmatprep.subr.bf16.mxu0 0
        %3701 = vmatpush1.bf16.msra.mxu0 %v3654
        %3702 = vmatprep.subr.bf16.mxu0 0
        %3703 = vmatpush2.bf16.msra.mxu0 %v3669
        %3704 = vmatprep.subr.bf16.mxu0 0
        %3705 = vmatpush2.bf16.msra.mxu0 %v3668
        %3706 = vmatprep.subr.bf16.mxu0 0
        %3707 = vmatpush2.bf16.msra.mxu0 %v3667
        %3708 = vmatprep.subr.bf16.mxu0 0
        %3709 = vmatpush2.bf16.msra.mxu0 %v3666
        %3710 = vmatprep.subr.bf16.mxu0 0
        %3711 = vmatpush2.bf16.msra.mxu0 %v3665
        %3712 = vmatprep.subr.bf16.mxu0 0
        %3713 = vmatpush2.bf16.msra.mxu0 %v3664
        %3714 = vmatprep.subr.bf16.mxu0 0
        %3715 = vmatpush2.bf16.msra.mxu0 %v3663
        %3716 = vmatprep.subr.bf16.mxu0 0
        %3717 = vmatpush2.bf16.msra.mxu0 %v3662
        %3718 = vmatprep.mubr.bf16.mxu0 %v3587
        %3719 = vmatmul.mubr.bf16.gmra.mxu0 %v3570
        %v3720 = vpop.f32.mrf.mxu0
        %v3721 = vadd.f32 0.0, %v3720
        %v3722 = vpop.f32.mrf.mxu0
        %v3723 = vpop.f32.mrf.mxu0
        %v3724 = vadd.f32 0.0, %v3723
        %v3725 = vpop.f32.mrf.mxu0
        %3726 = vdwg.mxu0
        %v3727 = vadd.f32 %v3507, %v3721
        %v3728 = vadd.f32 %v3508, %v3724
        %v3730 = vlaneseq
        %v3731 = vshrl.u32 %v3730, 7
        %v3732 = vsub.s32 0, %v3731
        %v3733 = vrot.slane %v2851, %v3732
        %v3735 = vadd.f32 %v3727, %v3733
        %v3736 = vadd.f32 %v3728, %v3733
        %v3737 = vmax.f32 %v3735, 0.0
        %v3738 = vmax.f32 %v3736, 0.0
        %v3739 = vpack.c.bf16 %v3738, %v3737
        %v3741 = vunpack.c.l.b16 %v3739
        %v3742 = vunpack.c.h.b16 %v3739
        %v3743 = vpack.c.b16 %v3741, %v3741
        %v3744 = vpack.c.b16 %v3742, %v3742
        %3747 = vst [vmem:[#allocation4 + $0x8] sm:$0xf] %v3743
        %3748 = vst [vmem:[#allocation4 + $0xc] sm:$0xf] %v3744
        %v3749 = vld [vmem:[%s12] sm:$0x1]
        %v3750 = vld [vmem:[#allocation4 + $0x4] sm:$0x8]
        %v3751 = vld [vmem:[#allocation4 + $0x8] sm:$0xf]
        %v3752 = vld [vmem:[#allocation4 + $0xc] sm:$0x7]
        %v3753 = vld [vmem:[#allocation4 + $0xc] sm:$0xf]
        %v3757 = vunpack.c.l.b16 %v3750
        %v3758 = vunpack.c.l.b16 %v3751
        %v3759 = vunpack.c.l.b16 %v3752
        %v3760 = vpack.c.b16 %v3758, %v3757
        %v3761 = vpack.c.b16 %v3759, %v3759
        %v3763 = vunpack.c.l.b16 %v3753
        %v3764 = vpack.c.b16 %v3763, %v3763
        %v3766 = vshrl.u32 %v3760, 16
        %v3768 = vshll.u32 %v3760, 16
        %v3770 = vrot.slane %v3768, 1
        %v3771 = vor.u32 %v3766, %v3770
        %v3773 = vshll.u32 %v3764, 16
        %v3775 = vrot.slane %v3773, 1
        %v3776 = vsel %vm955, %v3771, %v3775
        %v3777 = vshrl.u32 %v3764, 16
        %v3779 = vor.u32 %v3777, %v3775
        %v3780 = vld [vmem:[#allocation15] sm:$0xf]
        %v3781 = vld [vmem:[#allocation15 + $0x4] sm:$0xf]
        %v3782 = vld [vmem:[#allocation15 + $0x8] sm:$0xf]
        %v3783 = vld [vmem:[#allocation15 + $0xc] sm:$0xf]
        %v3784 = vld [vmem:[#allocation15 + $0x10] sm:$0xf]
        %v3785 = vld [vmem:[#allocation15 + $0x14] sm:$0xf]
        %v3786 = vld [vmem:[#allocation15 + $0x18] sm:$0xf]
        %v3787 = vld [vmem:[#allocation15 + $0x1c] sm:$0xf]
        %v3788 = vld [vmem:[#allocation15 + $0x20] sm:$0xf]
        %v3789 = vld [vmem:[#allocation15 + $0x24] sm:$0xf]
        %v3790 = vld [vmem:[#allocation15 + $0x28] sm:$0xf]
        %v3791 = vld [vmem:[#allocation15 + $0x2c] sm:$0xf]
        %v3792 = vld [vmem:[#allocation15 + $0x30] sm:$0xf]
        %v3793 = vld [vmem:[#allocation15 + $0x34] sm:$0xf]
        %v3794 = vld [vmem:[#allocation15 + $0x38] sm:$0xf]
        %v3795 = vld [vmem:[#allocation15 + $0x3c] sm:$0xf]
        %v3796 = vld [vmem:[#allocation15 + $0x40] sm:$0xf]
        %v3797 = vld [vmem:[#allocation15 + $0x44] sm:$0xf]
        %v3798 = vld [vmem:[#allocation15 + $0x48] sm:$0xf]
        %v3799 = vld [vmem:[#allocation15 + $0x4c] sm:$0xf]
        %v3800 = vld [vmem:[#allocation15 + $0x50] sm:$0xf]
        %v3801 = vld [vmem:[#allocation15 + $0x54] sm:$0xf]
        %v3802 = vld [vmem:[#allocation15 + $0x58] sm:$0xf]
        %v3803 = vld [vmem:[#allocation15 + $0x5c] sm:$0xf]
        %v3804 = vld [vmem:[#allocation15 + $0x60] sm:$0xf]
        %v3805 = vld [vmem:[#allocation15 + $0x64] sm:$0xf]
        %v3806 = vld [vmem:[#allocation15 + $0x68] sm:$0xf]
        %v3807 = vld [vmem:[#allocation15 + $0x6c] sm:$0xf]
        %v3808 = vld [vmem:[#allocation15 + $0x70] sm:$0xf]
        %v3809 = vld [vmem:[#allocation15 + $0x74] sm:$0xf]
        %v3810 = vld [vmem:[#allocation15 + $0x78] sm:$0xf]
        %v3811 = vld [vmem:[#allocation15 + $0x7c] sm:$0xf]
        %v3812 = vld [vmem:[#allocation4 + $0x10] sm:$0x1]
        %v3813 = vpack.c.b16 %v3763, %v3758
        %v3816 = vunpack.c.l.b16 %v3812
        %v3817 = vpack.c.b16 %v3816, %v3816
        %v3819 = vshrl.u32 %v3813, 16
        %v3821 = vshll.u32 %v3813, 16
        %v3823 = vrot.slane %v3821, 1
        %v3824 = vor.u32 %v3819, %v3823
        %v3826 = vshll.u32 %v3817, 16
        %v3828 = vrot.slane %v3826, 1
        %v3829 = vsel %vm955, %v3824, %v3828
        %v3831 = vld [vmem:[#allocation15 + $0x80] sm:$0xf]
        %v3832 = vld [vmem:[#allocation15 + $0x84] sm:$0xf]
        %v3833 = vld [vmem:[#allocation15 + $0x88] sm:$0xf]
        %v3834 = vld [vmem:[#allocation15 + $0x8c] sm:$0xf]
        %v3835 = vld [vmem:[#allocation15 + $0x90] sm:$0xf]
        %v3836 = vld [vmem:[#allocation15 + $0x94] sm:$0xf]
        %v3837 = vld [vmem:[#allocation15 + $0x98] sm:$0xf]
        %v3838 = vld [vmem:[#allocation15 + $0x9c] sm:$0xf]
        %v3839 = vld [vmem:[#allocation15 + $0xa0] sm:$0xf]
        %v3840 = vld [vmem:[#allocation15 + $0xa4] sm:$0xf]
        %v3841 = vld [vmem:[#allocation15 + $0xa8] sm:$0xf]
        %v3842 = vld [vmem:[#allocation15 + $0xac] sm:$0xf]
        %v3843 = vld [vmem:[#allocation15 + $0xb0] sm:$0xf]
        %v3844 = vld [vmem:[#allocation15 + $0xb4] sm:$0xf]
        %v3845 = vld [vmem:[#allocation15 + $0xb8] sm:$0xf]
        %v3846 = vld [vmem:[#allocation15 + $0xbc] sm:$0xf]
        %v3847 = vld [vmem:[#allocation15 + $0xc0] sm:$0xf]
        %v3848 = vld [vmem:[#allocation15 + $0xc4] sm:$0xf]
        %v3849 = vld [vmem:[#allocation15 + $0xc8] sm:$0xf]
        %v3850 = vld [vmem:[#allocation15 + $0xcc] sm:$0xf]
        %v3851 = vld [vmem:[#allocation15 + $0xd0] sm:$0xf]
        %v3852 = vld [vmem:[#allocation15 + $0xd4] sm:$0xf]
        %v3853 = vld [vmem:[#allocation15 + $0xd8] sm:$0xf]
        %v3854 = vld [vmem:[#allocation15 + $0xdc] sm:$0xf]
        %v3855 = vld [vmem:[#allocation15 + $0xe0] sm:$0xf]
        %v3856 = vld [vmem:[#allocation15 + $0xe4] sm:$0xf]
        %v3857 = vld [vmem:[#allocation15 + $0xe8] sm:$0xf]
        %v3858 = vld [vmem:[#allocation15 + $0xec] sm:$0xf]
        %v3859 = vld [vmem:[#allocation15 + $0xf0] sm:$0xf]
        %v3860 = vld [vmem:[#allocation15 + $0xf4] sm:$0xf]
        %v3861 = vld [vmem:[#allocation15 + $0xf8] sm:$0xf]
        %v3862 = vld [vmem:[#allocation15 + $0xfc] sm:$0xf]
        %v3895 = vunpack.c.l.b16 %v3831
        %v3896 = vunpack.c.l.b16 %v3832
        %v3897 = vunpack.c.l.b16 %v3833
        %v3898 = vunpack.c.l.b16 %v3834
        %v3899 = vunpack.c.l.b16 %v3835
        %v3900 = vunpack.c.l.b16 %v3836
        %v3901 = vunpack.c.l.b16 %v3837
        %v3902 = vunpack.c.l.b16 %v3838
        %v3903 = vunpack.c.l.b16 %v3839
        %v3904 = vunpack.c.l.b16 %v3840
        %v3905 = vunpack.c.l.b16 %v3841
        %v3906 = vunpack.c.l.b16 %v3842
        %v3907 = vunpack.c.l.b16 %v3843
        %v3908 = vunpack.c.l.b16 %v3844
        %v3909 = vunpack.c.l.b16 %v3845
        %v3910 = vunpack.c.l.b16 %v3846
        %v3911 = vunpack.c.l.b16 %v3847
        %v3912 = vunpack.c.l.b16 %v3848
        %v3913 = vunpack.c.l.b16 %v3849
        %v3914 = vunpack.c.l.b16 %v3850
        %v3915 = vunpack.c.l.b16 %v3851
        %v3916 = vunpack.c.l.b16 %v3852
        %v3917 = vunpack.c.l.b16 %v3853
        %v3918 = vunpack.c.l.b16 %v3854
        %v3919 = vunpack.c.l.b16 %v3855
        %v3920 = vunpack.c.l.b16 %v3856
        %v3921 = vunpack.c.l.b16 %v3857
        %v3922 = vunpack.c.l.b16 %v3858
        %v3923 = vunpack.c.l.b16 %v3859
        %v3924 = vunpack.c.l.b16 %v3860
        %v3925 = vunpack.c.l.b16 %v3861
        %v3926 = vunpack.c.l.b16 %v3862
        %v3927 = vpack.c.b16 %v3896, %v3895
        %v3928 = vpack.c.b16 %v3898, %v3897
        %v3929 = vpack.c.b16 %v3900, %v3899
        %v3930 = vpack.c.b16 %v3902, %v3901
        %v3931 = vpack.c.b16 %v3904, %v3903
        %v3932 = vpack.c.b16 %v3906, %v3905
        %v3933 = vpack.c.b16 %v3908, %v3907
        %v3934 = vpack.c.b16 %v3910, %v3909
        %v3935 = vpack.c.b16 %v3912, %v3911
        %v3936 = vpack.c.b16 %v3914, %v3913
        %v3937 = vpack.c.b16 %v3916, %v3915
        %v3938 = vpack.c.b16 %v3918, %v3917
        %v3939 = vpack.c.b16 %v3920, %v3919
        %v3940 = vpack.c.b16 %v3922, %v3921
        %v3941 = vpack.c.b16 %v3924, %v3923
        %v3942 = vpack.c.b16 %v3926, %v3925
        %3959 = vmatprep.subr.bf16.mxu0 0
        %3960 = vmatpush1.bf16.msra.mxu0 %v3934
        %3961 = vmatprep.subr.bf16.mxu0 0
        %3962 = vmatpush1.bf16.msra.mxu0 %v3933
        %3963 = vmatprep.subr.bf16.mxu0 0
        %3964 = vmatpush1.bf16.msra.mxu0 %v3932
        %3965 = vmatprep.subr.bf16.mxu0 0
        %3966 = vmatpush1.bf16.msra.mxu0 %v3931
        %3967 = vmatprep.subr.bf16.mxu0 0
        %3968 = vmatpush1.bf16.msra.mxu0 %v3930
        %3969 = vmatprep.subr.bf16.mxu0 0
        %3970 = vmatpush1.bf16.msra.mxu0 %v3929
        %3971 = vmatprep.subr.bf16.mxu0 0
        %3972 = vmatpush1.bf16.msra.mxu0 %v3928
        %3973 = vmatprep.subr.bf16.mxu0 0
        %3974 = vmatpush1.bf16.msra.mxu0 %v3927
        %3975 = vmatprep.subr.bf16.mxu0 0
        %3976 = vmatpush2.bf16.msra.mxu0 %v3942
        %3977 = vmatprep.subr.bf16.mxu0 0
        %3978 = vmatpush2.bf16.msra.mxu0 %v3941
        %3979 = vmatprep.subr.bf16.mxu0 0
        %3980 = vmatpush2.bf16.msra.mxu0 %v3940
        %3981 = vmatprep.subr.bf16.mxu0 0
        %3982 = vmatpush2.bf16.msra.mxu0 %v3939
        %3983 = vmatprep.subr.bf16.mxu0 0
        %3984 = vmatpush2.bf16.msra.mxu0 %v3938
        %3985 = vmatprep.subr.bf16.mxu0 0
        %3986 = vmatpush2.bf16.msra.mxu0 %v3937
        %3987 = vmatprep.subr.bf16.mxu0 0
        %3988 = vmatpush2.bf16.msra.mxu0 %v3936
        %3989 = vmatprep.subr.bf16.mxu0 0
        %3990 = vmatpush2.bf16.msra.mxu0 %v3935
        %3991 = vmatprep.mubr.bf16.mxu0 %v3829
        %3992 = vmatmul.mubr.bf16.gmra.mxu0 %v3813
        %v3993 = vpop.f32.mrf.mxu0
        %v3994 = vadd.f32 0.0, %v3993
        %v3995 = vpop.f32.mrf.mxu0
        %v3996 = vpop.f32.mrf.mxu0
        %v3997 = vadd.f32 0.0, %v3996
        %v3998 = vpop.f32.mrf.mxu0
        %3999 = vdwg.mxu0
        %v4000 = vrot.slane %v3760, 3
        %v4001 = vrot.slane %v3761, 3
        %v4002 = vsel %vm2092, %v4000, %v4001
        %v4003 = vrot.slane %v3776, 3
        %v4004 = vrot.slane %v3779, 3
        %v4005 = vsel %vm2092, %v4003, %v4004
        %v4040 = vunpack.c.l.b16 %v3780
        %v4041 = vunpack.c.l.b16 %v3781
        %v4042 = vunpack.c.l.b16 %v3782
        %v4043 = vunpack.c.l.b16 %v3783
        %v4044 = vunpack.c.l.b16 %v3784
        %v4045 = vunpack.c.l.b16 %v3785
        %v4046 = vunpack.c.l.b16 %v3786
        %v4047 = vunpack.c.l.b16 %v3787
        %v4048 = vunpack.c.l.b16 %v3788
        %v4049 = vunpack.c.l.b16 %v3789
        %v4050 = vunpack.c.l.b16 %v3790
        %v4051 = vunpack.c.l.b16 %v3791
        %v4052 = vunpack.c.l.b16 %v3792
        %v4053 = vunpack.c.l.b16 %v3793
        %v4054 = vunpack.c.l.b16 %v3794
        %v4055 = vunpack.c.l.b16 %v3795
        %v4056 = vunpack.c.l.b16 %v3796
        %v4057 = vunpack.c.l.b16 %v3797
        %v4058 = vunpack.c.l.b16 %v3798
        %v4059 = vunpack.c.l.b16 %v3799
        %v4060 = vunpack.c.l.b16 %v3800
        %v4061 = vunpack.c.l.b16 %v3801
        %v4062 = vunpack.c.l.b16 %v3802
        %v4063 = vunpack.c.l.b16 %v3803
        %v4064 = vunpack.c.l.b16 %v3804
        %v4065 = vunpack.c.l.b16 %v3805
        %v4066 = vunpack.c.l.b16 %v3806
        %v4067 = vunpack.c.l.b16 %v3807
        %v4068 = vunpack.c.l.b16 %v3808
        %v4069 = vunpack.c.l.b16 %v3809
        %v4070 = vunpack.c.l.b16 %v3810
        %v4071 = vunpack.c.l.b16 %v3811
        %v4072 = vpack.c.b16 %v4041, %v4040
        %v4073 = vpack.c.b16 %v4043, %v4042
        %v4074 = vpack.c.b16 %v4045, %v4044
        %v4075 = vpack.c.b16 %v4047, %v4046
        %v4076 = vpack.c.b16 %v4049, %v4048
        %v4077 = vpack.c.b16 %v4051, %v4050
        %v4078 = vpack.c.b16 %v4053, %v4052
        %v4079 = vpack.c.b16 %v4055, %v4054
        %v4080 = vpack.c.b16 %v4057, %v4056
        %v4081 = vpack.c.b16 %v4059, %v4058
        %v4082 = vpack.c.b16 %v4061, %v4060
        %v4083 = vpack.c.b16 %v4063, %v4062
        %v4084 = vpack.c.b16 %v4065, %v4064
        %v4085 = vpack.c.b16 %v4067, %v4066
        %v4086 = vpack.c.b16 %v4069, %v4068
        %v4087 = vpack.c.b16 %v4071, %v4070
        %4104 = vmatprep.subr.bf16.mxu0 0
        %4105 = vmatpush1.bf16.msra.mxu0 %v4079
        %4106 = vmatprep.subr.bf16.mxu0 0
        %4107 = vmatpush1.bf16.msra.mxu0 %v4078
        %4108 = vmatprep.subr.bf16.mxu0 0
        %4109 = vmatpush1.bf16.msra.mxu0 %v4077
        %4110 = vmatprep.subr.bf16.mxu0 0
        %4111 = vmatpush1.bf16.msra.mxu0 %v4076
        %4112 = vmatprep.subr.bf16.mxu0 0
        %4113 = vmatpush1.bf16.msra.mxu0 %v4075
        %4114 = vmatprep.subr.bf16.mxu0 0
        %4115 = vmatpush1.bf16.msra.mxu0 %v4074
        %4116 = vmatprep.subr.bf16.mxu0 0
        %4117 = vmatpush1.bf16.msra.mxu0 %v4073
        %4118 = vmatprep.subr.bf16.mxu0 0
        %4119 = vmatpush1.bf16.msra.mxu0 %v4072
        %4120 = vmatprep.subr.bf16.mxu0 0
        %4121 = vmatpush2.bf16.msra.mxu0 %v4087
        %4122 = vmatprep.subr.bf16.mxu0 0
        %4123 = vmatpush2.bf16.msra.mxu0 %v4086
        %4124 = vmatprep.subr.bf16.mxu0 0
        %4125 = vmatpush2.bf16.msra.mxu0 %v4085
        %4126 = vmatprep.subr.bf16.mxu0 0
        %4127 = vmatpush2.bf16.msra.mxu0 %v4084
        %4128 = vmatprep.subr.bf16.mxu0 0
        %4129 = vmatpush2.bf16.msra.mxu0 %v4083
        %4130 = vmatprep.subr.bf16.mxu0 0
        %4131 = vmatpush2.bf16.msra.mxu0 %v4082
        %4132 = vmatprep.subr.bf16.mxu0 0
        %4133 = vmatpush2.bf16.msra.mxu0 %v4081
        %4134 = vmatprep.subr.bf16.mxu0 0
        %4135 = vmatpush2.bf16.msra.mxu0 %v4080
        %4136 = vmatprep.mubr.bf16.mxu0 %v4005
        %4137 = vmatmul.mubr.bf16.gmra.mxu0 %v4002
        %v4138 = vpop.f32.mrf.mxu0
        %v4139 = vadd.f32 %v3994, %v4138
        %v4140 = vpop.f32.mrf.mxu0
        %v4141 = vpop.f32.mrf.mxu0
        %v4142 = vadd.f32 %v3997, %v4141
        %v4143 = vpop.f32.mrf.mxu0
        %4144 = vdwg.mxu0
        %v4145 = vld [vmem:[#allocation4 + $0x8] sm:$0xe]
        %v4146 = vld [vmem:[#allocation15 + $0x100] sm:$0xf]
        %v4147 = vld [vmem:[#allocation15 + $0x104] sm:$0xf]
        %v4148 = vld [vmem:[#allocation15 + $0x108] sm:$0xf]
        %v4149 = vld [vmem:[#allocation15 + $0x10c] sm:$0xf]
        %v4150 = vld [vmem:[#allocation15 + $0x110] sm:$0xf]
        %v4151 = vld [vmem:[#allocation15 + $0x114] sm:$0xf]
        %v4152 = vld [vmem:[#allocation15 + $0x118] sm:$0xf]
        %v4153 = vld [vmem:[#allocation15 + $0x11c] sm:$0xf]
        %v4154 = vld [vmem:[#allocation15 + $0x120] sm:$0xf]
        %v4155 = vld [vmem:[#allocation15 + $0x124] sm:$0xf]
        %v4156 = vld [vmem:[#allocation15 + $0x128] sm:$0xf]
        %v4157 = vld [vmem:[#allocation15 + $0x12c] sm:$0xf]
        %v4158 = vld [vmem:[#allocation15 + $0x130] sm:$0xf]
        %v4159 = vld [vmem:[#allocation15 + $0x134] sm:$0xf]
        %v4160 = vld [vmem:[#allocation15 + $0x138] sm:$0xf]
        %v4161 = vld [vmem:[#allocation15 + $0x13c] sm:$0xf]
        %v4163 = vunpack.c.l.b16 %v4145
        %v4164 = vpack.c.b16 %v3763, %v4163
        %v4165 = vrot.slane %v4164, 1
        %v4166 = vrot.slane %v3817, 1
        %v4167 = vsel %vm2258, %v4165, %v4166
        %v4185 = vunpack.c.l.b16 %v4146
        %v4186 = vunpack.c.l.b16 %v4147
        %v4187 = vunpack.c.l.b16 %v4148
        %v4188 = vunpack.c.l.b16 %v4149
        %v4189 = vunpack.c.l.b16 %v4150
        %v4190 = vunpack.c.l.b16 %v4151
        %v4191 = vunpack.c.l.b16 %v4152
        %v4192 = vunpack.c.l.b16 %v4153
        %v4193 = vunpack.c.l.b16 %v4154
        %v4194 = vunpack.c.l.b16 %v4155
        %v4195 = vunpack.c.l.b16 %v4156
        %v4196 = vunpack.c.l.b16 %v4157
        %v4197 = vunpack.c.l.b16 %v4158
        %v4198 = vunpack.c.l.b16 %v4159
        %v4199 = vunpack.c.l.b16 %v4160
        %v4200 = vunpack.c.l.b16 %v4161
        %v4201 = vpack.c.b16 %v4186, %v4185
        %v4202 = vpack.c.b16 %v4188, %v4187
        %v4203 = vpack.c.b16 %v4190, %v4189
        %v4204 = vpack.c.b16 %v4192, %v4191
        %v4205 = vpack.c.b16 %v4194, %v4193
        %v4206 = vpack.c.b16 %v4196, %v4195
        %v4207 = vpack.c.b16 %v4198, %v4197
        %v4208 = vpack.c.b16 %v4200, %v4199
        %4217 = vmatprep.subr.bf16.mxu0 0
        %4218 = vmatpush1.bf16.msra.mxu0 %v4208
        %4219 = vmatprep.subr.bf16.mxu0 0
        %4220 = vmatpush1.bf16.msra.mxu0 %v4207
        %4221 = vmatprep.subr.bf16.mxu0 0
        %4222 = vmatpush1.bf16.msra.mxu0 %v4206
        %4223 = vmatprep.subr.bf16.mxu0 0
        %4224 = vmatpush1.bf16.msra.mxu0 %v4205
        %4225 = vmatprep.subr.bf16.mxu0 0
        %4226 = vmatpush1.bf16.msra.mxu0 %v4204
        %4227 = vmatprep.subr.bf16.mxu0 0
        %4228 = vmatpush1.bf16.msra.mxu0 %v4203
        %4229 = vmatprep.subr.bf16.mxu0 0
        %4230 = vmatpush1.bf16.msra.mxu0 %v4202
        %4231 = vmatprep.subr.bf16.mxu0 0
        %4232 = vmatpush1.bf16.msra.mxu0 %v4201
        %4233 = vmatprep.subr.bf16.mxu0 0
        %4234 = vmatpush2.bf16.msra.mxu0 0
        %4235 = vmatprep.subr.bf16.mxu0 0
        %4236 = vmatpush2.bf16.msra.mxu0 0
        %4237 = vmatprep.subr.bf16.mxu0 0
        %4238 = vmatpush2.bf16.msra.mxu0 0
        %4239 = vmatprep.subr.bf16.mxu0 0
        %4240 = vmatpush2.bf16.msra.mxu0 0
        %4241 = vmatprep.subr.bf16.mxu0 0
        %4242 = vmatpush2.bf16.msra.mxu0 0
        %4243 = vmatprep.subr.bf16.mxu0 0
        %4244 = vmatpush2.bf16.msra.mxu0 0
        %4245 = vmatprep.subr.bf16.mxu0 0
        %4246 = vmatpush2.bf16.msra.mxu0 0
        %4247 = vmatprep.subr.bf16.mxu0 0
        %4248 = vmatpush2.bf16.msra.mxu0 0
        %4249 = vmatprep.mubr.bf16.mxu0 0
        %4250 = vmatmul.mubr.bf16.gmra.mxu0 %v4167
        %v4251 = vpop.f32.mrf.mxu0
        %v4252 = vadd.f32 0.0, %v4251
        %v4253 = vpop.f32.mrf.mxu0
        %v4254 = vpop.f32.mrf.mxu0
        %v4255 = vadd.f32 0.0, %v4254
        %v4256 = vpop.f32.mrf.mxu0
        %4257 = vdwg.mxu0
        %v4258 = vadd.f32 %v4139, %v4252
        %v4259 = vadd.f32 %v4142, %v4255
        %v4261 = vlaneseq
        %v4262 = vshrl.u32 %v4261, 7
        %v4263 = vsub.s32 0, %v4262
        %v4264 = vrot.slane %v3749, %v4263
        %v4266 = vadd.f32 %v4258, %v4264
        %v4267 = vadd.f32 %v4259, %v4264
        %v4268 = vmax.f32 %v4266, 0.0
        %v4269 = vmax.f32 %v4267, 0.0
        %v4270 = vpack.c.bf16 %v4269, %v4268
        %v4272 = vunpack.c.l.b16 %v4270
        %v4273 = vunpack.c.h.b16 %v4270
        %v4274 = vpack.c.b16 %v4272, %v4272
        %v4275 = vpack.c.b16 %v4273, %v4273
        %4278 = vst [vmem:[#allocation2 + $0x8] sm:$0xf] %v4274
        %4279 = vst [vmem:[#allocation2 + $0xc] sm:$0xf] %v4275
        %v4280 = vld [vmem:[%s14] sm:$0x1]
        %v4281 = vld [vmem:[%s16] sm:$0x1]
        %v4282 = vld [vmem:[#allocation2 + $0x4] sm:$0x8]
        %v4283 = vld [vmem:[#allocation2 + $0x8] sm:$0xf]
        %v4284 = vld [vmem:[#allocation2 + $0xc] sm:$0xf]
        %v4288 = vunpack.c.l.b16 %v4282
        %v4289 = vunpack.c.l.b16 %v4283
        %v4290 = vunpack.c.l.b16 %v4284
        %v4291 = vpack.c.b16 %v4289, %v4288
        %v4292 = vpack.c.b16 %v4290, %v4290
        %v4293 = vpack.c.b16 %v4290, %v4289
        %v4295 = vshrl.u32 %v4293, 16
        %v4297 = vrot.slane %v4295, 4
        %v4298 = vshll.u32 %v4293, 16
        %v4300 = vrot.slane %v4298, 5
        %v4301 = vor.u32 %v4297, %v4300
        %v4302 = vld [vmem:[#allocation17] sm:$0xf]
        %v4303 = vld [vmem:[#allocation17 + $0x4] sm:$0xf]
        %v4304 = vld [vmem:[#allocation17 + $0x8] sm:$0xf]
        %v4305 = vld [vmem:[#allocation17 + $0xc] sm:$0xf]
        %v4306 = vld [vmem:[#allocation17 + $0x10] sm:$0xf]
        %v4307 = vld [vmem:[#allocation17 + $0x14] sm:$0xf]
        %v4308 = vld [vmem:[#allocation17 + $0x18] sm:$0xf]
        %v4309 = vld [vmem:[#allocation17 + $0x1c] sm:$0xf]
        %v4310 = vld [vmem:[#allocation17 + $0x20] sm:$0xf]
        %v4311 = vld [vmem:[#allocation17 + $0x24] sm:$0xf]
        %v4312 = vld [vmem:[#allocation17 + $0x28] sm:$0xf]
        %v4313 = vld [vmem:[#allocation17 + $0x2c] sm:$0xf]
        %v4314 = vld [vmem:[#allocation17 + $0x30] sm:$0xf]
        %v4315 = vld [vmem:[#allocation17 + $0x34] sm:$0xf]
        %v4316 = vld [vmem:[#allocation17 + $0x38] sm:$0xf]
        %v4317 = vld [vmem:[#allocation17 + $0x3c] sm:$0xf]
        %v4318 = vld [vmem:[#allocation17 + $0x40] sm:$0xf]
        %v4319 = vld [vmem:[#allocation17 + $0x44] sm:$0xf]
        %v4320 = vld [vmem:[#allocation17 + $0x48] sm:$0xf]
        %v4321 = vld [vmem:[#allocation17 + $0x4c] sm:$0xf]
        %v4322 = vld [vmem:[#allocation17 + $0x50] sm:$0xf]
        %v4323 = vld [vmem:[#allocation17 + $0x54] sm:$0xf]
        %v4324 = vld [vmem:[#allocation17 + $0x58] sm:$0xf]
        %v4325 = vld [vmem:[#allocation17 + $0x5c] sm:$0xf]
        %v4326 = vld [vmem:[#allocation17 + $0x60] sm:$0xf]
        %v4327 = vld [vmem:[#allocation17 + $0x64] sm:$0xf]
        %v4328 = vld [vmem:[#allocation17 + $0x68] sm:$0xf]
        %v4329 = vld [vmem:[#allocation17 + $0x6c] sm:$0xf]
        %v4330 = vld [vmem:[#allocation17 + $0x70] sm:$0xf]
        %v4331 = vld [vmem:[#allocation17 + $0x74] sm:$0xf]
        %v4332 = vld [vmem:[#allocation17 + $0x78] sm:$0xf]
        %v4333 = vld [vmem:[#allocation17 + $0x7c] sm:$0xf]
        %v4334 = vld [vmem:[#allocation2 + $0x10] sm:$0x1]
        %v4335 = vld [vmem:[#allocation17 + $0x80] sm:$0xf]
        %v4336 = vld [vmem:[#allocation17 + $0x84] sm:$0xf]
        %v4337 = vld [vmem:[#allocation17 + $0x88] sm:$0xf]
        %v4338 = vld [vmem:[#allocation17 + $0x8c] sm:$0xf]
        %v4339 = vld [vmem:[#allocation17 + $0x90] sm:$0xf]
        %v4340 = vld [vmem:[#allocation17 + $0x94] sm:$0xf]
        %v4341 = vld [vmem:[#allocation17 + $0x98] sm:$0xf]
        %v4342 = vld [vmem:[#allocation17 + $0x9c] sm:$0xf]
        %v4343 = vld [vmem:[#allocation17 + $0xa0] sm:$0xf]
        %v4344 = vld [vmem:[#allocation17 + $0xa4] sm:$0xf]
        %v4345 = vld [vmem:[#allocation17 + $0xa8] sm:$0xf]
        %v4346 = vld [vmem:[#allocation17 + $0xac] sm:$0xf]
        %v4347 = vld [vmem:[#allocation17 + $0xb0] sm:$0xf]
        %v4348 = vld [vmem:[#allocation17 + $0xb4] sm:$0xf]
        %v4349 = vld [vmem:[#allocation17 + $0xb8] sm:$0xf]
        %v4350 = vld [vmem:[#allocation17 + $0xbc] sm:$0xf]
        %v4352 = vunpack.c.l.b16 %v4334
        %v4353 = vpack.c.b16 %v4352, %v4352
        %v4354 = vrot.slane %v4298, 1
        %v4355 = vor.u32 %v4295, %v4354
        %v4357 = vshll.u32 %v4353, 16
        %v4359 = vrot.slane %v4357, 1
        %v4360 = vsel %vm955, %v4355, %v4359
        %v4378 = vunpack.c.l.b16 %v4335
        %v4379 = vunpack.c.l.b16 %v4336
        %v4380 = vunpack.c.l.b16 %v4337
        %v4381 = vunpack.c.l.b16 %v4338
        %v4382 = vunpack.c.l.b16 %v4339
        %v4383 = vunpack.c.l.b16 %v4340
        %v4384 = vunpack.c.l.b16 %v4341
        %v4385 = vunpack.c.l.b16 %v4342
        %v4386 = vunpack.c.l.b16 %v4343
        %v4387 = vunpack.c.l.b16 %v4344
        %v4388 = vunpack.c.l.b16 %v4345
        %v4389 = vunpack.c.l.b16 %v4346
        %v4390 = vunpack.c.l.b16 %v4347
        %v4391 = vunpack.c.l.b16 %v4348
        %v4392 = vunpack.c.l.b16 %v4349
        %v4393 = vunpack.c.l.b16 %v4350
        %v4394 = vpack.c.b16 %v4379, %v4378
        %v4395 = vpack.c.b16 %v4381, %v4380
        %v4396 = vpack.c.b16 %v4383, %v4382
        %v4397 = vpack.c.b16 %v4385, %v4384
        %v4398 = vpack.c.b16 %v4387, %v4386
        %v4399 = vpack.c.b16 %v4389, %v4388
        %v4400 = vpack.c.b16 %v4391, %v4390
        %v4401 = vpack.c.b16 %v4393, %v4392
        %4410 = vmatprep.subr.bf16.mxu0 0
        %4411 = vmatpush1.bf16.msra.mxu0 %v4401
        %4412 = vmatprep.subr.bf16.mxu0 0
        %4413 = vmatpush1.bf16.msra.mxu0 %v4400
        %4414 = vmatprep.subr.bf16.mxu0 0
        %4415 = vmatpush1.bf16.msra.mxu0 %v4399
        %4416 = vmatprep.subr.bf16.mxu0 0
        %4417 = vmatpush1.bf16.msra.mxu0 %v4398
        %4418 = vmatprep.subr.bf16.mxu0 0
        %4419 = vmatpush1.bf16.msra.mxu0 %v4397
        %4420 = vmatprep.subr.bf16.mxu0 0
        %4421 = vmatpush1.bf16.msra.mxu0 %v4396
        %4422 = vmatprep.subr.bf16.mxu0 0
        %4423 = vmatpush1.bf16.msra.mxu0 %v4395
        %4424 = vmatprep.subr.bf16.mxu0 0
        %4425 = vmatpush1.bf16.msra.mxu0 %v4394
        %4426 = vmatprep.subr.bf16.mxu0 0
        %4427 = vmatpush2.bf16.msra.mxu0 0
        %4428 = vmatprep.subr.bf16.mxu0 0
        %4429 = vmatpush2.bf16.msra.mxu0 0
        %4430 = vmatprep.subr.bf16.mxu0 0
        %4431 = vmatpush2.bf16.msra.mxu0 0
        %4432 = vmatprep.subr.bf16.mxu0 0
        %4433 = vmatpush2.bf16.msra.mxu0 0
        %4434 = vmatprep.subr.bf16.mxu0 0
        %4435 = vmatpush2.bf16.msra.mxu0 0
        %4436 = vmatprep.subr.bf16.mxu0 0
        %4437 = vmatpush2.bf16.msra.mxu0 0
        %4438 = vmatprep.subr.bf16.mxu0 0
        %4439 = vmatpush2.bf16.msra.mxu0 0
        %4440 = vmatprep.subr.bf16.mxu0 0
        %4441 = vmatpush2.bf16.msra.mxu0 0
        %4442 = vmatprep.mubr.bf16.mxu0 0
        %4443 = vmatmul.mubr.bf16.gmra.mxu0 %v4360
        %v4444 = vpop.f32.mrf.mxu0
        %v4445 = vadd.f32 0.0, %v4444
        %v4446 = vpop.f32.mrf.mxu0
        %v4447 = vpop.f32.mrf.mxu0
        %v4448 = vadd.f32 0.0, %v4447
        %v4449 = vpop.f32.mrf.mxu0
        %4450 = vdwg.mxu0
        %v4452 = vshrl.u32 %v4291, 16
        %v4454 = vrot.slane %v4452, 3
        %v4455 = vshll.u32 %v4291, 16
        %v4457 = vrot.slane %v4455, 4
        %v4458 = vor.u32 %v4454, %v4457
        %v4460 = vshrl.u32 %v4292, 16
        %v4462 = vrot.slane %v4460, 3
        %v4463 = vshll.u32 %v4292, 16
        %v4465 = vrot.slane %v4463, 4
        %v4466 = vor.u32 %v4462, %v4465
        %v4467 = vsel %vm1048, %v4458, %v4466
        %v4469 = vshrl.u32 %v4301, 16
        %v4471 = vrot.slane %v4469, 3
        %v4472 = vshll.u32 %v4301, 16
        %v4474 = vrot.slane %v4472, 4
        %v4475 = vor.u32 %v4471, %v4474
        %v4476 = vsel %vm1048, %v4475, %v4475
        %v4511 = vunpack.c.l.b16 %v4302
        %v4512 = vunpack.c.l.b16 %v4303
        %v4513 = vunpack.c.l.b16 %v4304
        %v4514 = vunpack.c.l.b16 %v4305
        %v4515 = vunpack.c.l.b16 %v4306
        %v4516 = vunpack.c.l.b16 %v4307
        %v4517 = vunpack.c.l.b16 %v4308
        %v4518 = vunpack.c.l.b16 %v4309
        %v4519 = vunpack.c.l.b16 %v4310
        %v4520 = vunpack.c.l.b16 %v4311
        %v4521 = vunpack.c.l.b16 %v4312
        %v4522 = vunpack.c.l.b16 %v4313
        %v4523 = vunpack.c.l.b16 %v4314
        %v4524 = vunpack.c.l.b16 %v4315
        %v4525 = vunpack.c.l.b16 %v4316
        %v4526 = vunpack.c.l.b16 %v4317
        %v4527 = vunpack.c.l.b16 %v4318
        %v4528 = vunpack.c.l.b16 %v4319
        %v4529 = vunpack.c.l.b16 %v4320
        %v4530 = vunpack.c.l.b16 %v4321
        %v4531 = vunpack.c.l.b16 %v4322
        %v4532 = vunpack.c.l.b16 %v4323
        %v4533 = vunpack.c.l.b16 %v4324
        %v4534 = vunpack.c.l.b16 %v4325
        %v4535 = vunpack.c.l.b16 %v4326
        %v4536 = vunpack.c.l.b16 %v4327
        %v4537 = vunpack.c.l.b16 %v4328
        %v4538 = vunpack.c.l.b16 %v4329
        %v4539 = vunpack.c.l.b16 %v4330
        %v4540 = vunpack.c.l.b16 %v4331
        %v4541 = vunpack.c.l.b16 %v4332
        %v4542 = vunpack.c.l.b16 %v4333
        %v4543 = vpack.c.b16 %v4512, %v4511
        %v4544 = vpack.c.b16 %v4514, %v4513
        %v4545 = vpack.c.b16 %v4516, %v4515
        %v4546 = vpack.c.b16 %v4518, %v4517
        %v4547 = vpack.c.b16 %v4520, %v4519
        %v4548 = vpack.c.b16 %v4522, %v4521
        %v4549 = vpack.c.b16 %v4524, %v4523
        %v4550 = vpack.c.b16 %v4526, %v4525
        %v4551 = vpack.c.b16 %v4528, %v4527
        %v4552 = vpack.c.b16 %v4530, %v4529
        %v4553 = vpack.c.b16 %v4532, %v4531
        %v4554 = vpack.c.b16 %v4534, %v4533
        %v4555 = vpack.c.b16 %v4536, %v4535
        %v4556 = vpack.c.b16 %v4538, %v4537
        %v4557 = vpack.c.b16 %v4540, %v4539
        %v4558 = vpack.c.b16 %v4542, %v4541
        %4575 = vmatprep.subr.bf16.mxu0 0
        %4576 = vmatpush1.bf16.msra.mxu0 %v4550
        %4577 = vmatprep.subr.bf16.mxu0 0
        %4578 = vmatpush1.bf16.msra.mxu0 %v4549
        %4579 = vmatprep.subr.bf16.mxu0 0
        %4580 = vmatpush1.bf16.msra.mxu0 %v4548
        %4581 = vmatprep.subr.bf16.mxu0 0
        %4582 = vmatpush1.bf16.msra.mxu0 %v4547
        %4583 = vmatprep.subr.bf16.mxu0 0
        %4584 = vmatpush1.bf16.msra.mxu0 %v4546
        %4585 = vmatprep.subr.bf16.mxu0 0
        %4586 = vmatpush1.bf16.msra.mxu0 %v4545
        %4587 = vmatprep.subr.bf16.mxu0 0
        %4588 = vmatpush1.bf16.msra.mxu0 %v4544
        %4589 = vmatprep.subr.bf16.mxu0 0
        %4590 = vmatpush1.bf16.msra.mxu0 %v4543
        %4591 = vmatprep.subr.bf16.mxu0 0
        %4592 = vmatpush2.bf16.msra.mxu0 %v4558
        %4593 = vmatprep.subr.bf16.mxu0 0
        %4594 = vmatpush2.bf16.msra.mxu0 %v4557
        %4595 = vmatprep.subr.bf16.mxu0 0
        %4596 = vmatpush2.bf16.msra.mxu0 %v4556
        %4597 = vmatprep.subr.bf16.mxu0 0
        %4598 = vmatpush2.bf16.msra.mxu0 %v4555
        %4599 = vmatprep.subr.bf16.mxu0 0
        %4600 = vmatpush2.bf16.msra.mxu0 %v4554
        %4601 = vmatprep.subr.bf16.mxu0 0
        %4602 = vmatpush2.bf16.msra.mxu0 %v4553
        %4603 = vmatprep.subr.bf16.mxu0 0
        %4604 = vmatpush2.bf16.msra.mxu0 %v4552
        %4605 = vmatprep.subr.bf16.mxu0 0
        %4606 = vmatpush2.bf16.msra.mxu0 %v4551
        %4607 = vmatprep.mubr.bf16.mxu0 %v4476
        %4608 = vmatmul.mubr.bf16.gmra.mxu0 %v4467
        %v4609 = vpop.f32.mrf.mxu0
        %v4610 = vadd.f32 %v4445, %v4609
        %v4611 = vpop.f32.mrf.mxu0
        %v4612 = vpop.f32.mrf.mxu0
        %v4613 = vadd.f32 %v4448, %v4612
        %v4614 = vpop.f32.mrf.mxu0
        %4615 = vdwg.mxu0
        %v4617 = vlaneseq
        %v4618 = vshrl.u32 %v4617, 7
        %v4619 = vsub.s32 0, %v4618
        %v4620 = vrot.slane %v4280, %v4619
        %v4622 = vadd.f32 %v4610, %v4620
        %v4623 = vadd.f32 %v4613, %v4620
        %v4624 = vmax.f32 %v4622, 0.0
        %v4625 = vmax.f32 %v4623, 0.0
        %v4626 = vld [vmem:[#allocation3 + $0x8] sm:$0xf]
        %v4627 = vld [vmem:[#allocation3 + $0xc] sm:$0xf]
        %v4628 = vld [vmem:[%s15] sm:$0xf]
        %v4629 = vld [vmem:[%s15 + $0x4] sm:$0xf]
        %v4630 = vld [vmem:[%s15 + $0x8] sm:$0xf]
        %v4631 = vld [vmem:[%s15 + $0xc] sm:$0xf]
        %v4632 = vld [vmem:[%s15 + $0x10] sm:$0xf]
        %v4633 = vld [vmem:[%s15 + $0x14] sm:$0xf]
        %v4634 = vld [vmem:[%s15 + $0x18] sm:$0xf]
        %v4635 = vld [vmem:[%s15 + $0x1c] sm:$0xf]
        %v4636 = vld [vmem:[%s15 + $0x20] sm:$0xf]
        %v4637 = vld [vmem:[%s15 + $0x24] sm:$0xf]
        %v4638 = vld [vmem:[%s15 + $0x28] sm:$0xf]
        %v4639 = vld [vmem:[%s15 + $0x2c] sm:$0xf]
        %v4640 = vld [vmem:[%s15 + $0x30] sm:$0xf]
        %v4641 = vld [vmem:[%s15 + $0x34] sm:$0xf]
        %v4642 = vld [vmem:[%s15 + $0x38] sm:$0xf]
        %v4643 = vld [vmem:[%s15 + $0x3c] sm:$0xf]
        %v4645 = vlaneseq
        %v4646 = vshrl.u32 %v4645, 7
        %v4647 = vsub.s32 0, %v4646
        %v4648 = vrot.slane %v4281, %v4647
        %v4652 = vunpack.c.l.b16 %v4626
        %v4653 = vunpack.c.l.b16 %v4627
        %v4654 = vpack.c.b16 %v4653, %v4652
        %v4672 = vunpack.c.l.b16 %v4628
        %v4673 = vunpack.c.l.b16 %v4629
        %v4674 = vunpack.c.l.b16 %v4630
        %v4675 = vunpack.c.l.b16 %v4631
        %v4676 = vunpack.c.l.b16 %v4632
        %v4677 = vunpack.c.l.b16 %v4633
        %v4678 = vunpack.c.l.b16 %v4634
        %v4679 = vunpack.c.l.b16 %v4635
        %v4680 = vunpack.c.l.b16 %v4636
        %v4681 = vunpack.c.l.b16 %v4637
        %v4682 = vunpack.c.l.b16 %v4638
        %v4683 = vunpack.c.l.b16 %v4639
        %v4684 = vunpack.c.l.b16 %v4640
        %v4685 = vunpack.c.l.b16 %v4641
        %v4686 = vunpack.c.l.b16 %v4642
        %v4687 = vunpack.c.l.b16 %v4643
        %v4688 = vpack.c.b16 %v4673, %v4672
        %v4689 = vpack.c.b16 %v4675, %v4674
        %v4690 = vpack.c.b16 %v4677, %v4676
        %v4691 = vpack.c.b16 %v4679, %v4678
        %v4692 = vpack.c.b16 %v4681, %v4680
        %v4693 = vpack.c.b16 %v4683, %v4682
        %v4694 = vpack.c.b16 %v4685, %v4684
        %v4695 = vpack.c.b16 %v4687, %v4686
        %4704 = vmatprep.subr.bf16.mxu0 0
        %4705 = vmatpush1.bf16.msra.mxu0 %v4695
        %4706 = vmatprep.subr.bf16.mxu0 0
        %4707 = vmatpush1.bf16.msra.mxu0 %v4694
        %4708 = vmatprep.subr.bf16.mxu0 0
        %4709 = vmatpush1.bf16.msra.mxu0 %v4693
        %4710 = vmatprep.subr.bf16.mxu0 0
        %4711 = vmatpush1.bf16.msra.mxu0 %v4692
        %4712 = vmatprep.subr.bf16.mxu0 0
        %4713 = vmatpush1.bf16.msra.mxu0 %v4691
        %4714 = vmatprep.subr.bf16.mxu0 0
        %4715 = vmatpush1.bf16.msra.mxu0 %v4690
        %4716 = vmatprep.subr.bf16.mxu0 0
        %4717 = vmatpush1.bf16.msra.mxu0 %v4689
        %4718 = vmatprep.subr.bf16.mxu0 0
        %4719 = vmatpush1.bf16.msra.mxu0 %v4688
        %4720 = vmatprep.subr.bf16.mxu0 0
        %4721 = vmatpush2.bf16.msra.mxu0 0
        %4722 = vmatprep.subr.bf16.mxu0 0
        %4723 = vmatpush2.bf16.msra.mxu0 0
        %4724 = vmatprep.subr.bf16.mxu0 0
        %4725 = vmatpush2.bf16.msra.mxu0 0
        %4726 = vmatprep.subr.bf16.mxu0 0
        %4727 = vmatpush2.bf16.msra.mxu0 0
        %4728 = vmatprep.subr.bf16.mxu0 0
        %4729 = vmatpush2.bf16.msra.mxu0 0
        %4730 = vmatprep.subr.bf16.mxu0 0
        %4731 = vmatpush2.bf16.msra.mxu0 0
        %4732 = vmatprep.subr.bf16.mxu0 0
        %4733 = vmatpush2.bf16.msra.mxu0 0
        %4734 = vmatprep.subr.bf16.mxu0 0
        %4735 = vmatpush2.bf16.msra.mxu0 0
        %4736 = vmatprep.mubr.bf16.mxu0 0
        %4737 = vmatmul.mubr.bf16.gmra.mxu0 %v4654
        %v4738 = vpop.f32.mrf.mxu0
        %v4739 = vadd.f32 %v4648, %v4738
        %v4740 = vpop.f32.mrf.mxu0
        %v4741 = vpop.f32.mrf.mxu0
        %v4742 = vadd.f32 %v4648, %v4741
        %v4743 = vpop.f32.mrf.mxu0
        %4744 = vdwg.mxu0
        %v4745 = vadd.f32 %v4624, %v4739
        %v4746 = vadd.f32 %v4625, %v4742
        %v4747 = vpack.c.bf16 %v4746, %v4745
        %v4749 = vunpack.c.l.b16 %v4747
        %v4750 = vunpack.c.h.b16 %v4747
        %v4751 = vpack.c.b16 %v4749, %v4749
        %v4752 = vpack.c.b16 %v4750, %v4750
        %4755 = vst [vmem:[#allocation4 + $0x8] sm:$0xf] %v4751
        %4756 = vst [vmem:[#allocation4 + $0xc] sm:$0xf] %v4752
        %v4757 = vld [vmem:[%s18] sm:$0x1]
        %v4758 = vld [vmem:[#allocation4 + $0x4] sm:$0xc]
        %v4759 = vld [vmem:[#allocation4 + $0x8] sm:$0xf]
        %v4760 = vld [vmem:[#allocation4 + $0xc] sm:$0x7]
        %v4761 = vld [vmem:[#allocation4 + $0x4] sm:$0x8]
        %v4765 = vunpack.c.l.b16 %v4758
        %v4766 = vunpack.c.l.b16 %v4759
        %v4767 = vunpack.c.l.b16 %v4760
        %v4768 = vpack.c.b16 %v4766, %v4765
        %v4769 = vpack.c.b16 %v4767, %v4767
        %v4771 = vunpack.c.l.b16 %v4761
        %v4772 = vpack.c.b16 %v4766, %v4771
        %v4774 = vshrl.u32 %v4772, 16
        %v4776 = vshll.u32 %v4772, 16
        %v4778 = vrot.slane %v4776, 1
        %v4779 = vor.u32 %v4774, %v4778
        %v4781 = vshll.u32 %v4769, 16
        %v4783 = vrot.slane %v4781, 1
        %v4784 = vsel %vm955, %v4779, %v4783
        %v4785 = vshrl.u32 %v4769, 16
        %v4787 = vor.u32 %v4785, %v4783
        %v4788 = vld [vmem:[#allocation18] sm:$0xf]
        %v4789 = vld [vmem:[#allocation18 + $0x4] sm:$0xf]
        %v4790 = vld [vmem:[#allocation18 + $0x8] sm:$0xf]
        %v4791 = vld [vmem:[#allocation18 + $0xc] sm:$0xf]
        %v4792 = vld [vmem:[#allocation18 + $0x10] sm:$0xf]
        %v4793 = vld [vmem:[#allocation18 + $0x14] sm:$0xf]
        %v4794 = vld [vmem:[#allocation18 + $0x18] sm:$0xf]
        %v4795 = vld [vmem:[#allocation18 + $0x1c] sm:$0xf]
        %v4796 = vld [vmem:[#allocation18 + $0x20] sm:$0xf]
        %v4797 = vld [vmem:[#allocation18 + $0x24] sm:$0xf]
        %v4798 = vld [vmem:[#allocation18 + $0x28] sm:$0xf]
        %v4799 = vld [vmem:[#allocation18 + $0x2c] sm:$0xf]
        %v4800 = vld [vmem:[#allocation18 + $0x30] sm:$0xf]
        %v4801 = vld [vmem:[#allocation18 + $0x34] sm:$0xf]
        %v4802 = vld [vmem:[#allocation18 + $0x38] sm:$0xf]
        %v4803 = vld [vmem:[#allocation18 + $0x3c] sm:$0xf]
        %v4804 = vld [vmem:[#allocation18 + $0x40] sm:$0xf]
        %v4805 = vld [vmem:[#allocation18 + $0x44] sm:$0xf]
        %v4806 = vld [vmem:[#allocation18 + $0x48] sm:$0xf]
        %v4807 = vld [vmem:[#allocation18 + $0x4c] sm:$0xf]
        %v4808 = vld [vmem:[#allocation18 + $0x50] sm:$0xf]
        %v4809 = vld [vmem:[#allocation18 + $0x54] sm:$0xf]
        %v4810 = vld [vmem:[#allocation18 + $0x58] sm:$0xf]
        %v4811 = vld [vmem:[#allocation18 + $0x5c] sm:$0xf]
        %v4812 = vld [vmem:[#allocation18 + $0x60] sm:$0xf]
        %v4813 = vld [vmem:[#allocation18 + $0x64] sm:$0xf]
        %v4814 = vld [vmem:[#allocation18 + $0x68] sm:$0xf]
        %v4815 = vld [vmem:[#allocation18 + $0x6c] sm:$0xf]
        %v4816 = vld [vmem:[#allocation18 + $0x70] sm:$0xf]
        %v4817 = vld [vmem:[#allocation18 + $0x74] sm:$0xf]
        %v4818 = vld [vmem:[#allocation18 + $0x78] sm:$0xf]
        %v4819 = vld [vmem:[#allocation18 + $0x7c] sm:$0xf]
        %v4820 = vld [vmem:[#allocation4 + $0xc] sm:$0xf]
        %v4822 = vunpack.c.l.b16 %v4820
        %v4823 = vpack.c.b16 %v4822, %v4822
        %v4824 = vpack.c.b16 %v4822, %v4766
        %v4826 = vshrl.u32 %v4824, 16
        %v4828 = vrot.slane %v4826, 4
        %v4829 = vshll.u32 %v4824, 16
        %v4831 = vrot.slane %v4829, 5
        %v4832 = vor.u32 %v4828, %v4831
        %v4833 = vld [vmem:[#allocation18 + $0x80] sm:$0xf]
        %v4834 = vld [vmem:[#allocation18 + $0x84] sm:$0xf]
        %v4835 = vld [vmem:[#allocation18 + $0x88] sm:$0xf]
        %v4836 = vld [vmem:[#allocation18 + $0x8c] sm:$0xf]
        %v4837 = vld [vmem:[#allocation18 + $0x90] sm:$0xf]
        %v4838 = vld [vmem:[#allocation18 + $0x94] sm:$0xf]
        %v4839 = vld [vmem:[#allocation18 + $0x98] sm:$0xf]
        %v4840 = vld [vmem:[#allocation18 + $0x9c] sm:$0xf]
        %v4841 = vld [vmem:[#allocation18 + $0xa0] sm:$0xf]
        %v4842 = vld [vmem:[#allocation18 + $0xa4] sm:$0xf]
        %v4843 = vld [vmem:[#allocation18 + $0xa8] sm:$0xf]
        %v4844 = vld [vmem:[#allocation18 + $0xac] sm:$0xf]
        %v4845 = vld [vmem:[#allocation18 + $0xb0] sm:$0xf]
        %v4846 = vld [vmem:[#allocation18 + $0xb4] sm:$0xf]
        %v4847 = vld [vmem:[#allocation18 + $0xb8] sm:$0xf]
        %v4848 = vld [vmem:[#allocation18 + $0xbc] sm:$0xf]
        %v4849 = vld [vmem:[#allocation18 + $0xc0] sm:$0xf]
        %v4850 = vld [vmem:[#allocation18 + $0xc4] sm:$0xf]
        %v4851 = vld [vmem:[#allocation18 + $0xc8] sm:$0xf]
        %v4852 = vld [vmem:[#allocation18 + $0xcc] sm:$0xf]
        %v4853 = vld [vmem:[#allocation18 + $0xd0] sm:$0xf]
        %v4854 = vld [vmem:[#allocation18 + $0xd4] sm:$0xf]
        %v4855 = vld [vmem:[#allocation18 + $0xd8] sm:$0xf]
        %v4856 = vld [vmem:[#allocation18 + $0xdc] sm:$0xf]
        %v4857 = vld [vmem:[#allocation18 + $0xe0] sm:$0xf]
        %v4858 = vld [vmem:[#allocation18 + $0xe4] sm:$0xf]
        %v4859 = vld [vmem:[#allocation18 + $0xe8] sm:$0xf]
        %v4860 = vld [vmem:[#allocation18 + $0xec] sm:$0xf]
        %v4861 = vld [vmem:[#allocation18 + $0xf0] sm:$0xf]
        %v4862 = vld [vmem:[#allocation18 + $0xf4] sm:$0xf]
        %v4863 = vld [vmem:[#allocation18 + $0xf8] sm:$0xf]
        %v4864 = vld [vmem:[#allocation18 + $0xfc] sm:$0xf]
        %v4865 = vrot.slane %v4774, 3
        %v4866 = vrot.slane %v4776, 4
        %v4867 = vor.u32 %v4865, %v4866
        %v4869 = vshrl.u32 %v4823, 16
        %v4871 = vrot.slane %v4869, 3
        %v4872 = vshll.u32 %v4823, 16
        %v4874 = vrot.slane %v4872, 4
        %v4875 = vor.u32 %v4871, %v4874
        %v4876 = vsel %vm1048, %v4867, %v4875
        %v4878 = vshrl.u32 %v4832, 16
        %v4880 = vrot.slane %v4878, 3
        %v4881 = vshll.u32 %v4832, 16
        %v4883 = vrot.slane %v4881, 4
        %v4884 = vor.u32 %v4880, %v4883
        %v4885 = vsel %vm1048, %v4884, %v4884
        %v4920 = vunpack.c.l.b16 %v4833
        %v4921 = vunpack.c.l.b16 %v4834
        %v4922 = vunpack.c.l.b16 %v4835
        %v4923 = vunpack.c.l.b16 %v4836
        %v4924 = vunpack.c.l.b16 %v4837
        %v4925 = vunpack.c.l.b16 %v4838
        %v4926 = vunpack.c.l.b16 %v4839
        %v4927 = vunpack.c.l.b16 %v4840
        %v4928 = vunpack.c.l.b16 %v4841
        %v4929 = vunpack.c.l.b16 %v4842
        %v4930 = vunpack.c.l.b16 %v4843
        %v4931 = vunpack.c.l.b16 %v4844
        %v4932 = vunpack.c.l.b16 %v4845
        %v4933 = vunpack.c.l.b16 %v4846
        %v4934 = vunpack.c.l.b16 %v4847
        %v4935 = vunpack.c.l.b16 %v4848
        %v4936 = vunpack.c.l.b16 %v4849
        %v4937 = vunpack.c.l.b16 %v4850
        %v4938 = vunpack.c.l.b16 %v4851
        %v4939 = vunpack.c.l.b16 %v4852
        %v4940 = vunpack.c.l.b16 %v4853
        %v4941 = vunpack.c.l.b16 %v4854
        %v4942 = vunpack.c.l.b16 %v4855
        %v4943 = vunpack.c.l.b16 %v4856
        %v4944 = vunpack.c.l.b16 %v4857
        %v4945 = vunpack.c.l.b16 %v4858
        %v4946 = vunpack.c.l.b16 %v4859
        %v4947 = vunpack.c.l.b16 %v4860
        %v4948 = vunpack.c.l.b16 %v4861
        %v4949 = vunpack.c.l.b16 %v4862
        %v4950 = vunpack.c.l.b16 %v4863
        %v4951 = vunpack.c.l.b16 %v4864
        %v4952 = vpack.c.b16 %v4921, %v4920
        %v4953 = vpack.c.b16 %v4923, %v4922
        %v4954 = vpack.c.b16 %v4925, %v4924
        %v4955 = vpack.c.b16 %v4927, %v4926
        %v4956 = vpack.c.b16 %v4929, %v4928
        %v4957 = vpack.c.b16 %v4931, %v4930
        %v4958 = vpack.c.b16 %v4933, %v4932
        %v4959 = vpack.c.b16 %v4935, %v4934
        %v4960 = vpack.c.b16 %v4937, %v4936
        %v4961 = vpack.c.b16 %v4939, %v4938
        %v4962 = vpack.c.b16 %v4941, %v4940
        %v4963 = vpack.c.b16 %v4943, %v4942
        %v4964 = vpack.c.b16 %v4945, %v4944
        %v4965 = vpack.c.b16 %v4947, %v4946
        %v4966 = vpack.c.b16 %v4949, %v4948
        %v4967 = vpack.c.b16 %v4951, %v4950
        %4984 = vmatprep.subr.bf16.mxu0 0
        %4985 = vmatpush1.bf16.msra.mxu0 %v4959
        %4986 = vmatprep.subr.bf16.mxu0 0
        %4987 = vmatpush1.bf16.msra.mxu0 %v4958
        %4988 = vmatprep.subr.bf16.mxu0 0
        %4989 = vmatpush1.bf16.msra.mxu0 %v4957
        %4990 = vmatprep.subr.bf16.mxu0 0
        %4991 = vmatpush1.bf16.msra.mxu0 %v4956
        %4992 = vmatprep.subr.bf16.mxu0 0
        %4993 = vmatpush1.bf16.msra.mxu0 %v4955
        %4994 = vmatprep.subr.bf16.mxu0 0
        %4995 = vmatpush1.bf16.msra.mxu0 %v4954
        %4996 = vmatprep.subr.bf16.mxu0 0
        %4997 = vmatpush1.bf16.msra.mxu0 %v4953
        %4998 = vmatprep.subr.bf16.mxu0 0
        %4999 = vmatpush1.bf16.msra.mxu0 %v4952
        %5000 = vmatprep.subr.bf16.mxu0 0
        %5001 = vmatpush2.bf16.msra.mxu0 %v4967
        %5002 = vmatprep.subr.bf16.mxu0 0
        %5003 = vmatpush2.bf16.msra.mxu0 %v4966
        %5004 = vmatprep.subr.bf16.mxu0 0
        %5005 = vmatpush2.bf16.msra.mxu0 %v4965
        %5006 = vmatprep.subr.bf16.mxu0 0
        %5007 = vmatpush2.bf16.msra.mxu0 %v4964
        %5008 = vmatprep.subr.bf16.mxu0 0
        %5009 = vmatpush2.bf16.msra.mxu0 %v4963
        %5010 = vmatprep.subr.bf16.mxu0 0
        %5011 = vmatpush2.bf16.msra.mxu0 %v4962
        %5012 = vmatprep.subr.bf16.mxu0 0
        %5013 = vmatpush2.bf16.msra.mxu0 %v4961
        %5014 = vmatprep.subr.bf16.mxu0 0
        %5015 = vmatpush2.bf16.msra.mxu0 %v4960
        %5016 = vmatprep.mubr.bf16.mxu0 %v4885
        %5017 = vmatmul.mubr.bf16.gmra.mxu0 %v4876
        %v5018 = vpop.f32.mrf.mxu0
        %v5019 = vadd.f32 0.0, %v5018
        %v5020 = vpop.f32.mrf.mxu0
        %v5021 = vpop.f32.mrf.mxu0
        %v5022 = vadd.f32 0.0, %v5021
        %v5023 = vpop.f32.mrf.mxu0
        %5024 = vdwg.mxu0
        %v5026 = vshrl.u32 %v4768, 16
        %v5028 = vrot.slane %v5026, 2
        %v5029 = vshll.u32 %v4768, 16
        %v5031 = vrot.slane %v5029, 3
        %v5032 = vor.u32 %v5028, %v5031
        %v5033 = vrot.slane %v4785, 2
        %v5034 = vrot.slane %v4781, 3
        %v5035 = vor.u32 %v5033, %v5034
        %v5036 = vsel %vm1209, %v5032, %v5035
        %v5038 = vshrl.u32 %v4784, 16
        %v5040 = vrot.slane %v5038, 2
        %v5041 = vshll.u32 %v4784, 16
        %v5043 = vrot.slane %v5041, 3
        %v5044 = vor.u32 %v5040, %v5043
        %v5046 = vshrl.u32 %v4787, 16
        %v5048 = vrot.slane %v5046, 2
        %v5049 = vshll.u32 %v4787, 16
        %v5051 = vrot.slane %v5049, 3
        %v5052 = vor.u32 %v5048, %v5051
        %v5053 = vsel %vm1209, %v5044, %v5052
        %v5088 = vunpack.c.l.b16 %v4788
        %v5089 = vunpack.c.l.b16 %v4789
        %v5090 = vunpack.c.l.b16 %v4790
        %v5091 = vunpack.c.l.b16 %v4791
        %v5092 = vunpack.c.l.b16 %v4792
        %v5093 = vunpack.c.l.b16 %v4793
        %v5094 = vunpack.c.l.b16 %v4794
        %v5095 = vunpack.c.l.b16 %v4795
        %v5096 = vunpack.c.l.b16 %v4796
        %v5097 = vunpack.c.l.b16 %v4797
        %v5098 = vunpack.c.l.b16 %v4798
        %v5099 = vunpack.c.l.b16 %v4799
        %v5100 = vunpack.c.l.b16 %v4800
        %v5101 = vunpack.c.l.b16 %v4801
        %v5102 = vunpack.c.l.b16 %v4802
        %v5103 = vunpack.c.l.b16 %v4803
        %v5104 = vunpack.c.l.b16 %v4804
        %v5105 = vunpack.c.l.b16 %v4805
        %v5106 = vunpack.c.l.b16 %v4806
        %v5107 = vunpack.c.l.b16 %v4807
        %v5108 = vunpack.c.l.b16 %v4808
        %v5109 = vunpack.c.l.b16 %v4809
        %v5110 = vunpack.c.l.b16 %v4810
        %v5111 = vunpack.c.l.b16 %v4811
        %v5112 = vunpack.c.l.b16 %v4812
        %v5113 = vunpack.c.l.b16 %v4813
        %v5114 = vunpack.c.l.b16 %v4814
        %v5115 = vunpack.c.l.b16 %v4815
        %v5116 = vunpack.c.l.b16 %v4816
        %v5117 = vunpack.c.l.b16 %v4817
        %v5118 = vunpack.c.l.b16 %v4818
        %v5119 = vunpack.c.l.b16 %v4819
        %v5120 = vpack.c.b16 %v5089, %v5088
        %v5121 = vpack.c.b16 %v5091, %v5090
        %v5122 = vpack.c.b16 %v5093, %v5092
        %v5123 = vpack.c.b16 %v5095, %v5094
        %v5124 = vpack.c.b16 %v5097, %v5096
        %v5125 = vpack.c.b16 %v5099, %v5098
        %v5126 = vpack.c.b16 %v5101, %v5100
        %v5127 = vpack.c.b16 %v5103, %v5102
        %v5128 = vpack.c.b16 %v5105, %v5104
        %v5129 = vpack.c.b16 %v5107, %v5106
        %v5130 = vpack.c.b16 %v5109, %v5108
        %v5131 = vpack.c.b16 %v5111, %v5110
        %v5132 = vpack.c.b16 %v5113, %v5112
        %v5133 = vpack.c.b16 %v5115, %v5114
        %v5134 = vpack.c.b16 %v5117, %v5116
        %v5135 = vpack.c.b16 %v5119, %v5118
        %5152 = vmatprep.subr.bf16.mxu0 0
        %5153 = vmatpush1.bf16.msra.mxu0 %v5127
        %5154 = vmatprep.subr.bf16.mxu0 0
        %5155 = vmatpush1.bf16.msra.mxu0 %v5126
        %5156 = vmatprep.subr.bf16.mxu0 0
        %5157 = vmatpush1.bf16.msra.mxu0 %v5125
        %5158 = vmatprep.subr.bf16.mxu0 0
        %5159 = vmatpush1.bf16.msra.mxu0 %v5124
        %5160 = vmatprep.subr.bf16.mxu0 0
        %5161 = vmatpush1.bf16.msra.mxu0 %v5123
        %5162 = vmatprep.subr.bf16.mxu0 0
        %5163 = vmatpush1.bf16.msra.mxu0 %v5122
        %5164 = vmatprep.subr.bf16.mxu0 0
        %5165 = vmatpush1.bf16.msra.mxu0 %v5121
        %5166 = vmatprep.subr.bf16.mxu0 0
        %5167 = vmatpush1.bf16.msra.mxu0 %v5120
        %5168 = vmatprep.subr.bf16.mxu0 0
        %5169 = vmatpush2.bf16.msra.mxu0 %v5135
        %5170 = vmatprep.subr.bf16.mxu0 0
        %5171 = vmatpush2.bf16.msra.mxu0 %v5134
        %5172 = vmatprep.subr.bf16.mxu0 0
        %5173 = vmatpush2.bf16.msra.mxu0 %v5133
        %5174 = vmatprep.subr.bf16.mxu0 0
        %5175 = vmatpush2.bf16.msra.mxu0 %v5132
        %5176 = vmatprep.subr.bf16.mxu0 0
        %5177 = vmatpush2.bf16.msra.mxu0 %v5131
        %5178 = vmatprep.subr.bf16.mxu0 0
        %5179 = vmatpush2.bf16.msra.mxu0 %v5130
        %5180 = vmatprep.subr.bf16.mxu0 0
        %5181 = vmatpush2.bf16.msra.mxu0 %v5129
        %5182 = vmatprep.subr.bf16.mxu0 0
        %5183 = vmatpush2.bf16.msra.mxu0 %v5128
        %5184 = vmatprep.mubr.bf16.mxu0 %v5053
        %5185 = vmatmul.mubr.bf16.gmra.mxu0 %v5036
        %v5186 = vpop.f32.mrf.mxu0
        %v5187 = vadd.f32 %v5019, %v5186
        %v5188 = vpop.f32.mrf.mxu0
        %v5189 = vpop.f32.mrf.mxu0
        %v5190 = vadd.f32 %v5022, %v5189
        %v5191 = vpop.f32.mrf.mxu0
        %5192 = vdwg.mxu0
        %v5193 = vld [vmem:[#allocation4 + $0x8] sm:$0xf]
        %v5194 = vld [vmem:[#allocation4 + $0xc] sm:$0xf]
        %v5195 = vld [vmem:[#allocation4 + $0x10] sm:$0x1]
        %v5196 = vld [vmem:[#allocation4 + $0x8] sm:$0xe]
        %v5200 = vunpack.c.l.b16 %v5193
        %v5201 = vunpack.c.l.b16 %v5194
        %v5202 = vunpack.c.l.b16 %v5195
        %v5203 = vpack.c.b16 %v5201, %v5200
        %v5204 = vpack.c.b16 %v5202, %v5202
        %v5206 = vunpack.c.l.b16 %v5196
        %v5207 = vpack.c.b16 %v5201, %v5206
        %v5209 = vshrl.u32 %v5207, 16
        %v5211 = vshll.u32 %v5207, 16
        %v5213 = vrot.slane %v5211, 1
        %v5214 = vor.u32 %v5209, %v5213
        %v5216 = vshll.u32 %v5204, 16
        %v5218 = vrot.slane %v5216, 1
        %v5219 = vsel %vm955, %v5214, %v5218
        %v5220 = vshrl.u32 %v5204, 16
        %v5222 = vld [vmem:[#allocation18 + $0x100] sm:$0xf]
        %v5223 = vld [vmem:[#allocation18 + $0x104] sm:$0xf]
        %v5224 = vld [vmem:[#allocation18 + $0x108] sm:$0xf]
        %v5225 = vld [vmem:[#allocation18 + $0x10c] sm:$0xf]
        %v5226 = vld [vmem:[#allocation18 + $0x110] sm:$0xf]
        %v5227 = vld [vmem:[#allocation18 + $0x114] sm:$0xf]
        %v5228 = vld [vmem:[#allocation18 + $0x118] sm:$0xf]
        %v5229 = vld [vmem:[#allocation18 + $0x11c] sm:$0xf]
        %v5230 = vld [vmem:[#allocation18 + $0x120] sm:$0xf]
        %v5231 = vld [vmem:[#allocation18 + $0x124] sm:$0xf]
        %v5232 = vld [vmem:[#allocation18 + $0x128] sm:$0xf]
        %v5233 = vld [vmem:[#allocation18 + $0x12c] sm:$0xf]
        %v5234 = vld [vmem:[#allocation18 + $0x130] sm:$0xf]
        %v5235 = vld [vmem:[#allocation18 + $0x134] sm:$0xf]
        %v5236 = vld [vmem:[#allocation18 + $0x138] sm:$0xf]
        %v5237 = vld [vmem:[#allocation18 + $0x13c] sm:$0xf]
        %v5238 = vld [vmem:[#allocation18 + $0x140] sm:$0xf]
        %v5239 = vld [vmem:[#allocation18 + $0x144] sm:$0xf]
        %v5240 = vld [vmem:[#allocation18 + $0x148] sm:$0xf]
        %v5241 = vld [vmem:[#allocation18 + $0x14c] sm:$0xf]
        %v5242 = vld [vmem:[#allocation18 + $0x150] sm:$0xf]
        %v5243 = vld [vmem:[#allocation18 + $0x154] sm:$0xf]
        %v5244 = vld [vmem:[#allocation18 + $0x158] sm:$0xf]
        %v5245 = vld [vmem:[#allocation18 + $0x15c] sm:$0xf]
        %v5246 = vld [vmem:[#allocation18 + $0x160] sm:$0xf]
        %v5247 = vld [vmem:[#allocation18 + $0x164] sm:$0xf]
        %v5248 = vld [vmem:[#allocation18 + $0x168] sm:$0xf]
        %v5249 = vld [vmem:[#allocation18 + $0x16c] sm:$0xf]
        %v5250 = vld [vmem:[#allocation18 + $0x170] sm:$0xf]
        %v5251 = vld [vmem:[#allocation18 + $0x174] sm:$0xf]
        %v5252 = vld [vmem:[#allocation18 + $0x178] sm:$0xf]
        %v5253 = vld [vmem:[#allocation18 + $0x17c] sm:$0xf]
        %v5255 = vshrl.u32 %v5203, 16
        %v5257 = vshll.u32 %v5203, 16
        %v5259 = vrot.slane %v5257, 1
        %v5260 = vor.u32 %v5255, %v5259
        %v5261 = vsel %vm955, %v5260, %v5218
        %v5263 = vshrl.u32 %v5219, 16
        %v5265 = vshll.u32 %v5219, 16
        %v5267 = vrot.slane %v5265, 1
        %v5268 = vor.u32 %v5263, %v5267
        %v5270 = vshll.u32 %v5220, 16
        %v5272 = vrot.slane %v5270, 1
        %v5273 = vsel %vm955, %v5268, %v5272
        %v5308 = vunpack.c.l.b16 %v5222
        %v5309 = vunpack.c.l.b16 %v5223
        %v5310 = vunpack.c.l.b16 %v5224
        %v5311 = vunpack.c.l.b16 %v5225
        %v5312 = vunpack.c.l.b16 %v5226
        %v5313 = vunpack.c.l.b16 %v5227
        %v5314 = vunpack.c.l.b16 %v5228
        %v5315 = vunpack.c.l.b16 %v5229
        %v5316 = vunpack.c.l.b16 %v5230
        %v5317 = vunpack.c.l.b16 %v5231
        %v5318 = vunpack.c.l.b16 %v5232
        %v5319 = vunpack.c.l.b16 %v5233
        %v5320 = vunpack.c.l.b16 %v5234
        %v5321 = vunpack.c.l.b16 %v5235
        %v5322 = vunpack.c.l.b16 %v5236
        %v5323 = vunpack.c.l.b16 %v5237
        %v5324 = vunpack.c.l.b16 %v5238
        %v5325 = vunpack.c.l.b16 %v5239
        %v5326 = vunpack.c.l.b16 %v5240
        %v5327 = vunpack.c.l.b16 %v5241
        %v5328 = vunpack.c.l.b16 %v5242
        %v5329 = vunpack.c.l.b16 %v5243
        %v5330 = vunpack.c.l.b16 %v5244
        %v5331 = vunpack.c.l.b16 %v5245
        %v5332 = vunpack.c.l.b16 %v5246
        %v5333 = vunpack.c.l.b16 %v5247
        %v5334 = vunpack.c.l.b16 %v5248
        %v5335 = vunpack.c.l.b16 %v5249
        %v5336 = vunpack.c.l.b16 %v5250
        %v5337 = vunpack.c.l.b16 %v5251
        %v5338 = vunpack.c.l.b16 %v5252
        %v5339 = vunpack.c.l.b16 %v5253
        %v5340 = vpack.c.b16 %v5309, %v5308
        %v5341 = vpack.c.b16 %v5311, %v5310
        %v5342 = vpack.c.b16 %v5313, %v5312
        %v5343 = vpack.c.b16 %v5315, %v5314
        %v5344 = vpack.c.b16 %v5317, %v5316
        %v5345 = vpack.c.b16 %v5319, %v5318
        %v5346 = vpack.c.b16 %v5321, %v5320
        %v5347 = vpack.c.b16 %v5323, %v5322
        %v5348 = vpack.c.b16 %v5325, %v5324
        %v5349 = vpack.c.b16 %v5327, %v5326
        %v5350 = vpack.c.b16 %v5329, %v5328
        %v5351 = vpack.c.b16 %v5331, %v5330
        %v5352 = vpack.c.b16 %v5333, %v5332
        %v5353 = vpack.c.b16 %v5335, %v5334
        %v5354 = vpack.c.b16 %v5337, %v5336
        %v5355 = vpack.c.b16 %v5339, %v5338
        %5372 = vmatprep.subr.bf16.mxu0 0
        %5373 = vmatpush1.bf16.msra.mxu0 %v5347
        %5374 = vmatprep.subr.bf16.mxu0 0
        %5375 = vmatpush1.bf16.msra.mxu0 %v5346
        %5376 = vmatprep.subr.bf16.mxu0 0
        %5377 = vmatpush1.bf16.msra.mxu0 %v5345
        %5378 = vmatprep.subr.bf16.mxu0 0
        %5379 = vmatpush1.bf16.msra.mxu0 %v5344
        %5380 = vmatprep.subr.bf16.mxu0 0
        %5381 = vmatpush1.bf16.msra.mxu0 %v5343
        %5382 = vmatprep.subr.bf16.mxu0 0
        %5383 = vmatpush1.bf16.msra.mxu0 %v5342
        %5384 = vmatprep.subr.bf16.mxu0 0
        %5385 = vmatpush1.bf16.msra.mxu0 %v5341
        %5386 = vmatprep.subr.bf16.mxu0 0
        %5387 = vmatpush1.bf16.msra.mxu0 %v5340
        %5388 = vmatprep.subr.bf16.mxu0 0
        %5389 = vmatpush2.bf16.msra.mxu0 %v5355
        %5390 = vmatprep.subr.bf16.mxu0 0
        %5391 = vmatpush2.bf16.msra.mxu0 %v5354
        %5392 = vmatprep.subr.bf16.mxu0 0
        %5393 = vmatpush2.bf16.msra.mxu0 %v5353
        %5394 = vmatprep.subr.bf16.mxu0 0
        %5395 = vmatpush2.bf16.msra.mxu0 %v5352
        %5396 = vmatprep.subr.bf16.mxu0 0
        %5397 = vmatpush2.bf16.msra.mxu0 %v5351
        %5398 = vmatprep.subr.bf16.mxu0 0
        %5399 = vmatpush2.bf16.msra.mxu0 %v5350
        %5400 = vmatprep.subr.bf16.mxu0 0
        %5401 = vmatpush2.bf16.msra.mxu0 %v5349
        %5402 = vmatprep.subr.bf16.mxu0 0
        %5403 = vmatpush2.bf16.msra.mxu0 %v5348
        %5404 = vmatprep.mubr.bf16.mxu0 %v5273
        %5405 = vmatmul.mubr.bf16.gmra.mxu0 %v5261
        %v5406 = vpop.f32.mrf.mxu0
        %v5407 = vadd.f32 0.0, %v5406
        %v5408 = vpop.f32.mrf.mxu0
        %v5409 = vpop.f32.mrf.mxu0
        %v5410 = vadd.f32 0.0, %v5409
        %v5411 = vpop.f32.mrf.mxu0
        %5412 = vdwg.mxu0
        %v5413 = vadd.f32 %v5187, %v5407
        %v5414 = vadd.f32 %v5190, %v5410
        %v5415 = vld [vmem:[#allocation4 + $0x10] sm:$0x3]
        %v5416 = vld [vmem:[#allocation4 + $0x8] sm:$0xc]
        %v5418 = vunpack.c.l.b16 %v5415
        %v5419 = vpack.c.b16 %v5418, %v5418
        %v5421 = vunpack.c.l.b16 %v5416
        %v5422 = vpack.c.b16 %v5201, %v5421
        %v5424 = vshrl.u32 %v5422, 16
        %v5426 = vshll.u32 %v5422, 16
        %v5428 = vrot.slane %v5426, 1
        %v5429 = vor.u32 %v5424, %v5428
        %v5431 = vshll.u32 %v5419, 16
        %v5433 = vrot.slane %v5431, 1
        %v5434 = vsel %vm955, %v5429, %v5433
        %v5435 = vshrl.u32 %v5419, 16
        %v5437 = vor.u32 %v5435, %v5433
        %v5438 = vld [vmem:[#allocation18 + $0x180] sm:$0xf]
        %v5439 = vld [vmem:[#allocation18 + $0x184] sm:$0xf]
        %v5440 = vld [vmem:[#allocation18 + $0x188] sm:$0xf]
        %v5441 = vld [vmem:[#allocation18 + $0x18c] sm:$0xf]
        %v5442 = vld [vmem:[#allocation18 + $0x190] sm:$0xf]
        %v5443 = vld [vmem:[#allocation18 + $0x194] sm:$0xf]
        %v5444 = vld [vmem:[#allocation18 + $0x198] sm:$0xf]
        %v5445 = vld [vmem:[#allocation18 + $0x19c] sm:$0xf]
        %v5446 = vld [vmem:[#allocation18 + $0x1a0] sm:$0xf]
        %v5447 = vld [vmem:[#allocation18 + $0x1a4] sm:$0xf]
        %v5448 = vld [vmem:[#allocation18 + $0x1a8] sm:$0xf]
        %v5449 = vld [vmem:[#allocation18 + $0x1ac] sm:$0xf]
        %v5450 = vld [vmem:[#allocation18 + $0x1b0] sm:$0xf]
        %v5451 = vld [vmem:[#allocation18 + $0x1b4] sm:$0xf]
        %v5452 = vld [vmem:[#allocation18 + $0x1b8] sm:$0xf]
        %v5453 = vld [vmem:[#allocation18 + $0x1bc] sm:$0xf]
        %v5454 = vld [vmem:[#allocation18 + $0x1c0] sm:$0xf]
        %v5455 = vld [vmem:[#allocation18 + $0x1c4] sm:$0xf]
        %v5456 = vld [vmem:[#allocation18 + $0x1c8] sm:$0xf]
        %v5457 = vld [vmem:[#allocation18 + $0x1cc] sm:$0xf]
        %v5458 = vld [vmem:[#allocation18 + $0x1d0] sm:$0xf]
        %v5459 = vld [vmem:[#allocation18 + $0x1d4] sm:$0xf]
        %v5460 = vld [vmem:[#allocation18 + $0x1d8] sm:$0xf]
        %v5461 = vld [vmem:[#allocation18 + $0x1dc] sm:$0xf]
        %v5462 = vld [vmem:[#allocation18 + $0x1e0] sm:$0xf]
        %v5463 = vld [vmem:[#allocation18 + $0x1e4] sm:$0xf]
        %v5464 = vld [vmem:[#allocation18 + $0x1e8] sm:$0xf]
        %v5465 = vld [vmem:[#allocation18 + $0x1ec] sm:$0xf]
        %v5466 = vld [vmem:[#allocation18 + $0x1f0] sm:$0xf]
        %v5467 = vld [vmem:[#allocation18 + $0x1f4] sm:$0xf]
        %v5468 = vld [vmem:[#allocation18 + $0x1f8] sm:$0xf]
        %v5469 = vld [vmem:[#allocation18 + $0x1fc] sm:$0xf]
        %v5470 = vrot.slane %v5209, 1
        %v5471 = vrot.slane %v5211, 2
        %v5472 = vor.u32 %v5470, %v5471
        %v5473 = vrot.slane %v5435, 1
        %v5474 = vrot.slane %v5431, 2
        %v5475 = vor.u32 %v5473, %v5474
        %v5476 = vsel %vm1655, %v5472, %v5475
        %v5478 = vshrl.u32 %v5434, 16
        %v5480 = vrot.slane %v5478, 1
        %v5481 = vshll.u32 %v5434, 16
        %v5483 = vrot.slane %v5481, 2
        %v5484 = vor.u32 %v5480, %v5483
        %v5486 = vshrl.u32 %v5437, 16
        %v5488 = vrot.slane %v5486, 1
        %v5489 = vshll.u32 %v5437, 16
        %v5491 = vrot.slane %v5489, 2
        %v5492 = vor.u32 %v5488, %v5491
        %v5493 = vsel %vm1655, %v5484, %v5492
        %v5528 = vunpack.c.l.b16 %v5438
        %v5529 = vunpack.c.l.b16 %v5439
        %v5530 = vunpack.c.l.b16 %v5440
        %v5531 = vunpack.c.l.b16 %v5441
        %v5532 = vunpack.c.l.b16 %v5442
        %v5533 = vunpack.c.l.b16 %v5443
        %v5534 = vunpack.c.l.b16 %v5444
        %v5535 = vunpack.c.l.b16 %v5445
        %v5536 = vunpack.c.l.b16 %v5446
        %v5537 = vunpack.c.l.b16 %v5447
        %v5538 = vunpack.c.l.b16 %v5448
        %v5539 = vunpack.c.l.b16 %v5449
        %v5540 = vunpack.c.l.b16 %v5450
        %v5541 = vunpack.c.l.b16 %v5451
        %v5542 = vunpack.c.l.b16 %v5452
        %v5543 = vunpack.c.l.b16 %v5453
        %v5544 = vunpack.c.l.b16 %v5454
        %v5545 = vunpack.c.l.b16 %v5455
        %v5546 = vunpack.c.l.b16 %v5456
        %v5547 = vunpack.c.l.b16 %v5457
        %v5548 = vunpack.c.l.b16 %v5458
        %v5549 = vunpack.c.l.b16 %v5459
        %v5550 = vunpack.c.l.b16 %v5460
        %v5551 = vunpack.c.l.b16 %v5461
        %v5552 = vunpack.c.l.b16 %v5462
        %v5553 = vunpack.c.l.b16 %v5463
        %v5554 = vunpack.c.l.b16 %v5464
        %v5555 = vunpack.c.l.b16 %v5465
        %v5556 = vunpack.c.l.b16 %v5466
        %v5557 = vunpack.c.l.b16 %v5467
        %v5558 = vunpack.c.l.b16 %v5468
        %v5559 = vunpack.c.l.b16 %v5469
        %v5560 = vpack.c.b16 %v5529, %v5528
        %v5561 = vpack.c.b16 %v5531, %v5530
        %v5562 = vpack.c.b16 %v5533, %v5532
        %v5563 = vpack.c.b16 %v5535, %v5534
        %v5564 = vpack.c.b16 %v5537, %v5536
        %v5565 = vpack.c.b16 %v5539, %v5538
        %v5566 = vpack.c.b16 %v5541, %v5540
        %v5567 = vpack.c.b16 %v5543, %v5542
        %v5568 = vpack.c.b16 %v5545, %v5544
        %v5569 = vpack.c.b16 %v5547, %v5546
        %v5570 = vpack.c.b16 %v5549, %v5548
        %v5571 = vpack.c.b16 %v5551, %v5550
        %v5572 = vpack.c.b16 %v5553, %v5552
        %v5573 = vpack.c.b16 %v5555, %v5554
        %v5574 = vpack.c.b16 %v5557, %v5556
        %v5575 = vpack.c.b16 %v5559, %v5558
        %5592 = vmatprep.subr.bf16.mxu0 0
        %5593 = vmatpush1.bf16.msra.mxu0 %v5567
        %5594 = vmatprep.subr.bf16.mxu0 0
        %5595 = vmatpush1.bf16.msra.mxu0 %v5566
        %5596 = vmatprep.subr.bf16.mxu0 0
        %5597 = vmatpush1.bf16.msra.mxu0 %v5565
        %5598 = vmatprep.subr.bf16.mxu0 0
        %5599 = vmatpush1.bf16.msra.mxu0 %v5564
        %5600 = vmatprep.subr.bf16.mxu0 0
        %5601 = vmatpush1.bf16.msra.mxu0 %v5563
        %5602 = vmatprep.subr.bf16.mxu0 0
        %5603 = vmatpush1.bf16.msra.mxu0 %v5562
        %5604 = vmatprep.subr.bf16.mxu0 0
        %5605 = vmatpush1.bf16.msra.mxu0 %v5561
        %5606 = vmatprep.subr.bf16.mxu0 0
        %5607 = vmatpush1.bf16.msra.mxu0 %v5560
        %5608 = vmatprep.subr.bf16.mxu0 0
        %5609 = vmatpush2.bf16.msra.mxu0 %v5575
        %5610 = vmatprep.subr.bf16.mxu0 0
        %5611 = vmatpush2.bf16.msra.mxu0 %v5574
        %5612 = vmatprep.subr.bf16.mxu0 0
        %5613 = vmatpush2.bf16.msra.mxu0 %v5573
        %5614 = vmatprep.subr.bf16.mxu0 0
        %5615 = vmatpush2.bf16.msra.mxu0 %v5572
        %5616 = vmatprep.subr.bf16.mxu0 0
        %5617 = vmatpush2.bf16.msra.mxu0 %v5571
        %5618 = vmatprep.subr.bf16.mxu0 0
        %5619 = vmatpush2.bf16.msra.mxu0 %v5570
        %5620 = vmatprep.subr.bf16.mxu0 0
        %5621 = vmatpush2.bf16.msra.mxu0 %v5569
        %5622 = vmatprep.subr.bf16.mxu0 0
        %5623 = vmatpush2.bf16.msra.mxu0 %v5568
        %5624 = vmatprep.mubr.bf16.mxu0 %v5493
        %5625 = vmatmul.mubr.bf16.gmra.mxu0 %v5476
        %v5626 = vpop.f32.mrf.mxu0
        %v5627 = vadd.f32 0.0, %v5626
        %v5628 = vpop.f32.mrf.mxu0
        %v5629 = vpop.f32.mrf.mxu0
        %v5630 = vadd.f32 0.0, %v5629
        %v5631 = vpop.f32.mrf.mxu0
        %5632 = vdwg.mxu0
        %v5633 = vadd.f32 %v5413, %v5627
        %v5634 = vadd.f32 %v5414, %v5630
        %v5636 = vlaneseq
        %v5637 = vshrl.u32 %v5636, 7
        %v5638 = vsub.s32 0, %v5637
        %v5639 = vrot.slane %v4757, %v5638
        %v5641 = vadd.f32 %v5633, %v5639
        %v5642 = vadd.f32 %v5634, %v5639
        %v5643 = vmax.f32 %v5641, 0.0
        %v5644 = vmax.f32 %v5642, 0.0
        %v5645 = vpack.c.bf16 %v5644, %v5643
        %v5647 = vunpack.c.l.b16 %v5645
        %v5648 = vunpack.c.h.b16 %v5645
        %v5649 = vpack.c.b16 %v5647, %v5647
        %v5650 = vpack.c.b16 %v5648, %v5648
        %5653 = vst [vmem:[#allocation2 + $0x8] sm:$0xf] %v5649
        %5654 = vst [vmem:[#allocation2 + $0xc] sm:$0xf] %v5650
        %v5655 = vld [vmem:[%s20] sm:$0x1]
        %v5656 = vld [vmem:[#allocation2 + $0x4] sm:$0x8]
        %v5657 = vld [vmem:[#allocation2 + $0x8] sm:$0xf]
        %v5658 = vld [vmem:[#allocation2 + $0xc] sm:$0x7]
        %v5659 = vld [vmem:[#allocation2 + $0xc] sm:$0xf]
        %v5663 = vunpack.c.l.b16 %v5656
        %v5664 = vunpack.c.l.b16 %v5657
        %v5665 = vunpack.c.l.b16 %v5658
        %v5666 = vpack.c.b16 %v5664, %v5663
        %v5667 = vpack.c.b16 %v5665, %v5665
        %v5669 = vunpack.c.l.b16 %v5659
        %v5670 = vpack.c.b16 %v5669, %v5669
        %v5672 = vshrl.u32 %v5666, 16
        %v5674 = vshll.u32 %v5666, 16
        %v5676 = vrot.slane %v5674, 1
        %v5677 = vor.u32 %v5672, %v5676
        %v5679 = vshll.u32 %v5670, 16
        %v5681 = vrot.slane %v5679, 1
        %v5682 = vsel %vm955, %v5677, %v5681
        %v5683 = vshrl.u32 %v5670, 16
        %v5685 = vor.u32 %v5683, %v5681
        %v5686 = vld [vmem:[#allocation20] sm:$0xf]
        %v5687 = vld [vmem:[#allocation20 + $0x4] sm:$0xf]
        %v5688 = vld [vmem:[#allocation20 + $0x8] sm:$0xf]
        %v5689 = vld [vmem:[#allocation20 + $0xc] sm:$0xf]
        %v5690 = vld [vmem:[#allocation20 + $0x10] sm:$0xf]
        %v5691 = vld [vmem:[#allocation20 + $0x14] sm:$0xf]
        %v5692 = vld [vmem:[#allocation20 + $0x18] sm:$0xf]
        %v5693 = vld [vmem:[#allocation20 + $0x1c] sm:$0xf]
        %v5694 = vld [vmem:[#allocation20 + $0x20] sm:$0xf]
        %v5695 = vld [vmem:[#allocation20 + $0x24] sm:$0xf]
        %v5696 = vld [vmem:[#allocation20 + $0x28] sm:$0xf]
        %v5697 = vld [vmem:[#allocation20 + $0x2c] sm:$0xf]
        %v5698 = vld [vmem:[#allocation20 + $0x30] sm:$0xf]
        %v5699 = vld [vmem:[#allocation20 + $0x34] sm:$0xf]
        %v5700 = vld [vmem:[#allocation20 + $0x38] sm:$0xf]
        %v5701 = vld [vmem:[#allocation20 + $0x3c] sm:$0xf]
        %v5702 = vld [vmem:[#allocation20 + $0x40] sm:$0xf]
        %v5703 = vld [vmem:[#allocation20 + $0x44] sm:$0xf]
        %v5704 = vld [vmem:[#allocation20 + $0x48] sm:$0xf]
        %v5705 = vld [vmem:[#allocation20 + $0x4c] sm:$0xf]
        %v5706 = vld [vmem:[#allocation20 + $0x50] sm:$0xf]
        %v5707 = vld [vmem:[#allocation20 + $0x54] sm:$0xf]
        %v5708 = vld [vmem:[#allocation20 + $0x58] sm:$0xf]
        %v5709 = vld [vmem:[#allocation20 + $0x5c] sm:$0xf]
        %v5710 = vld [vmem:[#allocation20 + $0x60] sm:$0xf]
        %v5711 = vld [vmem:[#allocation20 + $0x64] sm:$0xf]
        %v5712 = vld [vmem:[#allocation20 + $0x68] sm:$0xf]
        %v5713 = vld [vmem:[#allocation20 + $0x6c] sm:$0xf]
        %v5714 = vld [vmem:[#allocation20 + $0x70] sm:$0xf]
        %v5715 = vld [vmem:[#allocation20 + $0x74] sm:$0xf]
        %v5716 = vld [vmem:[#allocation20 + $0x78] sm:$0xf]
        %v5717 = vld [vmem:[#allocation20 + $0x7c] sm:$0xf]
        %v5718 = vld [vmem:[#allocation2 + $0x10] sm:$0x1]
        %v5719 = vpack.c.b16 %v5669, %v5664
        %v5722 = vunpack.c.l.b16 %v5718
        %v5723 = vpack.c.b16 %v5722, %v5722
        %v5725 = vshrl.u32 %v5719, 16
        %v5727 = vshll.u32 %v5719, 16
        %v5729 = vrot.slane %v5727, 1
        %v5730 = vor.u32 %v5725, %v5729
        %v5732 = vshll.u32 %v5723, 16
        %v5734 = vrot.slane %v5732, 1
        %v5735 = vsel %vm955, %v5730, %v5734
        %v5737 = vld [vmem:[#allocation20 + $0x80] sm:$0xf]
        %v5738 = vld [vmem:[#allocation20 + $0x84] sm:$0xf]
        %v5739 = vld [vmem:[#allocation20 + $0x88] sm:$0xf]
        %v5740 = vld [vmem:[#allocation20 + $0x8c] sm:$0xf]
        %v5741 = vld [vmem:[#allocation20 + $0x90] sm:$0xf]
        %v5742 = vld [vmem:[#allocation20 + $0x94] sm:$0xf]
        %v5743 = vld [vmem:[#allocation20 + $0x98] sm:$0xf]
        %v5744 = vld [vmem:[#allocation20 + $0x9c] sm:$0xf]
        %v5745 = vld [vmem:[#allocation20 + $0xa0] sm:$0xf]
        %v5746 = vld [vmem:[#allocation20 + $0xa4] sm:$0xf]
        %v5747 = vld [vmem:[#allocation20 + $0xa8] sm:$0xf]
        %v5748 = vld [vmem:[#allocation20 + $0xac] sm:$0xf]
        %v5749 = vld [vmem:[#allocation20 + $0xb0] sm:$0xf]
        %v5750 = vld [vmem:[#allocation20 + $0xb4] sm:$0xf]
        %v5751 = vld [vmem:[#allocation20 + $0xb8] sm:$0xf]
        %v5752 = vld [vmem:[#allocation20 + $0xbc] sm:$0xf]
        %v5753 = vld [vmem:[#allocation20 + $0xc0] sm:$0xf]
        %v5754 = vld [vmem:[#allocation20 + $0xc4] sm:$0xf]
        %v5755 = vld [vmem:[#allocation20 + $0xc8] sm:$0xf]
        %v5756 = vld [vmem:[#allocation20 + $0xcc] sm:$0xf]
        %v5757 = vld [vmem:[#allocation20 + $0xd0] sm:$0xf]
        %v5758 = vld [vmem:[#allocation20 + $0xd4] sm:$0xf]
        %v5759 = vld [vmem:[#allocation20 + $0xd8] sm:$0xf]
        %v5760 = vld [vmem:[#allocation20 + $0xdc] sm:$0xf]
        %v5761 = vld [vmem:[#allocation20 + $0xe0] sm:$0xf]
        %v5762 = vld [vmem:[#allocation20 + $0xe4] sm:$0xf]
        %v5763 = vld [vmem:[#allocation20 + $0xe8] sm:$0xf]
        %v5764 = vld [vmem:[#allocation20 + $0xec] sm:$0xf]
        %v5765 = vld [vmem:[#allocation20 + $0xf0] sm:$0xf]
        %v5766 = vld [vmem:[#allocation20 + $0xf4] sm:$0xf]
        %v5767 = vld [vmem:[#allocation20 + $0xf8] sm:$0xf]
        %v5768 = vld [vmem:[#allocation20 + $0xfc] sm:$0xf]
        %v5801 = vunpack.c.l.b16 %v5737
        %v5802 = vunpack.c.l.b16 %v5738
        %v5803 = vunpack.c.l.b16 %v5739
        %v5804 = vunpack.c.l.b16 %v5740
        %v5805 = vunpack.c.l.b16 %v5741
        %v5806 = vunpack.c.l.b16 %v5742
        %v5807 = vunpack.c.l.b16 %v5743
        %v5808 = vunpack.c.l.b16 %v5744
        %v5809 = vunpack.c.l.b16 %v5745
        %v5810 = vunpack.c.l.b16 %v5746
        %v5811 = vunpack.c.l.b16 %v5747
        %v5812 = vunpack.c.l.b16 %v5748
        %v5813 = vunpack.c.l.b16 %v5749
        %v5814 = vunpack.c.l.b16 %v5750
        %v5815 = vunpack.c.l.b16 %v5751
        %v5816 = vunpack.c.l.b16 %v5752
        %v5817 = vunpack.c.l.b16 %v5753
        %v5818 = vunpack.c.l.b16 %v5754
        %v5819 = vunpack.c.l.b16 %v5755
        %v5820 = vunpack.c.l.b16 %v5756
        %v5821 = vunpack.c.l.b16 %v5757
        %v5822 = vunpack.c.l.b16 %v5758
        %v5823 = vunpack.c.l.b16 %v5759
        %v5824 = vunpack.c.l.b16 %v5760
        %v5825 = vunpack.c.l.b16 %v5761
        %v5826 = vunpack.c.l.b16 %v5762
        %v5827 = vunpack.c.l.b16 %v5763
        %v5828 = vunpack.c.l.b16 %v5764
        %v5829 = vunpack.c.l.b16 %v5765
        %v5830 = vunpack.c.l.b16 %v5766
        %v5831 = vunpack.c.l.b16 %v5767
        %v5832 = vunpack.c.l.b16 %v5768
        %v5833 = vpack.c.b16 %v5802, %v5801
        %v5834 = vpack.c.b16 %v5804, %v5803
        %v5835 = vpack.c.b16 %v5806, %v5805
        %v5836 = vpack.c.b16 %v5808, %v5807
        %v5837 = vpack.c.b16 %v5810, %v5809
        %v5838 = vpack.c.b16 %v5812, %v5811
        %v5839 = vpack.c.b16 %v5814, %v5813
        %v5840 = vpack.c.b16 %v5816, %v5815
        %v5841 = vpack.c.b16 %v5818, %v5817
        %v5842 = vpack.c.b16 %v5820, %v5819
        %v5843 = vpack.c.b16 %v5822, %v5821
        %v5844 = vpack.c.b16 %v5824, %v5823
        %v5845 = vpack.c.b16 %v5826, %v5825
        %v5846 = vpack.c.b16 %v5828, %v5827
        %v5847 = vpack.c.b16 %v5830, %v5829
        %v5848 = vpack.c.b16 %v5832, %v5831
        %5865 = vmatprep.subr.bf16.mxu0 0
        %5866 = vmatpush1.bf16.msra.mxu0 %v5840
        %5867 = vmatprep.subr.bf16.mxu0 0
        %5868 = vmatpush1.bf16.msra.mxu0 %v5839
        %5869 = vmatprep.subr.bf16.mxu0 0
        %5870 = vmatpush1.bf16.msra.mxu0 %v5838
        %5871 = vmatprep.subr.bf16.mxu0 0
        %5872 = vmatpush1.bf16.msra.mxu0 %v5837
        %5873 = vmatprep.subr.bf16.mxu0 0
        %5874 = vmatpush1.bf16.msra.mxu0 %v5836
        %5875 = vmatprep.subr.bf16.mxu0 0
        %5876 = vmatpush1.bf16.msra.mxu0 %v5835
        %5877 = vmatprep.subr.bf16.mxu0 0
        %5878 = vmatpush1.bf16.msra.mxu0 %v5834
        %5879 = vmatprep.subr.bf16.mxu0 0
        %5880 = vmatpush1.bf16.msra.mxu0 %v5833
        %5881 = vmatprep.subr.bf16.mxu0 0
        %5882 = vmatpush2.bf16.msra.mxu0 %v5848
        %5883 = vmatprep.subr.bf16.mxu0 0
        %5884 = vmatpush2.bf16.msra.mxu0 %v5847
        %5885 = vmatprep.subr.bf16.mxu0 0
        %5886 = vmatpush2.bf16.msra.mxu0 %v5846
        %5887 = vmatprep.subr.bf16.mxu0 0
        %5888 = vmatpush2.bf16.msra.mxu0 %v5845
        %5889 = vmatprep.subr.bf16.mxu0 0
        %5890 = vmatpush2.bf16.msra.mxu0 %v5844
        %5891 = vmatprep.subr.bf16.mxu0 0
        %5892 = vmatpush2.bf16.msra.mxu0 %v5843
        %5893 = vmatprep.subr.bf16.mxu0 0
        %5894 = vmatpush2.bf16.msra.mxu0 %v5842
        %5895 = vmatprep.subr.bf16.mxu0 0
        %5896 = vmatpush2.bf16.msra.mxu0 %v5841
        %5897 = vmatprep.mubr.bf16.mxu0 %v5735
        %5898 = vmatmul.mubr.bf16.gmra.mxu0 %v5719
        %v5899 = vpop.f32.mrf.mxu0
        %v5900 = vadd.f32 0.0, %v5899
        %v5901 = vpop.f32.mrf.mxu0
        %v5902 = vpop.f32.mrf.mxu0
        %v5903 = vadd.f32 0.0, %v5902
        %v5904 = vpop.f32.mrf.mxu0
        %5905 = vdwg.mxu0
        %v5906 = vrot.slane %v5666, 3
        %v5907 = vrot.slane %v5667, 3
        %v5908 = vsel %vm2092, %v5906, %v5907
        %v5909 = vrot.slane %v5682, 3
        %v5910 = vrot.slane %v5685, 3
        %v5911 = vsel %vm2092, %v5909, %v5910
        %v5946 = vunpack.c.l.b16 %v5686
        %v5947 = vunpack.c.l.b16 %v5687
        %v5948 = vunpack.c.l.b16 %v5688
        %v5949 = vunpack.c.l.b16 %v5689
        %v5950 = vunpack.c.l.b16 %v5690
        %v5951 = vunpack.c.l.b16 %v5691
        %v5952 = vunpack.c.l.b16 %v5692
        %v5953 = vunpack.c.l.b16 %v5693
        %v5954 = vunpack.c.l.b16 %v5694
        %v5955 = vunpack.c.l.b16 %v5695
        %v5956 = vunpack.c.l.b16 %v5696
        %v5957 = vunpack.c.l.b16 %v5697
        %v5958 = vunpack.c.l.b16 %v5698
        %v5959 = vunpack.c.l.b16 %v5699
        %v5960 = vunpack.c.l.b16 %v5700
        %v5961 = vunpack.c.l.b16 %v5701
        %v5962 = vunpack.c.l.b16 %v5702
        %v5963 = vunpack.c.l.b16 %v5703
        %v5964 = vunpack.c.l.b16 %v5704
        %v5965 = vunpack.c.l.b16 %v5705
        %v5966 = vunpack.c.l.b16 %v5706
        %v5967 = vunpack.c.l.b16 %v5707
        %v5968 = vunpack.c.l.b16 %v5708
        %v5969 = vunpack.c.l.b16 %v5709
        %v5970 = vunpack.c.l.b16 %v5710
        %v5971 = vunpack.c.l.b16 %v5711
        %v5972 = vunpack.c.l.b16 %v5712
        %v5973 = vunpack.c.l.b16 %v5713
        %v5974 = vunpack.c.l.b16 %v5714
        %v5975 = vunpack.c.l.b16 %v5715
        %v5976 = vunpack.c.l.b16 %v5716
        %v5977 = vunpack.c.l.b16 %v5717
        %v5978 = vpack.c.b16 %v5947, %v5946
        %v5979 = vpack.c.b16 %v5949, %v5948
        %v5980 = vpack.c.b16 %v5951, %v5950
        %v5981 = vpack.c.b16 %v5953, %v5952
        %v5982 = vpack.c.b16 %v5955, %v5954
        %v5983 = vpack.c.b16 %v5957, %v5956
        %v5984 = vpack.c.b16 %v5959, %v5958
        %v5985 = vpack.c.b16 %v5961, %v5960
        %v5986 = vpack.c.b16 %v5963, %v5962
        %v5987 = vpack.c.b16 %v5965, %v5964
        %v5988 = vpack.c.b16 %v5967, %v5966
        %v5989 = vpack.c.b16 %v5969, %v5968
        %v5990 = vpack.c.b16 %v5971, %v5970
        %v5991 = vpack.c.b16 %v5973, %v5972
        %v5992 = vpack.c.b16 %v5975, %v5974
        %v5993 = vpack.c.b16 %v5977, %v5976
        %6010 = vmatprep.subr.bf16.mxu0 0
        %6011 = vmatpush1.bf16.msra.mxu0 %v5985
        %6012 = vmatprep.subr.bf16.mxu0 0
        %6013 = vmatpush1.bf16.msra.mxu0 %v5984
        %6014 = vmatprep.subr.bf16.mxu0 0
        %6015 = vmatpush1.bf16.msra.mxu0 %v5983
        %6016 = vmatprep.subr.bf16.mxu0 0
        %6017 = vmatpush1.bf16.msra.mxu0 %v5982
        %6018 = vmatprep.subr.bf16.mxu0 0
        %6019 = vmatpush1.bf16.msra.mxu0 %v5981
        %6020 = vmatprep.subr.bf16.mxu0 0
        %6021 = vmatpush1.bf16.msra.mxu0 %v5980
        %6022 = vmatprep.subr.bf16.mxu0 0
        %6023 = vmatpush1.bf16.msra.mxu0 %v5979
        %6024 = vmatprep.subr.bf16.mxu0 0
        %6025 = vmatpush1.bf16.msra.mxu0 %v5978
        %6026 = vmatprep.subr.bf16.mxu0 0
        %6027 = vmatpush2.bf16.msra.mxu0 %v5993
        %6028 = vmatprep.subr.bf16.mxu0 0
        %6029 = vmatpush2.bf16.msra.mxu0 %v5992
        %6030 = vmatprep.subr.bf16.mxu0 0
        %6031 = vmatpush2.bf16.msra.mxu0 %v5991
        %6032 = vmatprep.subr.bf16.mxu0 0
        %6033 = vmatpush2.bf16.msra.mxu0 %v5990
        %6034 = vmatprep.subr.bf16.mxu0 0
        %6035 = vmatpush2.bf16.msra.mxu0 %v5989
        %6036 = vmatprep.subr.bf16.mxu0 0
        %6037 = vmatpush2.bf16.msra.mxu0 %v5988
        %6038 = vmatprep.subr.bf16.mxu0 0
        %6039 = vmatpush2.bf16.msra.mxu0 %v5987
        %6040 = vmatprep.subr.bf16.mxu0 0
        %6041 = vmatpush2.bf16.msra.mxu0 %v5986
        %6042 = vmatprep.mubr.bf16.mxu0 %v5911
        %6043 = vmatmul.mubr.bf16.gmra.mxu0 %v5908
        %v6044 = vpop.f32.mrf.mxu0
        %v6045 = vadd.f32 %v5900, %v6044
        %v6046 = vpop.f32.mrf.mxu0
        %v6047 = vpop.f32.mrf.mxu0
        %v6048 = vadd.f32 %v5903, %v6047
        %v6049 = vpop.f32.mrf.mxu0
        %6050 = vdwg.mxu0
        %v6051 = vld [vmem:[#allocation2 + $0x8] sm:$0xe]
        %v6052 = vld [vmem:[#allocation20 + $0x100] sm:$0xf]
        %v6053 = vld [vmem:[#allocation20 + $0x104] sm:$0xf]
        %v6054 = vld [vmem:[#allocation20 + $0x108] sm:$0xf]
        %v6055 = vld [vmem:[#allocation20 + $0x10c] sm:$0xf]
        %v6056 = vld [vmem:[#allocation20 + $0x110] sm:$0xf]
        %v6057 = vld [vmem:[#allocation20 + $0x114] sm:$0xf]
        %v6058 = vld [vmem:[#allocation20 + $0x118] sm:$0xf]
        %v6059 = vld [vmem:[#allocation20 + $0x11c] sm:$0xf]
        %v6060 = vld [vmem:[#allocation20 + $0x120] sm:$0xf]
        %v6061 = vld [vmem:[#allocation20 + $0x124] sm:$0xf]
        %v6062 = vld [vmem:[#allocation20 + $0x128] sm:$0xf]
        %v6063 = vld [vmem:[#allocation20 + $0x12c] sm:$0xf]
        %v6064 = vld [vmem:[#allocation20 + $0x130] sm:$0xf]
        %v6065 = vld [vmem:[#allocation20 + $0x134] sm:$0xf]
        %v6066 = vld [vmem:[#allocation20 + $0x138] sm:$0xf]
        %v6067 = vld [vmem:[#allocation20 + $0x13c] sm:$0xf]
        %v6069 = vunpack.c.l.b16 %v6051
        %v6070 = vpack.c.b16 %v5669, %v6069
        %v6071 = vrot.slane %v6070, 1
        %v6072 = vrot.slane %v5723, 1
        %v6073 = vsel %vm2258, %v6071, %v6072
        %v6091 = vunpack.c.l.b16 %v6052
        %v6092 = vunpack.c.l.b16 %v6053
        %v6093 = vunpack.c.l.b16 %v6054
        %v6094 = vunpack.c.l.b16 %v6055
        %v6095 = vunpack.c.l.b16 %v6056
        %v6096 = vunpack.c.l.b16 %v6057
        %v6097 = vunpack.c.l.b16 %v6058
        %v6098 = vunpack.c.l.b16 %v6059
        %v6099 = vunpack.c.l.b16 %v6060
        %v6100 = vunpack.c.l.b16 %v6061
        %v6101 = vunpack.c.l.b16 %v6062
        %v6102 = vunpack.c.l.b16 %v6063
        %v6103 = vunpack.c.l.b16 %v6064
        %v6104 = vunpack.c.l.b16 %v6065
        %v6105 = vunpack.c.l.b16 %v6066
        %v6106 = vunpack.c.l.b16 %v6067
        %v6107 = vpack.c.b16 %v6092, %v6091
        %v6108 = vpack.c.b16 %v6094, %v6093
        %v6109 = vpack.c.b16 %v6096, %v6095
        %v6110 = vpack.c.b16 %v6098, %v6097
        %v6111 = vpack.c.b16 %v6100, %v6099
        %v6112 = vpack.c.b16 %v6102, %v6101
        %v6113 = vpack.c.b16 %v6104, %v6103
        %v6114 = vpack.c.b16 %v6106, %v6105
        %6123 = vmatprep.subr.bf16.mxu0 0
        %6124 = vmatpush1.bf16.msra.mxu0 %v6114
        %6125 = vmatprep.subr.bf16.mxu0 0
        %6126 = vmatpush1.bf16.msra.mxu0 %v6113
        %6127 = vmatprep.subr.bf16.mxu0 0
        %6128 = vmatpush1.bf16.msra.mxu0 %v6112
        %6129 = vmatprep.subr.bf16.mxu0 0
        %6130 = vmatpush1.bf16.msra.mxu0 %v6111
        %6131 = vmatprep.subr.bf16.mxu0 0
        %6132 = vmatpush1.bf16.msra.mxu0 %v6110
        %6133 = vmatprep.subr.bf16.mxu0 0
        %6134 = vmatpush1.bf16.msra.mxu0 %v6109
        %6135 = vmatprep.subr.bf16.mxu0 0
        %6136 = vmatpush1.bf16.msra.mxu0 %v6108
        %6137 = vmatprep.subr.bf16.mxu0 0
        %6138 = vmatpush1.bf16.msra.mxu0 %v6107
        %6139 = vmatprep.subr.bf16.mxu0 0
        %6140 = vmatpush2.bf16.msra.mxu0 0
        %6141 = vmatprep.subr.bf16.mxu0 0
        %6142 = vmatpush2.bf16.msra.mxu0 0
        %6143 = vmatprep.subr.bf16.mxu0 0
        %6144 = vmatpush2.bf16.msra.mxu0 0
        %6145 = vmatprep.subr.bf16.mxu0 0
        %6146 = vmatpush2.bf16.msra.mxu0 0
        %6147 = vmatprep.subr.bf16.mxu0 0
        %6148 = vmatpush2.bf16.msra.mxu0 0
        %6149 = vmatprep.subr.bf16.mxu0 0
        %6150 = vmatpush2.bf16.msra.mxu0 0
        %6151 = vmatprep.subr.bf16.mxu0 0
        %6152 = vmatpush2.bf16.msra.mxu0 0
        %6153 = vmatprep.subr.bf16.mxu0 0
        %6154 = vmatpush2.bf16.msra.mxu0 0
        %6155 = vmatprep.mubr.bf16.mxu0 0
        %6156 = vmatmul.mubr.bf16.gmra.mxu0 %v6073
        %v6157 = vpop.f32.mrf.mxu0
        %v6158 = vadd.f32 0.0, %v6157
        %v6159 = vpop.f32.mrf.mxu0
        %v6160 = vpop.f32.mrf.mxu0
        %v6161 = vadd.f32 0.0, %v6160
        %v6162 = vpop.f32.mrf.mxu0
        %6163 = vdwg.mxu0
        %v6164 = vadd.f32 %v6045, %v6158
        %v6165 = vadd.f32 %v6048, %v6161
        %v6167 = vlaneseq
        %v6168 = vshrl.u32 %v6167, 7
        %v6169 = vsub.s32 0, %v6168
        %v6170 = vrot.slane %v5655, %v6169
        %v6172 = vadd.f32 %v6164, %v6170
        %v6173 = vadd.f32 %v6165, %v6170
        %v6174 = vmax.f32 %v6172, 0.0
        %v6175 = vmax.f32 %v6173, 0.0
        %v6176 = vpack.c.bf16 %v6175, %v6174
        %v6178 = vunpack.c.l.b16 %v6176
        %v6179 = vunpack.c.h.b16 %v6176
        %v6180 = vpack.c.b16 %v6178, %v6178
        %v6181 = vpack.c.b16 %v6179, %v6179
        %6184 = vst [vmem:[#allocation3 + $0x8] sm:$0xf] %v6180
        %6185 = vst [vmem:[#allocation3 + $0xc] sm:$0xf] %v6181
        %v6186 = vld [vmem:[%s22] sm:$0x1]
        %6187 = vst [vmem:[#allocation5] sm:$0x1] 0.0
        %v6188 = vld [vmem:[#allocation3 + $0x4] sm:$0x8]
        %v6189 = vld [vmem:[#allocation3 + $0x8] sm:$0xf]
        %v6190 = vld [vmem:[#allocation3 + $0xc] sm:$0xf]
        %v6194 = vunpack.c.l.b16 %v6188
        %v6195 = vunpack.c.l.b16 %v6189
        %v6196 = vunpack.c.l.b16 %v6190
        %v6197 = vpack.c.b16 %v6195, %v6194
        %v6198 = vpack.c.b16 %v6196, %v6196
        %v6199 = vpack.c.b16 %v6196, %v6195
        %v6201 = vshrl.u32 %v6199, 16
        %v6203 = vrot.slane %v6201, 4
        %v6204 = vshll.u32 %v6199, 16
        %v6206 = vrot.slane %v6204, 5
        %v6207 = vor.u32 %v6203, %v6206
        %v6208 = vld [vmem:[#allocation21] sm:$0xf]
        %v6209 = vld [vmem:[#allocation21 + $0x4] sm:$0xf]
        %v6210 = vld [vmem:[#allocation21 + $0x8] sm:$0xf]
        %v6211 = vld [vmem:[#allocation21 + $0xc] sm:$0xf]
        %v6212 = vld [vmem:[#allocation21 + $0x10] sm:$0xf]
        %v6213 = vld [vmem:[#allocation21 + $0x14] sm:$0xf]
        %v6214 = vld [vmem:[#allocation21 + $0x18] sm:$0xf]
        %v6215 = vld [vmem:[#allocation21 + $0x1c] sm:$0xf]
        %v6216 = vld [vmem:[#allocation21 + $0x20] sm:$0xf]
        %v6217 = vld [vmem:[#allocation21 + $0x24] sm:$0xf]
        %v6218 = vld [vmem:[#allocation21 + $0x28] sm:$0xf]
        %v6219 = vld [vmem:[#allocation21 + $0x2c] sm:$0xf]
        %v6220 = vld [vmem:[#allocation21 + $0x30] sm:$0xf]
        %v6221 = vld [vmem:[#allocation21 + $0x34] sm:$0xf]
        %v6222 = vld [vmem:[#allocation21 + $0x38] sm:$0xf]
        %v6223 = vld [vmem:[#allocation21 + $0x3c] sm:$0xf]
        %v6224 = vld [vmem:[#allocation21 + $0x40] sm:$0xf]
        %v6225 = vld [vmem:[#allocation21 + $0x44] sm:$0xf]
        %v6226 = vld [vmem:[#allocation21 + $0x48] sm:$0xf]
        %v6227 = vld [vmem:[#allocation21 + $0x4c] sm:$0xf]
        %v6228 = vld [vmem:[#allocation21 + $0x50] sm:$0xf]
        %v6229 = vld [vmem:[#allocation21 + $0x54] sm:$0xf]
        %v6230 = vld [vmem:[#allocation21 + $0x58] sm:$0xf]
        %v6231 = vld [vmem:[#allocation21 + $0x5c] sm:$0xf]
        %v6232 = vld [vmem:[#allocation21 + $0x60] sm:$0xf]
        %v6233 = vld [vmem:[#allocation21 + $0x64] sm:$0xf]
        %v6234 = vld [vmem:[#allocation21 + $0x68] sm:$0xf]
        %v6235 = vld [vmem:[#allocation21 + $0x6c] sm:$0xf]
        %v6236 = vld [vmem:[#allocation21 + $0x70] sm:$0xf]
        %v6237 = vld [vmem:[#allocation21 + $0x74] sm:$0xf]
        %v6238 = vld [vmem:[#allocation21 + $0x78] sm:$0xf]
        %v6239 = vld [vmem:[#allocation21 + $0x7c] sm:$0xf]
        %v6240 = vld [vmem:[#allocation3 + $0x10] sm:$0x1]
        %v6241 = vld [vmem:[#allocation21 + $0x80] sm:$0xf]
        %v6242 = vld [vmem:[#allocation21 + $0x84] sm:$0xf]
        %v6243 = vld [vmem:[#allocation21 + $0x88] sm:$0xf]
        %v6244 = vld [vmem:[#allocation21 + $0x8c] sm:$0xf]
        %v6245 = vld [vmem:[#allocation21 + $0x90] sm:$0xf]
        %v6246 = vld [vmem:[#allocation21 + $0x94] sm:$0xf]
        %v6247 = vld [vmem:[#allocation21 + $0x98] sm:$0xf]
        %v6248 = vld [vmem:[#allocation21 + $0x9c] sm:$0xf]
        %v6249 = vld [vmem:[#allocation21 + $0xa0] sm:$0xf]
        %v6250 = vld [vmem:[#allocation21 + $0xa4] sm:$0xf]
        %v6251 = vld [vmem:[#allocation21 + $0xa8] sm:$0xf]
        %v6252 = vld [vmem:[#allocation21 + $0xac] sm:$0xf]
        %v6253 = vld [vmem:[#allocation21 + $0xb0] sm:$0xf]
        %v6254 = vld [vmem:[#allocation21 + $0xb4] sm:$0xf]
        %v6255 = vld [vmem:[#allocation21 + $0xb8] sm:$0xf]
        %v6256 = vld [vmem:[#allocation21 + $0xbc] sm:$0xf]
        %v6258 = vunpack.c.l.b16 %v6240
        %v6259 = vpack.c.b16 %v6258, %v6258
        %v6260 = vrot.slane %v6204, 1
        %v6261 = vor.u32 %v6201, %v6260
        %v6263 = vshll.u32 %v6259, 16
        %v6265 = vrot.slane %v6263, 1
        %v6266 = vsel %vm955, %v6261, %v6265
        %v6284 = vunpack.c.l.b16 %v6241
        %v6285 = vunpack.c.l.b16 %v6242
        %v6286 = vunpack.c.l.b16 %v6243
        %v6287 = vunpack.c.l.b16 %v6244
        %v6288 = vunpack.c.l.b16 %v6245
        %v6289 = vunpack.c.l.b16 %v6246
        %v6290 = vunpack.c.l.b16 %v6247
        %v6291 = vunpack.c.l.b16 %v6248
        %v6292 = vunpack.c.l.b16 %v6249
        %v6293 = vunpack.c.l.b16 %v6250
        %v6294 = vunpack.c.l.b16 %v6251
        %v6295 = vunpack.c.l.b16 %v6252
        %v6296 = vunpack.c.l.b16 %v6253
        %v6297 = vunpack.c.l.b16 %v6254
        %v6298 = vunpack.c.l.b16 %v6255
        %v6299 = vunpack.c.l.b16 %v6256
        %v6300 = vpack.c.b16 %v6285, %v6284
        %v6301 = vpack.c.b16 %v6287, %v6286
        %v6302 = vpack.c.b16 %v6289, %v6288
        %v6303 = vpack.c.b16 %v6291, %v6290
        %v6304 = vpack.c.b16 %v6293, %v6292
        %v6305 = vpack.c.b16 %v6295, %v6294
        %v6306 = vpack.c.b16 %v6297, %v6296
        %v6307 = vpack.c.b16 %v6299, %v6298
        %6316 = vmatprep.subr.bf16.mxu0 0
        %6317 = vmatpush1.bf16.msra.mxu0 %v6307
        %6318 = vmatprep.subr.bf16.mxu0 0
        %6319 = vmatpush1.bf16.msra.mxu0 %v6306
        %6320 = vmatprep.subr.bf16.mxu0 0
        %6321 = vmatpush1.bf16.msra.mxu0 %v6305
        %6322 = vmatprep.subr.bf16.mxu0 0
        %6323 = vmatpush1.bf16.msra.mxu0 %v6304
        %6324 = vmatprep.subr.bf16.mxu0 0
        %6325 = vmatpush1.bf16.msra.mxu0 %v6303
        %6326 = vmatprep.subr.bf16.mxu0 0
        %6327 = vmatpush1.bf16.msra.mxu0 %v6302
        %6328 = vmatprep.subr.bf16.mxu0 0
        %6329 = vmatpush1.bf16.msra.mxu0 %v6301
        %6330 = vmatprep.subr.bf16.mxu0 0
        %6331 = vmatpush1.bf16.msra.mxu0 %v6300
        %6332 = vmatprep.subr.bf16.mxu0 0
        %6333 = vmatpush2.bf16.msra.mxu0 0
        %6334 = vmatprep.subr.bf16.mxu0 0
        %6335 = vmatpush2.bf16.msra.mxu0 0
        %6336 = vmatprep.subr.bf16.mxu0 0
        %6337 = vmatpush2.bf16.msra.mxu0 0
        %6338 = vmatprep.subr.bf16.mxu0 0
        %6339 = vmatpush2.bf16.msra.mxu0 0
        %6340 = vmatprep.subr.bf16.mxu0 0
        %6341 = vmatpush2.bf16.msra.mxu0 0
        %6342 = vmatprep.subr.bf16.mxu0 0
        %6343 = vmatpush2.bf16.msra.mxu0 0
        %6344 = vmatprep.subr.bf16.mxu0 0
        %6345 = vmatpush2.bf16.msra.mxu0 0
        %6346 = vmatprep.subr.bf16.mxu0 0
        %6347 = vmatpush2.bf16.msra.mxu0 0
        %6348 = vmatprep.mubr.bf16.mxu0 0
        %6349 = vmatmul.mubr.bf16.gmra.mxu0 %v6266
        %v6350 = vpop.f32.mrf.mxu0
        %v6351 = vadd.f32 0.0, %v6350
        %v6352 = vpop.f32.mrf.mxu0
        %v6353 = vpop.f32.mrf.mxu0
        %v6354 = vadd.f32 0.0, %v6353
        %v6355 = vpop.f32.mrf.mxu0
        %6356 = vdwg.mxu0
        %v6358 = vshrl.u32 %v6197, 16
        %v6360 = vrot.slane %v6358, 3
        %v6361 = vshll.u32 %v6197, 16
        %v6363 = vrot.slane %v6361, 4
        %v6364 = vor.u32 %v6360, %v6363
        %v6366 = vshrl.u32 %v6198, 16
        %v6368 = vrot.slane %v6366, 3
        %v6369 = vshll.u32 %v6198, 16
        %v6371 = vrot.slane %v6369, 4
        %v6372 = vor.u32 %v6368, %v6371
        %v6373 = vsel %vm1048, %v6364, %v6372
        %v6375 = vshrl.u32 %v6207, 16
        %v6377 = vrot.slane %v6375, 3
        %v6378 = vshll.u32 %v6207, 16
        %v6380 = vrot.slane %v6378, 4
        %v6381 = vor.u32 %v6377, %v6380
        %v6382 = vsel %vm1048, %v6381, %v6381
        %v6417 = vunpack.c.l.b16 %v6208
        %v6418 = vunpack.c.l.b16 %v6209
        %v6419 = vunpack.c.l.b16 %v6210
        %v6420 = vunpack.c.l.b16 %v6211
        %v6421 = vunpack.c.l.b16 %v6212
        %v6422 = vunpack.c.l.b16 %v6213
        %v6423 = vunpack.c.l.b16 %v6214
        %v6424 = vunpack.c.l.b16 %v6215
        %v6425 = vunpack.c.l.b16 %v6216
        %v6426 = vunpack.c.l.b16 %v6217
        %v6427 = vunpack.c.l.b16 %v6218
        %v6428 = vunpack.c.l.b16 %v6219
        %v6429 = vunpack.c.l.b16 %v6220
        %v6430 = vunpack.c.l.b16 %v6221
        %v6431 = vunpack.c.l.b16 %v6222
        %v6432 = vunpack.c.l.b16 %v6223
        %v6433 = vunpack.c.l.b16 %v6224
        %v6434 = vunpack.c.l.b16 %v6225
        %v6435 = vunpack.c.l.b16 %v6226
        %v6436 = vunpack.c.l.b16 %v6227
        %v6437 = vunpack.c.l.b16 %v6228
        %v6438 = vunpack.c.l.b16 %v6229
        %v6439 = vunpack.c.l.b16 %v6230
        %v6440 = vunpack.c.l.b16 %v6231
        %v6441 = vunpack.c.l.b16 %v6232
        %v6442 = vunpack.c.l.b16 %v6233
        %v6443 = vunpack.c.l.b16 %v6234
        %v6444 = vunpack.c.l.b16 %v6235
        %v6445 = vunpack.c.l.b16 %v6236
        %v6446 = vunpack.c.l.b16 %v6237
        %v6447 = vunpack.c.l.b16 %v6238
        %v6448 = vunpack.c.l.b16 %v6239
        %v6449 = vpack.c.b16 %v6418, %v6417
        %v6450 = vpack.c.b16 %v6420, %v6419
        %v6451 = vpack.c.b16 %v6422, %v6421
        %v6452 = vpack.c.b16 %v6424, %v6423
        %v6453 = vpack.c.b16 %v6426, %v6425
        %v6454 = vpack.c.b16 %v6428, %v6427
        %v6455 = vpack.c.b16 %v6430, %v6429
        %v6456 = vpack.c.b16 %v6432, %v6431
        %v6457 = vpack.c.b16 %v6434, %v6433
        %v6458 = vpack.c.b16 %v6436, %v6435
        %v6459 = vpack.c.b16 %v6438, %v6437
        %v6460 = vpack.c.b16 %v6440, %v6439
        %v6461 = vpack.c.b16 %v6442, %v6441
        %v6462 = vpack.c.b16 %v6444, %v6443
        %v6463 = vpack.c.b16 %v6446, %v6445
        %v6464 = vpack.c.b16 %v6448, %v6447
        %6481 = vmatprep.subr.bf16.mxu0 0
        %6482 = vmatpush1.bf16.msra.mxu0 %v6456
        %6483 = vmatprep.subr.bf16.mxu0 0
        %6484 = vmatpush1.bf16.msra.mxu0 %v6455
        %6485 = vmatprep.subr.bf16.mxu0 0
        %6486 = vmatpush1.bf16.msra.mxu0 %v6454
        %6487 = vmatprep.subr.bf16.mxu0 0
        %6488 = vmatpush1.bf16.msra.mxu0 %v6453
        %6489 = vmatprep.subr.bf16.mxu0 0
        %6490 = vmatpush1.bf16.msra.mxu0 %v6452
        %6491 = vmatprep.subr.bf16.mxu0 0
        %6492 = vmatpush1.bf16.msra.mxu0 %v6451
        %6493 = vmatprep.subr.bf16.mxu0 0
        %6494 = vmatpush1.bf16.msra.mxu0 %v6450
        %6495 = vmatprep.subr.bf16.mxu0 0
        %6496 = vmatpush1.bf16.msra.mxu0 %v6449
        %6497 = vmatprep.subr.bf16.mxu0 0
        %6498 = vmatpush2.bf16.msra.mxu0 %v6464
        %6499 = vmatprep.subr.bf16.mxu0 0
        %6500 = vmatpush2.bf16.msra.mxu0 %v6463
        %6501 = vmatprep.subr.bf16.mxu0 0
        %6502 = vmatpush2.bf16.msra.mxu0 %v6462
        %6503 = vmatprep.subr.bf16.mxu0 0
        %6504 = vmatpush2.bf16.msra.mxu0 %v6461
        %6505 = vmatprep.subr.bf16.mxu0 0
        %6506 = vmatpush2.bf16.msra.mxu0 %v6460
        %6507 = vmatprep.subr.bf16.mxu0 0
        %6508 = vmatpush2.bf16.msra.mxu0 %v6459
        %6509 = vmatprep.subr.bf16.mxu0 0
        %6510 = vmatpush2.bf16.msra.mxu0 %v6458
        %6511 = vmatprep.subr.bf16.mxu0 0
        %6512 = vmatpush2.bf16.msra.mxu0 %v6457
        %6513 = vmatprep.mubr.bf16.mxu0 %v6382
        %6514 = vmatmul.mubr.bf16.gmra.mxu0 %v6373
        %v6515 = vpop.f32.mrf.mxu0
        %v6516 = vadd.f32 %v6351, %v6515
        %v6517 = vpop.f32.mrf.mxu0
        %v6518 = vpop.f32.mrf.mxu0
        %v6519 = vadd.f32 %v6354, %v6518
        %v6520 = vpop.f32.mrf.mxu0
        %6521 = vdwg.mxu0
        %v6523 = vlaneseq
        %v6524 = vshrl.u32 %v6523, 7
        %v6525 = vsub.s32 0, %v6524
        %v6526 = vrot.slane %v6186, %v6525
        %v6528 = vadd.f32 %v6516, %v6526
        %v6529 = vadd.f32 %v6519, %v6526
        %v6530 = vmax.f32 %v6528, 0.0
        %v6531 = vmax.f32 %v6529, 0.0
        %v6532 = vld [vmem:[#allocation5] sm:$0x1]
        %v6533 = vadd.f32 %v6530, %v6531
        %v6534 = vrot.slane %v6533, 4
        %v6535 = vadd.f32 %v6533, %v6534
        %v6536 = vrot.slane %v6535, 2
        %v6537 = vadd.f32 %v6535, %v6536
        %v6538 = vrot.slane %v6537, 1
        %v6539 = vadd.f32 %v6537, %v6538
        %v6540 = vadd.f32 %v6532, %v6539
        %6541 = vst [vmem:[#allocation5] sm:$0x1] %v6540
        %v6542 = vld [vmem:[#allocation5] sm:$0x1]
        %v6543 = vmul.f32 %v6542, 0.0625
        %v6544 = vld [vmem:[#allocation23] sm:$0xff]
        %v6545 = vld [vmem:[#allocation23 + $0x8] sm:$0xff]
        %v6546 = vld [vmem:[#allocation23 + $0x10] sm:$0xff]
        %v6547 = vld [vmem:[#allocation23 + $0x18] sm:$0xff]
        %v6548 = vld [vmem:[#allocation23 + $0x20] sm:$0xff]
        %v6549 = vld [vmem:[#allocation23 + $0x28] sm:$0xff]
        %v6550 = vld [vmem:[#allocation23 + $0x30] sm:$0xff]
        %v6551 = vld [vmem:[#allocation23 + $0x38] sm:$0xff]
        %v6552 = vld [vmem:[#allocation23 + $0x40] sm:$0xff]
        %v6553 = vld [vmem:[#allocation23 + $0x48] sm:$0xff]
        %v6554 = vld [vmem:[#allocation23 + $0x50] sm:$0xff]
        %v6555 = vld [vmem:[#allocation23 + $0x58] sm:$0xff]
        %v6556 = vld [vmem:[#allocation23 + $0x60] sm:$0xff]
        %v6557 = vld [vmem:[#allocation23 + $0x68] sm:$0xff]
        %v6558 = vld [vmem:[#allocation23 + $0x70] sm:$0xff]
        %v6559 = vld [vmem:[#allocation23 + $0x78] sm:$0xff]
        %v6560 = vld [vmem:[%s24] sm:$0x1]
        %6561 = vmatprep.subr.mxu0 0.0
        %6562 = vmatpush1.msra.mxu0 %v6559
        %6563 = vmatprep.subr.mxu0 0.0
        %6564 = vmatpush1.msra.mxu0 %v6558
        %6565 = vmatprep.subr.mxu0 0.0
        %6566 = vmatpush1.msra.mxu0 %v6557
        %6567 = vmatprep.subr.mxu0 0.0
        %6568 = vmatpush1.msra.mxu0 %v6556
        %6569 = vmatprep.subr.mxu0 0.0
        %6570 = vmatpush1.msra.mxu0 %v6555
        %6571 = vmatprep.subr.mxu0 0.0
        %6572 = vmatpush1.msra.mxu0 %v6554
        %6573 = vmatprep.subr.mxu0 0.0
        %6574 = vmatpush1.msra.mxu0 %v6553
        %6575 = vmatprep.subr.mxu0 0.0
        %6576 = vmatpush1.msra.mxu0 %v6552
        %6577 = vmatprep.subr.mxu0 0.0
        %6578 = vmatpush1.msra.mxu0 %v6551
        %6579 = vmatprep.subr.mxu0 0.0
        %6580 = vmatpush1.msra.mxu0 %v6550
        %6581 = vmatprep.subr.mxu0 0.0
        %6582 = vmatpush1.msra.mxu0 %v6549
        %6583 = vmatprep.subr.mxu0 0.0
        %6584 = vmatpush1.msra.mxu0 %v6548
        %6585 = vmatprep.subr.mxu0 0.0
        %6586 = vmatpush1.msra.mxu0 %v6547
        %6587 = vmatprep.subr.mxu0 0.0
        %6588 = vmatpush1.msra.mxu0 %v6546
        %6589 = vmatprep.subr.mxu0 0.0
        %6590 = vmatpush1.msra.mxu0 %v6545
        %6591 = vmatprep.subr.mxu0 0.0
        %6592 = vmatpush1.msra.mxu0 %v6544
        %6593 = vmatprep.subr.mxu0 0.0
        %6594 = vmatpush2.msra.mxu0 0.0
        %6595 = vmatprep.subr.mxu0 0.0
        %6596 = vmatpush2.msra.mxu0 0.0
        %6597 = vmatprep.subr.mxu0 0.0
        %6598 = vmatpush2.msra.mxu0 0.0
        %6599 = vmatprep.subr.mxu0 0.0
        %6600 = vmatpush2.msra.mxu0 0.0
        %6601 = vmatprep.subr.mxu0 0.0
        %6602 = vmatpush2.msra.mxu0 0.0
        %6603 = vmatprep.subr.mxu0 0.0
        %6604 = vmatpush2.msra.mxu0 0.0
        %6605 = vmatprep.subr.mxu0 0.0
        %6606 = vmatpush2.msra.mxu0 0.0
        %6607 = vmatprep.subr.mxu0 0.0
        %6608 = vmatpush2.msra.mxu0 0.0
        %6609 = vmatprep.subr.mxu0 0.0
        %6610 = vmatpush2.msra.mxu0 0.0
        %6611 = vmatprep.subr.mxu0 0.0
        %6612 = vmatpush2.msra.mxu0 0.0
        %6613 = vmatprep.subr.mxu0 0.0
        %6614 = vmatpush2.msra.mxu0 0.0
        %6615 = vmatprep.subr.mxu0 0.0
        %6616 = vmatpush2.msra.mxu0 0.0
        %6617 = vmatprep.subr.mxu0 0.0
        %6618 = vmatpush2.msra.mxu0 0.0
        %6619 = vmatprep.subr.mxu0 0.0
        %6620 = vmatpush2.msra.mxu0 0.0
        %6621 = vmatprep.subr.mxu0 0.0
        %6622 = vmatpush2.msra.mxu0 0.0
        %6623 = vmatprep.subr.mxu0 0.0
        %6624 = vmatpush2.msra.mxu0 0.0
        %6625 = vmatprep.mubr.f32.mxu0 0.0
        %6626 = vmatmul.mubr.f32.gmra.mxu0 %v6543
        %v6627 = vpop.f32.mrf.mxu0
        %v6628 = vadd.f32 %v6560, %v6627
        %v6629 = vpop.f32.mrf.mxu0
        %6630 = vdwg.mxu0
        %6631 = vst [vmem:[%s916] sm:$0x1] %v6628
        %s6632 = sand.u32 %s583, 1
        %s6633 = scalar_lea.sflag [#allocation8], %s6632
        %s6634 = sand.u32 %s583, 1
        %s6635 = scalar_lea.vmem [#allocation24], %s6634
        // Predicated region
        $region165: #{_lambda_.1} parent=119 // pred_check
          %p6636 = pneg %p593
        $region166: #{_lambda_.1} parent=119 // pred_check_branch
          %6638 = sbr.rel (%p6636) target = $region168
        $region167: #{_lambda_.1} parent=119 // pred_region
          %s6640 = ssub.s32 16, 16
          %6641 = vsyncadd %s6633, %s6640
          %s6642 = smul.addr %s45, 16
          %s6643 = scalar_lea.hbm %s25, %s6642
          %s6645 = sshll.u32 %s6635, 4
          %s6646 = int_to_ptr.vmem [resolvable:$true] %s6645
          %6648 = dma.vmem_to_hbm [thread:$0]  %s6646, 16, %s6643, %s6633
        $region168: #{_lambda_.1} parent=119 // pred_fallthru
          _
      $region120: #{_lambda_.1} parent=5 // pred_fallthru
        _
      %p6649 = scmp.le.s32.totalorder 2, %s40
      // Predicated region
      $region169: #{_lambda_.1} parent=5 // pred_check
        %p6650 = pneg %p6649
      $region170: #{_lambda_.1} parent=5 // pred_check_branch
        %6652 = sbr.rel (%p6650) target = $region172
      $region171: #{_lambda_.1} parent=5 // pred_region
        %s6653 = ssub.s32 %s40, 2
        // Predicated region
        $region173: #{_lambda_.1} parent=171 // pred_check
          %p6654 = pneg %p599
        $region174: #{_lambda_.1} parent=171 // pred_check_branch
          %6656 = sbr.rel (%p6654) target = $region176
        $region175: #{_lambda_.1} parent=171 // pred_region
          %s6657 = sand.u32 %s584, 1
          %s6658 = scalar_lea.sflag [#allocation8], %s6657
          %s6659 = sand.u32 %s584, 1
          %s6660 = scalar_lea.vmem [#allocation24], %s6659
          %6661 = dma.done %s6658, 16
        $region176: #{_lambda_.1} parent=171 // pred_fallthru
          _
      $region172: #{_lambda_.1} parent=5 // pred_fallthru
        _
    $region6: #{_lambda_.1} parent=1 // loop_footer
      %s44 = sadd.s32 1, %s40
    $region7: #{_lambda_.1} parent=1 // loop_footer_branch
      %39 = sbr.rel target = $region3
    $region8: #{_lambda_.1} parent=1 // loop_exit
      _
    %6662 = vsyncpa [#allocation7], 1
    %s6663 = scalar_lea.sflag [#allocation7], 1
    %6664 = vsyncpa %s6663, 1
    %6665 = vsyncpa [#allocation10], 1
    %6666 = vsyncpa [#allocation13], 1
    %6667 = vsyncpa [#allocation16], 1
    %6668 = vsyncpa [#allocation19], 1
    %6669 = vsyncpa [#allocation22], 1
    %6670 = vsyncpa [#allocation8], 1
    %s6671 = scalar_lea.sflag [#allocation8], 1
    %6672 = vsyncpa %s6671, 1

</llo_original>
